<compile_context>
chip_gen: v7x
topology: tpu7x:2x2x1
jax: 0.10.0
libtpu: 0.0.40
codegen_flags: <defaults>
</compile_context>

<pallas_src>
import functools

import jax
import jax.numpy as jnp
from jax.experimental import pallas as pl
from jax.experimental.pallas import tpu as pltpu


_VMEM_LIMIT = 48 * 1024 * 1024   # row-tiled footprint is small; <= v7x physical 64 MiB
_MAX_TILE_ROWS = 1024            # target flat rows (H-rows * W) per grid step


# ------------------------------ in-kernel math -------------------------------

def _gelu(x):
    """Exact-erf GELU; erf via Abramowitz&Stegun 7.1.26 (|err| <= 1.5e-7)."""
    z = x * 0.7071067811865476
    a = jnp.abs(z)
    t = 1.0 / (1.0 + 0.3275911 * a)
    poly = t * (0.254829592 + t * (-0.284496736 + t * (1.421413741
             + t * (-1.453152027 + t * 1.061405429))))
    erf_a = 1.0 - poly * jnp.exp(-a * a)
    erf_z = jnp.where(z >= 0.0, erf_a, -erf_a)
    return 0.5 * x * (1.0 + erf_z)


def _load_halo(ref, valid, W, C):
    """One-spatial-row halo (W flat rows), zeroed when out of the image."""
    if ref is None:
        return jnp.zeros((W, C), jnp.bfloat16)
    v = valid.astype(jnp.float32)
    return (ref[0].astype(jnp.float32) * v).astype(jnp.bfloat16)


def _conv3x3(xb16, up16, dn16, w_ref, *, W, P):
    """3x3 same-padding conv of one tile of spatial rows (channels-last,
    flattened rows), halo rows supplied by the caller.  bf16 MXU operands,
    fp32 accumulation; BN scale is pre-folded into w_ref.

    Only 3 padded buffers are materialized: the center and two +/-1-row-shifted
    copies carrying the left/right border masks, so all 9 tap slices below are
    sublane-aligned (start = P + dh*W) and each mask is applied exactly once.
    """
    TL, C = xb16.shape
    rows = TL + 2 * P
    zpad = jnp.zeros((P - W, C), jnp.bfloat16)
    xp = jnp.concatenate([zpad, up16, xb16, dn16, zpad], axis=0)       # (rows, C)

    zrow = jnp.zeros((1, C), jnp.bfloat16)
    sh_l = jnp.concatenate([zrow, xp[:rows - 1]], axis=0)   # row r holds xp[r-1]
    sh_r = jnp.concatenate([xp[1:], zrow], axis=0)          # row r holds xp[r+1]
    off = ((P + W - 1) // W) * W - P                        # keep iota arg >= 0
    col = (jax.lax.broadcasted_iota(jnp.int32, (rows, 1), 0) + off) % W
    xp_l = jnp.where(col >= 1, sh_l, jnp.zeros_like(sh_l))      # column w-1 exists
    xp_r = jnp.where(col <= W - 2, sh_r, jnp.zeros_like(sh_r))  # column w+1 exists

    srcs = (xp_l, xp, xp_r)
    acc = jnp.zeros((TL, C), jnp.float32)
    tap = 0
    for dh in (-1, 0, 1):
        base = P + dh * W
        for dw in (-1, 0, 1):
            piece = srcs[dw + 1][base:base + TL]
            acc = acc + jnp.dot(piece, w_ref[tap],
                                preferred_element_type=jnp.float32)
            tap += 1
    return acc


# -------------------------------- kernels ------------------------------------

def _conv1_kernel(*refs, W, P, halo, inv_L):
    if halo:
        (xb_ref, xu_ref, xd_ref, w_ref, b_ref,
         sw1_ref, sb1_ref, sw2_ref, sb2_ref, o_ref, pool_ref) = refs
    else:
        (xb_ref, w_ref, b_ref,
         sw1_ref, sb1_ref, sw2_ref, sb2_ref, o_ref, pool_ref) = refs
        xu_ref = xd_ref = None

    t = pl.program_id(1)
    xb = xb_ref[0]                                   # (TL, C) input dtype
    xb16 = xb.astype(jnp.bfloat16)
    C = xb16.shape[-1]
    up16 = _load_halo(xu_ref, t > 0, W, C)
    dn16 = _load_halo(xd_ref, t < pl.num_programs(1) - 1, W, C)

    acc = _conv3x3(xb16, up16, dn16, w_ref, W=W, P=P)
    y = _gelu(acc + b_ref[...])                      # BN bias (scale folded in w)

    # fused spatial_interaction(x): 1x1 conv C->C//2 (BN scale folded), exact
    # GELU, 1-wide projection as a lane reduce, sigmoid gate -- all on the
    # resident tile (no second HBM pass over x, no width-1 output store).
    s = jnp.dot(xb16, sw1_ref[...], preferred_element_type=jnp.float32)
    s = _gelu(s + sb1_ref[...])
    smap = jnp.sum(s * sw2_ref[...], axis=1, keepdims=True) + sb2_ref[...]
    y = y * (1.0 + jax.nn.sigmoid(smap))             # == y + y*sigmoid(map)
    o_ref[0] = y.astype(o_ref.dtype)

    # cross-tile global average pool of the raw input x (channel_interaction feed)
    psum = jnp.sum(xb.astype(jnp.float32), axis=0, keepdims=True)      # (1, C)

    @pl.when(t == 0)
    def _init():
        pool_ref[0] = psum

    @pl.when(t > 0)
    def _accum():
        pool_ref[0] = pool_ref[0] + psum

    @pl.when(t == pl.num_programs(1) - 1)
    def _finalize():
        pool_ref[0] = pool_ref[0] * inv_L


def _conv2_kernel(*refs, W, P, halo):
    if halo:
        (xb_ref, xu_ref, xd_ref, w_ref, b_ref,
         g_ref, pw_ref, pb_ref, o_ref) = refs
    else:
        (xb_ref, w_ref, b_ref, g_ref, pw_ref, pb_ref, o_ref) = refs
        xu_ref = xd_ref = None

    t = pl.program_id(1)
    xb16 = xb_ref[0].astype(jnp.bfloat16)
    C = xb16.shape[-1]
    up16 = _load_halo(xu_ref, t > 0, W, C)
    dn16 = _load_halo(xd_ref, t < pl.num_programs(1) - 1, W, C)

    acc = _conv3x3(xb16, up16, dn16, w_ref, W=W, P=P)
    y = _gelu(acc + b_ref[...])
    y = y * (1.0 + jax.nn.sigmoid(g_ref[0].astype(jnp.float32)))  # channel gate
    # fused proj Linear on the resident tile (proj_drop = Dropout(0.0) -> id)
    out = jnp.dot(y.astype(jnp.bfloat16), pw_ref[...],
                  preferred_element_type=jnp.float32) + pb_ref[...]
    o_ref[0] = out.astype(o_ref.dtype)


# ------------------------------- wrappers -------------------------------------

def _tiling(H, W):
    """Pick RH = spatial rows per grid step (tile = RH*W flat rows + 1-row halo)."""
    if W % 8 == 0:
        divs = [d for d in range(1, H + 1) if H % d == 0]
        cands = [d for d in divs if d * W <= _MAX_TILE_ROWS and H // d >= 2]
        if not cands:
            cands = [d for d in divs if d * W <= _MAX_TILE_ROWS]
        RH = max(cands) if cands else 1
    else:
        # TODO(synk): halo BlockSpec wants W % 8 == 0; fall back to whole image.
        RH = H
    T = H // RH
    P = ((W + 1 + 7) // 8) * 8       # sublane-aligned vertical pad, >= W + 1
    return RH, T, P, T > 1


def _rep(shape):
    """Grid-invariant (replicated) operand spec."""
    return pl.BlockSpec(shape, lambda b, t: (0,) * len(shape))


def _body_and_halo_specs(C, H, W, RH, halo):
    TL = RH * W
    specs = [pl.BlockSpec((1, TL, C), lambda b, t: (b, t, 0))]
    if halo:
        specs.append(pl.BlockSpec(
            (1, W, C), lambda b, t: (b, jnp.maximum(t * RH - 1, 0), 0)))
        specs.append(pl.BlockSpec(
            (1, W, C), lambda b, t: (b, jnp.minimum(t * RH + RH, H - 1), 0)))
    return TL, specs


def conv1_si_pallas(x, w9, b1, sw1, sb1, sw2, sb2, *, H, W):
    B, L, C = x.shape
    RH, T, P, halo = _tiling(H, W)
    TL, in_specs = _body_and_halo_specs(C, H, W, RH, halo)
    in_specs += [_rep((9, C, C)), _rep((1, C)), _rep(sw1.shape),
                 _rep(sb1.shape), _rep(sw2.shape), _rep(sb2.shape)]
    args = [x] + ([x, x] if halo else []) + [w9, b1, sw1, sb1, sw2, sb2]
    return pl.pallas_call(
        functools.partial(_conv1_kernel, W=W, P=P, halo=halo, inv_L=1.0 / (H * W)),
        out_shape=(jax.ShapeDtypeStruct((B, L, C), x.dtype),
                   jax.ShapeDtypeStruct((B, 1, C), jnp.float32)),
        grid=(B, T),
        in_specs=in_specs,
        out_specs=(pl.BlockSpec((1, TL, C), lambda b, t: (b, t, 0)),
                   pl.BlockSpec((1, 1, C), lambda b, t: (b, 0, 0))),
        compiler_params=pltpu.CompilerParams(
            dimension_semantics=("parallel", "arbitrary"),   # pool accumulates over t
            vmem_limit_bytes=_VMEM_LIMIT),
    )(*args)


def conv2_proj_pallas(x, w9, b2, channel_map, pw, pb, *, H, W):
    B, L, C = x.shape
    RH, T, P, halo = _tiling(H, W)
    TL, in_specs = _body_and_halo_specs(C, H, W, RH, halo)
    in_specs += [_rep((9, C, C)), _rep((1, C)),
                 pl.BlockSpec((1, 1, C), lambda b, t: (b, 0, 0)),
                 _rep((C, C)), _rep((1, C))]
    args = [x] + ([x, x] if halo else []) + [w9, b2, channel_map, pw, pb]
    return pl.pallas_call(
        functools.partial(_conv2_kernel, W=W, P=P, halo=halo),
        out_shape=jax.ShapeDtypeStruct((B, L, C), x.dtype),
        grid=(B, T),
        in_specs=in_specs,
        out_specs=pl.BlockSpec((1, TL, C), lambda b, t: (b, t, 0)),
        compiler_params=pltpu.CompilerParams(
            dimension_semantics=("parallel", "parallel"),
            vmem_limit_bytes=_VMEM_LIMIT),
    )(*args)


# ------------------------------ forward pass ----------------------------------

def bn_affine(gamma, beta, mean, var, eps=1e-5):
    scale = gamma / jnp.sqrt(var + eps)
    return scale, beta - mean * scale


def asc_forward(params, x, *, H, W):
    """ASC.forward(x, H, W, don=False). x: (B, L=H*W, C)."""
    B, L, C = x.shape
    assert L == H * W, 'flatten img_tokens has wrong size'
    f32, bf16 = jnp.float32, jnp.bfloat16
    Cs = C // 2

    # conv1: BN scale folded into the 9 conv taps (bf16 MXU weights), bias kept f32.
    s1, b1o = bn_affine(params['bn1_g'], params['bn1_b'], params['bn1_m'], params['bn1_v'])
    w1_9 = (params['conv1_w'].reshape(9, C, C) * s1[None, None, :]).astype(bf16)
    b1_eff = (params['conv1_b'] * s1 + b1o).reshape(1, C).astype(f32)

    # spatial_interaction (fused into the conv1 kernel), BN scale folded into si_w1.
    sis, sib0 = bn_affine(params['si_bn_g'], params['si_bn_b'],
                          params['si_bn_m'], params['si_bn_v'])
    sw1 = (params['si_w1'] * sis[None, :]).astype(bf16)
    sb1 = (params['si_b1'] * sis + sib0).reshape(1, Cs).astype(f32)
    sw2 = params['si_w2'].reshape(1, Cs).astype(f32)
    sb2 = params['si_b2'].reshape(1, 1).astype(f32)

    conv1_out, pooled = conv1_si_pallas(x, w1_9, b1_eff, sw1, sb1, sw2, sb2, H=H, W=W)

    # channel_interaction on the globally pooled raw x (tiny (B, C) MLP -- JAX glue)
    cis, cib0 = bn_affine(params['ci_bn_g'], params['ci_bn_b'],
                          params['ci_bn_m'], params['ci_bn_v'])
    t = pooled.reshape(B, C) @ (params['ci_w1'] * cis[None, :]) \
        + (params['ci_b1'] * cis + cib0)
    t = jax.nn.gelu(t, approximate=False)
    channel_map = (t @ params['ci_w2'] + params['ci_b2']).reshape(B, 1, C).astype(f32)

    # conv2 + channel gate + proj, all in one kernel.
    s2, b2o = bn_affine(params['bn2_g'], params['bn2_b'], params['bn2_m'], params['bn2_v'])
    w2_9 = (params['conv2_w'].reshape(9, C, C) * s2[None, None, :]).astype(bf16)
    b2_eff = (params['conv2_b'] * s2 + b2o).reshape(1, C).astype(f32)
    pw = params['proj_w'].astype(bf16)
    pb = params['proj_b'].reshape(1, C).astype(f32)

    return conv2_proj_pallas(conv1_out, w2_9, b2_eff, channel_map, pw, pb, H=H, W=W)


# -------------------------------- parameters ----------------------------------

def init_params(key, dim):
    c2 = dim // 2
    c8 = max(dim // 8, 1)
    ks = jax.random.split(key, 40)
    nrm = lambda k, shp, s=0.05: jax.random.normal(k, shp, jnp.float32) * s

    def bn(i, c):
        return (1.0 + nrm(ks[i], (c,), 0.1), nrm(ks[i + 1], (c,), 0.1),
                nrm(ks[i + 2], (c,), 0.1), 1.0 + jnp.abs(nrm(ks[i + 3], (c,), 0.1)))

    bn1_g, bn1_b, bn1_m, bn1_v = bn(0, dim)
    bn2_g, bn2_b, bn2_m, bn2_v = bn(4, dim)
    si_g, si_b, si_m, si_v = bn(8, c2)
    ci_g, ci_b, ci_m, ci_v = bn(12, c8)

    return {
        # conv1 / conv2: 3x3 conv weights stored (kh, kw, cin, cout)
        'conv1_w': nrm(ks[16], (3, 3, dim, dim)), 'conv1_b': nrm(ks[17], (dim,)),
        'bn1_g': bn1_g, 'bn1_b': bn1_b, 'bn1_m': bn1_m, 'bn1_v': bn1_v,
        'conv2_w': nrm(ks[18], (3, 3, dim, dim)), 'conv2_b': nrm(ks[19], (dim,)),
        'bn2_g': bn2_g, 'bn2_b': bn2_b, 'bn2_m': bn2_m, 'bn2_v': bn2_v,
        # spatial_interaction: C -> C//2 -> 1
        'si_w1': nrm(ks[20], (dim, c2)), 'si_b1': nrm(ks[21], (c2,)),
        'si_bn_g': si_g, 'si_bn_b': si_b, 'si_bn_m': si_m, 'si_bn_v': si_v,
        'si_w2': nrm(ks[22], (c2,)), 'si_b2': nrm(ks[23], (1,)),
        # channel_interaction: C -> C//8 -> C
        'ci_w1': nrm(ks[24], (dim, c8)), 'ci_b1': nrm(ks[25], (c8,)),
        'ci_bn_g': ci_g, 'ci_bn_b': ci_b, 'ci_bn_m': ci_m, 'ci_bn_v': ci_v,
        'ci_w2': nrm(ks[26], (c8, dim)), 'ci_b2': nrm(ks[27], (dim,)),
        # proj
        'proj_w': nrm(ks[28], (dim, dim)), 'proj_b': nrm(ks[29], (dim,)),
    }


# ----------------------------------- main --------------------------------------

if __name__ == "__main__":
    B, H, W, C = 2, 16, 16, 32     # L = 256 -> 2 row-tiles per image (halo path)
    L = H * W

    key = jax.random.PRNGKey(0)
    kx, kp = jax.random.split(key)
    x = jax.random.normal(kx, (B, L, C), jnp.float32)
    params = init_params(kp, C)

    fwd = jax.jit(functools.partial(asc_forward, H=H, W=W))
    out = jax.block_until_ready(fwd(params, x))
    assert out.shape == (B, L, C)
    assert bool(jnp.all(jnp.isfinite(out)))
    print("KERNEL_OK")
</pallas_src>

<mosaic_0001>
module attributes {stable_mosaic.version = 11 : i64} {
  func.func @_conv1_kernel(%arg0: i32, %arg1: i32, %arg2: memref<1x128x32xf32, #tpu.memory_space<vmem>>, %arg3: memref<1x16x32xf32, #tpu.memory_space<vmem>>, %arg4: memref<1x16x32xf32, #tpu.memory_space<vmem>>, %arg5: memref<9x32x32xbf16, #tpu.memory_space<vmem>>, %arg6: memref<1x32xf32, #tpu.memory_space<vmem>>, %arg7: memref<32x16xbf16, #tpu.memory_space<vmem>>, %arg8: memref<1x16xf32, #tpu.memory_space<vmem>>, %arg9: memref<1x16xf32, #tpu.memory_space<vmem>>, %arg10: memref<1x1xf32, #tpu.memory_space<vmem>>, %arg11: memref<1x128x32xf32, #tpu.memory_space<vmem>>, %arg12: memref<1x1x32xf32, #tpu.memory_space<vmem>>) attributes {dimension_semantics = [#tpu.dimension_semantics<parallel>, #tpu.dimension_semantics<arbitrary>], iteration_bounds = array<i64: 2, 2>, scalar_prefetch = 0 : i64, scratch_operands = 0 : i64, tpu.core_type = #tpu.core_type<tc>, window_params = [{transform_indices = @transform_0, window_bounds = array<i64: 1, 128, 32>}, {transform_indices = @transform_1, window_bounds = array<i64: 1, 16, 32>}, {transform_indices = @transform_2, window_bounds = array<i64: 1, 16, 32>}, {pipeline_mode = #tpu.pipeline_mode<synchronous>, transform_indices = @transform_3, window_bounds = array<i64: 9, 32, 32>}, {pipeline_mode = #tpu.pipeline_mode<synchronous>, transform_indices = @transform_4, window_bounds = array<i64: 1, 32>}, {pipeline_mode = #tpu.pipeline_mode<synchronous>, transform_indices = @transform_5, window_bounds = array<i64: 32, 16>}, {pipeline_mode = #tpu.pipeline_mode<synchronous>, transform_indices = @transform_6, window_bounds = array<i64: 1, 16>}, {pipeline_mode = #tpu.pipeline_mode<synchronous>, transform_indices = @transform_7, window_bounds = array<i64: 1, 16>}, {pipeline_mode = #tpu.pipeline_mode<synchronous>, transform_indices = @transform_8, window_bounds = array<i64: 1, 1>}, {transform_indices = @transform_9, window_bounds = array<i64: 1, 128, 32>}, {transform_indices = @transform_10, window_bounds = array<i64: 1, 1, 32>}]} {
    %c0 = arith.constant 0 : index
    %c0_0 = arith.constant 0 : index
    %c0_1 = arith.constant 0 : index
    %0 = vector.load %arg2[%c0, %c0_0, %c0_1] : memref<1x128x32xf32, #tpu.memory_space<vmem>>, vector<1x128x32xf32>
    %1 = vector.shape_cast %0 : vector<1x128x32xf32> to vector<128x32xf32>
    %2 = arith.truncf %1 : vector<128x32xf32> to vector<128x32xbf16>
    %c0_i32 = arith.constant 0 : i32
    %3 = arith.cmpi sgt, %arg1, %c0_i32 : i32
    %4 = arith.extui %3 : i1 to i32
    %5 = arith.sitofp %4 : i32 to f32
    %c0_2 = arith.constant 0 : index
    %c0_3 = arith.constant 0 : index
    %c0_4 = arith.constant 0 : index
    %6 = vector.load %arg3[%c0_2, %c0_3, %c0_4] : memref<1x16x32xf32, #tpu.memory_space<vmem>>, vector<1x16x32xf32>
    %7 = vector.shape_cast %6 : vector<1x16x32xf32> to vector<16x32xf32>
    %8 = vector.broadcast %5 : f32 to vector<16x32xf32>
    %9 = arith.mulf %7, %8 : vector<16x32xf32>
    %10 = arith.truncf %9 : vector<16x32xf32> to vector<16x32xbf16>
    %c1_i32 = arith.constant 1 : i32
    %11 = arith.cmpi slt, %arg1, %c1_i32 : i32
    %12 = arith.extui %11 : i1 to i32
    %13 = arith.sitofp %12 : i32 to f32
    %c0_5 = arith.constant 0 : index
    %c0_6 = arith.constant 0 : index
    %c0_7 = arith.constant 0 : index
    %14 = vector.load %arg4[%c0_5, %c0_6, %c0_7] : memref<1x16x32xf32, #tpu.memory_space<vmem>>, vector<1x16x32xf32>
    %15 = vector.shape_cast %14 : vector<1x16x32xf32> to vector<16x32xf32>
    %16 = vector.broadcast %13 : f32 to vector<16x32xf32>
    %17 = arith.mulf %15, %16 : vector<16x32xf32>
    %18 = arith.truncf %17 : vector<16x32xf32> to vector<16x32xbf16>
    %cst = arith.constant 0.000000e+00 : bf16
    %19 = vector.broadcast %cst : bf16 to vector<8x32xbf16>
    %20 = tpu.concatenate %19, %10, %2, %18, %19 in 0 : vector<8x32xbf16>, vector<16x32xbf16>, vector<128x32xbf16>, vector<16x32xbf16>, vector<8x32xbf16> -> vector<176x32xbf16>
    %cst_8 = arith.constant 0.000000e+00 : bf16
    %21 = vector.broadcast %cst_8 : bf16 to vector<1x32xbf16>
    %22 = vector.extract_strided_slice %20 {offsets = [0, 0], sizes = [175, 32], strides = [1, 1]} : vector<176x32xbf16> to vector<175x32xbf16>
    %23 = tpu.concatenate %21, %22 in 0 : vector<1x32xbf16>, vector<175x32xbf16> -> vector<176x32xbf16>
    %24 = vector.extract_strided_slice %20 {offsets = [1, 0], sizes = [175, 32], strides = [1, 1]} : vector<176x32xbf16> to vector<175x32xbf16>
    %25 = tpu.concatenate %24, %21 in 0 : vector<175x32xbf16>, vector<1x32xbf16> -> vector<176x32xbf16>
    %26 = tpu.iota {dimensions = array<i32: 0>} : vector<176x1xi32>
    %c8_i32 = arith.constant 8 : i32
    %27 = vector.broadcast %c8_i32 : i32 to vector<176x1xi32>
    %28 = arith.addi %26, %27 : vector<176x1xi32>
    %c16_i32 = arith.constant 16 : i32
    %c0_i32_9 = arith.constant 0 : i32
    %29 = arith.cmpi eq, %c16_i32, %c0_i32_9 : i32
    %c1_i32_10 = arith.constant 1 : i32
    %30 = arith.select %29, %c1_i32_10, %c16_i32 : i32
    %31 = vector.broadcast %30 : i32 to vector<176x1xi32>
    %32 = arith.remsi %28, %31 : vector<176x1xi32>
    %c0_i32_11 = arith.constant 0 : i32
    %33 = vector.broadcast %c0_i32_11 : i32 to vector<176x1xi32>
    %34 = arith.cmpi ne, %32, %33 : vector<176x1xi32>
    %c0_i32_12 = arith.constant 0 : i32
    %35 = vector.broadcast %c0_i32_12 : i32 to vector<176x1xi32>
    %36 = arith.cmpi slt, %32, %35 : vector<176x1xi32>
    %c0_i32_13 = arith.constant 0 : i32
    %37 = arith.cmpi slt, %30, %c0_i32_13 : i32
    %38 = vector.broadcast %37 : i1 to vector<176x1xi1>
    %39 = vector.broadcast %38 : vector<176x1xi1> to vector<176x1xi1>
    %40 = arith.xori %36, %39 : vector<176x1xi1>
    %41 = arith.andi %40, %34 : vector<176x1xi1>
    %42 = vector.broadcast %30 : i32 to vector<176x1xi32>
    %43 = arith.addi %32, %42 : vector<176x1xi32>
    %44 = arith.select %41, %43, %32 : vector<176x1xi1>, vector<176x1xi32>
    %c1_i32_14 = arith.constant 1 : i32
    %45 = vector.broadcast %c1_i32_14 : i32 to vector<176x1xi32>
    %46 = arith.cmpi sge, %44, %45 : vector<176x1xi32>
    %cst_15 = arith.constant 0.000000e+00 : bf16
    %47 = vector.broadcast %cst_15 : bf16 to vector<176x32xbf16>
    %48 = vector.shape_cast %46 : vector<176x1xi1> to vector<176x1xi1>
    %49 = vector.broadcast %48 : vector<176x1xi1> to vector<176x32xi1>
    %50 = arith.select %49, %23, %47 : vector<176x32xi1>, vector<176x32xbf16>
    %c14_i32 = arith.constant 14 : i32
    %51 = vector.broadcast %c14_i32 : i32 to vector<176x1xi32>
    %52 = arith.cmpi sle, %44, %51 : vector<176x1xi32>
    %cst_16 = arith.constant 0.000000e+00 : bf16
    %53 = vector.broadcast %cst_16 : bf16 to vector<176x32xbf16>
    %54 = vector.shape_cast %52 : vector<176x1xi1> to vector<176x1xi1>
    %55 = vector.broadcast %54 : vector<176x1xi1> to vector<176x32xi1>
    %56 = arith.select %55, %25, %53 : vector<176x32xi1>, vector<176x32xbf16>
    %cst_17 = arith.constant 0.000000e+00 : f32
    %57 = vector.broadcast %cst_17 : f32 to vector<128x32xf32>
    %58 = vector.extract_strided_slice %50 {offsets = [8, 0], sizes = [128, 32], strides = [1, 1]} : vector<176x32xbf16> to vector<128x32xbf16>
    %c0_18 = arith.constant 0 : index
    %c0_19 = arith.constant 0 : index
    %c0_20 = arith.constant 0 : index
    %59 = vector.load %arg5[%c0_18, %c0_19, %c0_20] : memref<9x32x32xbf16, #tpu.memory_space<vmem>>, vector<1x32x32xbf16>
    %60 = vector.shape_cast %59 : vector<1x32x32xbf16> to vector<32x32xbf16>
    %cst_21 = arith.constant dense<0.000000e+00> : vector<128x32xf32>
    %61 = tpu.matmul %58, %60, %cst_21 {dimension_numbers = #tpu.dot_dimension_numbers<[1], [0], [0], [1], [0, 0, 1, 1], [], []>} : vector<128x32xbf16>, vector<32x32xbf16>, vector<128x32xf32> -> vector<128x32xf32>
    %62 = arith.addf %57, %61 : vector<128x32xf32>
    %63 = vector.extract_strided_slice %20 {offsets = [8, 0], sizes = [128, 32], strides = [1, 1]} : vector<176x32xbf16> to vector<128x32xbf16>
    %c1 = arith.constant 1 : index
    %c0_22 = arith.constant 0 : index
    %c0_23 = arith.constant 0 : index
    %64 = vector.load %arg5[%c1, %c0_22, %c0_23] : memref<9x32x32xbf16, #tpu.memory_space<vmem>>, vector<1x32x32xbf16>
    %65 = vector.shape_cast %64 : vector<1x32x32xbf16> to vector<32x32xbf16>
    %cst_24 = arith.constant dense<0.000000e+00> : vector<128x32xf32>
    %66 = tpu.matmul %63, %65, %cst_24 {dimension_numbers = #tpu.dot_dimension_numbers<[1], [0], [0], [1], [0, 0, 1, 1], [], []>} : vector<128x32xbf16>, vector<32x32xbf16>, vector<128x32xf32> -> vector<128x32xf32>
    %67 = arith.addf %62, %66 : vector<128x32xf32>
    %68 = vector.extract_strided_slice %56 {offsets = [8, 0], sizes = [128, 32], strides = [1, 1]} : vector<176x32xbf16> to vector<128x32xbf16>
    %c2 = arith.constant 2 : index
    %c0_25 = arith.constant 0 : index
    %c0_26 = arith.constant 0 : index
    %69 = vector.load %arg5[%c2, %c0_25, %c0_26] : memref<9x32x32xbf16, #tpu.memory_space<vmem>>, vector<1x32x32xbf16>
    %70 = vector.shape_cast %69 : vector<1x32x32xbf16> to vector<32x32xbf16>
    %cst_27 = arith.constant dense<0.000000e+00> : vector<128x32xf32>
    %71 = tpu.matmul %68, %70, %cst_27 {dimension_numbers = #tpu.dot_dimension_numbers<[1], [0], [0], [1], [0, 0, 1, 1], [], []>} : vector<128x32xbf16>, vector<32x32xbf16>, vector<128x32xf32> -> vector<128x32xf32>
    %72 = arith.addf %67, %71 : vector<128x32xf32>
    %73 = vector.extract_strided_slice %50 {offsets = [24, 0], sizes = [128, 32], strides = [1, 1]} : vector<176x32xbf16> to vector<128x32xbf16>
    %c3 = arith.constant 3 : index
    %c0_28 = arith.constant 0 : index
    %c0_29 = arith.constant 0 : index
    %74 = vector.load %arg5[%c3, %c0_28, %c0_29] : memref<9x32x32xbf16, #tpu.memory_space<vmem>>, vector<1x32x32xbf16>
    %75 = vector.shape_cast %74 : vector<1x32x32xbf16> to vector<32x32xbf16>
    %cst_30 = arith.constant dense<0.000000e+00> : vector<128x32xf32>
    %76 = tpu.matmul %73, %75, %cst_30 {dimension_numbers = #tpu.dot_dimension_numbers<[1], [0], [0], [1], [0, 0, 1, 1], [], []>} : vector<128x32xbf16>, vector<32x32xbf16>, vector<128x32xf32> -> vector<128x32xf32>
    %77 = arith.addf %72, %76 : vector<128x32xf32>
    %78 = vector.extract_strided_slice %20 {offsets = [24, 0], sizes = [128, 32], strides = [1, 1]} : vector<176x32xbf16> to vector<128x32xbf16>
    %c4 = arith.constant 4 : index
    %c0_31 = arith.constant 0 : index
    %c0_32 = arith.constant 0 : index
    %79 = vector.load %arg5[%c4, %c0_31, %c0_32] : memref<9x32x32xbf16, #tpu.memory_space<vmem>>, vector<1x32x32xbf16>
    %80 = vector.shape_cast %79 : vector<1x32x32xbf16> to vector<32x32xbf16>
    %cst_33 = arith.constant dense<0.000000e+00> : vector<128x32xf32>
    %81 = tpu.matmul %78, %80, %cst_33 {dimension_numbers = #tpu.dot_dimension_numbers<[1], [0], [0], [1], [0, 0, 1, 1], [], []>} : vector<128x32xbf16>, vector<32x32xbf16>, vector<128x32xf32> -> vector<128x32xf32>
    %82 = arith.addf %77, %81 : vector<128x32xf32>
    %83 = vector.extract_strided_slice %56 {offsets = [24, 0], sizes = [128, 32], strides = [1, 1]} : vector<176x32xbf16> to vector<128x32xbf16>
    %c5 = arith.constant 5 : index
    %c0_34 = arith.constant 0 : index
    %c0_35 = arith.constant 0 : index
    %84 = vector.load %arg5[%c5, %c0_34, %c0_35] : memref<9x32x32xbf16, #tpu.memory_space<vmem>>, vector<1x32x32xbf16>
    %85 = vector.shape_cast %84 : vector<1x32x32xbf16> to vector<32x32xbf16>
    %cst_36 = arith.constant dense<0.000000e+00> : vector<128x32xf32>
    %86 = tpu.matmul %83, %85, %cst_36 {dimension_numbers = #tpu.dot_dimension_numbers<[1], [0], [0], [1], [0, 0, 1, 1], [], []>} : vector<128x32xbf16>, vector<32x32xbf16>, vector<128x32xf32> -> vector<128x32xf32>
    %87 = arith.addf %82, %86 : vector<128x32xf32>
    %88 = vector.extract_strided_slice %50 {offsets = [40, 0], sizes = [128, 32], strides = [1, 1]} : vector<176x32xbf16> to vector<128x32xbf16>
    %c6 = arith.constant 6 : index
    %c0_37 = arith.constant 0 : index
    %c0_38 = arith.constant 0 : index
    %89 = vector.load %arg5[%c6, %c0_37, %c0_38] : memref<9x32x32xbf16, #tpu.memory_space<vmem>>, vector<1x32x32xbf16>
    %90 = vector.shape_cast %89 : vector<1x32x32xbf16> to vector<32x32xbf16>
    %cst_39 = arith.constant dense<0.000000e+00> : vector<128x32xf32>
    %91 = tpu.matmul %88, %90, %cst_39 {dimension_numbers = #tpu.dot_dimension_numbers<[1], [0], [0], [1], [0, 0, 1, 1], [], []>} : vector<128x32xbf16>, vector<32x32xbf16>, vector<128x32xf32> -> vector<128x32xf32>
    %92 = arith.addf %87, %91 : vector<128x32xf32>
    %93 = vector.extract_strided_slice %20 {offsets = [40, 0], sizes = [128, 32], strides = [1, 1]} : vector<176x32xbf16> to vector<128x32xbf16>
    %c7 = arith.constant 7 : index
    %c0_40 = arith.constant 0 : index
    %c0_41 = arith.constant 0 : index
    %94 = vector.load %arg5[%c7, %c0_40, %c0_41] : memref<9x32x32xbf16, #tpu.memory_space<vmem>>, vector<1x32x32xbf16>
    %95 = vector.shape_cast %94 : vector<1x32x32xbf16> to vector<32x32xbf16>
    %cst_42 = arith.constant dense<0.000000e+00> : vector<128x32xf32>
    %96 = tpu.matmul %93, %95, %cst_42 {dimension_numbers = #tpu.dot_dimension_numbers<[1], [0], [0], [1], [0, 0, 1, 1], [], []>} : vector<128x32xbf16>, vector<32x32xbf16>, vector<128x32xf32> -> vector<128x32xf32>
    %97 = arith.addf %92, %96 : vector<128x32xf32>
    %98 = vector.extract_strided_slice %56 {offsets = [40, 0], sizes = [128, 32], strides = [1, 1]} : vector<176x32xbf16> to vector<128x32xbf16>
    %c8 = arith.constant 8 : index
    %c0_43 = arith.constant 0 : index
    %c0_44 = arith.constant 0 : index
    %99 = vector.load %arg5[%c8, %c0_43, %c0_44] : memref<9x32x32xbf16, #tpu.memory_space<vmem>>, vector<1x32x32xbf16>
    %100 = vector.shape_cast %99 : vector<1x32x32xbf16> to vector<32x32xbf16>
    %cst_45 = arith.constant dense<0.000000e+00> : vector<128x32xf32>
    %101 = tpu.matmul %98, %100, %cst_45 {dimension_numbers = #tpu.dot_dimension_numbers<[1], [0], [0], [1], [0, 0, 1, 1], [], []>} : vector<128x32xbf16>, vector<32x32xbf16>, vector<128x32xf32> -> vector<128x32xf32>
    %102 = arith.addf %97, %101 : vector<128x32xf32>
    %c0_46 = arith.constant 0 : index
    %c0_47 = arith.constant 0 : index
    %103 = vector.load %arg6[%c0_46, %c0_47] : memref<1x32xf32, #tpu.memory_space<vmem>>, vector<1x32xf32>
    %104 = vector.broadcast %103 : vector<1x32xf32> to vector<128x32xf32>
    %105 = arith.addf %102, %104 : vector<128x32xf32>
    %cst_48 = arith.constant 0.707106769 : f32
    %106 = vector.broadcast %cst_48 : f32 to vector<128x32xf32>
    %107 = arith.mulf %105, %106 : vector<128x32xf32>
    %108 = math.absf %107 : vector<128x32xf32>
    %cst_49 = arith.constant 0.327591091 : f32
    %109 = vector.broadcast %cst_49 : f32 to vector<128x32xf32>
    %110 = arith.mulf %109, %108 : vector<128x32xf32>
    %cst_50 = arith.constant 1.000000e+00 : f32
    %111 = vector.broadcast %cst_50 : f32 to vector<128x32xf32>
    %112 = arith.addf %111, %110 : vector<128x32xf32>
    %cst_51 = arith.constant 1.000000e+00 : f32
    %113 = vector.broadcast %cst_51 : f32 to vector<128x32xf32>
    %114 = arith.divf %113, %112 : vector<128x32xf32>
    %cst_52 = arith.constant 1.06140542 : f32
    %115 = vector.broadcast %cst_52 : f32 to vector<128x32xf32>
    %116 = arith.mulf %114, %115 : vector<128x32xf32>
    %cst_53 = arith.constant -1.45315206 : f32
    %117 = vector.broadcast %cst_53 : f32 to vector<128x32xf32>
    %118 = arith.addf %117, %116 : vector<128x32xf32>
    %119 = arith.mulf %114, %118 : vector<128x32xf32>
    %cst_54 = arith.constant 1.42141378 : f32
    %120 = vector.broadcast %cst_54 : f32 to vector<128x32xf32>
    %121 = arith.addf %120, %119 : vector<128x32xf32>
    %122 = arith.mulf %114, %121 : vector<128x32xf32>
    %cst_55 = arith.constant -0.284496725 : f32
    %123 = vector.broadcast %cst_55 : f32 to vector<128x32xf32>
    %124 = arith.addf %123, %122 : vector<128x32xf32>
    %125 = arith.mulf %114, %124 : vector<128x32xf32>
    %cst_56 = arith.constant 0.254829586 : f32
    %126 = vector.broadcast %cst_56 : f32 to vector<128x32xf32>
    %127 = arith.addf %126, %125 : vector<128x32xf32>
    %128 = arith.mulf %114, %127 : vector<128x32xf32>
    %cst_57 = arith.constant 0.000000e+00 : f32
    %129 = vector.broadcast %cst_57 : f32 to vector<128x32xf32>
    %130 = arith.subf %129, %108 : vector<128x32xf32>
    %131 = arith.mulf %130, %108 : vector<128x32xf32>
    %132 = math.exp %131 : vector<128x32xf32>
    %133 = arith.mulf %128, %132 : vector<128x32xf32>
    %cst_58 = arith.constant 1.000000e+00 : f32
    %134 = vector.broadcast %cst_58 : f32 to vector<128x32xf32>
    %135 = arith.subf %134, %133 : vector<128x32xf32>
    %cst_59 = arith.constant 0.000000e+00 : f32
    %136 = vector.broadcast %cst_59 : f32 to vector<128x32xf32>
    %137 = arith.cmpf oge, %107, %136 : vector<128x32xf32>
    %cst_60 = arith.constant 0.000000e+00 : f32
    %138 = vector.broadcast %cst_60 : f32 to vector<128x32xf32>
    %139 = arith.subf %138, %135 : vector<128x32xf32>
    %140 = arith.select %137, %135, %139 : vector<128x32xi1>, vector<128x32xf32>
    %cst_61 = arith.constant 5.000000e-01 : f32
    %141 = vector.broadcast %cst_61 : f32 to vector<128x32xf32>
    %142 = arith.mulf %141, %105 : vector<128x32xf32>
    %cst_62 = arith.constant 1.000000e+00 : f32
    %143 = vector.broadcast %cst_62 : f32 to vector<128x32xf32>
    %144 = arith.addf %143, %140 : vector<128x32xf32>
    %145 = arith.mulf %142, %144 : vector<128x32xf32>
    %c0_63 = arith.constant 0 : index
    %c0_64 = arith.constant 0 : index
    %146 = vector.load %arg7[%c0_63, %c0_64] : memref<32x16xbf16, #tpu.memory_space<vmem>>, vector<32x16xbf16>
    %cst_65 = arith.constant dense<0.000000e+00> : vector<128x16xf32>
    %147 = tpu.matmul %2, %146, %cst_65 {dimension_numbers = #tpu.dot_dimension_numbers<[1], [0], [0], [1], [0, 0, 1, 1], [], []>} : vector<128x32xbf16>, vector<32x16xbf16>, vector<128x16xf32> -> vector<128x16xf32>
    %c0_66 = arith.constant 0 : index
    %c0_67 = arith.constant 0 : index
    %148 = vector.load %arg8[%c0_66, %c0_67] : memref<1x16xf32, #tpu.memory_space<vmem>>, vector<1x16xf32>
    %149 = vector.broadcast %148 : vector<1x16xf32> to vector<128x16xf32>
    %150 = arith.addf %147, %149 : vector<128x16xf32>
    %cst_68 = arith.constant 0.707106769 : f32
    %151 = vector.broadcast %cst_68 : f32 to vector<128x16xf32>
    %152 = arith.mulf %150, %151 : vector<128x16xf32>
    %153 = math.absf %152 : vector<128x16xf32>
    %cst_69 = arith.constant 0.327591091 : f32
    %154 = vector.broadcast %cst_69 : f32 to vector<128x16xf32>
    %155 = arith.mulf %154, %153 : vector<128x16xf32>
    %cst_70 = arith.constant 1.000000e+00 : f32
    %156 = vector.broadcast %cst_70 : f32 to vector<128x16xf32>
    %157 = arith.addf %156, %155 : vector<128x16xf32>
    %cst_71 = arith.constant 1.000000e+00 : f32
    %158 = vector.broadcast %cst_71 : f32 to vector<128x16xf32>
    %159 = arith.divf %158, %157 : vector<128x16xf32>
    %cst_72 = arith.constant 1.06140542 : f32
    %160 = vector.broadcast %cst_72 : f32 to vector<128x16xf32>
    %161 = arith.mulf %159, %160 : vector<128x16xf32>
    %cst_73 = arith.constant -1.45315206 : f32
    %162 = vector.broadcast %cst_73 : f32 to vector<128x16xf32>
    %163 = arith.addf %162, %161 : vector<128x16xf32>
    %164 = arith.mulf %159, %163 : vector<128x16xf32>
    %cst_74 = arith.constant 1.42141378 : f32
    %165 = vector.broadcast %cst_74 : f32 to vector<128x16xf32>
    %166 = arith.addf %165, %164 : vector<128x16xf32>
    %167 = arith.mulf %159, %166 : vector<128x16xf32>
    %cst_75 = arith.constant -0.284496725 : f32
    %168 = vector.broadcast %cst_75 : f32 to vector<128x16xf32>
    %169 = arith.addf %168, %167 : vector<128x16xf32>
    %170 = arith.mulf %159, %169 : vector<128x16xf32>
    %cst_76 = arith.constant 0.254829586 : f32
    %171 = vector.broadcast %cst_76 : f32 to vector<128x16xf32>
    %172 = arith.addf %171, %170 : vector<128x16xf32>
    %173 = arith.mulf %159, %172 : vector<128x16xf32>
    %cst_77 = arith.constant 0.000000e+00 : f32
    %174 = vector.broadcast %cst_77 : f32 to vector<128x16xf32>
    %175 = arith.subf %174, %153 : vector<128x16xf32>
    %176 = arith.mulf %175, %153 : vector<128x16xf32>
    %177 = math.exp %176 : vector<128x16xf32>
    %178 = arith.mulf %173, %177 : vector<128x16xf32>
    %cst_78 = arith.constant 1.000000e+00 : f32
    %179 = vector.broadcast %cst_78 : f32 to vector<128x16xf32>
    %180 = arith.subf %179, %178 : vector<128x16xf32>
    %cst_79 = arith.constant 0.000000e+00 : f32
    %181 = vector.broadcast %cst_79 : f32 to vector<128x16xf32>
    %182 = arith.cmpf oge, %152, %181 : vector<128x16xf32>
    %cst_80 = arith.constant 0.000000e+00 : f32
    %183 = vector.broadcast %cst_80 : f32 to vector<128x16xf32>
    %184 = arith.subf %183, %180 : vector<128x16xf32>
    %185 = arith.select %182, %180, %184 : vector<128x16xi1>, vector<128x16xf32>
    %cst_81 = arith.constant 5.000000e-01 : f32
    %186 = vector.broadcast %cst_81 : f32 to vector<128x16xf32>
    %187 = arith.mulf %186, %150 : vector<128x16xf32>
    %cst_82 = arith.constant 1.000000e+00 : f32
    %188 = vector.broadcast %cst_82 : f32 to vector<128x16xf32>
    %189 = arith.addf %188, %185 : vector<128x16xf32>
    %190 = arith.mulf %187, %189 : vector<128x16xf32>
    %c0_83 = arith.constant 0 : index
    %c0_84 = arith.constant 0 : index
    %191 = vector.load %arg9[%c0_83, %c0_84] : memref<1x16xf32, #tpu.memory_space<vmem>>, vector<1x16xf32>
    %192 = vector.broadcast %191 : vector<1x16xf32> to vector<128x16xf32>
    %193 = arith.mulf %190, %192 : vector<128x16xf32>
    %cst_85 = arith.constant dense<0.000000e+00> : vector<128xf32>
    %194 = vector.multi_reduction <add>, %193, %cst_85 [1] : vector<128x16xf32> to vector<128xf32>
    %195 = vector.shape_cast %194 : vector<128xf32> to vector<128x1xf32>
    %c0_86 = arith.constant 0 : index
    %c0_87 = arith.constant 0 : index
    %196 = vector.load %arg10[%c0_86, %c0_87] : memref<1x1xf32, #tpu.memory_space<vmem>>, vector<1x1xf32>
    %197 = vector.broadcast %196 : vector<1x1xf32> to vector<128x1xf32>
    %198 = arith.addf %195, %197 : vector<128x1xf32>
    %199 = arith.negf %198 : vector<128x1xf32>
    %200 = math.exp %199 : vector<128x1xf32>
    %cst_88 = arith.constant 1.000000e+00 : f32
    %201 = vector.broadcast %cst_88 : f32 to vector<128x1xf32>
    %202 = arith.addf %201, %200 : vector<128x1xf32>
    %203 = arith.divf %201, %202 : vector<128x1xf32>
    %cst_89 = arith.constant 1.000000e+00 : f32
    %204 = vector.broadcast %cst_89 : f32 to vector<128x1xf32>
    %205 = arith.addf %204, %203 : vector<128x1xf32>
    %206 = vector.broadcast %205 : vector<128x1xf32> to vector<128x32xf32>
    %207 = arith.mulf %145, %206 : vector<128x32xf32>
    %c0_90 = arith.constant 0 : index
    %c0_91 = arith.constant 0 : index
    %c0_92 = arith.constant 0 : index
    %208 = vector.load %arg11[%c0_90, %c0_91, %c0_92] : memref<1x128x32xf32, #tpu.memory_space<vmem>>, vector<1x128x32xf32>
    %209 = vector.shape_cast %208 : vector<1x128x32xf32> to vector<128x32xf32>
    %210 = vector.shape_cast %207 : vector<128x32xf32> to vector<1x128x32xf32>
    tpu.vector_store %arg11[%c0_90, %c0_91, %c0_92], %210 {strides = array<i32>} : memref<1x128x32xf32, #tpu.memory_space<vmem>>, vector<1x128x32xf32>,
    %cst_93 = arith.constant dense<0.000000e+00> : vector<32xf32>
    %211 = vector.multi_reduction <add>, %1, %cst_93 [0] : vector<128x32xf32> to vector<32xf32>
    %212 = vector.shape_cast %211 : vector<32xf32> to vector<1x32xf32>
    %c0_i32_94 = arith.constant 0 : i32
    %213 = arith.cmpi eq, %arg1, %c0_i32_94 : i32
    %214 = arith.extui %213 : i1 to i32
    %c0_i32_95 = arith.constant 0 : i32
    %215 = arith.cmpi ne, %214, %c0_i32_95 : i32
    scf.if %215 {
      %c0_100 = arith.constant 0 : index
      %c0_101 = arith.constant 0 : index
      %c0_102 = arith.constant 0 : index
      %222 = vector.load %arg12[%c0_100, %c0_101, %c0_102] : memref<1x1x32xf32, #tpu.memory_space<vmem>>, vector<1x1x32xf32>
      %223 = vector.shape_cast %222 : vector<1x1x32xf32> to vector<1x32xf32>
      %224 = vector.shape_cast %212 : vector<1x32xf32> to vector<1x1x32xf32>
      tpu.vector_store %arg12[%c0_100, %c0_101, %c0_102], %224 {strides = array<i32>} : memref<1x1x32xf32, #tpu.memory_space<vmem>>, vector<1x1x32xf32>,
    } else {
    }
    %c0_i32_96 = arith.constant 0 : i32
    %216 = arith.cmpi sgt, %arg1, %c0_i32_96 : i32
    %217 = arith.extui %216 : i1 to i32
    %c0_i32_97 = arith.constant 0 : i32
    %218 = arith.cmpi ne, %217, %c0_i32_97 : i32
    scf.if %218 {
      %c0_100 = arith.constant 0 : index
      %c0_101 = arith.constant 0 : index
      %c0_102 = arith.constant 0 : index
      %222 = vector.load %arg12[%c0_100, %c0_101, %c0_102] : memref<1x1x32xf32, #tpu.memory_space<vmem>>, vector<1x1x32xf32>
      %223 = vector.shape_cast %222 : vector<1x1x32xf32> to vector<1x32xf32>
      %224 = arith.addf %223, %212 : vector<1x32xf32>
      %c0_103 = arith.constant 0 : index
      %c0_104 = arith.constant 0 : index
      %c0_105 = arith.constant 0 : index
      %225 = vector.load %arg12[%c0_103, %c0_104, %c0_105] : memref<1x1x32xf32, #tpu.memory_space<vmem>>, vector<1x1x32xf32>
      %226 = vector.shape_cast %225 : vector<1x1x32xf32> to vector<1x32xf32>
      %227 = vector.shape_cast %224 : vector<1x32xf32> to vector<1x1x32xf32>
      tpu.vector_store %arg12[%c0_103, %c0_104, %c0_105], %227 {strides = array<i32>} : memref<1x1x32xf32, #tpu.memory_space<vmem>>, vector<1x1x32xf32>,
    } else {
    }
    %c1_i32_98 = arith.constant 1 : i32
    %219 = arith.cmpi eq, %arg1, %c1_i32_98 : i32
    %220 = arith.extui %219 : i1 to i32
    %c0_i32_99 = arith.constant 0 : i32
    %221 = arith.cmpi ne, %220, %c0_i32_99 : i32
    scf.if %221 {
      %c0_100 = arith.constant 0 : index
      %c0_101 = arith.constant 0 : index
      %c0_102 = arith.constant 0 : index
      %222 = vector.load %arg12[%c0_100, %c0_101, %c0_102] : memref<1x1x32xf32, #tpu.memory_space<vmem>>, vector<1x1x32xf32>
      %223 = vector.shape_cast %222 : vector<1x1x32xf32> to vector<1x32xf32>
      %cst_103 = arith.constant 3.906250e-03 : f32
      %224 = vector.broadcast %cst_103 : f32 to vector<1x32xf32>
      %225 = arith.mulf %223, %224 : vector<1x32xf32>
      %c0_104 = arith.constant 0 : index
      %c0_105 = arith.constant 0 : index
      %c0_106 = arith.constant 0 : index
      %226 = vector.load %arg12[%c0_104, %c0_105, %c0_106] : memref<1x1x32xf32, #tpu.memory_space<vmem>>, vector<1x1x32xf32>
      %227 = vector.shape_cast %226 : vector<1x1x32xf32> to vector<1x32xf32>
      %228 = vector.shape_cast %225 : vector<1x32xf32> to vector<1x1x32xf32>
      tpu.vector_store %arg12[%c0_104, %c0_105, %c0_106], %228 {strides = array<i32>} : memref<1x1x32xf32, #tpu.memory_space<vmem>>, vector<1x1x32xf32>,
    } else {
    }
    return
  }
  func.func @transform_0(%arg0: i32, %arg1: i32) -> (i32, i32, i32) {
    %c0_i32 = arith.constant 0 : i32
    %c0_i32_0 = arith.constant 0 : i32
    return %arg0, %arg1, %c0_i32 : i32, i32, i32
  }
  func.func @transform_1(%arg0: i32, %arg1: i32) -> (i32, i32, i32) {
    %c8_i32 = arith.constant 8 : i32
    %0 = arith.muli %arg1, %c8_i32 : i32
    %c1_i32 = arith.constant 1 : i32
    %1 = arith.subi %0, %c1_i32 : i32
    %c0_i32 = arith.constant 0 : i32
    %2 = arith.maxsi %1, %c0_i32 : i32
    %c0_i32_0 = arith.constant 0 : i32
    %c0_i32_1 = arith.constant 0 : i32
    return %arg0, %2, %c0_i32_0 : i32, i32, i32
  }
  func.func @transform_2(%arg0: i32, %arg1: i32) -> (i32, i32, i32) {
    %c8_i32 = arith.constant 8 : i32
    %0 = arith.muli %arg1, %c8_i32 : i32
    %c8_i32_0 = arith.constant 8 : i32
    %1 = arith.addi %0, %c8_i32_0 : i32
    %c15_i32 = arith.constant 15 : i32
    %2 = arith.minsi %1, %c15_i32 : i32
    %c0_i32 = arith.constant 0 : i32
    %c0_i32_1 = arith.constant 0 : i32
    return %arg0, %2, %c0_i32 : i32, i32, i32
  }
  func.func @transform_3(%arg0: i32, %arg1: i32) -> (i32, i32, i32) {
    %c0_i32 = arith.constant 0 : i32
    %c0_i32_0 = arith.constant 0 : i32
    %c0_i32_1 = arith.constant 0 : i32
    %c0_i32_2 = arith.constant 0 : i32
    return %c0_i32, %c0_i32_0, %c0_i32_1 : i32, i32, i32
  }
  func.func @transform_4(%arg0: i32, %arg1: i32) -> (i32, i32) {
    %c0_i32 = arith.constant 0 : i32
    %c0_i32_0 = arith.constant 0 : i32
    %c0_i32_1 = arith.constant 0 : i32
    return %c0_i32, %c0_i32_0 : i32, i32
  }
  func.func @transform_5(%arg0: i32, %arg1: i32) -> (i32, i32) {
    %c0_i32 = arith.constant 0 : i32
    %c0_i32_0 = arith.constant 0 : i32
    %c0_i32_1 = arith.constant 0 : i32
    return %c0_i32, %c0_i32_0 : i32, i32
  }
  func.func @transform_6(%arg0: i32, %arg1: i32) -> (i32, i32) {
    %c0_i32 = arith.constant 0 : i32
    %c0_i32_0 = arith.constant 0 : i32
    %c0_i32_1 = arith.constant 0 : i32
    return %c0_i32, %c0_i32_0 : i32, i32
  }
  func.func @transform_7(%arg0: i32, %arg1: i32) -> (i32, i32) {
    %c0_i32 = arith.constant 0 : i32
    %c0_i32_0 = arith.constant 0 : i32
    %c0_i32_1 = arith.constant 0 : i32
    return %c0_i32, %c0_i32_0 : i32, i32
  }
  func.func @transform_8(%arg0: i32, %arg1: i32) -> (i32, i32) {
    %c0_i32 = arith.constant 0 : i32
    %c0_i32_0 = arith.constant 0 : i32
    %c0_i32_1 = arith.constant 0 : i32
    return %c0_i32, %c0_i32_0 : i32, i32
  }
  func.func @transform_9(%arg0: i32, %arg1: i32) -> (i32, i32, i32) {
    %c0_i32 = arith.constant 0 : i32
    %c0_i32_0 = arith.constant 0 : i32
    return %arg0, %arg1, %c0_i32 : i32, i32, i32
  }
  func.func @transform_10(%arg0: i32, %arg1: i32) -> (i32, i32, i32) {
    %c0_i32 = arith.constant 0 : i32
    %c0_i32_0 = arith.constant 0 : i32
    %c0_i32_1 = arith.constant 0 : i32
    return %arg0, %c0_i32, %c0_i32_0 : i32, i32, i32
  }
}

module attributes {stable_mosaic.version = 11 : i64} {
  func.func @_conv2_kernel(%arg0: i32, %arg1: i32, %arg2: memref<1x128x32xf32, #tpu.memory_space<vmem>>, %arg3: memref<1x16x32xf32, #tpu.memory_space<vmem>>, %arg4: memref<1x16x32xf32, #tpu.memory_space<vmem>>, %arg5: memref<9x32x32xbf16, #tpu.memory_space<vmem>>, %arg6: memref<1x32xf32, #tpu.memory_space<vmem>>, %arg7: memref<1x1x32xf32, #tpu.memory_space<vmem>>, %arg8: memref<32x32xbf16, #tpu.memory_space<vmem>>, %arg9: memref<1x32xf32, #tpu.memory_space<vmem>>, %arg10: memref<1x128x32xf32, #tpu.memory_space<vmem>>) attributes {dimension_semantics = [#tpu.dimension_semantics<parallel>, #tpu.dimension_semantics<parallel>], iteration_bounds = array<i64: 2, 2>, scalar_prefetch = 0 : i64, scratch_operands = 0 : i64, tpu.core_type = #tpu.core_type<tc>, window_params = [{transform_indices = @transform_0, window_bounds = array<i64: 1, 128, 32>}, {transform_indices = @transform_1, window_bounds = array<i64: 1, 16, 32>}, {transform_indices = @transform_2, window_bounds = array<i64: 1, 16, 32>}, {pipeline_mode = #tpu.pipeline_mode<synchronous>, transform_indices = @transform_3, window_bounds = array<i64: 9, 32, 32>}, {pipeline_mode = #tpu.pipeline_mode<synchronous>, transform_indices = @transform_4, window_bounds = array<i64: 1, 32>}, {transform_indices = @transform_5, window_bounds = array<i64: 1, 1, 32>}, {pipeline_mode = #tpu.pipeline_mode<synchronous>, transform_indices = @transform_6, window_bounds = array<i64: 32, 32>}, {pipeline_mode = #tpu.pipeline_mode<synchronous>, transform_indices = @transform_7, window_bounds = array<i64: 1, 32>}, {transform_indices = @transform_8, window_bounds = array<i64: 1, 128, 32>}]} {
    %c0 = arith.constant 0 : index
    %c0_0 = arith.constant 0 : index
    %c0_1 = arith.constant 0 : index
    %0 = vector.load %arg2[%c0, %c0_0, %c0_1] : memref<1x128x32xf32, #tpu.memory_space<vmem>>, vector<1x128x32xf32>
    %1 = vector.shape_cast %0 : vector<1x128x32xf32> to vector<128x32xf32>
    %2 = arith.truncf %1 : vector<128x32xf32> to vector<128x32xbf16>
    %c0_i32 = arith.constant 0 : i32
    %3 = arith.cmpi sgt, %arg1, %c0_i32 : i32
    %4 = arith.extui %3 : i1 to i32
    %5 = arith.sitofp %4 : i32 to f32
    %c0_2 = arith.constant 0 : index
    %c0_3 = arith.constant 0 : index
    %c0_4 = arith.constant 0 : index
    %6 = vector.load %arg3[%c0_2, %c0_3, %c0_4] : memref<1x16x32xf32, #tpu.memory_space<vmem>>, vector<1x16x32xf32>
    %7 = vector.shape_cast %6 : vector<1x16x32xf32> to vector<16x32xf32>
    %8 = vector.broadcast %5 : f32 to vector<16x32xf32>
    %9 = arith.mulf %7, %8 : vector<16x32xf32>
    %10 = arith.truncf %9 : vector<16x32xf32> to vector<16x32xbf16>
    %c1_i32 = arith.constant 1 : i32
    %11 = arith.cmpi slt, %arg1, %c1_i32 : i32
    %12 = arith.extui %11 : i1 to i32
    %13 = arith.sitofp %12 : i32 to f32
    %c0_5 = arith.constant 0 : index
    %c0_6 = arith.constant 0 : index
    %c0_7 = arith.constant 0 : index
    %14 = vector.load %arg4[%c0_5, %c0_6, %c0_7] : memref<1x16x32xf32, #tpu.memory_space<vmem>>, vector<1x16x32xf32>
    %15 = vector.shape_cast %14 : vector<1x16x32xf32> to vector<16x32xf32>
    %16 = vector.broadcast %13 : f32 to vector<16x32xf32>
    %17 = arith.mulf %15, %16 : vector<16x32xf32>
    %18 = arith.truncf %17 : vector<16x32xf32> to vector<16x32xbf16>
    %cst = arith.constant 0.000000e+00 : bf16
    %19 = vector.broadcast %cst : bf16 to vector<8x32xbf16>
    %20 = tpu.concatenate %19, %10, %2, %18, %19 in 0 : vector<8x32xbf16>, vector<16x32xbf16>, vector<128x32xbf16>, vector<16x32xbf16>, vector<8x32xbf16> -> vector<176x32xbf16>
    %cst_8 = arith.constant 0.000000e+00 : bf16
    %21 = vector.broadcast %cst_8 : bf16 to vector<1x32xbf16>
    %22 = vector.extract_strided_slice %20 {offsets = [0, 0], sizes = [175, 32], strides = [1, 1]} : vector<176x32xbf16> to vector<175x32xbf16>
    %23 = tpu.concatenate %21, %22 in 0 : vector<1x32xbf16>, vector<175x32xbf16> -> vector<176x32xbf16>
    %24 = vector.extract_strided_slice %20 {offsets = [1, 0], sizes = [175, 32], strides = [1, 1]} : vector<176x32xbf16> to vector<175x32xbf16>
    %25 = tpu.concatenate %24, %21 in 0 : vector<175x32xbf16>, vector<1x32xbf16> -> vector<176x32xbf16>
    %26 = tpu.iota {dimensions = array<i32: 0>} : vector<176x1xi32>
    %c8_i32 = arith.constant 8 : i32
    %27 = vector.broadcast %c8_i32 : i32 to vector<176x1xi32>
    %28 = arith.addi %26, %27 : vector<176x1xi32>
    %c16_i32 = arith.constant 16 : i32
    %c0_i32_9 = arith.constant 0 : i32
    %29 = arith.cmpi eq, %c16_i32, %c0_i32_9 : i32
    %c1_i32_10 = arith.constant 1 : i32
    %30 = arith.select %29, %c1_i32_10, %c16_i32 : i32
    %31 = vector.broadcast %30 : i32 to vector<176x1xi32>
    %32 = arith.remsi %28, %31 : vector<176x1xi32>
    %c0_i32_11 = arith.constant 0 : i32
    %33 = vector.broadcast %c0_i32_11 : i32 to vector<176x1xi32>
    %34 = arith.cmpi ne, %32, %33 : vector<176x1xi32>
    %c0_i32_12 = arith.constant 0 : i32
    %35 = vector.broadcast %c0_i32_12 : i32 to vector<176x1xi32>
    %36 = arith.cmpi slt, %32, %35 : vector<176x1xi32>
    %c0_i32_13 = arith.constant 0 : i32
    %37 = arith.cmpi slt, %30, %c0_i32_13 : i32
    %38 = vector.broadcast %37 : i1 to vector<176x1xi1>
    %39 = vector.broadcast %38 : vector<176x1xi1> to vector<176x1xi1>
    %40 = arith.xori %36, %39 : vector<176x1xi1>
    %41 = arith.andi %40, %34 : vector<176x1xi1>
    %42 = vector.broadcast %30 : i32 to vector<176x1xi32>
    %43 = arith.addi %32, %42 : vector<176x1xi32>
    %44 = arith.select %41, %43, %32 : vector<176x1xi1>, vector<176x1xi32>
    %c1_i32_14 = arith.constant 1 : i32
    %45 = vector.broadcast %c1_i32_14 : i32 to vector<176x1xi32>
    %46 = arith.cmpi sge, %44, %45 : vector<176x1xi32>
    %cst_15 = arith.constant 0.000000e+00 : bf16
    %47 = vector.broadcast %cst_15 : bf16 to vector<176x32xbf16>
    %48 = vector.shape_cast %46 : vector<176x1xi1> to vector<176x1xi1>
    %49 = vector.broadcast %48 : vector<176x1xi1> to vector<176x32xi1>
    %50 = arith.select %49, %23, %47 : vector<176x32xi1>, vector<176x32xbf16>
    %c14_i32 = arith.constant 14 : i32
    %51 = vector.broadcast %c14_i32 : i32 to vector<176x1xi32>
    %52 = arith.cmpi sle, %44, %51 : vector<176x1xi32>
    %cst_16 = arith.constant 0.000000e+00 : bf16
    %53 = vector.broadcast %cst_16 : bf16 to vector<176x32xbf16>
    %54 = vector.shape_cast %52 : vector<176x1xi1> to vector<176x1xi1>
    %55 = vector.broadcast %54 : vector<176x1xi1> to vector<176x32xi1>
    %56 = arith.select %55, %25, %53 : vector<176x32xi1>, vector<176x32xbf16>
    %cst_17 = arith.constant 0.000000e+00 : f32
    %57 = vector.broadcast %cst_17 : f32 to vector<128x32xf32>
    %58 = vector.extract_strided_slice %50 {offsets = [8, 0], sizes = [128, 32], strides = [1, 1]} : vector<176x32xbf16> to vector<128x32xbf16>
    %c0_18 = arith.constant 0 : index
    %c0_19 = arith.constant 0 : index
    %c0_20 = arith.constant 0 : index
    %59 = vector.load %arg5[%c0_18, %c0_19, %c0_20] : memref<9x32x32xbf16, #tpu.memory_space<vmem>>, vector<1x32x32xbf16>
    %60 = vector.shape_cast %59 : vector<1x32x32xbf16> to vector<32x32xbf16>
    %cst_21 = arith.constant dense<0.000000e+00> : vector<128x32xf32>
    %61 = tpu.matmul %58, %60, %cst_21 {dimension_numbers = #tpu.dot_dimension_numbers<[1], [0], [0], [1], [0, 0, 1, 1], [], []>} : vector<128x32xbf16>, vector<32x32xbf16>, vector<128x32xf32> -> vector<128x32xf32>
    %62 = arith.addf %57, %61 : vector<128x32xf32>
    %63 = vector.extract_strided_slice %20 {offsets = [8, 0], sizes = [128, 32], strides = [1, 1]} : vector<176x32xbf16> to vector<128x32xbf16>
    %c1 = arith.constant 1 : index
    %c0_22 = arith.constant 0 : index
    %c0_23 = arith.constant 0 : index
    %64 = vector.load %arg5[%c1, %c0_22, %c0_23] : memref<9x32x32xbf16, #tpu.memory_space<vmem>>, vector<1x32x32xbf16>
    %65 = vector.shape_cast %64 : vector<1x32x32xbf16> to vector<32x32xbf16>
    %cst_24 = arith.constant dense<0.000000e+00> : vector<128x32xf32>
    %66 = tpu.matmul %63, %65, %cst_24 {dimension_numbers = #tpu.dot_dimension_numbers<[1], [0], [0], [1], [0, 0, 1, 1], [], []>} : vector<128x32xbf16>, vector<32x32xbf16>, vector<128x32xf32> -> vector<128x32xf32>
    %67 = arith.addf %62, %66 : vector<128x32xf32>
    %68 = vector.extract_strided_slice %56 {offsets = [8, 0], sizes = [128, 32], strides = [1, 1]} : vector<176x32xbf16> to vector<128x32xbf16>
    %c2 = arith.constant 2 : index
    %c0_25 = arith.constant 0 : index
    %c0_26 = arith.constant 0 : index
    %69 = vector.load %arg5[%c2, %c0_25, %c0_26] : memref<9x32x32xbf16, #tpu.memory_space<vmem>>, vector<1x32x32xbf16>
    %70 = vector.shape_cast %69 : vector<1x32x32xbf16> to vector<32x32xbf16>
    %cst_27 = arith.constant dense<0.000000e+00> : vector<128x32xf32>
    %71 = tpu.matmul %68, %70, %cst_27 {dimension_numbers = #tpu.dot_dimension_numbers<[1], [0], [0], [1], [0, 0, 1, 1], [], []>} : vector<128x32xbf16>, vector<32x32xbf16>, vector<128x32xf32> -> vector<128x32xf32>
    %72 = arith.addf %67, %71 : vector<128x32xf32>
    %73 = vector.extract_strided_slice %50 {offsets = [24, 0], sizes = [128, 32], strides = [1, 1]} : vector<176x32xbf16> to vector<128x32xbf16>
    %c3 = arith.constant 3 : index
    %c0_28 = arith.constant 0 : index
    %c0_29 = arith.constant 0 : index
    %74 = vector.load %arg5[%c3, %c0_28, %c0_29] : memref<9x32x32xbf16, #tpu.memory_space<vmem>>, vector<1x32x32xbf16>
    %75 = vector.shape_cast %74 : vector<1x32x32xbf16> to vector<32x32xbf16>
    %cst_30 = arith.constant dense<0.000000e+00> : vector<128x32xf32>
    %76 = tpu.matmul %73, %75, %cst_30 {dimension_numbers = #tpu.dot_dimension_numbers<[1], [0], [0], [1], [0, 0, 1, 1], [], []>} : vector<128x32xbf16>, vector<32x32xbf16>, vector<128x32xf32> -> vector<128x32xf32>
    %77 = arith.addf %72, %76 : vector<128x32xf32>
    %78 = vector.extract_strided_slice %20 {offsets = [24, 0], sizes = [128, 32], strides = [1, 1]} : vector<176x32xbf16> to vector<128x32xbf16>
    %c4 = arith.constant 4 : index
    %c0_31 = arith.constant 0 : index
    %c0_32 = arith.constant 0 : index
    %79 = vector.load %arg5[%c4, %c0_31, %c0_32] : memref<9x32x32xbf16, #tpu.memory_space<vmem>>, vector<1x32x32xbf16>
    %80 = vector.shape_cast %79 : vector<1x32x32xbf16> to vector<32x32xbf16>
    %cst_33 = arith.constant dense<0.000000e+00> : vector<128x32xf32>
    %81 = tpu.matmul %78, %80, %cst_33 {dimension_numbers = #tpu.dot_dimension_numbers<[1], [0], [0], [1], [0, 0, 1, 1], [], []>} : vector<128x32xbf16>, vector<32x32xbf16>, vector<128x32xf32> -> vector<128x32xf32>
    %82 = arith.addf %77, %81 : vector<128x32xf32>
    %83 = vector.extract_strided_slice %56 {offsets = [24, 0], sizes = [128, 32], strides = [1, 1]} : vector<176x32xbf16> to vector<128x32xbf16>
    %c5 = arith.constant 5 : index
    %c0_34 = arith.constant 0 : index
    %c0_35 = arith.constant 0 : index
    %84 = vector.load %arg5[%c5, %c0_34, %c0_35] : memref<9x32x32xbf16, #tpu.memory_space<vmem>>, vector<1x32x32xbf16>
    %85 = vector.shape_cast %84 : vector<1x32x32xbf16> to vector<32x32xbf16>
    %cst_36 = arith.constant dense<0.000000e+00> : vector<128x32xf32>
    %86 = tpu.matmul %83, %85, %cst_36 {dimension_numbers = #tpu.dot_dimension_numbers<[1], [0], [0], [1], [0, 0, 1, 1], [], []>} : vector<128x32xbf16>, vector<32x32xbf16>, vector<128x32xf32> -> vector<128x32xf32>
    %87 = arith.addf %82, %86 : vector<128x32xf32>
    %88 = vector.extract_strided_slice %50 {offsets = [40, 0], sizes = [128, 32], strides = [1, 1]} : vector<176x32xbf16> to vector<128x32xbf16>
    %c6 = arith.constant 6 : index
    %c0_37 = arith.constant 0 : index
    %c0_38 = arith.constant 0 : index
    %89 = vector.load %arg5[%c6, %c0_37, %c0_38] : memref<9x32x32xbf16, #tpu.memory_space<vmem>>, vector<1x32x32xbf16>
    %90 = vector.shape_cast %89 : vector<1x32x32xbf16> to vector<32x32xbf16>
    %cst_39 = arith.constant dense<0.000000e+00> : vector<128x32xf32>
    %91 = tpu.matmul %88, %90, %cst_39 {dimension_numbers = #tpu.dot_dimension_numbers<[1], [0], [0], [1], [0, 0, 1, 1], [], []>} : vector<128x32xbf16>, vector<32x32xbf16>, vector<128x32xf32> -> vector<128x32xf32>
    %92 = arith.addf %87, %91 : vector<128x32xf32>
    %93 = vector.extract_strided_slice %20 {offsets = [40, 0], sizes = [128, 32], strides = [1, 1]} : vector<176x32xbf16> to vector<128x32xbf16>
    %c7 = arith.constant 7 : index
    %c0_40 = arith.constant 0 : index
    %c0_41 = arith.constant 0 : index
    %94 = vector.load %arg5[%c7, %c0_40, %c0_41] : memref<9x32x32xbf16, #tpu.memory_space<vmem>>, vector<1x32x32xbf16>
    %95 = vector.shape_cast %94 : vector<1x32x32xbf16> to vector<32x32xbf16>
    %cst_42 = arith.constant dense<0.000000e+00> : vector<128x32xf32>
    %96 = tpu.matmul %93, %95, %cst_42 {dimension_numbers = #tpu.dot_dimension_numbers<[1], [0], [0], [1], [0, 0, 1, 1], [], []>} : vector<128x32xbf16>, vector<32x32xbf16>, vector<128x32xf32> -> vector<128x32xf32>
    %97 = arith.addf %92, %96 : vector<128x32xf32>
    %98 = vector.extract_strided_slice %56 {offsets = [40, 0], sizes = [128, 32], strides = [1, 1]} : vector<176x32xbf16> to vector<128x32xbf16>
    %c8 = arith.constant 8 : index
    %c0_43 = arith.constant 0 : index
    %c0_44 = arith.constant 0 : index
    %99 = vector.load %arg5[%c8, %c0_43, %c0_44] : memref<9x32x32xbf16, #tpu.memory_space<vmem>>, vector<1x32x32xbf16>
    %100 = vector.shape_cast %99 : vector<1x32x32xbf16> to vector<32x32xbf16>
    %cst_45 = arith.constant dense<0.000000e+00> : vector<128x32xf32>
    %101 = tpu.matmul %98, %100, %cst_45 {dimension_numbers = #tpu.dot_dimension_numbers<[1], [0], [0], [1], [0, 0, 1, 1], [], []>} : vector<128x32xbf16>, vector<32x32xbf16>, vector<128x32xf32> -> vector<128x32xf32>
    %102 = arith.addf %97, %101 : vector<128x32xf32>
    %c0_46 = arith.constant 0 : index
    %c0_47 = arith.constant 0 : index
    %103 = vector.load %arg6[%c0_46, %c0_47] : memref<1x32xf32, #tpu.memory_space<vmem>>, vector<1x32xf32>
    %104 = vector.broadcast %103 : vector<1x32xf32> to vector<128x32xf32>
    %105 = arith.addf %102, %104 : vector<128x32xf32>
    %cst_48 = arith.constant 0.707106769 : f32
    %106 = vector.broadcast %cst_48 : f32 to vector<128x32xf32>
    %107 = arith.mulf %105, %106 : vector<128x32xf32>
    %108 = math.absf %107 : vector<128x32xf32>
    %cst_49 = arith.constant 0.327591091 : f32
    %109 = vector.broadcast %cst_49 : f32 to vector<128x32xf32>
    %110 = arith.mulf %109, %108 : vector<128x32xf32>
    %cst_50 = arith.constant 1.000000e+00 : f32
    %111 = vector.broadcast %cst_50 : f32 to vector<128x32xf32>
    %112 = arith.addf %111, %110 : vector<128x32xf32>
    %cst_51 = arith.constant 1.000000e+00 : f32
    %113 = vector.broadcast %cst_51 : f32 to vector<128x32xf32>
    %114 = arith.divf %113, %112 : vector<128x32xf32>
    %cst_52 = arith.constant 1.06140542 : f32
    %115 = vector.broadcast %cst_52 : f32 to vector<128x32xf32>
    %116 = arith.mulf %114, %115 : vector<128x32xf32>
    %cst_53 = arith.constant -1.45315206 : f32
    %117 = vector.broadcast %cst_53 : f32 to vector<128x32xf32>
    %118 = arith.addf %117, %116 : vector<128x32xf32>
    %119 = arith.mulf %114, %118 : vector<128x32xf32>
    %cst_54 = arith.constant 1.42141378 : f32
    %120 = vector.broadcast %cst_54 : f32 to vector<128x32xf32>
    %121 = arith.addf %120, %119 : vector<128x32xf32>
    %122 = arith.mulf %114, %121 : vector<128x32xf32>
    %cst_55 = arith.constant -0.284496725 : f32
    %123 = vector.broadcast %cst_55 : f32 to vector<128x32xf32>
    %124 = arith.addf %123, %122 : vector<128x32xf32>
    %125 = arith.mulf %114, %124 : vector<128x32xf32>
    %cst_56 = arith.constant 0.254829586 : f32
    %126 = vector.broadcast %cst_56 : f32 to vector<128x32xf32>
    %127 = arith.addf %126, %125 : vector<128x32xf32>
    %128 = arith.mulf %114, %127 : vector<128x32xf32>
    %cst_57 = arith.constant 0.000000e+00 : f32
    %129 = vector.broadcast %cst_57 : f32 to vector<128x32xf32>
    %130 = arith.subf %129, %108 : vector<128x32xf32>
    %131 = arith.mulf %130, %108 : vector<128x32xf32>
    %132 = math.exp %131 : vector<128x32xf32>
    %133 = arith.mulf %128, %132 : vector<128x32xf32>
    %cst_58 = arith.constant 1.000000e+00 : f32
    %134 = vector.broadcast %cst_58 : f32 to vector<128x32xf32>
    %135 = arith.subf %134, %133 : vector<128x32xf32>
    %cst_59 = arith.constant 0.000000e+00 : f32
    %136 = vector.broadcast %cst_59 : f32 to vector<128x32xf32>
    %137 = arith.cmpf oge, %107, %136 : vector<128x32xf32>
    %cst_60 = arith.constant 0.000000e+00 : f32
    %138 = vector.broadcast %cst_60 : f32 to vector<128x32xf32>
    %139 = arith.subf %138, %135 : vector<128x32xf32>
    %140 = arith.select %137, %135, %139 : vector<128x32xi1>, vector<128x32xf32>
    %cst_61 = arith.constant 5.000000e-01 : f32
    %141 = vector.broadcast %cst_61 : f32 to vector<128x32xf32>
    %142 = arith.mulf %141, %105 : vector<128x32xf32>
    %cst_62 = arith.constant 1.000000e+00 : f32
    %143 = vector.broadcast %cst_62 : f32 to vector<128x32xf32>
    %144 = arith.addf %143, %140 : vector<128x32xf32>
    %145 = arith.mulf %142, %144 : vector<128x32xf32>
    %c0_63 = arith.constant 0 : index
    %c0_64 = arith.constant 0 : index
    %c0_65 = arith.constant 0 : index
    %146 = vector.load %arg7[%c0_63, %c0_64, %c0_65] : memref<1x1x32xf32, #tpu.memory_space<vmem>>, vector<1x1x32xf32>
    %147 = vector.shape_cast %146 : vector<1x1x32xf32> to vector<1x32xf32>
    %148 = arith.negf %147 : vector<1x32xf32>
    %149 = math.exp %148 : vector<1x32xf32>
    %cst_66 = arith.constant 1.000000e+00 : f32
    %150 = vector.broadcast %cst_66 : f32 to vector<1x32xf32>
    %151 = arith.addf %150, %149 : vector<1x32xf32>
    %152 = arith.divf %150, %151 : vector<1x32xf32>
    %cst_67 = arith.constant 1.000000e+00 : f32
    %153 = vector.broadcast %cst_67 : f32 to vector<1x32xf32>
    %154 = arith.addf %153, %152 : vector<1x32xf32>
    %155 = vector.broadcast %154 : vector<1x32xf32> to vector<128x32xf32>
    %156 = arith.mulf %145, %155 : vector<128x32xf32>
    %157 = arith.truncf %156 : vector<128x32xf32> to vector<128x32xbf16>
    %c0_68 = arith.constant 0 : index
    %c0_69 = arith.constant 0 : index
    %158 = vector.load %arg8[%c0_68, %c0_69] : memref<32x32xbf16, #tpu.memory_space<vmem>>, vector<32x32xbf16>
    %cst_70 = arith.constant dense<0.000000e+00> : vector<128x32xf32>
    %159 = tpu.matmul %157, %158, %cst_70 {dimension_numbers = #tpu.dot_dimension_numbers<[1], [0], [0], [1], [0, 0, 1, 1], [], []>} : vector<128x32xbf16>, vector<32x32xbf16>, vector<128x32xf32> -> vector<128x32xf32>
    %c0_71 = arith.constant 0 : index
    %c0_72 = arith.constant 0 : index
    %160 = vector.load %arg9[%c0_71, %c0_72] : memref<1x32xf32, #tpu.memory_space<vmem>>, vector<1x32xf32>
    %161 = vector.broadcast %160 : vector<1x32xf32> to vector<128x32xf32>
    %162 = arith.addf %159, %161 : vector<128x32xf32>
    %c0_73 = arith.constant 0 : index
    %c0_74 = arith.constant 0 : index
    %c0_75 = arith.constant 0 : index
    %163 = vector.load %arg10[%c0_73, %c0_74, %c0_75] : memref<1x128x32xf32, #tpu.memory_space<vmem>>, vector<1x128x32xf32>
    %164 = vector.shape_cast %163 : vector<1x128x32xf32> to vector<128x32xf32>
    %165 = vector.shape_cast %162 : vector<128x32xf32> to vector<1x128x32xf32>
    tpu.vector_store %arg10[%c0_73, %c0_74, %c0_75], %165 {strides = array<i32>} : memref<1x128x32xf32, #tpu.memory_space<vmem>>, vector<1x128x32xf32>,
    return
  }
  func.func @transform_0(%arg0: i32, %arg1: i32) -> (i32, i32, i32) {
    %c0_i32 = arith.constant 0 : i32
    %c0_i32_0 = arith.constant 0 : i32
    return %arg0, %arg1, %c0_i32 : i32, i32, i32
  }
  func.func @transform_1(%arg0: i32, %arg1: i32) -> (i32, i32, i32) {
    %c8_i32 = arith.constant 8 : i32
    %0 = arith.muli %arg1, %c8_i32 : i32
    %c1_i32 = arith.constant 1 : i32
    %1 = arith.subi %0, %c1_i32 : i32
    %c0_i32 = arith.constant 0 : i32
    %2 = arith.maxsi %1, %c0_i32 : i32
    %c0_i32_0 = arith.constant 0 : i32
    %c0_i32_1 = arith.constant 0 : i32
    return %arg0, %2, %c0_i32_0 : i32, i32, i32
  }
  func.func @transform_2(%arg0: i32, %arg1: i32) -> (i32, i32, i32) {
    %c8_i32 = arith.constant 8 : i32
    %0 = arith.muli %arg1, %c8_i32 : i32
    %c8_i32_0 = arith.constant 8 : i32
    %1 = arith.addi %0, %c8_i32_0 : i32
    %c15_i32 = arith.constant 15 : i32
    %2 = arith.minsi %1, %c15_i32 : i32
    %c0_i32 = arith.constant 0 : i32
    %c0_i32_1 = arith.constant 0 : i32
    return %arg0, %2, %c0_i32 : i32, i32, i32
  }
  func.func @transform_3(%arg0: i32, %arg1: i32) -> (i32, i32, i32) {
    %c0_i32 = arith.constant 0 : i32
    %c0_i32_0 = arith.constant 0 : i32
    %c0_i32_1 = arith.constant 0 : i32
    %c0_i32_2 = arith.constant 0 : i32
    return %c0_i32, %c0_i32_0, %c0_i32_1 : i32, i32, i32
  }
  func.func @transform_4(%arg0: i32, %arg1: i32) -> (i32, i32) {
    %c0_i32 = arith.constant 0 : i32
    %c0_i32_0 = arith.constant 0 : i32
    %c0_i32_1 = arith.constant 0 : i32
    return %c0_i32, %c0_i32_0 : i32, i32
  }
  func.func @transform_5(%arg0: i32, %arg1: i32) -> (i32, i32, i32) {
    %c0_i32 = arith.constant 0 : i32
    %c0_i32_0 = arith.constant 0 : i32
    %c0_i32_1 = arith.constant 0 : i32
    return %arg0, %c0_i32, %c0_i32_0 : i32, i32, i32
  }
  func.func @transform_6(%arg0: i32, %arg1: i32) -> (i32, i32) {
    %c0_i32 = arith.constant 0 : i32
    %c0_i32_0 = arith.constant 0 : i32
    %c0_i32_1 = arith.constant 0 : i32
    return %c0_i32, %c0_i32_0 : i32, i32
  }
  func.func @transform_7(%arg0: i32, %arg1: i32) -> (i32, i32) {
    %c0_i32 = arith.constant 0 : i32
    %c0_i32_0 = arith.constant 0 : i32
    %c0_i32_1 = arith.constant 0 : i32
    return %c0_i32, %c0_i32_0 : i32, i32
  }
  func.func @transform_8(%arg0: i32, %arg1: i32) -> (i32, i32, i32) {
    %c0_i32 = arith.constant 0 : i32
    %c0_i32_0 = arith.constant 0 : i32
    return %arg0, %arg1, %c0_i32 : i32, i32, i32
  }
}

</mosaic_0001>

<llo_original>
// kernel: asc_forward.3
$region0: #{asc_forward.3}
  #allocation0 [shape = 'u32[]', space=smem, size = 0x4, offset = 0x4, fixed_abs, tag = 'smem constant byte address 0x4 - core index']
  #allocation1 [shape = 'u32[144,128]{1,0:T(1,128)}', space=vmem, size = 0x12000, scoped, tag = 'internal scratch']
  %s0 = inlined_call_operand.vmem [shape: f32[2,256,32], index: 0, kind: input, shape index: {}, may-alias: {0,1,2}]
  %s1 = inlined_call_operand.vmem [shape: f32[2,256,32], index: 1, kind: input, shape index: {}, may-alias: {0,1,2}]
  %s2 = inlined_call_operand.vmem [shape: f32[2,256,32], index: 2, kind: input, shape index: {}, may-alias: {0,1,2}]
  %s3 = inlined_call_operand.vmem [shape: bf16[9,32,32], index: 3, kind: input, shape index: {}]
  %s4 = inlined_call_operand.vmem [shape: f32[1,32], index: 4, kind: input, shape index: {}]
  %s5 = inlined_call_operand.vmem [shape: f32[2,1,32], index: 5, kind: input, shape index: {}]
  %s6 = inlined_call_operand.vmem [shape: bf16[32,32], index: 6, kind: input, shape index: {}]
  %s7 = inlined_call_operand.vmem [shape: f32[1,32], index: 7, kind: input, shape index: {}]
  %s8 = inlined_call_operand.vmem [shape: f32[2,256,32], index: 8, kind: output, shape index: {}]
  %s9 = sld [smem:[#allocation0]]
  $region65: #{asc_forward.3} parent=0
    _
  %s11 = ssub.s32 1, %s9
  %s12 = scalar_select 0, %s11, %s9
  loop: start=0, step=1, limit=6
  $region2: #{asc_forward.3} parent=0 // loop_pre_header
    _
  $region3: #{asc_forward.3} parent=0 // loop_header
    %s14 = sphi 0, %s18
    %p15 = scmp.ge.s32.totalorder %s14, 6
    %s21 = sphi 0, %s33
    %s22 = sphi 0, %s29
    %s23 = sphi 0, %s21
    %s24 = sphi 0, %s22
    %s25 = sphi 0, %s23
    %s26 = sphi 0, %s24
    %s38 = sphi 0, %s40
    %s41 = sphi 0, %s38
    %s42 = sphi 0, %s41
    %s58 = sphi 0, %s42
    %s74 = sphi 0, %s76
    %s77 = sphi 0, %s74
    %s78 = sphi 0, %s77
    %s94 = sphi 0, %s78
    %s110 = sphi 0, %s112
    %s113 = sphi 0, %s110
    %s114 = sphi 0, %s113
    %s130 = sphi 0, %s114
    %s134 = sphi 0, %s134
    %s136 = sphi 0, %s134
    %s137 = sphi 0, %s136
    %s151 = sphi 0, %s137
    %s155 = sphi 0, %s155
    %s157 = sphi 0, %s155
    %s158 = sphi 0, %s157
    %s172 = sphi 0, %s158
    %s178 = sphi 0, %s180
    %s181 = sphi 0, %s178
    %s182 = sphi 0, %s181
    %s198 = sphi 0, %s182
    %s202 = sphi 0, %s202
    %s204 = sphi 0, %s202
    %s205 = sphi 0, %s204
    %s219 = sphi 0, %s205
    %s223 = sphi 0, %s223
    %s225 = sphi 0, %s223
    %s226 = sphi 0, %s225
    %s240 = sphi 0, %s226
    %s248 = sphi 0, %s250
    %s251 = sphi 0, %s248
    %s252 = sphi 0, %s251
    %s268 = sphi 0, %s252
  $region4: #{asc_forward.3} parent=0 // loop_header_branch
    %17 = sbr.rel (%p15) target = $region8
  $region5: #{asc_forward.3} parent=0 // loop_body
    %s19 = ssub.s32 %s14, 1
    %s20 = ssub.s32 %s14, 2
    %s27 = sadd.s32 1, %s22
    %p28 = scmp.ge.s32.totalorder %s27, 2
    %s29 = scalar_select %p28, 0, %s27
    %s30 = sadd.s32 1, %s21
    %s31 = scalar_select %p28, %s30, %s21
    %p32 = scmp.ge.s32.totalorder %s31, 2
    %s33 = scalar_select %p32, 0, %s31
    %s34 = ssub.s32 %s21, %s33
    %s35 = ssub.s32 %s22, %s29
    %s36 = sor.u32 %s34, %s35
    %p37 = scmp.eq.s32.totalorder %s36, 0
    %s39 = sadd.s32 %s38, 1
    %s40 = scalar_select %p37, %s38, %s39
    %p43 = pneg %p37
    %p44 = scmp.eq.s32.totalorder %s14, 3
    %p45 = por %p43, %p44
    %p46 = scmp.ne.s32.totalorder %s38, %s41
    %p47 = scmp.eq.s32.totalorder %s14, 0
    %p48 = por %p46, %p47
    %p49 = scmp.ne.s32.totalorder %s38, %s41
    %p50 = scmp.eq.s32.totalorder %s19, 3
    %p51 = por %p49, %p50
    %p52 = scmp.ne.s32.totalorder %s41, %s42
    %p53 = scmp.eq.s32.totalorder %s19, 0
    %p54 = por %p52, %p53
    %p55 = scmp.ne.s32.totalorder %s41, %s42
    %p56 = scmp.eq.s32.totalorder %s20, 3
    %p57 = por %p55, %p56
    %p59 = scmp.ne.s32.totalorder %s42, %s58
    %p60 = scmp.eq.s32.totalorder %s20, 0
    %p61 = por %p59, %p60
    %s62 = smul.u32 %s22, 8
    %s63 = ssub.s32 %s62, 1
    %p64 = scmp.gt.s32.totalorder %s63, 0
    %s65 = scalar_select %p64, %s63, 0
    %s66 = smul.u32 %s29, 8
    %s67 = ssub.s32 %s66, 1
    %p68 = scmp.gt.s32.totalorder %s67, 0
    %s69 = scalar_select %p68, %s67, 0
    %s70 = ssub.s32 %s21, %s33
    %s71 = ssub.s32 %s65, %s69
    %s72 = sor.u32 %s70, %s71
    %p73 = scmp.eq.s32.totalorder %s72, 0
    %s75 = sadd.s32 %s74, 1
    %s76 = scalar_select %p73, %s74, %s75
    %p79 = pneg %p73
    %p80 = scmp.eq.s32.totalorder %s14, 3
    %p81 = por %p79, %p80
    %p82 = scmp.ne.s32.totalorder %s74, %s77
    %p83 = scmp.eq.s32.totalorder %s14, 0
    %p84 = por %p82, %p83
    %p85 = scmp.ne.s32.totalorder %s74, %s77
    %p86 = scmp.eq.s32.totalorder %s19, 3
    %p87 = por %p85, %p86
    %p88 = scmp.ne.s32.totalorder %s77, %s78
    %p89 = scmp.eq.s32.totalorder %s19, 0
    %p90 = por %p88, %p89
    %p91 = scmp.ne.s32.totalorder %s77, %s78
    %p92 = scmp.eq.s32.totalorder %s20, 3
    %p93 = por %p91, %p92
    %p95 = scmp.ne.s32.totalorder %s78, %s94
    %p96 = scmp.eq.s32.totalorder %s20, 0
    %p97 = por %p95, %p96
    %s98 = smul.u32 %s22, 8
    %s99 = sadd.s32 %s98, 8
    %p100 = scmp.lt.s32.totalorder %s99, 15
    %s101 = scalar_select %p100, %s99, 15
    %s102 = smul.u32 %s29, 8
    %s103 = sadd.s32 %s102, 8
    %p104 = scmp.lt.s32.totalorder %s103, 15
    %s105 = scalar_select %p104, %s103, 15
    %s106 = ssub.s32 %s21, %s33
    %s107 = ssub.s32 %s101, %s105
    %s108 = sor.u32 %s106, %s107
    %p109 = scmp.eq.s32.totalorder %s108, 0
    %s111 = sadd.s32 %s110, 1
    %s112 = scalar_select %p109, %s110, %s111
    %p115 = pneg %p109
    %p116 = scmp.eq.s32.totalorder %s14, 3
    %p117 = por %p115, %p116
    %p118 = scmp.ne.s32.totalorder %s110, %s113
    %p119 = scmp.eq.s32.totalorder %s14, 0
    %p120 = por %p118, %p119
    %p121 = scmp.ne.s32.totalorder %s110, %s113
    %p122 = scmp.eq.s32.totalorder %s19, 3
    %p123 = por %p121, %p122
    %p124 = scmp.ne.s32.totalorder %s113, %s114
    %p125 = scmp.eq.s32.totalorder %s19, 0
    %p126 = por %p124, %p125
    %p127 = scmp.ne.s32.totalorder %s113, %s114
    %p128 = scmp.eq.s32.totalorder %s20, 3
    %p129 = por %p127, %p128
    %p131 = scmp.ne.s32.totalorder %s114, %s130
    %p132 = scmp.eq.s32.totalorder %s20, 0
    %p133 = por %p131, %p132
    %s135 = sadd.s32 %s134, 1
    %p138 = scmp.eq.s32.totalorder %s14, 3
    %p139 = scmp.ne.s32.totalorder %s134, %s136
    %p140 = scmp.eq.s32.totalorder %s14, 0
    %p141 = por %p139, %p140
    %p142 = scmp.ne.s32.totalorder %s134, %s136
    %p143 = scmp.eq.s32.totalorder %s19, 3
    %p144 = por %p142, %p143
    %p145 = scmp.ne.s32.totalorder %s136, %s137
    %p146 = scmp.eq.s32.totalorder %s19, 0
    %p147 = por %p145, %p146
    %p148 = scmp.ne.s32.totalorder %s136, %s137
    %p149 = scmp.eq.s32.totalorder %s20, 3
    %p150 = por %p148, %p149
    %p152 = scmp.ne.s32.totalorder %s137, %s151
    %p153 = scmp.eq.s32.totalorder %s20, 0
    %p154 = por %p152, %p153
    %s156 = sadd.s32 %s155, 1
    %p159 = scmp.eq.s32.totalorder %s14, 3
    %p160 = scmp.ne.s32.totalorder %s155, %s157
    %p161 = scmp.eq.s32.totalorder %s14, 0
    %p162 = por %p160, %p161
    %p163 = scmp.ne.s32.totalorder %s155, %s157
    %p164 = scmp.eq.s32.totalorder %s19, 3
    %p165 = por %p163, %p164
    %p166 = scmp.ne.s32.totalorder %s157, %s158
    %p167 = scmp.eq.s32.totalorder %s19, 0
    %p168 = por %p166, %p167
    %p169 = scmp.ne.s32.totalorder %s157, %s158
    %p170 = scmp.eq.s32.totalorder %s20, 3
    %p171 = por %p169, %p170
    %p173 = scmp.ne.s32.totalorder %s158, %s172
    %p174 = scmp.eq.s32.totalorder %s20, 0
    %p175 = por %p173, %p174
    %s176 = ssub.s32 %s21, %s33
    %p177 = scmp.eq.s32.totalorder %s176, 0
    %s179 = sadd.s32 %s178, 1
    %s180 = scalar_select %p177, %s178, %s179
    %p183 = pneg %p177
    %p184 = scmp.eq.s32.totalorder %s14, 3
    %p185 = por %p183, %p184
    %p186 = scmp.ne.s32.totalorder %s178, %s181
    %p187 = scmp.eq.s32.totalorder %s14, 0
    %p188 = por %p186, %p187
    %p189 = scmp.ne.s32.totalorder %s178, %s181
    %p190 = scmp.eq.s32.totalorder %s19, 3
    %p191 = por %p189, %p190
    %p192 = scmp.ne.s32.totalorder %s181, %s182
    %p193 = scmp.eq.s32.totalorder %s19, 0
    %p194 = por %p192, %p193
    %p195 = scmp.ne.s32.totalorder %s181, %s182
    %p196 = scmp.eq.s32.totalorder %s20, 3
    %p197 = por %p195, %p196
    %p199 = scmp.ne.s32.totalorder %s182, %s198
    %p200 = scmp.eq.s32.totalorder %s20, 0
    %p201 = por %p199, %p200
    %s203 = sadd.s32 %s202, 1
    %p206 = scmp.eq.s32.totalorder %s14, 3
    %p207 = scmp.ne.s32.totalorder %s202, %s204
    %p208 = scmp.eq.s32.totalorder %s14, 0
    %p209 = por %p207, %p208
    %p210 = scmp.ne.s32.totalorder %s202, %s204
    %p211 = scmp.eq.s32.totalorder %s19, 3
    %p212 = por %p210, %p211
    %p213 = scmp.ne.s32.totalorder %s204, %s205
    %p214 = scmp.eq.s32.totalorder %s19, 0
    %p215 = por %p213, %p214
    %p216 = scmp.ne.s32.totalorder %s204, %s205
    %p217 = scmp.eq.s32.totalorder %s20, 3
    %p218 = por %p216, %p217
    %p220 = scmp.ne.s32.totalorder %s205, %s219
    %p221 = scmp.eq.s32.totalorder %s20, 0
    %p222 = por %p220, %p221
    %s224 = sadd.s32 %s223, 1
    %p227 = scmp.eq.s32.totalorder %s14, 3
    %p228 = scmp.ne.s32.totalorder %s223, %s225
    %p229 = scmp.eq.s32.totalorder %s14, 0
    %p230 = por %p228, %p229
    %p231 = scmp.ne.s32.totalorder %s223, %s225
    %p232 = scmp.eq.s32.totalorder %s19, 3
    %p233 = por %p231, %p232
    %p234 = scmp.ne.s32.totalorder %s225, %s226
    %p235 = scmp.eq.s32.totalorder %s19, 0
    %p236 = por %p234, %p235
    %p237 = scmp.ne.s32.totalorder %s225, %s226
    %p238 = scmp.eq.s32.totalorder %s20, 3
    %p239 = por %p237, %p238
    %p241 = scmp.ne.s32.totalorder %s226, %s240
    %p242 = scmp.eq.s32.totalorder %s20, 0
    %p243 = por %p241, %p242
    %s244 = ssub.s32 %s21, %s33
    %s245 = ssub.s32 %s22, %s29
    %s246 = sor.u32 %s244, %s245
    %p247 = scmp.eq.s32.totalorder %s246, 0
    %s249 = sadd.s32 %s248, 1
    %s250 = scalar_select %p247, %s248, %s249
    %p253 = pneg %p247
    %p254 = scmp.eq.s32.totalorder %s14, 3
    %p255 = por %p253, %p254
    %p256 = scmp.ne.s32.totalorder %s248, %s251
    %p257 = scmp.eq.s32.totalorder %s14, 0
    %p258 = por %p256, %p257
    %p259 = scmp.ne.s32.totalorder %s248, %s251
    %p260 = scmp.eq.s32.totalorder %s19, 3
    %p261 = por %p259, %p260
    %p262 = scmp.ne.s32.totalorder %s251, %s252
    %p263 = scmp.eq.s32.totalorder %s19, 0
    %p264 = por %p262, %p263
    %p265 = scmp.ne.s32.totalorder %s251, %s252
    %p266 = scmp.eq.s32.totalorder %s20, 3
    %p267 = por %p265, %p266
    %p269 = scmp.ne.s32.totalorder %s252, %s268
    %p270 = scmp.eq.s32.totalorder %s20, 0
    %p271 = por %p269, %p270
    %p272 = scmp.le.s32.totalorder 1, %s14
    %p273 = scmp.lt.s32.totalorder %s14, 5
    %p274 = pnand %p272, %p273
    %p275 = pneg %p274
    // Predicated region
    $region9: #{asc_forward.3} parent=5 // pred_check
      _
    $region10: #{asc_forward.3} parent=5 // pred_check_branch
      %277 = sbr.rel (%p274) target = $region12
    $region11: #{asc_forward.3} parent=5 // pred_region
      %s278 = ssub.s32 %s14, 1
      // Predicated region
      $region13: #{asc_forward.3} parent=11 // pred_check
        %p279 = pneg %p147
      $region14: #{asc_forward.3} parent=11 // pred_check_branch
        %281 = sbr.rel (%p279) target = $region16
      $region15: #{asc_forward.3} parent=11 // pred_region
        _
      $region16: #{asc_forward.3} parent=11 // pred_fallthru
        _
      // Predicated region
      $region17: #{asc_forward.3} parent=11 // pred_check
        %p282 = pneg %p168
      $region18: #{asc_forward.3} parent=11 // pred_check_branch
        %284 = sbr.rel (%p282) target = $region20
      $region19: #{asc_forward.3} parent=11 // pred_region
        _
      $region20: #{asc_forward.3} parent=11 // pred_fallthru
        _
      // Predicated region
      $region21: #{asc_forward.3} parent=11 // pred_check
        %p285 = pneg %p215
      $region22: #{asc_forward.3} parent=11 // pred_check_branch
        %287 = sbr.rel (%p285) target = $region24
      $region23: #{asc_forward.3} parent=11 // pred_region
        _
      $region24: #{asc_forward.3} parent=11 // pred_fallthru
        _
      // Predicated region
      $region25: #{asc_forward.3} parent=11 // pred_check
        %p288 = pneg %p236
      $region26: #{asc_forward.3} parent=11 // pred_check_branch
        %290 = sbr.rel (%p288) target = $region28
      $region27: #{asc_forward.3} parent=11 // pred_region
        _
      $region28: #{asc_forward.3} parent=11 // pred_fallthru
        _
    $region12: #{asc_forward.3} parent=5 // pred_fallthru
      _
    %p291 = scmp.lt.s32.totalorder %s14, 4
    // Predicated region
    $region29: #{asc_forward.3} parent=5 // pred_check
      %p292 = pneg %p291
    $region30: #{asc_forward.3} parent=5 // pred_check_branch
      %294 = sbr.rel (%p292) target = $region32
    $region31: #{asc_forward.3} parent=5 // pred_region
      // Predicated region
      $region33: #{asc_forward.3} parent=31 // pred_check
        %p295 = pneg %p48
      $region34: #{asc_forward.3} parent=31 // pred_check_branch
        %297 = sbr.rel (%p295) target = $region36
      $region35: #{asc_forward.3} parent=31 // pred_region
        %s298 = smul.u32 16, %s22
        %p299 = scmp.lt.s32.totalorder %s21, 1
        %s300 = scalar_select %p299, %s21, 1
        %p301 = scmp.lt.s32.totalorder %s298, 31
        %s302 = scalar_select %p301, %s298, 31
        %s303 = smul.addr %s300, 32
        %s304 = sadd.s32 %s302, %s303
        %s305 = smul.addr %s304, 8
        %s306 = scalar_lea.vmem %s0, %s305
        %s307 = smul.u32 16, %s22
      $region36: #{asc_forward.3} parent=31 // pred_fallthru
        _
      // Predicated region
      $region37: #{asc_forward.3} parent=31 // pred_check
        %p308 = pneg %p84
      $region38: #{asc_forward.3} parent=31 // pred_check_branch
        %310 = sbr.rel (%p308) target = $region40
      $region39: #{asc_forward.3} parent=31 // pred_region
        %s311 = smul.u32 %s22, 8
        %s312 = ssub.s32 %s311, 1
        %p313 = scmp.gt.s32.totalorder %s312, 0
        %s314 = scalar_select %p313, %s312, 0
        %s315 = smul.u32 2, %s314
        %p316 = scmp.lt.s32.totalorder %s21, 1
        %s317 = scalar_select %p316, %s21, 1
        %p318 = scmp.lt.s32.totalorder %s315, 31
        %s319 = scalar_select %p318, %s315, 31
        %s320 = smul.addr %s317, 32
        %s321 = sadd.s32 %s319, %s320
        %s322 = smul.addr %s321, 8
        %s323 = scalar_lea.vmem %s1, %s322
        %s324 = smul.u32 %s22, 8
        %s325 = ssub.s32 %s324, 1
        %p326 = scmp.gt.s32.totalorder %s325, 0
        %s327 = scalar_select %p326, %s325, 0
        %s328 = smul.u32 2, %s327
      $region40: #{asc_forward.3} parent=31 // pred_fallthru
        _
      // Predicated region
      $region41: #{asc_forward.3} parent=31 // pred_check
        %p329 = pneg %p120
      $region42: #{asc_forward.3} parent=31 // pred_check_branch
        %331 = sbr.rel (%p329) target = $region44
      $region43: #{asc_forward.3} parent=31 // pred_region
        %s332 = smul.u32 %s22, 8
        %s333 = sadd.s32 %s332, 8
        %p334 = scmp.lt.s32.totalorder %s333, 15
        %s335 = scalar_select %p334, %s333, 15
        %s336 = smul.u32 2, %s335
        %p337 = scmp.lt.s32.totalorder %s21, 1
        %s338 = scalar_select %p337, %s21, 1
        %p339 = scmp.lt.s32.totalorder %s336, 31
        %s340 = scalar_select %p339, %s336, 31
        %s341 = smul.addr %s338, 32
        %s342 = sadd.s32 %s340, %s341
        %s343 = smul.addr %s342, 8
        %s344 = scalar_lea.vmem %s2, %s343
        %s345 = smul.u32 %s22, 8
        %s346 = sadd.s32 %s345, 8
        %p347 = scmp.lt.s32.totalorder %s346, 15
        %s348 = scalar_select %p347, %s346, 15
        %s349 = smul.u32 2, %s348
      $region44: #{asc_forward.3} parent=31 // pred_fallthru
        _
      // Predicated region
      $region45: #{asc_forward.3} parent=31 // pred_check
        %p350 = pneg %p188
      $region46: #{asc_forward.3} parent=31 // pred_check_branch
        %352 = sbr.rel (%p350) target = $region48
      $region47: #{asc_forward.3} parent=31 // pred_region
        %p353 = scmp.lt.s32.totalorder %s21, 1
        %s354 = scalar_select %p353, %s21, 1
        %s355 = scalar_lea.vmem %s5, %s354
      $region48: #{asc_forward.3} parent=31 // pred_fallthru
        _
    $region32: #{asc_forward.3} parent=5 // pred_fallthru
      _
    %p356 = scmp.le.s32.totalorder 1, %s14
    %p357 = scmp.lt.s32.totalorder %s14, 5
    %p358 = pnand %p356, %p357
    %p359 = pneg %p358
    // Predicated region
    $region49: #{asc_forward.3} parent=5 // pred_check
      _
    $region50: #{asc_forward.3} parent=5 // pred_check_branch
      %361 = sbr.rel (%p358) target = $region52
    $region51: #{asc_forward.3} parent=5 // pred_region
      %s362 = ssub.s32 %s14, 1
      %s363 = smul.u32 16, %s24
      %p364 = scmp.lt.s32.totalorder %s23, 1
      %s365 = scalar_select %p364, %s23, 1
      %p366 = scmp.lt.s32.totalorder %s363, 31
      %s367 = scalar_select %p366, %s363, 31
      %s368 = smul.addr %s365, 32
      %s369 = sadd.s32 %s367, %s368
      %s370 = smul.addr %s369, 8
      %s371 = scalar_lea.vmem %s0, %s370
      %p372 = pneg %p54
      %p373 = pneg %p51
      %s374 = smul.u32 %s24, 8
      %s375 = ssub.s32 %s374, 1
      %p376 = scmp.gt.s32.totalorder %s375, 0
      %s377 = scalar_select %p376, %s375, 0
      %s378 = smul.u32 2, %s377
      %p379 = scmp.lt.s32.totalorder %s23, 1
      %s380 = scalar_select %p379, %s23, 1
      %p381 = scmp.lt.s32.totalorder %s378, 31
      %s382 = scalar_select %p381, %s378, 31
      %s383 = smul.addr %s380, 32
      %s384 = sadd.s32 %s382, %s383
      %s385 = smul.addr %s384, 8
      %s386 = scalar_lea.vmem %s1, %s385
      %p387 = pneg %p90
      %p388 = pneg %p87
      %s389 = smul.u32 %s24, 8
      %s390 = sadd.s32 %s389, 8
      %p391 = scmp.lt.s32.totalorder %s390, 15
      %s392 = scalar_select %p391, %s390, 15
      %s393 = smul.u32 2, %s392
      %p394 = scmp.lt.s32.totalorder %s23, 1
      %s395 = scalar_select %p394, %s23, 1
      %p396 = scmp.lt.s32.totalorder %s393, 31
      %s397 = scalar_select %p396, %s393, 31
      %s398 = smul.addr %s395, 32
      %s399 = sadd.s32 %s397, %s398
      %s400 = smul.addr %s399, 8
      %s401 = scalar_lea.vmem %s2, %s400
      %p402 = pneg %p126
      %p403 = pneg %p123
      %p404 = pneg %p147
      %p405 = pneg %p144
      %p406 = pneg %p168
      %p407 = pneg %p165
      %p408 = scmp.lt.s32.totalorder %s23, 1
      %s409 = scalar_select %p408, %s23, 1
      %s410 = scalar_lea.vmem %s5, %s409
      %p411 = pneg %p194
      %p412 = pneg %p191
      %p413 = pneg %p215
      %p414 = pneg %p212
      %p415 = pneg %p236
      %p416 = pneg %p233
      %p417 = pneg %p264
      %p418 = pneg %p261
      %s419 = smul.u32 16, %s24
      %p420 = scmp.lt.s32.totalorder %s23, 1
      %s421 = scalar_select %p420, %s23, 1
      %p422 = scmp.lt.s32.totalorder %s419, 31
      %s423 = scalar_select %p422, %s419, 31
      %s424 = smul.addr %s421, 32
      %s425 = sadd.s32 %s423, %s424
      %s426 = smul.addr %s425, 8
      %s427 = scalar_lea.vmem %s8, %s426
      %s428 = smul.u32 16, %s24
      %p429 = scmp.lt.s32.totalorder %s23, 1
      %s430 = scalar_select %p429, %s23, 1
      %p431 = scmp.lt.s32.totalorder %s428, 31
      %s432 = scalar_select %p431, %s428, 31
      %s433 = smul.addr %s430, 32
      %s434 = sadd.s32 %s432, %s433
      %s435 = smul.addr %s434, 8
      %s436 = scalar_lea.vmem %s0, %s435
      %s437 = smul.u32 16, %s24
      %s438 = smul.u32 %s24, 8
      %s439 = ssub.s32 %s438, 1
      %p440 = scmp.gt.s32.totalorder %s439, 0
      %s441 = scalar_select %p440, %s439, 0
      %s442 = smul.u32 2, %s441
      %p443 = scmp.lt.s32.totalorder %s23, 1
      %s444 = scalar_select %p443, %s23, 1
      %p445 = scmp.lt.s32.totalorder %s442, 31
      %s446 = scalar_select %p445, %s442, 31
      %s447 = smul.addr %s444, 32
      %s448 = sadd.s32 %s446, %s447
      %s449 = smul.addr %s448, 8
      %s450 = scalar_lea.vmem %s1, %s449
      %s451 = smul.u32 %s24, 8
      %s452 = ssub.s32 %s451, 1
      %p453 = scmp.gt.s32.totalorder %s452, 0
      %s454 = scalar_select %p453, %s452, 0
      %s455 = smul.u32 2, %s454
      %s456 = smul.u32 %s24, 8
      %s457 = sadd.s32 %s456, 8
      %p458 = scmp.lt.s32.totalorder %s457, 15
      %s459 = scalar_select %p458, %s457, 15
      %s460 = smul.u32 2, %s459
      %p461 = scmp.lt.s32.totalorder %s23, 1
      %s462 = scalar_select %p461, %s23, 1
      %p463 = scmp.lt.s32.totalorder %s460, 31
      %s464 = scalar_select %p463, %s460, 31
      %s465 = smul.addr %s462, 32
      %s466 = sadd.s32 %s464, %s465
      %s467 = smul.addr %s466, 8
      %s468 = scalar_lea.vmem %s2, %s467
      %s469 = smul.u32 %s24, 8
      %s470 = sadd.s32 %s469, 8
      %p471 = scmp.lt.s32.totalorder %s470, 15
      %s472 = scalar_select %p471, %s470, 15
      %s473 = smul.u32 2, %s472
      %p474 = scmp.lt.s32.totalorder %s23, 1
      %s475 = scalar_select %p474, %s23, 1
      %s476 = scalar_lea.vmem %s5, %s475
      %s477 = smul.u32 16, %s24
      %p478 = scmp.lt.s32.totalorder %s23, 1
      %s479 = scalar_select %p478, %s23, 1
      %p480 = scmp.lt.s32.totalorder %s477, 31
      %s481 = scalar_select %p480, %s477, 31
      %s482 = smul.addr %s479, 32
      %s483 = sadd.s32 %s481, %s482
      %s484 = smul.addr %s483, 8
      %s485 = scalar_lea.vmem %s8, %s484
      %s486 = smul.u32 16, %s24
      %v490 = vld [vmem:[%s436] sm:$0xff]
      %v491 = vld [vmem:[%s436 + $0x8] sm:$0xff]
      %v492 = vld [vmem:[%s436 + $0x10] sm:$0xff]
      %v493 = vld [vmem:[%s436 + $0x18] sm:$0xff]
      %v494 = vld [vmem:[%s436 + $0x20] sm:$0xff]
      %v495 = vld [vmem:[%s436 + $0x28] sm:$0xff]
      %v496 = vld [vmem:[%s436 + $0x30] sm:$0xff]
      %v497 = vld [vmem:[%s436 + $0x38] sm:$0xff]
      %v498 = vld [vmem:[%s436 + $0x40] sm:$0xff]
      %v499 = vld [vmem:[%s436 + $0x48] sm:$0xff]
      %v500 = vld [vmem:[%s436 + $0x50] sm:$0xff]
      %v501 = vld [vmem:[%s436 + $0x58] sm:$0xff]
      %v502 = vld [vmem:[%s436 + $0x60] sm:$0xff]
      %v503 = vld [vmem:[%s436 + $0x68] sm:$0xff]
      %v504 = vld [vmem:[%s436 + $0x70] sm:$0xff]
      %v505 = vld [vmem:[%s436 + $0x78] sm:$0xff]
      %v506 = vpack.c.bf16 %v491, %v490
      %v507 = vpack.c.bf16 %v493, %v492
      %v508 = vpack.c.bf16 %v495, %v494
      %v509 = vpack.c.bf16 %v497, %v496
      %v510 = vpack.c.bf16 %v499, %v498
      %v511 = vpack.c.bf16 %v501, %v500
      %v512 = vpack.c.bf16 %v503, %v502
      %v513 = vpack.c.bf16 %v505, %v504
      %p514 = scmp.gt.s32.totalorder %s24, 0
      %s515 = scalar_select %p514, 1, 0
      %s516 = scvt.s32.f32 %s515
      %v517 = vld [vmem:[%s450] sm:$0xff]
      %v518 = vld [vmem:[%s450 + $0x8] sm:$0xff]
      %v519 = vstv %s516
      %v520 = vmul.f32 %v517, %v519
      %v521 = vmul.f32 %v518, %v519
      %v522 = vpack.c.bf16 %v521, %v520
      %p523 = scmp.lt.s32.totalorder %s24, 1
      %s524 = scalar_select %p523, 1, 0
      %s525 = scvt.s32.f32 %s524
      %v526 = vld [vmem:[%s468] sm:$0xff]
      %v527 = vld [vmem:[%s468 + $0x8] sm:$0xff]
      %v528 = vstv %s525
      %v529 = vmul.f32 %v526, %v528
      %v530 = vmul.f32 %v527, %v528
      %v531 = vpack.c.bf16 %v530, %v529
      %v533 = vrot.slane %v522, 4
      %vm542 = vcmask 1043456
      %v543 = vrot.slane %v506, 4
      %v544 = vrot.slane %v507, 4
      %v545 = vsel %vm542, %v543, %v544
      %v546 = vrot.slane %v508, 4
      %v547 = vsel %vm542, %v544, %v546
      %v548 = vrot.slane %v509, 4
      %v549 = vsel %vm542, %v546, %v548
      %v550 = vrot.slane %v510, 4
      %v551 = vsel %vm542, %v548, %v550
      %v552 = vrot.slane %v511, 4
      %v553 = vsel %vm542, %v550, %v552
      %v554 = vrot.slane %v512, 4
      %v555 = vsel %vm542, %v552, %v554
      %v556 = vrot.slane %v513, 4
      %v557 = vsel %vm542, %v554, %v556
      %v559 = vrot.slane %v531, 4
      %vm560 = vcmask 1043456
      %v563 = vsel %vm560, 0, %v533
      %v565 = vsel %vm560, %v533, %v543
      %v568 = vsel %vm560, %v556, %v559
      %v569 = vsel %vm560, %v559, 0
      %vm570 = vsmask.f32 256
      %v571 = vshrl.u32 %v563, 16
      %v573 = vrot.slane %v571, 7
      %v574 = vshll.u32 %v563, 16
      %v576 = vor.u32 %v573, %v574
      %v577 = vshrl.u32 %v565, 16
      %v579 = vrot.slane %v577, 7
      %v580 = vshll.u32 %v565, 16
      %v582 = vor.u32 %v579, %v580
      %v583 = vsel %vm570, %v573, %v582
      %v585 = vshrl.u32 %v545, 16
      %v587 = vrot.slane %v585, 7
      %v588 = vshll.u32 %v545, 16
      %v590 = vor.u32 %v587, %v588
      %v591 = vsel %vm570, %v579, %v590
      %v593 = vshrl.u32 %v547, 16
      %v595 = vrot.slane %v593, 7
      %v596 = vshll.u32 %v547, 16
      %v598 = vor.u32 %v595, %v596
      %v599 = vsel %vm570, %v587, %v598
      %v601 = vshrl.u32 %v549, 16
      %v603 = vrot.slane %v601, 7
      %v604 = vshll.u32 %v549, 16
      %v606 = vor.u32 %v603, %v604
      %v607 = vsel %vm570, %v595, %v606
      %v609 = vshrl.u32 %v551, 16
      %v611 = vrot.slane %v609, 7
      %v612 = vshll.u32 %v551, 16
      %v614 = vor.u32 %v611, %v612
      %v615 = vsel %vm570, %v603, %v614
      %v617 = vshrl.u32 %v553, 16
      %v619 = vrot.slane %v617, 7
      %v620 = vshll.u32 %v553, 16
      %v622 = vor.u32 %v619, %v620
      %v623 = vsel %vm570, %v611, %v622
      %v625 = vshrl.u32 %v555, 16
      %v627 = vrot.slane %v625, 7
      %v628 = vshll.u32 %v555, 16
      %v630 = vor.u32 %v627, %v628
      %v631 = vsel %vm570, %v619, %v630
      %v633 = vshrl.u32 %v557, 16
      %v635 = vrot.slane %v633, 7
      %v636 = vshll.u32 %v557, 16
      %v638 = vor.u32 %v635, %v636
      %v639 = vsel %vm570, %v627, %v638
      %v640 = vshrl.u32 %v568, 16
      %v642 = vrot.slane %v640, 7
      %v643 = vshll.u32 %v568, 16
      %v645 = vor.u32 %v642, %v643
      %v646 = vsel %vm570, %v635, %v645
      %v647 = vshrl.u32 %v569, 16
      %v649 = vrot.slane %v647, 7
      %v650 = vshll.u32 %v569, 16
      %v652 = vor.u32 %v649, %v650
      %v653 = vsel %vm570, %v642, %v652
      %vm665 = vcmask 1040384
      %vm666 = vmand %vm665, %vm570
      %v667 = vsel %vm666, 0, %v576
      %vm668 = vsmask.f32 7424
      %v669 = vrot.slane %v574, 1
      %v670 = vor.u32 %v571, %v669
      %v671 = vrot.slane %v580, 1
      %v672 = vsel %vm668, %v670, %v671
      %v673 = vor.u32 %v577, %v671
      %v674 = vrot.slane %v588, 1
      %v675 = vsel %vm668, %v673, %v674
      %v676 = vor.u32 %v585, %v674
      %v677 = vrot.slane %v596, 1
      %v678 = vsel %vm668, %v676, %v677
      %v679 = vor.u32 %v593, %v677
      %v680 = vrot.slane %v604, 1
      %v681 = vsel %vm668, %v679, %v680
      %v682 = vor.u32 %v601, %v680
      %v683 = vrot.slane %v612, 1
      %v684 = vsel %vm668, %v682, %v683
      %v685 = vor.u32 %v609, %v683
      %v686 = vrot.slane %v620, 1
      %v687 = vsel %vm668, %v685, %v686
      %v688 = vor.u32 %v617, %v686
      %v689 = vrot.slane %v628, 1
      %v690 = vsel %vm668, %v688, %v689
      %v691 = vor.u32 %v625, %v689
      %v692 = vrot.slane %v636, 1
      %v693 = vsel %vm668, %v691, %v692
      %v694 = vor.u32 %v633, %v692
      %v695 = vrot.slane %v643, 1
      %v696 = vsel %vm668, %v694, %v695
      %v697 = vor.u32 %v640, %v695
      %v698 = vrot.slane %v650, 1
      %v699 = vsel %vm668, %v697, %v698
      %v700 = vor.u32 %v647, %v698
      %vm712 = vcmask 1047552
      %vm713 = vmand %vm712, %vm668
      %v714 = vsel %vm713, %v700, 0
      %v715 = vlaneseq
      %v716 = vshrl.u32 %v715, 7
      %v717 = vadd.s32 %v716, 8
      %v718 = vadd.s32 %v716, 16
      %v719 = vadd.s32 %v716, 24
      %v720 = vadd.s32 %v716, 32
      %v721 = vadd.s32 %v716, 40
      %v722 = vadd.s32 %v716, 48
      %v723 = vadd.s32 %v716, 56
      %v724 = vadd.s32 %v716, 64
      %v725 = vadd.s32 %v716, 72
      %v726 = vadd.s32 %v716, 80
      %v727 = vadd.s32 %v716, 88
      %v728 = vadd.s32 %v716, 96
      %v729 = vadd.s32 %v716, 104
      %v730 = vadd.s32 %v716, 112
      %v731 = vadd.s32 %v716, 120
      %v732 = vadd.s32 %v716, 128
      %v733 = vadd.s32 %v716, 136
      %v734 = vadd.s32 %v716, 144
      %v735 = vadd.s32 %v716, 152
      %v736 = vadd.s32 %v716, 160
      %v737 = vadd.s32 %v716, 168
      %v738 = vadd.s32 %v717, 8
      %v739 = vadd.s32 %v718, 8
      %v740 = vadd.s32 %v719, 8
      %v741 = vadd.s32 %v720, 8
      %v742 = vadd.s32 %v721, 8
      %v743 = vadd.s32 %v722, 8
      %v744 = vadd.s32 %v723, 8
      %v745 = vadd.s32 %v724, 8
      %v746 = vadd.s32 %v725, 8
      %v747 = vadd.s32 %v726, 8
      %v748 = vadd.s32 %v727, 8
      %v749 = vadd.s32 %v728, 8
      %v750 = vadd.s32 %v729, 8
      %v751 = vadd.s32 %v730, 8
      %v752 = vadd.s32 %v731, 8
      %v753 = vadd.s32 %v732, 8
      %v754 = vadd.s32 %v733, 8
      %v755 = vadd.s32 %v734, 8
      %v756 = vadd.s32 %v735, 8
      %v757 = vadd.s32 %v736, 8
      %v758 = vadd.s32 %v737, 8
      %vm759 = vcmp.lt.s32.totalorder %v717, 0
      %v760 = vsub.s32 0, %v717
      %v761 = vsel %vm759, %v760, %v717
      %v762 = vshrl.u32 %v761, 4
      %v763 = vand.u32 %v761, 15
      %v764 = vsub.s32 0, %v763
      %v765 = vsel %vm759, %v764, %v763
      %vm766 = vcmp.lt.s32.totalorder %v738, 0
      %v767 = vsub.s32 0, %v738
      %v768 = vsel %vm766, %v767, %v738
      %v769 = vshrl.u32 %v768, 4
      %v770 = vand.u32 %v768, 15
      %v771 = vsub.s32 0, %v770
      %v772 = vsel %vm766, %v771, %v770
      %vm773 = vcmp.lt.s32.totalorder %v739, 0
      %v774 = vsub.s32 0, %v739
      %v775 = vsel %vm773, %v774, %v739
      %v776 = vshrl.u32 %v775, 4
      %v777 = vand.u32 %v775, 15
      %v778 = vsub.s32 0, %v777
      %v779 = vsel %vm773, %v778, %v777
      %vm780 = vcmp.lt.s32.totalorder %v740, 0
      %v781 = vsub.s32 0, %v740
      %v782 = vsel %vm780, %v781, %v740
      %v783 = vshrl.u32 %v782, 4
      %v784 = vand.u32 %v782, 15
      %v785 = vsub.s32 0, %v784
      %v786 = vsel %vm780, %v785, %v784
      %vm787 = vcmp.lt.s32.totalorder %v741, 0
      %v788 = vsub.s32 0, %v741
      %v789 = vsel %vm787, %v788, %v741
      %v790 = vshrl.u32 %v789, 4
      %v791 = vand.u32 %v789, 15
      %v792 = vsub.s32 0, %v791
      %v793 = vsel %vm787, %v792, %v791
      %vm794 = vcmp.lt.s32.totalorder %v742, 0
      %v795 = vsub.s32 0, %v742
      %v796 = vsel %vm794, %v795, %v742
      %v797 = vshrl.u32 %v796, 4
      %v798 = vand.u32 %v796, 15
      %v799 = vsub.s32 0, %v798
      %v800 = vsel %vm794, %v799, %v798
      %vm801 = vcmp.lt.s32.totalorder %v743, 0
      %v802 = vsub.s32 0, %v743
      %v803 = vsel %vm801, %v802, %v743
      %v804 = vshrl.u32 %v803, 4
      %v805 = vand.u32 %v803, 15
      %v806 = vsub.s32 0, %v805
      %v807 = vsel %vm801, %v806, %v805
      %vm808 = vcmp.lt.s32.totalorder %v744, 0
      %v809 = vsub.s32 0, %v744
      %v810 = vsel %vm808, %v809, %v744
      %v811 = vshrl.u32 %v810, 4
      %v812 = vand.u32 %v810, 15
      %v813 = vsub.s32 0, %v812
      %v814 = vsel %vm808, %v813, %v812
      %vm815 = vcmp.lt.s32.totalorder %v745, 0
      %v816 = vsub.s32 0, %v745
      %v817 = vsel %vm815, %v816, %v745
      %v818 = vshrl.u32 %v817, 4
      %v819 = vand.u32 %v817, 15
      %v820 = vsub.s32 0, %v819
      %v821 = vsel %vm815, %v820, %v819
      %vm822 = vcmp.lt.s32.totalorder %v746, 0
      %v823 = vsub.s32 0, %v746
      %v824 = vsel %vm822, %v823, %v746
      %v825 = vshrl.u32 %v824, 4
      %v826 = vand.u32 %v824, 15
      %v827 = vsub.s32 0, %v826
      %v828 = vsel %vm822, %v827, %v826
      %vm829 = vcmp.lt.s32.totalorder %v747, 0
      %v830 = vsub.s32 0, %v747
      %v831 = vsel %vm829, %v830, %v747
      %v832 = vshrl.u32 %v831, 4
      %v833 = vand.u32 %v831, 15
      %v834 = vsub.s32 0, %v833
      %v835 = vsel %vm829, %v834, %v833
      %vm836 = vcmp.lt.s32.totalorder %v748, 0
      %v837 = vsub.s32 0, %v748
      %v838 = vsel %vm836, %v837, %v748
      %v839 = vshrl.u32 %v838, 4
      %v840 = vand.u32 %v838, 15
      %v841 = vsub.s32 0, %v840
      %v842 = vsel %vm836, %v841, %v840
      %vm843 = vcmp.lt.s32.totalorder %v749, 0
      %v844 = vsub.s32 0, %v749
      %v845 = vsel %vm843, %v844, %v749
      %v846 = vshrl.u32 %v845, 4
      %v847 = vand.u32 %v845, 15
      %v848 = vsub.s32 0, %v847
      %v849 = vsel %vm843, %v848, %v847
      %vm850 = vcmp.lt.s32.totalorder %v750, 0
      %v851 = vsub.s32 0, %v750
      %v852 = vsel %vm850, %v851, %v750
      %v853 = vshrl.u32 %v852, 4
      %v854 = vand.u32 %v852, 15
      %v855 = vsub.s32 0, %v854
      %v856 = vsel %vm850, %v855, %v854
      %vm857 = vcmp.lt.s32.totalorder %v751, 0
      %v858 = vsub.s32 0, %v751
      %v859 = vsel %vm857, %v858, %v751
      %v860 = vshrl.u32 %v859, 4
      %v861 = vand.u32 %v859, 15
      %v862 = vsub.s32 0, %v861
      %v863 = vsel %vm857, %v862, %v861
      %vm864 = vcmp.lt.s32.totalorder %v752, 0
      %v865 = vsub.s32 0, %v752
      %v866 = vsel %vm864, %v865, %v752
      %v867 = vshrl.u32 %v866, 4
      %v868 = vand.u32 %v866, 15
      %v869 = vsub.s32 0, %v868
      %v870 = vsel %vm864, %v869, %v868
      %vm871 = vcmp.lt.s32.totalorder %v753, 0
      %v872 = vsub.s32 0, %v753
      %v873 = vsel %vm871, %v872, %v753
      %v874 = vshrl.u32 %v873, 4
      %v875 = vand.u32 %v873, 15
      %v876 = vsub.s32 0, %v875
      %v877 = vsel %vm871, %v876, %v875
      %vm878 = vcmp.lt.s32.totalorder %v754, 0
      %v879 = vsub.s32 0, %v754
      %v880 = vsel %vm878, %v879, %v754
      %v881 = vshrl.u32 %v880, 4
      %v882 = vand.u32 %v880, 15
      %v883 = vsub.s32 0, %v882
      %v884 = vsel %vm878, %v883, %v882
      %vm885 = vcmp.lt.s32.totalorder %v755, 0
      %v886 = vsub.s32 0, %v755
      %v887 = vsel %vm885, %v886, %v755
      %v888 = vshrl.u32 %v887, 4
      %v889 = vand.u32 %v887, 15
      %v890 = vsub.s32 0, %v889
      %v891 = vsel %vm885, %v890, %v889
      %vm892 = vcmp.lt.s32.totalorder %v756, 0
      %v893 = vsub.s32 0, %v756
      %v894 = vsel %vm892, %v893, %v756
      %v895 = vshrl.u32 %v894, 4
      %v896 = vand.u32 %v894, 15
      %v897 = vsub.s32 0, %v896
      %v898 = vsel %vm892, %v897, %v896
      %vm899 = vcmp.lt.s32.totalorder %v757, 0
      %v900 = vsub.s32 0, %v757
      %v901 = vsel %vm899, %v900, %v757
      %v902 = vshrl.u32 %v901, 4
      %v903 = vand.u32 %v901, 15
      %v904 = vsub.s32 0, %v903
      %v905 = vsel %vm899, %v904, %v903
      %vm906 = vcmp.lt.s32.totalorder %v758, 0
      %v907 = vsub.s32 0, %v758
      %v908 = vsel %vm906, %v907, %v758
      %v909 = vshrl.u32 %v908, 4
      %v910 = vand.u32 %v908, 15
      %v911 = vsub.s32 0, %v910
      %v912 = vsel %vm906, %v911, %v910
      %vm913 = vcmp.ne.s32.totalorder %v765, 0
      %vm914 = vcmp.ne.s32.totalorder %v772, 0
      %vm915 = vcmp.ne.s32.totalorder %v779, 0
      %vm916 = vcmp.ne.s32.totalorder %v786, 0
      %vm917 = vcmp.ne.s32.totalorder %v793, 0
      %vm918 = vcmp.ne.s32.totalorder %v800, 0
      %vm919 = vcmp.ne.s32.totalorder %v807, 0
      %vm920 = vcmp.ne.s32.totalorder %v814, 0
      %vm921 = vcmp.ne.s32.totalorder %v821, 0
      %vm922 = vcmp.ne.s32.totalorder %v828, 0
      %vm923 = vcmp.ne.s32.totalorder %v835, 0
      %vm924 = vcmp.ne.s32.totalorder %v842, 0
      %vm925 = vcmp.ne.s32.totalorder %v849, 0
      %vm926 = vcmp.ne.s32.totalorder %v856, 0
      %vm927 = vcmp.ne.s32.totalorder %v863, 0
      %vm928 = vcmp.ne.s32.totalorder %v870, 0
      %vm929 = vcmp.ne.s32.totalorder %v877, 0
      %vm930 = vcmp.ne.s32.totalorder %v884, 0
      %vm931 = vcmp.ne.s32.totalorder %v891, 0
      %vm932 = vcmp.ne.s32.totalorder %v898, 0
      %vm933 = vcmp.ne.s32.totalorder %v905, 0
      %vm934 = vcmp.ne.s32.totalorder %v912, 0
      %vm935 = vcmp.lt.s32.totalorder %v765, 0
      %vm936 = vcmp.lt.s32.totalorder %v772, 0
      %vm937 = vcmp.lt.s32.totalorder %v779, 0
      %vm938 = vcmp.lt.s32.totalorder %v786, 0
      %vm939 = vcmp.lt.s32.totalorder %v793, 0
      %vm940 = vcmp.lt.s32.totalorder %v800, 0
      %vm941 = vcmp.lt.s32.totalorder %v807, 0
      %vm942 = vcmp.lt.s32.totalorder %v814, 0
      %vm943 = vcmp.lt.s32.totalorder %v821, 0
      %vm944 = vcmp.lt.s32.totalorder %v828, 0
      %vm945 = vcmp.lt.s32.totalorder %v835, 0
      %vm946 = vcmp.lt.s32.totalorder %v842, 0
      %vm947 = vcmp.lt.s32.totalorder %v849, 0
      %vm948 = vcmp.lt.s32.totalorder %v856, 0
      %vm949 = vcmp.lt.s32.totalorder %v863, 0
      %vm950 = vcmp.lt.s32.totalorder %v870, 0
      %vm951 = vcmp.lt.s32.totalorder %v877, 0
      %vm952 = vcmp.lt.s32.totalorder %v884, 0
      %vm953 = vcmp.lt.s32.totalorder %v891, 0
      %vm954 = vcmp.lt.s32.totalorder %v898, 0
      %vm955 = vcmp.lt.s32.totalorder %v905, 0
      %vm956 = vcmp.lt.s32.totalorder %v912, 0
      %vm957 = vmand %vm935, %vm913
      %vm958 = vmand %vm936, %vm914
      %vm959 = vmand %vm937, %vm915
      %vm960 = vmand %vm938, %vm916
      %vm961 = vmand %vm939, %vm917
      %vm962 = vmand %vm940, %vm918
      %vm963 = vmand %vm941, %vm919
      %vm964 = vmand %vm942, %vm920
      %vm965 = vmand %vm943, %vm921
      %vm966 = vmand %vm944, %vm922
      %vm967 = vmand %vm945, %vm923
      %vm968 = vmand %vm946, %vm924
      %vm969 = vmand %vm947, %vm925
      %vm970 = vmand %vm948, %vm926
      %vm971 = vmand %vm949, %vm927
      %vm972 = vmand %vm950, %vm928
      %vm973 = vmand %vm951, %vm929
      %vm974 = vmand %vm952, %vm930
      %vm975 = vmand %vm953, %vm931
      %vm976 = vmand %vm954, %vm932
      %vm977 = vmand %vm955, %vm933
      %vm978 = vmand %vm956, %vm934
      %v979 = vadd.s32 %v765, 16
      %v980 = vadd.s32 %v772, 16
      %v981 = vadd.s32 %v779, 16
      %v982 = vadd.s32 %v786, 16
      %v983 = vadd.s32 %v793, 16
      %v984 = vadd.s32 %v800, 16
      %v985 = vadd.s32 %v807, 16
      %v986 = vadd.s32 %v814, 16
      %v987 = vadd.s32 %v821, 16
      %v988 = vadd.s32 %v828, 16
      %v989 = vadd.s32 %v835, 16
      %v990 = vadd.s32 %v842, 16
      %v991 = vadd.s32 %v849, 16
      %v992 = vadd.s32 %v856, 16
      %v993 = vadd.s32 %v863, 16
      %v994 = vadd.s32 %v870, 16
      %v995 = vadd.s32 %v877, 16
      %v996 = vadd.s32 %v884, 16
      %v997 = vadd.s32 %v891, 16
      %v998 = vadd.s32 %v898, 16
      %v999 = vadd.s32 %v905, 16
      %v1000 = vadd.s32 %v912, 16
      %v1001 = vsel %vm957, %v979, %v765
      %v1002 = vsel %vm958, %v980, %v772
      %v1003 = vsel %vm959, %v981, %v779
      %v1004 = vsel %vm960, %v982, %v786
      %v1005 = vsel %vm961, %v983, %v793
      %v1006 = vsel %vm962, %v984, %v800
      %v1007 = vsel %vm963, %v985, %v807
      %v1008 = vsel %vm964, %v986, %v814
      %v1009 = vsel %vm965, %v987, %v821
      %v1010 = vsel %vm966, %v988, %v828
      %v1011 = vsel %vm967, %v989, %v835
      %v1012 = vsel %vm968, %v990, %v842
      %v1013 = vsel %vm969, %v991, %v849
      %v1014 = vsel %vm970, %v992, %v856
      %v1015 = vsel %vm971, %v993, %v863
      %v1016 = vsel %vm972, %v994, %v870
      %v1017 = vsel %vm973, %v995, %v877
      %v1018 = vsel %vm974, %v996, %v884
      %v1019 = vsel %vm975, %v997, %v891
      %v1020 = vsel %vm976, %v998, %v898
      %v1021 = vsel %vm977, %v999, %v905
      %v1022 = vsel %vm978, %v1000, %v912
      %vm1023 = vcmp.ge.s32.totalorder %v1001, 1
      %vm1024 = vcmp.ge.s32.totalorder %v1002, 1
      %vm1025 = vcmp.ge.s32.totalorder %v1003, 1
      %vm1026 = vcmp.ge.s32.totalorder %v1004, 1
      %vm1027 = vcmp.ge.s32.totalorder %v1005, 1
      %vm1028 = vcmp.ge.s32.totalorder %v1006, 1
      %vm1029 = vcmp.ge.s32.totalorder %v1007, 1
      %vm1030 = vcmp.ge.s32.totalorder %v1008, 1
      %vm1031 = vcmp.ge.s32.totalorder %v1009, 1
      %vm1032 = vcmp.ge.s32.totalorder %v1010, 1
      %vm1033 = vcmp.ge.s32.totalorder %v1011, 1
      %vm1034 = vcmp.ge.s32.totalorder %v1012, 1
      %vm1035 = vcmp.ge.s32.totalorder %v1013, 1
      %vm1036 = vcmp.ge.s32.totalorder %v1014, 1
      %vm1037 = vcmp.ge.s32.totalorder %v1015, 1
      %vm1038 = vcmp.ge.s32.totalorder %v1016, 1
      %vm1039 = vcmp.ge.s32.totalorder %v1017, 1
      %vm1040 = vcmp.ge.s32.totalorder %v1018, 1
      %vm1041 = vcmp.ge.s32.totalorder %v1019, 1
      %vm1042 = vcmp.ge.s32.totalorder %v1020, 1
      %vm1043 = vcmp.ge.s32.totalorder %v1021, 1
      %vm1044 = vcmp.ge.s32.totalorder %v1022, 1
      %v1045 = vsel %vm1023, 1, 0
      %v1046 = vsel %vm1024, 1, 0
      %v1047 = vsel %vm1025, 1, 0
      %v1048 = vsel %vm1026, 1, 0
      %v1049 = vsel %vm1027, 1, 0
      %v1050 = vsel %vm1028, 1, 0
      %v1051 = vsel %vm1029, 1, 0
      %v1052 = vsel %vm1030, 1, 0
      %v1053 = vsel %vm1031, 1, 0
      %v1054 = vsel %vm1032, 1, 0
      %v1055 = vsel %vm1033, 1, 0
      %v1056 = vsel %vm1034, 1, 0
      %v1057 = vsel %vm1035, 1, 0
      %v1058 = vsel %vm1036, 1, 0
      %v1059 = vsel %vm1037, 1, 0
      %v1060 = vsel %vm1038, 1, 0
      %v1061 = vsel %vm1039, 1, 0
      %v1062 = vsel %vm1040, 1, 0
      %v1063 = vsel %vm1041, 1, 0
      %v1064 = vsel %vm1042, 1, 0
      %v1065 = vsel %vm1043, 1, 0
      %v1066 = vsel %vm1044, 1, 0
      %vm1067 = vcmp.eq.s32.totalorder %v1045, 1
      %vm1068 = vcmp.eq.s32.totalorder %v1046, 1
      %vm1069 = vcmp.eq.s32.totalorder %v1047, 1
      %vm1070 = vcmp.eq.s32.totalorder %v1048, 1
      %vm1071 = vcmp.eq.s32.totalorder %v1049, 1
      %vm1072 = vcmp.eq.s32.totalorder %v1050, 1
      %vm1073 = vcmp.eq.s32.totalorder %v1051, 1
      %vm1074 = vcmp.eq.s32.totalorder %v1052, 1
      %vm1075 = vcmp.eq.s32.totalorder %v1053, 1
      %vm1076 = vcmp.eq.s32.totalorder %v1054, 1
      %vm1077 = vcmp.eq.s32.totalorder %v1055, 1
      %vm1078 = vcmp.eq.s32.totalorder %v1056, 1
      %vm1079 = vcmp.eq.s32.totalorder %v1057, 1
      %vm1080 = vcmp.eq.s32.totalorder %v1058, 1
      %vm1081 = vcmp.eq.s32.totalorder %v1059, 1
      %vm1082 = vcmp.eq.s32.totalorder %v1060, 1
      %vm1083 = vcmp.eq.s32.totalorder %v1061, 1
      %vm1084 = vcmp.eq.s32.totalorder %v1062, 1
      %vm1085 = vcmp.eq.s32.totalorder %v1063, 1
      %vm1086 = vcmp.eq.s32.totalorder %v1064, 1
      %vm1087 = vcmp.eq.s32.totalorder %v1065, 1
      %vm1088 = vcmp.eq.s32.totalorder %v1066, 1
      %vm1089 = vmpackc.low %vm1067, %vm1067
      %vm1090 = vmpackc.low %vm1068, %vm1068
      %vm1091 = vmpackc.low %vm1069, %vm1069
      %vm1092 = vmpackc.low %vm1070, %vm1070
      %vm1093 = vmpackc.low %vm1071, %vm1071
      %vm1094 = vmpackc.low %vm1072, %vm1072
      %vm1095 = vmpackc.low %vm1073, %vm1073
      %vm1096 = vmpackc.low %vm1074, %vm1074
      %vm1097 = vmpackc.low %vm1075, %vm1075
      %vm1098 = vmpackc.low %vm1076, %vm1076
      %vm1099 = vmpackc.low %vm1077, %vm1077
      %vm1100 = vmpackc.low %vm1078, %vm1078
      %vm1101 = vmpackc.low %vm1079, %vm1079
      %vm1102 = vmpackc.low %vm1080, %vm1080
      %vm1103 = vmpackc.low %vm1081, %vm1081
      %vm1104 = vmpackc.low %vm1082, %vm1082
      %vm1105 = vmpackc.low %vm1083, %vm1083
      %vm1106 = vmpackc.low %vm1084, %vm1084
      %vm1107 = vmpackc.low %vm1085, %vm1085
      %vm1108 = vmpackc.low %vm1086, %vm1086
      %vm1109 = vmpackc.low %vm1087, %vm1087
      %vm1110 = vmpackc.low %vm1088, %vm1088
      %v1111 = vsel %vm1089, 65537, 0
      %v1112 = vsel %vm1090, 65537, 0
      %v1113 = vsel %vm1091, 65537, 0
      %v1114 = vsel %vm1092, 65537, 0
      %v1115 = vsel %vm1093, 65537, 0
      %v1116 = vsel %vm1094, 65537, 0
      %v1117 = vsel %vm1095, 65537, 0
      %v1118 = vsel %vm1096, 65537, 0
      %v1119 = vsel %vm1097, 65537, 0
      %v1120 = vsel %vm1098, 65537, 0
      %v1121 = vsel %vm1099, 65537, 0
      %v1122 = vsel %vm1100, 65537, 0
      %v1123 = vsel %vm1101, 65537, 0
      %v1124 = vsel %vm1102, 65537, 0
      %v1125 = vsel %vm1103, 65537, 0
      %v1126 = vsel %vm1104, 65537, 0
      %v1127 = vsel %vm1105, 65537, 0
      %v1128 = vsel %vm1106, 65537, 0
      %v1129 = vsel %vm1107, 65537, 0
      %v1130 = vsel %vm1108, 65537, 0
      %v1131 = vsel %vm1109, 65537, 0
      %v1132 = vsel %vm1110, 65537, 0
      %v1133 = vunpack.c.l.b16 %v1111
      %v1134 = vunpack.c.l.b16 %v1112
      %v1135 = vunpack.c.l.b16 %v1113
      %v1136 = vunpack.c.l.b16 %v1114
      %v1137 = vunpack.c.l.b16 %v1115
      %v1138 = vunpack.c.l.b16 %v1116
      %v1139 = vunpack.c.l.b16 %v1117
      %v1140 = vunpack.c.l.b16 %v1118
      %v1141 = vunpack.c.l.b16 %v1119
      %v1142 = vunpack.c.l.b16 %v1120
      %v1143 = vunpack.c.l.b16 %v1121
      %v1144 = vunpack.c.l.b16 %v1122
      %v1145 = vunpack.c.l.b16 %v1123
      %v1146 = vunpack.c.l.b16 %v1124
      %v1147 = vunpack.c.l.b16 %v1125
      %v1148 = vunpack.c.l.b16 %v1126
      %v1149 = vunpack.c.l.b16 %v1127
      %v1150 = vunpack.c.l.b16 %v1128
      %v1151 = vunpack.c.l.b16 %v1129
      %v1152 = vunpack.c.l.b16 %v1130
      %v1153 = vunpack.c.l.b16 %v1131
      %v1154 = vunpack.c.l.b16 %v1132
      %v1155 = vpack.c.b16 %v1134, %v1133
      %v1156 = vpack.c.b16 %v1136, %v1135
      %v1157 = vpack.c.b16 %v1138, %v1137
      %v1158 = vpack.c.b16 %v1140, %v1139
      %v1159 = vpack.c.b16 %v1142, %v1141
      %v1160 = vpack.c.b16 %v1144, %v1143
      %v1161 = vpack.c.b16 %v1146, %v1145
      %v1162 = vpack.c.b16 %v1148, %v1147
      %v1163 = vpack.c.b16 %v1150, %v1149
      %v1164 = vpack.c.b16 %v1152, %v1151
      %v1165 = vpack.c.b16 %v1154, %v1153
      %vm1166 = vcmp.ne.s16.totalorder %v1155, 0
      %vm1167 = vcmp.ne.s16.totalorder %v1156, 0
      %vm1168 = vcmp.ne.s16.totalorder %v1157, 0
      %vm1169 = vcmp.ne.s16.totalorder %v1158, 0
      %vm1170 = vcmp.ne.s16.totalorder %v1159, 0
      %vm1171 = vcmp.ne.s16.totalorder %v1160, 0
      %vm1172 = vcmp.ne.s16.totalorder %v1161, 0
      %vm1173 = vcmp.ne.s16.totalorder %v1162, 0
      %vm1174 = vcmp.ne.s16.totalorder %v1163, 0
      %vm1175 = vcmp.ne.s16.totalorder %v1164, 0
      %vm1176 = vcmp.ne.s16.totalorder %v1165, 0
      %v1177 = vsel %vm1166, %v667, 0
      %v1178 = vsel %vm1167, %v583, 0
      %v1179 = vsel %vm1168, %v591, 0
      %v1180 = vsel %vm1169, %v599, 0
      %v1181 = vsel %vm1170, %v607, 0
      %v1182 = vsel %vm1171, %v615, 0
      %v1183 = vsel %vm1172, %v623, 0
      %v1184 = vsel %vm1173, %v631, 0
      %v1185 = vsel %vm1174, %v639, 0
      %v1186 = vsel %vm1175, %v646, 0
      %v1187 = vsel %vm1176, %v653, 0
      %vm1188 = vcmp.le.s32.totalorder %v1001, 14
      %vm1189 = vcmp.le.s32.totalorder %v1002, 14
      %vm1190 = vcmp.le.s32.totalorder %v1003, 14
      %vm1191 = vcmp.le.s32.totalorder %v1004, 14
      %vm1192 = vcmp.le.s32.totalorder %v1005, 14
      %vm1193 = vcmp.le.s32.totalorder %v1006, 14
      %vm1194 = vcmp.le.s32.totalorder %v1007, 14
      %vm1195 = vcmp.le.s32.totalorder %v1008, 14
      %vm1196 = vcmp.le.s32.totalorder %v1009, 14
      %vm1197 = vcmp.le.s32.totalorder %v1010, 14
      %vm1198 = vcmp.le.s32.totalorder %v1011, 14
      %vm1199 = vcmp.le.s32.totalorder %v1012, 14
      %vm1200 = vcmp.le.s32.totalorder %v1013, 14
      %vm1201 = vcmp.le.s32.totalorder %v1014, 14
      %vm1202 = vcmp.le.s32.totalorder %v1015, 14
      %vm1203 = vcmp.le.s32.totalorder %v1016, 14
      %vm1204 = vcmp.le.s32.totalorder %v1017, 14
      %vm1205 = vcmp.le.s32.totalorder %v1018, 14
      %vm1206 = vcmp.le.s32.totalorder %v1019, 14
      %vm1207 = vcmp.le.s32.totalorder %v1020, 14
      %vm1208 = vcmp.le.s32.totalorder %v1021, 14
      %vm1209 = vcmp.le.s32.totalorder %v1022, 14
      %v1210 = vsel %vm1188, 1, 0
      %v1211 = vsel %vm1189, 1, 0
      %v1212 = vsel %vm1190, 1, 0
      %v1213 = vsel %vm1191, 1, 0
      %v1214 = vsel %vm1192, 1, 0
      %v1215 = vsel %vm1193, 1, 0
      %v1216 = vsel %vm1194, 1, 0
      %v1217 = vsel %vm1195, 1, 0
      %v1218 = vsel %vm1196, 1, 0
      %v1219 = vsel %vm1197, 1, 0
      %v1220 = vsel %vm1198, 1, 0
      %v1221 = vsel %vm1199, 1, 0
      %v1222 = vsel %vm1200, 1, 0
      %v1223 = vsel %vm1201, 1, 0
      %v1224 = vsel %vm1202, 1, 0
      %v1225 = vsel %vm1203, 1, 0
      %v1226 = vsel %vm1204, 1, 0
      %v1227 = vsel %vm1205, 1, 0
      %v1228 = vsel %vm1206, 1, 0
      %v1229 = vsel %vm1207, 1, 0
      %v1230 = vsel %vm1208, 1, 0
      %v1231 = vsel %vm1209, 1, 0
      %vm1232 = vcmp.eq.s32.totalorder %v1210, 1
      %vm1233 = vcmp.eq.s32.totalorder %v1211, 1
      %vm1234 = vcmp.eq.s32.totalorder %v1212, 1
      %vm1235 = vcmp.eq.s32.totalorder %v1213, 1
      %vm1236 = vcmp.eq.s32.totalorder %v1214, 1
      %vm1237 = vcmp.eq.s32.totalorder %v1215, 1
      %vm1238 = vcmp.eq.s32.totalorder %v1216, 1
      %vm1239 = vcmp.eq.s32.totalorder %v1217, 1
      %vm1240 = vcmp.eq.s32.totalorder %v1218, 1
      %vm1241 = vcmp.eq.s32.totalorder %v1219, 1
      %vm1242 = vcmp.eq.s32.totalorder %v1220, 1
      %vm1243 = vcmp.eq.s32.totalorder %v1221, 1
      %vm1244 = vcmp.eq.s32.totalorder %v1222, 1
      %vm1245 = vcmp.eq.s32.totalorder %v1223, 1
      %vm1246 = vcmp.eq.s32.totalorder %v1224, 1
      %vm1247 = vcmp.eq.s32.totalorder %v1225, 1
      %vm1248 = vcmp.eq.s32.totalorder %v1226, 1
      %vm1249 = vcmp.eq.s32.totalorder %v1227, 1
      %vm1250 = vcmp.eq.s32.totalorder %v1228, 1
      %vm1251 = vcmp.eq.s32.totalorder %v1229, 1
      %vm1252 = vcmp.eq.s32.totalorder %v1230, 1
      %vm1253 = vcmp.eq.s32.totalorder %v1231, 1
      %vm1254 = vmpackc.low %vm1232, %vm1232
      %vm1255 = vmpackc.low %vm1233, %vm1233
      %vm1256 = vmpackc.low %vm1234, %vm1234
      %vm1257 = vmpackc.low %vm1235, %vm1235
      %vm1258 = vmpackc.low %vm1236, %vm1236
      %vm1259 = vmpackc.low %vm1237, %vm1237
      %vm1260 = vmpackc.low %vm1238, %vm1238
      %vm1261 = vmpackc.low %vm1239, %vm1239
      %vm1262 = vmpackc.low %vm1240, %vm1240
      %vm1263 = vmpackc.low %vm1241, %vm1241
      %vm1264 = vmpackc.low %vm1242, %vm1242
      %vm1265 = vmpackc.low %vm1243, %vm1243
      %vm1266 = vmpackc.low %vm1244, %vm1244
      %vm1267 = vmpackc.low %vm1245, %vm1245
      %vm1268 = vmpackc.low %vm1246, %vm1246
      %vm1269 = vmpackc.low %vm1247, %vm1247
      %vm1270 = vmpackc.low %vm1248, %vm1248
      %vm1271 = vmpackc.low %vm1249, %vm1249
      %vm1272 = vmpackc.low %vm1250, %vm1250
      %vm1273 = vmpackc.low %vm1251, %vm1251
      %vm1274 = vmpackc.low %vm1252, %vm1252
      %vm1275 = vmpackc.low %vm1253, %vm1253
      %v1276 = vsel %vm1254, 65537, 0
      %v1277 = vsel %vm1255, 65537, 0
      %v1278 = vsel %vm1256, 65537, 0
      %v1279 = vsel %vm1257, 65537, 0
      %v1280 = vsel %vm1258, 65537, 0
      %v1281 = vsel %vm1259, 65537, 0
      %v1282 = vsel %vm1260, 65537, 0
      %v1283 = vsel %vm1261, 65537, 0
      %v1284 = vsel %vm1262, 65537, 0
      %v1285 = vsel %vm1263, 65537, 0
      %v1286 = vsel %vm1264, 65537, 0
      %v1287 = vsel %vm1265, 65537, 0
      %v1288 = vsel %vm1266, 65537, 0
      %v1289 = vsel %vm1267, 65537, 0
      %v1290 = vsel %vm1268, 65537, 0
      %v1291 = vsel %vm1269, 65537, 0
      %v1292 = vsel %vm1270, 65537, 0
      %v1293 = vsel %vm1271, 65537, 0
      %v1294 = vsel %vm1272, 65537, 0
      %v1295 = vsel %vm1273, 65537, 0
      %v1296 = vsel %vm1274, 65537, 0
      %v1297 = vsel %vm1275, 65537, 0
      %v1298 = vunpack.c.l.b16 %v1276
      %v1299 = vunpack.c.l.b16 %v1277
      %v1300 = vunpack.c.l.b16 %v1278
      %v1301 = vunpack.c.l.b16 %v1279
      %v1302 = vunpack.c.l.b16 %v1280
      %v1303 = vunpack.c.l.b16 %v1281
      %v1304 = vunpack.c.l.b16 %v1282
      %v1305 = vunpack.c.l.b16 %v1283
      %v1306 = vunpack.c.l.b16 %v1284
      %v1307 = vunpack.c.l.b16 %v1285
      %v1308 = vunpack.c.l.b16 %v1286
      %v1309 = vunpack.c.l.b16 %v1287
      %v1310 = vunpack.c.l.b16 %v1288
      %v1311 = vunpack.c.l.b16 %v1289
      %v1312 = vunpack.c.l.b16 %v1290
      %v1313 = vunpack.c.l.b16 %v1291
      %v1314 = vunpack.c.l.b16 %v1292
      %v1315 = vunpack.c.l.b16 %v1293
      %v1316 = vunpack.c.l.b16 %v1294
      %v1317 = vunpack.c.l.b16 %v1295
      %v1318 = vunpack.c.l.b16 %v1296
      %v1319 = vunpack.c.l.b16 %v1297
      %v1320 = vpack.c.b16 %v1299, %v1298
      %v1321 = vpack.c.b16 %v1301, %v1300
      %v1322 = vpack.c.b16 %v1303, %v1302
      %v1323 = vpack.c.b16 %v1305, %v1304
      %v1324 = vpack.c.b16 %v1307, %v1306
      %v1325 = vpack.c.b16 %v1309, %v1308
      %v1326 = vpack.c.b16 %v1311, %v1310
      %v1327 = vpack.c.b16 %v1313, %v1312
      %v1328 = vpack.c.b16 %v1315, %v1314
      %v1329 = vpack.c.b16 %v1317, %v1316
      %v1330 = vpack.c.b16 %v1319, %v1318
      %vm1331 = vcmp.ne.s16.totalorder %v1320, 0
      %vm1332 = vcmp.ne.s16.totalorder %v1321, 0
      %vm1333 = vcmp.ne.s16.totalorder %v1322, 0
      %vm1334 = vcmp.ne.s16.totalorder %v1323, 0
      %vm1335 = vcmp.ne.s16.totalorder %v1324, 0
      %vm1336 = vcmp.ne.s16.totalorder %v1325, 0
      %vm1337 = vcmp.ne.s16.totalorder %v1326, 0
      %vm1338 = vcmp.ne.s16.totalorder %v1327, 0
      %vm1339 = vcmp.ne.s16.totalorder %v1328, 0
      %vm1340 = vcmp.ne.s16.totalorder %v1329, 0
      %vm1341 = vcmp.ne.s16.totalorder %v1330, 0
      %v1342 = vsel %vm1331, %v672, 0
      %v1343 = vsel %vm1332, %v675, 0
      %v1344 = vsel %vm1333, %v678, 0
      %v1345 = vsel %vm1334, %v681, 0
      %v1346 = vsel %vm1335, %v684, 0
      %v1347 = vsel %vm1336, %v687, 0
      %v1348 = vsel %vm1337, %v690, 0
      %v1349 = vsel %vm1338, %v693, 0
      %v1350 = vsel %vm1339, %v696, 0
      %v1351 = vsel %vm1340, %v699, 0
      %v1352 = vsel %vm1341, %v714, 0
      %v1353 = vld [vmem:[%s3] sm:$0xf]
      %v1354 = vld [vmem:[%s3 + $0x4] sm:$0xf]
      %v1355 = vld [vmem:[%s3 + $0x8] sm:$0xf]
      %v1356 = vld [vmem:[%s3 + $0xc] sm:$0xf]
      %s1357 = scalar_lea.vmem %s3, 16
      %v1358 = vld [vmem:[%s1357] sm:$0xf]
      %v1359 = vld [vmem:[%s1357 + $0x4] sm:$0xf]
      %v1360 = vld [vmem:[%s1357 + $0x8] sm:$0xf]
      %v1361 = vld [vmem:[%s1357 + $0xc] sm:$0xf]
      %v1364 = vrot.slane %v563, 4
      %v1365 = vrot.slane %v565, 4
      %v1366 = vsel %vm542, %v1364, %v1365
      %v1367 = vrot.slane %v545, 4
      %v1368 = vsel %vm542, %v1365, %v1367
      %v1369 = vrot.slane %v547, 4
      %v1370 = vsel %vm542, %v1367, %v1369
      %v1371 = vrot.slane %v549, 4
      %v1372 = vsel %vm542, %v1369, %v1371
      %v1373 = vrot.slane %v551, 4
      %v1374 = vsel %vm542, %v1371, %v1373
      %v1375 = vrot.slane %v553, 4
      %v1376 = vsel %vm542, %v1373, %v1375
      %v1377 = vrot.slane %v555, 4
      %v1378 = vsel %vm542, %v1375, %v1377
      %v1379 = vrot.slane %v557, 4
      %v1380 = vsel %vm542, %v1377, %v1379
      %v1385 = vunpack.c.l.b16 %v1358
      %v1386 = vunpack.c.l.b16 %v1359
      %v1387 = vunpack.c.l.b16 %v1360
      %v1388 = vunpack.c.l.b16 %v1361
      %v1389 = vpack.c.b16 %v1386, %v1385
      %v1390 = vpack.c.b16 %v1388, %v1387
      %vm1393 = vcmask 261120
      %v1395 = vsel %vm1393, %v1366, 0
      %v1398 = vsel %vm1393, %v1368, 0
      %v1401 = vsel %vm1393, %v1370, 0
      %v1404 = vsel %vm1393, %v1372, 0
      %v1407 = vsel %vm1393, %v1374, 0
      %v1410 = vsel %vm1393, %v1376, 0
      %v1413 = vsel %vm1393, %v1378, 0
      %v1416 = vsel %vm1393, %v1380, 0
      %1418 = vmatprep.subr.bf16.mxu0 0
      %1419 = vmatpush1.bf16.msra.mxu0 %v1389
      %1420 = vmatprep.subr.bf16.mxu0 0
      %1421 = vmatpush1.bf16.msra.mxu0 %v1390
      %1422 = vmatprep.subr.bf16.mxu0 0
      %1423 = vmatpush1.bf16.msra.mxu0 0
      %1424 = vmatprep.subr.bf16.mxu0 0
      %1425 = vmatpush1.bf16.msra.mxu0 0
      %1426 = vmatprep.subr.bf16.mxu0 0
      %1427 = vmatpush1.bf16.msra.mxu0 0
      %1428 = vmatprep.subr.bf16.mxu0 0
      %1429 = vmatpush1.bf16.msra.mxu0 0
      %1430 = vmatprep.subr.bf16.mxu0 0
      %1431 = vmatpush1.bf16.msra.mxu0 0
      %1432 = vmatprep.subr.bf16.mxu0 0
      %1433 = vmatpush1.bf16.msra.mxu0 0
      %1434 = vmatprep.subr.bf16.mxu0 0
      %1435 = vmatpush1.bf16.msra.mxu0 0
      %1436 = vmatprep.subr.bf16.mxu0 0
      %1437 = vmatpush1.bf16.msra.mxu0 0
      %1438 = vmatprep.subr.bf16.mxu0 0
      %1439 = vmatpush1.bf16.msra.mxu0 0
      %1440 = vmatprep.subr.bf16.mxu0 0
      %1441 = vmatpush1.bf16.msra.mxu0 0
      %1442 = vmatprep.subr.bf16.mxu0 0
      %1443 = vmatpush1.bf16.msra.mxu0 0
      %1444 = vmatprep.subr.bf16.mxu0 0
      %1445 = vmatpush1.bf16.msra.mxu0 0
      %1446 = vmatprep.subr.bf16.mxu0 0
      %1447 = vmatpush1.bf16.msra.mxu0 0
      %1448 = vmatprep.subr.bf16.mxu0 0
      %1449 = vmatpush1.bf16.msra.mxu0 0
      %1450 = vmatprep.mubr.bf16.mxu0 0
      %1451 = vmatmul.mubr.bf16.gmra.mrb[0].mxu0 %v1395
      %v1452 = vpop.f32.mrb[0].mxu0
      %v1453 = vadd.f32 0.0, %v1452
      %v1454 = vpop.f32.mrb[0].mxu0
      %v1455 = vpop.f32.mrb[0].mxu0
      %v1456 = vadd.f32 0.0, %v1455
      %v1457 = vpop.f32.mrb[0].mxu0
      %1458 = vmatprep.mubr.bf16.mxu0 0
      %1459 = vmatmul.mubr.bf16.gmra.mrb[0].mxu0 %v1398
      %v1460 = vpop.f32.mrb[0].mxu0
      %v1461 = vadd.f32 0.0, %v1460
      %v1462 = vpop.f32.mrb[0].mxu0
      %v1463 = vpop.f32.mrb[0].mxu0
      %v1464 = vadd.f32 0.0, %v1463
      %v1465 = vpop.f32.mrb[0].mxu0
      %1466 = vmatprep.mubr.bf16.mxu0 0
      %1467 = vmatmul.mubr.bf16.gmra.mrb[0].mxu0 %v1401
      %v1468 = vpop.f32.mrb[0].mxu0
      %v1469 = vadd.f32 0.0, %v1468
      %v1470 = vpop.f32.mrb[0].mxu0
      %v1471 = vpop.f32.mrb[0].mxu0
      %v1472 = vadd.f32 0.0, %v1471
      %v1473 = vpop.f32.mrb[0].mxu0
      %1474 = vmatprep.mubr.bf16.mxu0 0
      %1475 = vmatmul.mubr.bf16.gmra.mrb[0].mxu0 %v1404
      %v1476 = vpop.f32.mrb[0].mxu0
      %v1477 = vadd.f32 0.0, %v1476
      %v1478 = vpop.f32.mrb[0].mxu0
      %v1479 = vpop.f32.mrb[0].mxu0
      %v1480 = vadd.f32 0.0, %v1479
      %v1481 = vpop.f32.mrb[0].mxu0
      %1482 = vmatprep.mubr.bf16.mxu0 0
      %1483 = vmatmul.mubr.bf16.gmra.mrb[0].mxu0 %v1407
      %v1484 = vpop.f32.mrb[0].mxu0
      %v1485 = vadd.f32 0.0, %v1484
      %v1486 = vpop.f32.mrb[0].mxu0
      %v1487 = vpop.f32.mrb[0].mxu0
      %v1488 = vadd.f32 0.0, %v1487
      %v1489 = vpop.f32.mrb[0].mxu0
      %1490 = vmatprep.mubr.bf16.mxu0 0
      %1491 = vmatmul.mubr.bf16.gmra.mrb[0].mxu0 %v1410
      %v1492 = vpop.f32.mrb[0].mxu0
      %v1493 = vadd.f32 0.0, %v1492
      %v1494 = vpop.f32.mrb[0].mxu0
      %v1495 = vpop.f32.mrb[0].mxu0
      %v1496 = vadd.f32 0.0, %v1495
      %v1497 = vpop.f32.mrb[0].mxu0
      %1498 = vmatprep.mubr.bf16.mxu0 0
      %1499 = vmatmul.mubr.bf16.gmra.mrb[0].mxu0 %v1413
      %v1500 = vpop.f32.mrb[0].mxu0
      %v1501 = vadd.f32 0.0, %v1500
      %v1502 = vpop.f32.mrb[0].mxu0
      %v1503 = vpop.f32.mrb[0].mxu0
      %v1504 = vadd.f32 0.0, %v1503
      %v1505 = vpop.f32.mrb[0].mxu0
      %1506 = vmatprep.mubr.bf16.mxu0 0
      %1507 = vmatmul.mubr.bf16.gmra.mrb[0].mxu0 %v1416
      %v1508 = vpop.f32.mrb[0].mxu0
      %v1509 = vadd.f32 0.0, %v1508
      %v1510 = vpop.f32.mrb[0].mxu0
      %v1511 = vpop.f32.mrb[0].mxu0
      %v1512 = vadd.f32 0.0, %v1511
      %v1513 = vpop.f32.mrb[0].mxu0
      %1514 = vdwg.mxu0
      %v1524 = vrot.slane %v1177, 4
      %v1525 = vrot.slane %v1178, 4
      %v1526 = vsel %vm542, %v1524, %v1525
      %v1527 = vrot.slane %v1179, 4
      %v1528 = vsel %vm542, %v1525, %v1527
      %v1529 = vrot.slane %v1180, 4
      %v1530 = vsel %vm542, %v1527, %v1529
      %v1531 = vrot.slane %v1181, 4
      %v1532 = vsel %vm542, %v1529, %v1531
      %v1533 = vrot.slane %v1182, 4
      %v1534 = vsel %vm542, %v1531, %v1533
      %v1535 = vrot.slane %v1183, 4
      %v1536 = vsel %vm542, %v1533, %v1535
      %v1537 = vrot.slane %v1184, 4
      %v1538 = vsel %vm542, %v1535, %v1537
      %v1539 = vrot.slane %v1185, 4
      %v1540 = vsel %vm542, %v1537, %v1539
      %v1545 = vunpack.c.l.b16 %v1353
      %v1546 = vunpack.c.l.b16 %v1354
      %v1547 = vunpack.c.l.b16 %v1355
      %v1548 = vunpack.c.l.b16 %v1356
      %v1549 = vpack.c.b16 %v1546, %v1545
      %v1550 = vpack.c.b16 %v1548, %v1547
      %v1554 = vsel %vm1393, %v1526, 0
      %v1557 = vsel %vm1393, %v1528, 0
      %v1560 = vsel %vm1393, %v1530, 0
      %v1563 = vsel %vm1393, %v1532, 0
      %v1566 = vsel %vm1393, %v1534, 0
      %v1569 = vsel %vm1393, %v1536, 0
      %v1572 = vsel %vm1393, %v1538, 0
      %v1575 = vsel %vm1393, %v1540, 0
      %1577 = vmatprep.subr.bf16.mxu0 0
      %1578 = vmatpush1.bf16.msra.mxu0 %v1549
      %1579 = vmatprep.subr.bf16.mxu0 0
      %1580 = vmatpush1.bf16.msra.mxu0 %v1550
      %1581 = vmatprep.subr.bf16.mxu0 0
      %1582 = vmatpush1.bf16.msra.mxu0 0
      %1583 = vmatprep.subr.bf16.mxu0 0
      %1584 = vmatpush1.bf16.msra.mxu0 0
      %1585 = vmatprep.subr.bf16.mxu0 0
      %1586 = vmatpush1.bf16.msra.mxu0 0
      %1587 = vmatprep.subr.bf16.mxu0 0
      %1588 = vmatpush1.bf16.msra.mxu0 0
      %1589 = vmatprep.subr.bf16.mxu0 0
      %1590 = vmatpush1.bf16.msra.mxu0 0
      %1591 = vmatprep.subr.bf16.mxu0 0
      %1592 = vmatpush1.bf16.msra.mxu0 0
      %1593 = vmatprep.subr.bf16.mxu0 0
      %1594 = vmatpush1.bf16.msra.mxu0 0
      %1595 = vmatprep.subr.bf16.mxu0 0
      %1596 = vmatpush1.bf16.msra.mxu0 0
      %1597 = vmatprep.subr.bf16.mxu0 0
      %1598 = vmatpush1.bf16.msra.mxu0 0
      %1599 = vmatprep.subr.bf16.mxu0 0
      %1600 = vmatpush1.bf16.msra.mxu0 0
      %1601 = vmatprep.subr.bf16.mxu0 0
      %1602 = vmatpush1.bf16.msra.mxu0 0
      %1603 = vmatprep.subr.bf16.mxu0 0
      %1604 = vmatpush1.bf16.msra.mxu0 0
      %1605 = vmatprep.subr.bf16.mxu0 0
      %1606 = vmatpush1.bf16.msra.mxu0 0
      %1607 = vmatprep.subr.bf16.mxu0 0
      %1608 = vmatpush1.bf16.msra.mxu0 0
      %1609 = vmatprep.mubr.bf16.mxu0 0
      %1610 = vmatmul.mubr.bf16.gmra.mrb[0].mxu0 %v1554
      %v1611 = vpop.f32.mrb[0].mxu0
      %v1612 = vadd.f32 %v1453, %v1611
      %v1613 = vpop.f32.mrb[0].mxu0
      %v1614 = vpop.f32.mrb[0].mxu0
      %v1615 = vadd.f32 %v1456, %v1614
      %v1616 = vpop.f32.mrb[0].mxu0
      %1617 = vmatprep.mubr.bf16.mxu0 0
      %1618 = vmatmul.mubr.bf16.gmra.mrb[0].mxu0 %v1557
      %v1619 = vpop.f32.mrb[0].mxu0
      %v1620 = vadd.f32 %v1461, %v1619
      %v1621 = vpop.f32.mrb[0].mxu0
      %v1622 = vpop.f32.mrb[0].mxu0
      %v1623 = vadd.f32 %v1464, %v1622
      %v1624 = vpop.f32.mrb[0].mxu0
      %1625 = vmatprep.mubr.bf16.mxu0 0
      %1626 = vmatmul.mubr.bf16.gmra.mrb[0].mxu0 %v1560
      %v1627 = vpop.f32.mrb[0].mxu0
      %v1628 = vadd.f32 %v1469, %v1627
      %v1629 = vpop.f32.mrb[0].mxu0
      %v1630 = vpop.f32.mrb[0].mxu0
      %v1631 = vadd.f32 %v1472, %v1630
      %v1632 = vpop.f32.mrb[0].mxu0
      %1633 = vmatprep.mubr.bf16.mxu0 0
      %1634 = vmatmul.mubr.bf16.gmra.mrb[0].mxu0 %v1563
      %v1635 = vpop.f32.mrb[0].mxu0
      %v1636 = vadd.f32 %v1477, %v1635
      %v1637 = vpop.f32.mrb[0].mxu0
      %v1638 = vpop.f32.mrb[0].mxu0
      %v1639 = vadd.f32 %v1480, %v1638
      %v1640 = vpop.f32.mrb[0].mxu0
      %1641 = vmatprep.mubr.bf16.mxu0 0
      %1642 = vmatmul.mubr.bf16.gmra.mrb[0].mxu0 %v1566
      %v1643 = vpop.f32.mrb[0].mxu0
      %v1644 = vadd.f32 %v1485, %v1643
      %v1645 = vpop.f32.mrb[0].mxu0
      %v1646 = vpop.f32.mrb[0].mxu0
      %v1647 = vadd.f32 %v1488, %v1646
      %v1648 = vpop.f32.mrb[0].mxu0
      %1649 = vmatprep.mubr.bf16.mxu0 0
      %1650 = vmatmul.mubr.bf16.gmra.mrb[0].mxu0 %v1569
      %v1651 = vpop.f32.mrb[0].mxu0
      %v1652 = vadd.f32 %v1493, %v1651
      %v1653 = vpop.f32.mrb[0].mxu0
      %v1654 = vpop.f32.mrb[0].mxu0
      %v1655 = vadd.f32 %v1496, %v1654
      %v1656 = vpop.f32.mrb[0].mxu0
      %1657 = vmatprep.mubr.bf16.mxu0 0
      %1658 = vmatmul.mubr.bf16.gmra.mrb[0].mxu0 %v1572
      %v1659 = vpop.f32.mrb[0].mxu0
      %v1660 = vadd.f32 %v1501, %v1659
      %v1661 = vpop.f32.mrb[0].mxu0
      %v1662 = vpop.f32.mrb[0].mxu0
      %v1663 = vadd.f32 %v1504, %v1662
      %v1664 = vpop.f32.mrb[0].mxu0
      %1665 = vmatprep.mubr.bf16.mxu0 0
      %1666 = vmatmul.mubr.bf16.gmra.mrb[0].mxu0 %v1575
      %v1667 = vpop.f32.mrb[0].mxu0
      %v1668 = vadd.f32 %v1509, %v1667
      %v1669 = vpop.f32.mrb[0].mxu0
      %v1670 = vpop.f32.mrb[0].mxu0
      %v1671 = vadd.f32 %v1512, %v1670
      %v1672 = vpop.f32.mrb[0].mxu0
      %1673 = vdwg.mxu0
      %s1674 = scalar_lea.vmem %s3, 32
      %v1675 = vld [vmem:[%s1674] sm:$0xf]
      %v1676 = vld [vmem:[%s1674 + $0x4] sm:$0xf]
      %v1677 = vld [vmem:[%s1674 + $0x8] sm:$0xf]
      %v1678 = vld [vmem:[%s1674 + $0xc] sm:$0xf]
      %v1688 = vrot.slane %v1342, 4
      %v1689 = vrot.slane %v1343, 4
      %v1690 = vsel %vm542, %v1688, %v1689
      %v1691 = vrot.slane %v1344, 4
      %v1692 = vsel %vm542, %v1689, %v1691
      %v1693 = vrot.slane %v1345, 4
      %v1694 = vsel %vm542, %v1691, %v1693
      %v1695 = vrot.slane %v1346, 4
      %v1696 = vsel %vm542, %v1693, %v1695
      %v1697 = vrot.slane %v1347, 4
      %v1698 = vsel %vm542, %v1695, %v1697
      %v1699 = vrot.slane %v1348, 4
      %v1700 = vsel %vm542, %v1697, %v1699
      %v1701 = vrot.slane %v1349, 4
      %v1702 = vsel %vm542, %v1699, %v1701
      %v1703 = vrot.slane %v1350, 4
      %v1704 = vsel %vm542, %v1701, %v1703
      %v1709 = vunpack.c.l.b16 %v1675
      %v1710 = vunpack.c.l.b16 %v1676
      %v1711 = vunpack.c.l.b16 %v1677
      %v1712 = vunpack.c.l.b16 %v1678
      %v1713 = vpack.c.b16 %v1710, %v1709
      %v1714 = vpack.c.b16 %v1712, %v1711
      %v1718 = vsel %vm1393, %v1690, 0
      %v1721 = vsel %vm1393, %v1692, 0
      %v1724 = vsel %vm1393, %v1694, 0
      %v1727 = vsel %vm1393, %v1696, 0
      %v1730 = vsel %vm1393, %v1698, 0
      %v1733 = vsel %vm1393, %v1700, 0
      %v1736 = vsel %vm1393, %v1702, 0
      %v1739 = vsel %vm1393, %v1704, 0
      %1741 = vmatprep.subr.bf16.mxu0 0
      %1742 = vmatpush1.bf16.msra.mxu0 %v1713
      %1743 = vmatprep.subr.bf16.mxu0 0
      %1744 = vmatpush1.bf16.msra.mxu0 %v1714
      %1745 = vmatprep.subr.bf16.mxu0 0
      %1746 = vmatpush1.bf16.msra.mxu0 0
      %1747 = vmatprep.subr.bf16.mxu0 0
      %1748 = vmatpush1.bf16.msra.mxu0 0
      %1749 = vmatprep.subr.bf16.mxu0 0
      %1750 = vmatpush1.bf16.msra.mxu0 0
      %1751 = vmatprep.subr.bf16.mxu0 0
      %1752 = vmatpush1.bf16.msra.mxu0 0
      %1753 = vmatprep.subr.bf16.mxu0 0
      %1754 = vmatpush1.bf16.msra.mxu0 0
      %1755 = vmatprep.subr.bf16.mxu0 0
      %1756 = vmatpush1.bf16.msra.mxu0 0
      %1757 = vmatprep.subr.bf16.mxu0 0
      %1758 = vmatpush1.bf16.msra.mxu0 0
      %1759 = vmatprep.subr.bf16.mxu0 0
      %1760 = vmatpush1.bf16.msra.mxu0 0
      %1761 = vmatprep.subr.bf16.mxu0 0
      %1762 = vmatpush1.bf16.msra.mxu0 0
      %1763 = vmatprep.subr.bf16.mxu0 0
      %1764 = vmatpush1.bf16.msra.mxu0 0
      %1765 = vmatprep.subr.bf16.mxu0 0
      %1766 = vmatpush1.bf16.msra.mxu0 0
      %1767 = vmatprep.subr.bf16.mxu0 0
      %1768 = vmatpush1.bf16.msra.mxu0 0
      %1769 = vmatprep.subr.bf16.mxu0 0
      %1770 = vmatpush1.bf16.msra.mxu0 0
      %1771 = vmatprep.subr.bf16.mxu0 0
      %1772 = vmatpush1.bf16.msra.mxu0 0
      %1773 = vmatprep.mubr.bf16.mxu0 0
      %1774 = vmatmul.mubr.bf16.gmra.mrb[0].mxu0 %v1718
      %v1775 = vpop.f32.mrb[0].mxu0
      %v1776 = vadd.f32 0.0, %v1775
      %v1777 = vpop.f32.mrb[0].mxu0
      %v1778 = vpop.f32.mrb[0].mxu0
      %v1779 = vadd.f32 0.0, %v1778
      %v1780 = vpop.f32.mrb[0].mxu0
      %1781 = vmatprep.mubr.bf16.mxu0 0
      %1782 = vmatmul.mubr.bf16.gmra.mrb[0].mxu0 %v1721
      %v1783 = vpop.f32.mrb[0].mxu0
      %v1784 = vadd.f32 0.0, %v1783
      %v1785 = vpop.f32.mrb[0].mxu0
      %v1786 = vpop.f32.mrb[0].mxu0
      %v1787 = vadd.f32 0.0, %v1786
      %v1788 = vpop.f32.mrb[0].mxu0
      %1789 = vmatprep.mubr.bf16.mxu0 0
      %1790 = vmatmul.mubr.bf16.gmra.mrb[0].mxu0 %v1724
      %v1791 = vpop.f32.mrb[0].mxu0
      %v1792 = vadd.f32 0.0, %v1791
      %v1793 = vpop.f32.mrb[0].mxu0
      %v1794 = vpop.f32.mrb[0].mxu0
      %v1795 = vadd.f32 0.0, %v1794
      %v1796 = vpop.f32.mrb[0].mxu0
      %1797 = vmatprep.mubr.bf16.mxu0 0
      %1798 = vmatmul.mubr.bf16.gmra.mrb[0].mxu0 %v1727
      %v1799 = vpop.f32.mrb[0].mxu0
      %v1800 = vadd.f32 0.0, %v1799
      %v1801 = vpop.f32.mrb[0].mxu0
      %v1802 = vpop.f32.mrb[0].mxu0
      %v1803 = vadd.f32 0.0, %v1802
      %v1804 = vpop.f32.mrb[0].mxu0
      %1805 = vmatprep.mubr.bf16.mxu0 0
      %1806 = vmatmul.mubr.bf16.gmra.mrb[0].mxu0 %v1730
      %v1807 = vpop.f32.mrb[0].mxu0
      %v1808 = vadd.f32 0.0, %v1807
      %v1809 = vpop.f32.mrb[0].mxu0
      %v1810 = vpop.f32.mrb[0].mxu0
      %v1811 = vadd.f32 0.0, %v1810
      %v1812 = vpop.f32.mrb[0].mxu0
      %1813 = vmatprep.mubr.bf16.mxu0 0
      %1814 = vmatmul.mubr.bf16.gmra.mrb[0].mxu0 %v1733
      %v1815 = vpop.f32.mrb[0].mxu0
      %v1816 = vadd.f32 0.0, %v1815
      %v1817 = vpop.f32.mrb[0].mxu0
      %v1818 = vpop.f32.mrb[0].mxu0
      %v1819 = vadd.f32 0.0, %v1818
      %v1820 = vpop.f32.mrb[0].mxu0
      %1821 = vmatprep.mubr.bf16.mxu0 0
      %1822 = vmatmul.mubr.bf16.gmra.mrb[0].mxu0 %v1736
      %v1823 = vpop.f32.mrb[0].mxu0
      %v1824 = vadd.f32 0.0, %v1823
      %v1825 = vpop.f32.mrb[0].mxu0
      %v1826 = vpop.f32.mrb[0].mxu0
      %v1827 = vadd.f32 0.0, %v1826
      %v1828 = vpop.f32.mrb[0].mxu0
      %1829 = vmatprep.mubr.bf16.mxu0 0
      %1830 = vmatmul.mubr.bf16.gmra.mrb[0].mxu0 %v1739
      %v1831 = vpop.f32.mrb[0].mxu0
      %v1832 = vadd.f32 0.0, %v1831
      %v1833 = vpop.f32.mrb[0].mxu0
      %v1834 = vpop.f32.mrb[0].mxu0
      %v1835 = vadd.f32 0.0, %v1834
      %v1836 = vpop.f32.mrb[0].mxu0
      %1837 = vdwg.mxu0
      %v1838 = vadd.f32 %v1612, %v1776
      %v1839 = vadd.f32 %v1615, %v1779
      %v1840 = vadd.f32 %v1620, %v1784
      %v1841 = vadd.f32 %v1623, %v1787
      %v1842 = vadd.f32 %v1628, %v1792
      %v1843 = vadd.f32 %v1631, %v1795
      %v1844 = vadd.f32 %v1636, %v1800
      %v1845 = vadd.f32 %v1639, %v1803
      %v1846 = vadd.f32 %v1644, %v1808
      %v1847 = vadd.f32 %v1647, %v1811
      %v1848 = vadd.f32 %v1652, %v1816
      %v1849 = vadd.f32 %v1655, %v1819
      %v1850 = vadd.f32 %v1660, %v1824
      %v1851 = vadd.f32 %v1663, %v1827
      %v1852 = vadd.f32 %v1668, %v1832
      %v1853 = vadd.f32 %v1671, %v1835
      %s1854 = scalar_lea.vmem %s3, 48
      %v1855 = vld [vmem:[%s1854] sm:$0xf]
      %v1856 = vld [vmem:[%s1854 + $0x4] sm:$0xf]
      %v1857 = vld [vmem:[%s1854 + $0x8] sm:$0xf]
      %v1858 = vld [vmem:[%s1854 + $0xc] sm:$0xf]
      %v1860 = vrot.slane %v1186, 4
      %v1861 = vsel %vm542, %v1539, %v1860
      %v1866 = vunpack.c.l.b16 %v1855
      %v1867 = vunpack.c.l.b16 %v1856
      %v1868 = vunpack.c.l.b16 %v1857
      %v1869 = vunpack.c.l.b16 %v1858
      %v1870 = vpack.c.b16 %v1867, %v1866
      %v1871 = vpack.c.b16 %v1869, %v1868
      %v1875 = vsel %vm1393, %v1861, 0
      %1877 = vmatprep.subr.bf16.mxu0 0
      %1878 = vmatpush1.bf16.msra.mxu0 %v1870
      %1879 = vmatprep.subr.bf16.mxu0 0
      %1880 = vmatpush1.bf16.msra.mxu0 %v1871
      %1881 = vmatprep.subr.bf16.mxu0 0
      %1882 = vmatpush1.bf16.msra.mxu0 0
      %1883 = vmatprep.subr.bf16.mxu0 0
      %1884 = vmatpush1.bf16.msra.mxu0 0
      %1885 = vmatprep.subr.bf16.mxu0 0
      %1886 = vmatpush1.bf16.msra.mxu0 0
      %1887 = vmatprep.subr.bf16.mxu0 0
      %1888 = vmatpush1.bf16.msra.mxu0 0
      %1889 = vmatprep.subr.bf16.mxu0 0
      %1890 = vmatpush1.bf16.msra.mxu0 0
      %1891 = vmatprep.subr.bf16.mxu0 0
      %1892 = vmatpush1.bf16.msra.mxu0 0
      %1893 = vmatprep.subr.bf16.mxu0 0
      %1894 = vmatpush1.bf16.msra.mxu0 0
      %1895 = vmatprep.subr.bf16.mxu0 0
      %1896 = vmatpush1.bf16.msra.mxu0 0
      %1897 = vmatprep.subr.bf16.mxu0 0
      %1898 = vmatpush1.bf16.msra.mxu0 0
      %1899 = vmatprep.subr.bf16.mxu0 0
      %1900 = vmatpush1.bf16.msra.mxu0 0
      %1901 = vmatprep.subr.bf16.mxu0 0
      %1902 = vmatpush1.bf16.msra.mxu0 0
      %1903 = vmatprep.subr.bf16.mxu0 0
      %1904 = vmatpush1.bf16.msra.mxu0 0
      %1905 = vmatprep.subr.bf16.mxu0 0
      %1906 = vmatpush1.bf16.msra.mxu0 0
      %1907 = vmatprep.subr.bf16.mxu0 0
      %1908 = vmatpush1.bf16.msra.mxu0 0
      %1909 = vmatprep.mubr.bf16.mxu0 0
      %1910 = vmatmul.mubr.bf16.gmra.mrb[0].mxu0 %v1557
      %v1911 = vpop.f32.mrb[0].mxu0
      %v1912 = vadd.f32 0.0, %v1911
      %v1913 = vpop.f32.mrb[0].mxu0
      %v1914 = vpop.f32.mrb[0].mxu0
      %v1915 = vadd.f32 0.0, %v1914
      %v1916 = vpop.f32.mrb[0].mxu0
      %1917 = vmatprep.mubr.bf16.mxu0 0
      %1918 = vmatmul.mubr.bf16.gmra.mrb[0].mxu0 %v1560
      %v1919 = vpop.f32.mrb[0].mxu0
      %v1920 = vadd.f32 0.0, %v1919
      %v1921 = vpop.f32.mrb[0].mxu0
      %v1922 = vpop.f32.mrb[0].mxu0
      %v1923 = vadd.f32 0.0, %v1922
      %v1924 = vpop.f32.mrb[0].mxu0
      %1925 = vmatprep.mubr.bf16.mxu0 0
      %1926 = vmatmul.mubr.bf16.gmra.mrb[0].mxu0 %v1563
      %v1927 = vpop.f32.mrb[0].mxu0
      %v1928 = vadd.f32 0.0, %v1927
      %v1929 = vpop.f32.mrb[0].mxu0
      %v1930 = vpop.f32.mrb[0].mxu0
      %v1931 = vadd.f32 0.0, %v1930
      %v1932 = vpop.f32.mrb[0].mxu0
      %1933 = vmatprep.mubr.bf16.mxu0 0
      %1934 = vmatmul.mubr.bf16.gmra.mrb[0].mxu0 %v1566
      %v1935 = vpop.f32.mrb[0].mxu0
      %v1936 = vadd.f32 0.0, %v1935
      %v1937 = vpop.f32.mrb[0].mxu0
      %v1938 = vpop.f32.mrb[0].mxu0
      %v1939 = vadd.f32 0.0, %v1938
      %v1940 = vpop.f32.mrb[0].mxu0
      %1941 = vmatprep.mubr.bf16.mxu0 0
      %1942 = vmatmul.mubr.bf16.gmra.mrb[0].mxu0 %v1569
      %v1943 = vpop.f32.mrb[0].mxu0
      %v1944 = vadd.f32 0.0, %v1943
      %v1945 = vpop.f32.mrb[0].mxu0
      %v1946 = vpop.f32.mrb[0].mxu0
      %v1947 = vadd.f32 0.0, %v1946
      %v1948 = vpop.f32.mrb[0].mxu0
      %1949 = vmatprep.mubr.bf16.mxu0 0
      %1950 = vmatmul.mubr.bf16.gmra.mrb[0].mxu0 %v1572
      %v1951 = vpop.f32.mrb[0].mxu0
      %v1952 = vadd.f32 0.0, %v1951
      %v1953 = vpop.f32.mrb[0].mxu0
      %v1954 = vpop.f32.mrb[0].mxu0
      %v1955 = vadd.f32 0.0, %v1954
      %v1956 = vpop.f32.mrb[0].mxu0
      %1957 = vmatprep.mubr.bf16.mxu0 0
      %1958 = vmatmul.mubr.bf16.gmra.mrb[0].mxu0 %v1575
      %v1959 = vpop.f32.mrb[0].mxu0
      %v1960 = vadd.f32 0.0, %v1959
      %v1961 = vpop.f32.mrb[0].mxu0
      %v1962 = vpop.f32.mrb[0].mxu0
      %v1963 = vadd.f32 0.0, %v1962
      %v1964 = vpop.f32.mrb[0].mxu0
      %1965 = vmatprep.mubr.bf16.mxu0 0
      %1966 = vmatmul.mubr.bf16.gmra.mrb[0].mxu0 %v1875
      %v1967 = vpop.f32.mrb[0].mxu0
      %v1968 = vadd.f32 0.0, %v1967
      %v1969 = vpop.f32.mrb[0].mxu0
      %v1970 = vpop.f32.mrb[0].mxu0
      %v1971 = vadd.f32 0.0, %v1970
      %v1972 = vpop.f32.mrb[0].mxu0
      %1973 = vdwg.mxu0
      %v1974 = vadd.f32 %v1838, %v1912
      %v1975 = vadd.f32 %v1839, %v1915
      %v1976 = vadd.f32 %v1840, %v1920
      %v1977 = vadd.f32 %v1841, %v1923
      %v1978 = vadd.f32 %v1842, %v1928
      %v1979 = vadd.f32 %v1843, %v1931
      %v1980 = vadd.f32 %v1844, %v1936
      %v1981 = vadd.f32 %v1845, %v1939
      %v1982 = vadd.f32 %v1846, %v1944
      %v1983 = vadd.f32 %v1847, %v1947
      %v1984 = vadd.f32 %v1848, %v1952
      %v1985 = vadd.f32 %v1849, %v1955
      %v1986 = vadd.f32 %v1850, %v1960
      %v1987 = vadd.f32 %v1851, %v1963
      %v1988 = vadd.f32 %v1852, %v1968
      %v1989 = vadd.f32 %v1853, %v1971
      %s1990 = scalar_lea.vmem %s3, 64
      %v1991 = vld [vmem:[%s1990] sm:$0xf]
      %v1992 = vld [vmem:[%s1990 + $0x4] sm:$0xf]
      %v1993 = vld [vmem:[%s1990 + $0x8] sm:$0xf]
      %v1994 = vld [vmem:[%s1990 + $0xc] sm:$0xf]
      %v1996 = vrot.slane %v568, 4
      %v1997 = vsel %vm542, %v1379, %v1996
      %v2002 = vunpack.c.l.b16 %v1991
      %v2003 = vunpack.c.l.b16 %v1992
      %v2004 = vunpack.c.l.b16 %v1993
      %v2005 = vunpack.c.l.b16 %v1994
      %v2006 = vpack.c.b16 %v2003, %v2002
      %v2007 = vpack.c.b16 %v2005, %v2004
      %v2011 = vsel %vm1393, %v1997, 0
      %2013 = vmatprep.subr.bf16.mxu0 0
      %2014 = vmatpush1.bf16.msra.mxu0 %v2006
      %2015 = vmatprep.subr.bf16.mxu0 0
      %2016 = vmatpush1.bf16.msra.mxu0 %v2007
      %2017 = vmatprep.subr.bf16.mxu0 0
      %2018 = vmatpush1.bf16.msra.mxu0 0
      %2019 = vmatprep.subr.bf16.mxu0 0
      %2020 = vmatpush1.bf16.msra.mxu0 0
      %2021 = vmatprep.subr.bf16.mxu0 0
      %2022 = vmatpush1.bf16.msra.mxu0 0
      %2023 = vmatprep.subr.bf16.mxu0 0
      %2024 = vmatpush1.bf16.msra.mxu0 0
      %2025 = vmatprep.subr.bf16.mxu0 0
      %2026 = vmatpush1.bf16.msra.mxu0 0
      %2027 = vmatprep.subr.bf16.mxu0 0
      %2028 = vmatpush1.bf16.msra.mxu0 0
      %2029 = vmatprep.subr.bf16.mxu0 0
      %2030 = vmatpush1.bf16.msra.mxu0 0
      %2031 = vmatprep.subr.bf16.mxu0 0
      %2032 = vmatpush1.bf16.msra.mxu0 0
      %2033 = vmatprep.subr.bf16.mxu0 0
      %2034 = vmatpush1.bf16.msra.mxu0 0
      %2035 = vmatprep.subr.bf16.mxu0 0
      %2036 = vmatpush1.bf16.msra.mxu0 0
      %2037 = vmatprep.subr.bf16.mxu0 0
      %2038 = vmatpush1.bf16.msra.mxu0 0
      %2039 = vmatprep.subr.bf16.mxu0 0
      %2040 = vmatpush1.bf16.msra.mxu0 0
      %2041 = vmatprep.subr.bf16.mxu0 0
      %2042 = vmatpush1.bf16.msra.mxu0 0
      %2043 = vmatprep.subr.bf16.mxu0 0
      %2044 = vmatpush1.bf16.msra.mxu0 0
      %2045 = vmatprep.mubr.bf16.mxu0 0
      %2046 = vmatmul.mubr.bf16.gmra.mrb[0].mxu0 %v1398
      %v2047 = vpop.f32.mrb[0].mxu0
      %v2048 = vadd.f32 0.0, %v2047
      %v2049 = vpop.f32.mrb[0].mxu0
      %v2050 = vpop.f32.mrb[0].mxu0
      %v2051 = vadd.f32 0.0, %v2050
      %v2052 = vpop.f32.mrb[0].mxu0
      %2053 = vmatprep.mubr.bf16.mxu0 0
      %2054 = vmatmul.mubr.bf16.gmra.mrb[0].mxu0 %v1401
      %v2055 = vpop.f32.mrb[0].mxu0
      %v2056 = vadd.f32 0.0, %v2055
      %v2057 = vpop.f32.mrb[0].mxu0
      %v2058 = vpop.f32.mrb[0].mxu0
      %v2059 = vadd.f32 0.0, %v2058
      %v2060 = vpop.f32.mrb[0].mxu0
      %2061 = vmatprep.mubr.bf16.mxu0 0
      %2062 = vmatmul.mubr.bf16.gmra.mrb[0].mxu0 %v1404
      %v2063 = vpop.f32.mrb[0].mxu0
      %v2064 = vadd.f32 0.0, %v2063
      %v2065 = vpop.f32.mrb[0].mxu0
      %v2066 = vpop.f32.mrb[0].mxu0
      %v2067 = vadd.f32 0.0, %v2066
      %v2068 = vpop.f32.mrb[0].mxu0
      %2069 = vmatprep.mubr.bf16.mxu0 0
      %2070 = vmatmul.mubr.bf16.gmra.mrb[0].mxu0 %v1407
      %v2071 = vpop.f32.mrb[0].mxu0
      %v2072 = vadd.f32 0.0, %v2071
      %v2073 = vpop.f32.mrb[0].mxu0
      %v2074 = vpop.f32.mrb[0].mxu0
      %v2075 = vadd.f32 0.0, %v2074
      %v2076 = vpop.f32.mrb[0].mxu0
      %2077 = vmatprep.mubr.bf16.mxu0 0
      %2078 = vmatmul.mubr.bf16.gmra.mrb[0].mxu0 %v1410
      %v2079 = vpop.f32.mrb[0].mxu0
      %v2080 = vadd.f32 0.0, %v2079
      %v2081 = vpop.f32.mrb[0].mxu0
      %v2082 = vpop.f32.mrb[0].mxu0
      %v2083 = vadd.f32 0.0, %v2082
      %v2084 = vpop.f32.mrb[0].mxu0
      %2085 = vmatprep.mubr.bf16.mxu0 0
      %2086 = vmatmul.mubr.bf16.gmra.mrb[0].mxu0 %v1413
      %v2087 = vpop.f32.mrb[0].mxu0
      %v2088 = vadd.f32 0.0, %v2087
      %v2089 = vpop.f32.mrb[0].mxu0
      %v2090 = vpop.f32.mrb[0].mxu0
      %v2091 = vadd.f32 0.0, %v2090
      %v2092 = vpop.f32.mrb[0].mxu0
      %2093 = vmatprep.mubr.bf16.mxu0 0
      %2094 = vmatmul.mubr.bf16.gmra.mrb[0].mxu0 %v1416
      %v2095 = vpop.f32.mrb[0].mxu0
      %v2096 = vadd.f32 0.0, %v2095
      %v2097 = vpop.f32.mrb[0].mxu0
      %v2098 = vpop.f32.mrb[0].mxu0
      %v2099 = vadd.f32 0.0, %v2098
      %v2100 = vpop.f32.mrb[0].mxu0
      %2101 = vmatprep.mubr.bf16.mxu0 0
      %2102 = vmatmul.mubr.bf16.gmra.mrb[0].mxu0 %v2011
      %v2103 = vpop.f32.mrb[0].mxu0
      %v2104 = vadd.f32 0.0, %v2103
      %v2105 = vpop.f32.mrb[0].mxu0
      %v2106 = vpop.f32.mrb[0].mxu0
      %v2107 = vadd.f32 0.0, %v2106
      %v2108 = vpop.f32.mrb[0].mxu0
      %2109 = vdwg.mxu0
      %v2110 = vadd.f32 %v1974, %v2048
      %v2111 = vadd.f32 %v1975, %v2051
      %v2112 = vadd.f32 %v1976, %v2056
      %v2113 = vadd.f32 %v1977, %v2059
      %v2114 = vadd.f32 %v1978, %v2064
      %v2115 = vadd.f32 %v1979, %v2067
      %v2116 = vadd.f32 %v1980, %v2072
      %v2117 = vadd.f32 %v1981, %v2075
      %v2118 = vadd.f32 %v1982, %v2080
      %v2119 = vadd.f32 %v1983, %v2083
      %v2120 = vadd.f32 %v1984, %v2088
      %v2121 = vadd.f32 %v1985, %v2091
      %v2122 = vadd.f32 %v1986, %v2096
      %v2123 = vadd.f32 %v1987, %v2099
      %v2124 = vadd.f32 %v1988, %v2104
      %v2125 = vadd.f32 %v1989, %v2107
      %s2126 = scalar_lea.vmem %s3, 80
      %v2127 = vld [vmem:[%s2126] sm:$0xf]
      %v2128 = vld [vmem:[%s2126 + $0x4] sm:$0xf]
      %v2129 = vld [vmem:[%s2126 + $0x8] sm:$0xf]
      %v2130 = vld [vmem:[%s2126 + $0xc] sm:$0xf]
      %v2132 = vrot.slane %v1351, 4
      %v2133 = vsel %vm542, %v1703, %v2132
      %v2138 = vunpack.c.l.b16 %v2127
      %v2139 = vunpack.c.l.b16 %v2128
      %v2140 = vunpack.c.l.b16 %v2129
      %v2141 = vunpack.c.l.b16 %v2130
      %v2142 = vpack.c.b16 %v2139, %v2138
      %v2143 = vpack.c.b16 %v2141, %v2140
      %v2147 = vsel %vm1393, %v2133, 0
      %2149 = vmatprep.subr.bf16.mxu0 0
      %2150 = vmatpush1.bf16.msra.mxu0 %v2142
      %2151 = vmatprep.subr.bf16.mxu0 0
      %2152 = vmatpush1.bf16.msra.mxu0 %v2143
      %2153 = vmatprep.subr.bf16.mxu0 0
      %2154 = vmatpush1.bf16.msra.mxu0 0
      %2155 = vmatprep.subr.bf16.mxu0 0
      %2156 = vmatpush1.bf16.msra.mxu0 0
      %2157 = vmatprep.subr.bf16.mxu0 0
      %2158 = vmatpush1.bf16.msra.mxu0 0
      %2159 = vmatprep.subr.bf16.mxu0 0
      %2160 = vmatpush1.bf16.msra.mxu0 0
      %2161 = vmatprep.subr.bf16.mxu0 0
      %2162 = vmatpush1.bf16.msra.mxu0 0
      %2163 = vmatprep.subr.bf16.mxu0 0
      %2164 = vmatpush1.bf16.msra.mxu0 0
      %2165 = vmatprep.subr.bf16.mxu0 0
      %2166 = vmatpush1.bf16.msra.mxu0 0
      %2167 = vmatprep.subr.bf16.mxu0 0
      %2168 = vmatpush1.bf16.msra.mxu0 0
      %2169 = vmatprep.subr.bf16.mxu0 0
      %2170 = vmatpush1.bf16.msra.mxu0 0
      %2171 = vmatprep.subr.bf16.mxu0 0
      %2172 = vmatpush1.bf16.msra.mxu0 0
      %2173 = vmatprep.subr.bf16.mxu0 0
      %2174 = vmatpush1.bf16.msra.mxu0 0
      %2175 = vmatprep.subr.bf16.mxu0 0
      %2176 = vmatpush1.bf16.msra.mxu0 0
      %2177 = vmatprep.subr.bf16.mxu0 0
      %2178 = vmatpush1.bf16.msra.mxu0 0
      %2179 = vmatprep.subr.bf16.mxu0 0
      %2180 = vmatpush1.bf16.msra.mxu0 0
      %2181 = vmatprep.mubr.bf16.mxu0 0
      %2182 = vmatmul.mubr.bf16.gmra.mrb[0].mxu0 %v1721
      %v2183 = vpop.f32.mrb[0].mxu0
      %v2184 = vadd.f32 0.0, %v2183
      %v2185 = vpop.f32.mrb[0].mxu0
      %v2186 = vpop.f32.mrb[0].mxu0
      %v2187 = vadd.f32 0.0, %v2186
      %v2188 = vpop.f32.mrb[0].mxu0
      %2189 = vmatprep.mubr.bf16.mxu0 0
      %2190 = vmatmul.mubr.bf16.gmra.mrb[0].mxu0 %v1724
      %v2191 = vpop.f32.mrb[0].mxu0
      %v2192 = vadd.f32 0.0, %v2191
      %v2193 = vpop.f32.mrb[0].mxu0
      %v2194 = vpop.f32.mrb[0].mxu0
      %v2195 = vadd.f32 0.0, %v2194
      %v2196 = vpop.f32.mrb[0].mxu0
      %2197 = vmatprep.mubr.bf16.mxu0 0
      %2198 = vmatmul.mubr.bf16.gmra.mrb[0].mxu0 %v1727
      %v2199 = vpop.f32.mrb[0].mxu0
      %v2200 = vadd.f32 0.0, %v2199
      %v2201 = vpop.f32.mrb[0].mxu0
      %v2202 = vpop.f32.mrb[0].mxu0
      %v2203 = vadd.f32 0.0, %v2202
      %v2204 = vpop.f32.mrb[0].mxu0
      %2205 = vmatprep.mubr.bf16.mxu0 0
      %2206 = vmatmul.mubr.bf16.gmra.mrb[0].mxu0 %v1730
      %v2207 = vpop.f32.mrb[0].mxu0
      %v2208 = vadd.f32 0.0, %v2207
      %v2209 = vpop.f32.mrb[0].mxu0
      %v2210 = vpop.f32.mrb[0].mxu0
      %v2211 = vadd.f32 0.0, %v2210
      %v2212 = vpop.f32.mrb[0].mxu0
      %2213 = vmatprep.mubr.bf16.mxu0 0
      %2214 = vmatmul.mubr.bf16.gmra.mrb[0].mxu0 %v1733
      %v2215 = vpop.f32.mrb[0].mxu0
      %v2216 = vadd.f32 0.0, %v2215
      %v2217 = vpop.f32.mrb[0].mxu0
      %v2218 = vpop.f32.mrb[0].mxu0
      %v2219 = vadd.f32 0.0, %v2218
      %v2220 = vpop.f32.mrb[0].mxu0
      %2221 = vmatprep.mubr.bf16.mxu0 0
      %2222 = vmatmul.mubr.bf16.gmra.mrb[0].mxu0 %v1736
      %v2223 = vpop.f32.mrb[0].mxu0
      %v2224 = vadd.f32 0.0, %v2223
      %v2225 = vpop.f32.mrb[0].mxu0
      %v2226 = vpop.f32.mrb[0].mxu0
      %v2227 = vadd.f32 0.0, %v2226
      %v2228 = vpop.f32.mrb[0].mxu0
      %2229 = vmatprep.mubr.bf16.mxu0 0
      %2230 = vmatmul.mubr.bf16.gmra.mrb[0].mxu0 %v1739
      %v2231 = vpop.f32.mrb[0].mxu0
      %v2232 = vadd.f32 0.0, %v2231
      %v2233 = vpop.f32.mrb[0].mxu0
      %v2234 = vpop.f32.mrb[0].mxu0
      %v2235 = vadd.f32 0.0, %v2234
      %v2236 = vpop.f32.mrb[0].mxu0
      %2237 = vmatprep.mubr.bf16.mxu0 0
      %2238 = vmatmul.mubr.bf16.gmra.mrb[0].mxu0 %v2147
      %v2239 = vpop.f32.mrb[0].mxu0
      %v2240 = vadd.f32 0.0, %v2239
      %v2241 = vpop.f32.mrb[0].mxu0
      %v2242 = vpop.f32.mrb[0].mxu0
      %v2243 = vadd.f32 0.0, %v2242
      %v2244 = vpop.f32.mrb[0].mxu0
      %2245 = vdwg.mxu0
      %v2246 = vadd.f32 %v2110, %v2184
      %v2247 = vadd.f32 %v2111, %v2187
      %v2248 = vadd.f32 %v2112, %v2192
      %v2249 = vadd.f32 %v2113, %v2195
      %v2250 = vadd.f32 %v2114, %v2200
      %v2251 = vadd.f32 %v2115, %v2203
      %v2252 = vadd.f32 %v2116, %v2208
      %v2253 = vadd.f32 %v2117, %v2211
      %v2254 = vadd.f32 %v2118, %v2216
      %v2255 = vadd.f32 %v2119, %v2219
      %v2256 = vadd.f32 %v2120, %v2224
      %v2257 = vadd.f32 %v2121, %v2227
      %v2258 = vadd.f32 %v2122, %v2232
      %v2259 = vadd.f32 %v2123, %v2235
      %v2260 = vadd.f32 %v2124, %v2240
      %v2261 = vadd.f32 %v2125, %v2243
      %s2262 = scalar_lea.vmem %s3, 96
      %v2263 = vld [vmem:[%s2262] sm:$0xf]
      %v2264 = vld [vmem:[%s2262 + $0x4] sm:$0xf]
      %v2265 = vld [vmem:[%s2262 + $0x8] sm:$0xf]
      %v2266 = vld [vmem:[%s2262 + $0xc] sm:$0xf]
      %v2268 = vrot.slane %v1187, 4
      %v2269 = vsel %vm542, %v1860, %v2268
      %v2274 = vunpack.c.l.b16 %v2263
      %v2275 = vunpack.c.l.b16 %v2264
      %v2276 = vunpack.c.l.b16 %v2265
      %v2277 = vunpack.c.l.b16 %v2266
      %v2278 = vpack.c.b16 %v2275, %v2274
      %v2279 = vpack.c.b16 %v2277, %v2276
      %v2283 = vsel %vm1393, %v2269, 0
      %2285 = vmatprep.subr.bf16.mxu0 0
      %2286 = vmatpush1.bf16.msra.mxu0 %v2278
      %2287 = vmatprep.subr.bf16.mxu0 0
      %2288 = vmatpush1.bf16.msra.mxu0 %v2279
      %2289 = vmatprep.subr.bf16.mxu0 0
      %2290 = vmatpush1.bf16.msra.mxu0 0
      %2291 = vmatprep.subr.bf16.mxu0 0
      %2292 = vmatpush1.bf16.msra.mxu0 0
      %2293 = vmatprep.subr.bf16.mxu0 0
      %2294 = vmatpush1.bf16.msra.mxu0 0
      %2295 = vmatprep.subr.bf16.mxu0 0
      %2296 = vmatpush1.bf16.msra.mxu0 0
      %2297 = vmatprep.subr.bf16.mxu0 0
      %2298 = vmatpush1.bf16.msra.mxu0 0
      %2299 = vmatprep.subr.bf16.mxu0 0
      %2300 = vmatpush1.bf16.msra.mxu0 0
      %2301 = vmatprep.subr.bf16.mxu0 0
      %2302 = vmatpush1.bf16.msra.mxu0 0
      %2303 = vmatprep.subr.bf16.mxu0 0
      %2304 = vmatpush1.bf16.msra.mxu0 0
      %2305 = vmatprep.subr.bf16.mxu0 0
      %2306 = vmatpush1.bf16.msra.mxu0 0
      %2307 = vmatprep.subr.bf16.mxu0 0
      %2308 = vmatpush1.bf16.msra.mxu0 0
      %2309 = vmatprep.subr.bf16.mxu0 0
      %2310 = vmatpush1.bf16.msra.mxu0 0
      %2311 = vmatprep.subr.bf16.mxu0 0
      %2312 = vmatpush1.bf16.msra.mxu0 0
      %2313 = vmatprep.subr.bf16.mxu0 0
      %2314 = vmatpush1.bf16.msra.mxu0 0
      %2315 = vmatprep.subr.bf16.mxu0 0
      %2316 = vmatpush1.bf16.msra.mxu0 0
      %2317 = vmatprep.mubr.bf16.mxu0 0
      %2318 = vmatmul.mubr.bf16.gmra.mrb[0].mxu0 %v1560
      %v2319 = vpop.f32.mrb[0].mxu0
      %v2320 = vadd.f32 0.0, %v2319
      %v2321 = vpop.f32.mrb[0].mxu0
      %v2322 = vpop.f32.mrb[0].mxu0
      %v2323 = vadd.f32 0.0, %v2322
      %v2324 = vpop.f32.mrb[0].mxu0
      %2325 = vmatprep.mubr.bf16.mxu0 0
      %2326 = vmatmul.mubr.bf16.gmra.mrb[0].mxu0 %v1563
      %v2327 = vpop.f32.mrb[0].mxu0
      %v2328 = vadd.f32 0.0, %v2327
      %v2329 = vpop.f32.mrb[0].mxu0
      %v2330 = vpop.f32.mrb[0].mxu0
      %v2331 = vadd.f32 0.0, %v2330
      %v2332 = vpop.f32.mrb[0].mxu0
      %2333 = vmatprep.mubr.bf16.mxu0 0
      %2334 = vmatmul.mubr.bf16.gmra.mrb[0].mxu0 %v1566
      %v2335 = vpop.f32.mrb[0].mxu0
      %v2336 = vadd.f32 0.0, %v2335
      %v2337 = vpop.f32.mrb[0].mxu0
      %v2338 = vpop.f32.mrb[0].mxu0
      %v2339 = vadd.f32 0.0, %v2338
      %v2340 = vpop.f32.mrb[0].mxu0
      %2341 = vmatprep.mubr.bf16.mxu0 0
      %2342 = vmatmul.mubr.bf16.gmra.mrb[0].mxu0 %v1569
      %v2343 = vpop.f32.mrb[0].mxu0
      %v2344 = vadd.f32 0.0, %v2343
      %v2345 = vpop.f32.mrb[0].mxu0
      %v2346 = vpop.f32.mrb[0].mxu0
      %v2347 = vadd.f32 0.0, %v2346
      %v2348 = vpop.f32.mrb[0].mxu0
      %2349 = vmatprep.mubr.bf16.mxu0 0
      %2350 = vmatmul.mubr.bf16.gmra.mrb[0].mxu0 %v1572
      %v2351 = vpop.f32.mrb[0].mxu0
      %v2352 = vadd.f32 0.0, %v2351
      %v2353 = vpop.f32.mrb[0].mxu0
      %v2354 = vpop.f32.mrb[0].mxu0
      %v2355 = vadd.f32 0.0, %v2354
      %v2356 = vpop.f32.mrb[0].mxu0
      %2357 = vmatprep.mubr.bf16.mxu0 0
      %2358 = vmatmul.mubr.bf16.gmra.mrb[0].mxu0 %v1575
      %v2359 = vpop.f32.mrb[0].mxu0
      %v2360 = vadd.f32 0.0, %v2359
      %v2361 = vpop.f32.mrb[0].mxu0
      %v2362 = vpop.f32.mrb[0].mxu0
      %v2363 = vadd.f32 0.0, %v2362
      %v2364 = vpop.f32.mrb[0].mxu0
      %2365 = vmatprep.mubr.bf16.mxu0 0
      %2366 = vmatmul.mubr.bf16.gmra.mrb[0].mxu0 %v1875
      %v2367 = vpop.f32.mrb[0].mxu0
      %v2368 = vadd.f32 0.0, %v2367
      %v2369 = vpop.f32.mrb[0].mxu0
      %v2370 = vpop.f32.mrb[0].mxu0
      %v2371 = vadd.f32 0.0, %v2370
      %v2372 = vpop.f32.mrb[0].mxu0
      %2373 = vmatprep.mubr.bf16.mxu0 0
      %2374 = vmatmul.mubr.bf16.gmra.mrb[0].mxu0 %v2283
      %v2375 = vpop.f32.mrb[0].mxu0
      %v2376 = vadd.f32 0.0, %v2375
      %v2377 = vpop.f32.mrb[0].mxu0
      %v2378 = vpop.f32.mrb[0].mxu0
      %v2379 = vadd.f32 0.0, %v2378
      %v2380 = vpop.f32.mrb[0].mxu0
      %2381 = vdwg.mxu0
      %v2382 = vadd.f32 %v2246, %v2320
      %v2383 = vadd.f32 %v2247, %v2323
      %v2384 = vadd.f32 %v2248, %v2328
      %v2385 = vadd.f32 %v2249, %v2331
      %v2386 = vadd.f32 %v2250, %v2336
      %v2387 = vadd.f32 %v2251, %v2339
      %v2388 = vadd.f32 %v2252, %v2344
      %v2389 = vadd.f32 %v2253, %v2347
      %v2390 = vadd.f32 %v2254, %v2352
      %v2391 = vadd.f32 %v2255, %v2355
      %v2392 = vadd.f32 %v2256, %v2360
      %v2393 = vadd.f32 %v2257, %v2363
      %v2394 = vadd.f32 %v2258, %v2368
      %v2395 = vadd.f32 %v2259, %v2371
      %v2396 = vadd.f32 %v2260, %v2376
      %v2397 = vadd.f32 %v2261, %v2379
      %s2398 = scalar_lea.vmem %s3, 112
      %v2399 = vld [vmem:[%s2398] sm:$0xf]
      %v2400 = vld [vmem:[%s2398 + $0x4] sm:$0xf]
      %v2401 = vld [vmem:[%s2398 + $0x8] sm:$0xf]
      %v2402 = vld [vmem:[%s2398 + $0xc] sm:$0xf]
      %v2404 = vrot.slane %v569, 4
      %v2405 = vsel %vm542, %v1996, %v2404
      %v2410 = vunpack.c.l.b16 %v2399
      %v2411 = vunpack.c.l.b16 %v2400
      %v2412 = vunpack.c.l.b16 %v2401
      %v2413 = vunpack.c.l.b16 %v2402
      %v2414 = vpack.c.b16 %v2411, %v2410
      %v2415 = vpack.c.b16 %v2413, %v2412
      %v2419 = vsel %vm1393, %v2405, 0
      %2421 = vmatprep.subr.bf16.mxu0 0
      %2422 = vmatpush1.bf16.msra.mxu0 %v2414
      %2423 = vmatprep.subr.bf16.mxu0 0
      %2424 = vmatpush1.bf16.msra.mxu0 %v2415
      %2425 = vmatprep.subr.bf16.mxu0 0
      %2426 = vmatpush1.bf16.msra.mxu0 0
      %2427 = vmatprep.subr.bf16.mxu0 0
      %2428 = vmatpush1.bf16.msra.mxu0 0
      %2429 = vmatprep.subr.bf16.mxu0 0
      %2430 = vmatpush1.bf16.msra.mxu0 0
      %2431 = vmatprep.subr.bf16.mxu0 0
      %2432 = vmatpush1.bf16.msra.mxu0 0
      %2433 = vmatprep.subr.bf16.mxu0 0
      %2434 = vmatpush1.bf16.msra.mxu0 0
      %2435 = vmatprep.subr.bf16.mxu0 0
      %2436 = vmatpush1.bf16.msra.mxu0 0
      %2437 = vmatprep.subr.bf16.mxu0 0
      %2438 = vmatpush1.bf16.msra.mxu0 0
      %2439 = vmatprep.subr.bf16.mxu0 0
      %2440 = vmatpush1.bf16.msra.mxu0 0
      %2441 = vmatprep.subr.bf16.mxu0 0
      %2442 = vmatpush1.bf16.msra.mxu0 0
      %2443 = vmatprep.subr.bf16.mxu0 0
      %2444 = vmatpush1.bf16.msra.mxu0 0
      %2445 = vmatprep.subr.bf16.mxu0 0
      %2446 = vmatpush1.bf16.msra.mxu0 0
      %2447 = vmatprep.subr.bf16.mxu0 0
      %2448 = vmatpush1.bf16.msra.mxu0 0
      %2449 = vmatprep.subr.bf16.mxu0 0
      %2450 = vmatpush1.bf16.msra.mxu0 0
      %2451 = vmatprep.subr.bf16.mxu0 0
      %2452 = vmatpush1.bf16.msra.mxu0 0
      %2453 = vmatprep.mubr.bf16.mxu0 0
      %2454 = vmatmul.mubr.bf16.gmra.mrb[0].mxu0 %v1401
      %v2455 = vpop.f32.mrb[0].mxu0
      %v2456 = vadd.f32 0.0, %v2455
      %v2457 = vpop.f32.mrb[0].mxu0
      %v2458 = vpop.f32.mrb[0].mxu0
      %v2459 = vadd.f32 0.0, %v2458
      %v2460 = vpop.f32.mrb[0].mxu0
      %2461 = vmatprep.mubr.bf16.mxu0 0
      %2462 = vmatmul.mubr.bf16.gmra.mrb[0].mxu0 %v1404
      %v2463 = vpop.f32.mrb[0].mxu0
      %v2464 = vadd.f32 0.0, %v2463
      %v2465 = vpop.f32.mrb[0].mxu0
      %v2466 = vpop.f32.mrb[0].mxu0
      %v2467 = vadd.f32 0.0, %v2466
      %v2468 = vpop.f32.mrb[0].mxu0
      %2469 = vmatprep.mubr.bf16.mxu0 0
      %2470 = vmatmul.mubr.bf16.gmra.mrb[0].mxu0 %v1407
      %v2471 = vpop.f32.mrb[0].mxu0
      %v2472 = vadd.f32 0.0, %v2471
      %v2473 = vpop.f32.mrb[0].mxu0
      %v2474 = vpop.f32.mrb[0].mxu0
      %v2475 = vadd.f32 0.0, %v2474
      %v2476 = vpop.f32.mrb[0].mxu0
      %2477 = vmatprep.mubr.bf16.mxu0 0
      %2478 = vmatmul.mubr.bf16.gmra.mrb[0].mxu0 %v1410
      %v2479 = vpop.f32.mrb[0].mxu0
      %v2480 = vadd.f32 0.0, %v2479
      %v2481 = vpop.f32.mrb[0].mxu0
      %v2482 = vpop.f32.mrb[0].mxu0
      %v2483 = vadd.f32 0.0, %v2482
      %v2484 = vpop.f32.mrb[0].mxu0
      %2485 = vmatprep.mubr.bf16.mxu0 0
      %2486 = vmatmul.mubr.bf16.gmra.mrb[0].mxu0 %v1413
      %v2487 = vpop.f32.mrb[0].mxu0
      %v2488 = vadd.f32 0.0, %v2487
      %v2489 = vpop.f32.mrb[0].mxu0
      %v2490 = vpop.f32.mrb[0].mxu0
      %v2491 = vadd.f32 0.0, %v2490
      %v2492 = vpop.f32.mrb[0].mxu0
      %2493 = vmatprep.mubr.bf16.mxu0 0
      %2494 = vmatmul.mubr.bf16.gmra.mrb[0].mxu0 %v1416
      %v2495 = vpop.f32.mrb[0].mxu0
      %v2496 = vadd.f32 0.0, %v2495
      %v2497 = vpop.f32.mrb[0].mxu0
      %v2498 = vpop.f32.mrb[0].mxu0
      %v2499 = vadd.f32 0.0, %v2498
      %v2500 = vpop.f32.mrb[0].mxu0
      %2501 = vmatprep.mubr.bf16.mxu0 0
      %2502 = vmatmul.mubr.bf16.gmra.mrb[0].mxu0 %v2011
      %v2503 = vpop.f32.mrb[0].mxu0
      %v2504 = vadd.f32 0.0, %v2503
      %v2505 = vpop.f32.mrb[0].mxu0
      %v2506 = vpop.f32.mrb[0].mxu0
      %v2507 = vadd.f32 0.0, %v2506
      %v2508 = vpop.f32.mrb[0].mxu0
      %2509 = vmatprep.mubr.bf16.mxu0 0
      %2510 = vmatmul.mubr.bf16.gmra.mrb[0].mxu0 %v2419
      %v2511 = vpop.f32.mrb[0].mxu0
      %v2512 = vadd.f32 0.0, %v2511
      %v2513 = vpop.f32.mrb[0].mxu0
      %v2514 = vpop.f32.mrb[0].mxu0
      %v2515 = vadd.f32 0.0, %v2514
      %v2516 = vpop.f32.mrb[0].mxu0
      %2517 = vdwg.mxu0
      %v2518 = vadd.f32 %v2382, %v2456
      %v2519 = vadd.f32 %v2383, %v2459
      %v2520 = vadd.f32 %v2384, %v2464
      %v2521 = vadd.f32 %v2385, %v2467
      %v2522 = vadd.f32 %v2386, %v2472
      %v2523 = vadd.f32 %v2387, %v2475
      %v2524 = vadd.f32 %v2388, %v2480
      %v2525 = vadd.f32 %v2389, %v2483
      %v2526 = vadd.f32 %v2390, %v2488
      %v2527 = vadd.f32 %v2391, %v2491
      %v2528 = vadd.f32 %v2392, %v2496
      %v2529 = vadd.f32 %v2393, %v2499
      %v2530 = vadd.f32 %v2394, %v2504
      %v2531 = vadd.f32 %v2395, %v2507
      %v2532 = vadd.f32 %v2396, %v2512
      %v2533 = vadd.f32 %v2397, %v2515
      %s2534 = scalar_lea.vmem %s3, 128
      %v2535 = vld [vmem:[%s2534] sm:$0xf]
      %v2536 = vld [vmem:[%s2534 + $0x4] sm:$0xf]
      %v2537 = vld [vmem:[%s2534 + $0x8] sm:$0xf]
      %v2538 = vld [vmem:[%s2534 + $0xc] sm:$0xf]
      %v2540 = vrot.slane %v1352, 4
      %v2541 = vsel %vm542, %v2132, %v2540
      %v2546 = vunpack.c.l.b16 %v2535
      %v2547 = vunpack.c.l.b16 %v2536
      %v2548 = vunpack.c.l.b16 %v2537
      %v2549 = vunpack.c.l.b16 %v2538
      %v2550 = vpack.c.b16 %v2547, %v2546
      %v2551 = vpack.c.b16 %v2549, %v2548
      %v2555 = vsel %vm1393, %v2541, 0
      %2557 = vmatprep.subr.bf16.mxu0 0
      %2558 = vmatpush1.bf16.msra.mxu0 %v2550
      %2559 = vmatprep.subr.bf16.mxu0 0
      %2560 = vmatpush1.bf16.msra.mxu0 %v2551
      %2561 = vmatprep.subr.bf16.mxu0 0
      %2562 = vmatpush1.bf16.msra.mxu0 0
      %2563 = vmatprep.subr.bf16.mxu0 0
      %2564 = vmatpush1.bf16.msra.mxu0 0
      %2565 = vmatprep.subr.bf16.mxu0 0
      %2566 = vmatpush1.bf16.msra.mxu0 0
      %2567 = vmatprep.subr.bf16.mxu0 0
      %2568 = vmatpush1.bf16.msra.mxu0 0
      %2569 = vmatprep.subr.bf16.mxu0 0
      %2570 = vmatpush1.bf16.msra.mxu0 0
      %2571 = vmatprep.subr.bf16.mxu0 0
      %2572 = vmatpush1.bf16.msra.mxu0 0
      %2573 = vmatprep.subr.bf16.mxu0 0
      %2574 = vmatpush1.bf16.msra.mxu0 0
      %2575 = vmatprep.subr.bf16.mxu0 0
      %2576 = vmatpush1.bf16.msra.mxu0 0
      %2577 = vmatprep.subr.bf16.mxu0 0
      %2578 = vmatpush1.bf16.msra.mxu0 0
      %2579 = vmatprep.subr.bf16.mxu0 0
      %2580 = vmatpush1.bf16.msra.mxu0 0
      %2581 = vmatprep.subr.bf16.mxu0 0
      %2582 = vmatpush1.bf16.msra.mxu0 0
      %2583 = vmatprep.subr.bf16.mxu0 0
      %2584 = vmatpush1.bf16.msra.mxu0 0
      %2585 = vmatprep.subr.bf16.mxu0 0
      %2586 = vmatpush1.bf16.msra.mxu0 0
      %2587 = vmatprep.subr.bf16.mxu0 0
      %2588 = vmatpush1.bf16.msra.mxu0 0
      %2589 = vmatprep.mubr.bf16.mxu0 0
      %2590 = vmatmul.mubr.bf16.gmra.mrb[0].mxu0 %v1724
      %v2591 = vpop.f32.mrb[0].mxu0
      %v2592 = vadd.f32 0.0, %v2591
      %v2593 = vpop.f32.mrb[0].mxu0
      %v2594 = vpop.f32.mrb[0].mxu0
      %v2595 = vadd.f32 0.0, %v2594
      %v2596 = vpop.f32.mrb[0].mxu0
      %2597 = vmatprep.mubr.bf16.mxu0 0
      %2598 = vmatmul.mubr.bf16.gmra.mrb[0].mxu0 %v1727
      %v2599 = vpop.f32.mrb[0].mxu0
      %v2600 = vadd.f32 0.0, %v2599
      %v2601 = vpop.f32.mrb[0].mxu0
      %v2602 = vpop.f32.mrb[0].mxu0
      %v2603 = vadd.f32 0.0, %v2602
      %v2604 = vpop.f32.mrb[0].mxu0
      %2605 = vmatprep.mubr.bf16.mxu0 0
      %2606 = vmatmul.mubr.bf16.gmra.mrb[0].mxu0 %v1730
      %v2607 = vpop.f32.mrb[0].mxu0
      %v2608 = vadd.f32 0.0, %v2607
      %v2609 = vpop.f32.mrb[0].mxu0
      %v2610 = vpop.f32.mrb[0].mxu0
      %v2611 = vadd.f32 0.0, %v2610
      %v2612 = vpop.f32.mrb[0].mxu0
      %2613 = vmatprep.mubr.bf16.mxu0 0
      %2614 = vmatmul.mubr.bf16.gmra.mrb[0].mxu0 %v1733
      %v2615 = vpop.f32.mrb[0].mxu0
      %v2616 = vadd.f32 0.0, %v2615
      %v2617 = vpop.f32.mrb[0].mxu0
      %v2618 = vpop.f32.mrb[0].mxu0
      %v2619 = vadd.f32 0.0, %v2618
      %v2620 = vpop.f32.mrb[0].mxu0
      %2621 = vmatprep.mubr.bf16.mxu0 0
      %2622 = vmatmul.mubr.bf16.gmra.mrb[0].mxu0 %v1736
      %v2623 = vpop.f32.mrb[0].mxu0
      %v2624 = vadd.f32 0.0, %v2623
      %v2625 = vpop.f32.mrb[0].mxu0
      %v2626 = vpop.f32.mrb[0].mxu0
      %v2627 = vadd.f32 0.0, %v2626
      %v2628 = vpop.f32.mrb[0].mxu0
      %2629 = vmatprep.mubr.bf16.mxu0 0
      %2630 = vmatmul.mubr.bf16.gmra.mrb[0].mxu0 %v1739
      %v2631 = vpop.f32.mrb[0].mxu0
      %v2632 = vadd.f32 0.0, %v2631
      %v2633 = vpop.f32.mrb[0].mxu0
      %v2634 = vpop.f32.mrb[0].mxu0
      %v2635 = vadd.f32 0.0, %v2634
      %v2636 = vpop.f32.mrb[0].mxu0
      %2637 = vmatprep.mubr.bf16.mxu0 0
      %2638 = vmatmul.mubr.bf16.gmra.mrb[0].mxu0 %v2147
      %v2639 = vpop.f32.mrb[0].mxu0
      %v2640 = vadd.f32 0.0, %v2639
      %v2641 = vpop.f32.mrb[0].mxu0
      %v2642 = vpop.f32.mrb[0].mxu0
      %v2643 = vadd.f32 0.0, %v2642
      %v2644 = vpop.f32.mrb[0].mxu0
      %2645 = vmatprep.mubr.bf16.mxu0 0
      %2646 = vmatmul.mubr.bf16.gmra.mrb[0].mxu0 %v2555
      %v2647 = vpop.f32.mrb[0].mxu0
      %v2648 = vadd.f32 0.0, %v2647
      %v2649 = vpop.f32.mrb[0].mxu0
      %v2650 = vpop.f32.mrb[0].mxu0
      %v2651 = vadd.f32 0.0, %v2650
      %v2652 = vpop.f32.mrb[0].mxu0
      %2653 = vdwg.mxu0
      %v2654 = vadd.f32 %v2518, %v2592
      %v2655 = vadd.f32 %v2519, %v2595
      %v2656 = vadd.f32 %v2520, %v2600
      %v2657 = vadd.f32 %v2521, %v2603
      %v2658 = vadd.f32 %v2522, %v2608
      %v2659 = vadd.f32 %v2523, %v2611
      %v2660 = vadd.f32 %v2524, %v2616
      %v2661 = vadd.f32 %v2525, %v2619
      %v2662 = vadd.f32 %v2526, %v2624
      %v2663 = vadd.f32 %v2527, %v2627
      %v2664 = vadd.f32 %v2528, %v2632
      %v2665 = vadd.f32 %v2529, %v2635
      %v2666 = vadd.f32 %v2530, %v2640
      %v2667 = vadd.f32 %v2531, %v2643
      %v2668 = vadd.f32 %v2532, %v2648
      %v2669 = vadd.f32 %v2533, %v2651
      %v2670 = vld [vmem:[%s4] sm:$0x1]
      %v2672 = vlaneseq
      %v2673 = vshrl.u32 %v2672, 7
      %v2674 = vsub.s32 0, %v2673
      %v2675 = vrot.slane %v2670, %v2674
      %v2677 = vadd.f32 %v2654, %v2675
      %v2678 = vadd.f32 %v2655, %v2675
      %v2679 = vadd.f32 %v2656, %v2675
      %v2680 = vadd.f32 %v2657, %v2675
      %v2681 = vadd.f32 %v2658, %v2675
      %v2682 = vadd.f32 %v2659, %v2675
      %v2683 = vadd.f32 %v2660, %v2675
      %v2684 = vadd.f32 %v2661, %v2675
      %v2685 = vadd.f32 %v2662, %v2675
      %v2686 = vadd.f32 %v2663, %v2675
      %v2687 = vadd.f32 %v2664, %v2675
      %v2688 = vadd.f32 %v2665, %v2675
      %v2689 = vadd.f32 %v2666, %v2675
      %v2690 = vadd.f32 %v2667, %v2675
      %v2691 = vadd.f32 %v2668, %v2675
      %v2692 = vadd.f32 %v2669, %v2675
      %v2693 = vmul.f32 %v2677, 0.70710677
      %v2694 = vmul.f32 %v2678, 0.70710677
      %v2695 = vmul.f32 %v2679, 0.70710677
      %v2696 = vmul.f32 %v2680, 0.70710677
      %v2697 = vmul.f32 %v2681, 0.70710677
      %v2698 = vmul.f32 %v2682, 0.70710677
      %v2699 = vmul.f32 %v2683, 0.70710677
      %v2700 = vmul.f32 %v2684, 0.70710677
      %v2701 = vmul.f32 %v2685, 0.70710677
      %v2702 = vmul.f32 %v2686, 0.70710677
      %v2703 = vmul.f32 %v2687, 0.70710677
      %v2704 = vmul.f32 %v2688, 0.70710677
      %v2705 = vmul.f32 %v2689, 0.70710677
      %v2706 = vmul.f32 %v2690, 0.70710677
      %v2707 = vmul.f32 %v2691, 0.70710677
      %v2708 = vmul.f32 %v2692, 0.70710677
      %v2709 = vand.u32 2147483647, %v2693
      %v2710 = vand.u32 2147483647, %v2694
      %v2711 = vand.u32 2147483647, %v2695
      %v2712 = vand.u32 2147483647, %v2696
      %v2713 = vand.u32 2147483647, %v2697
      %v2714 = vand.u32 2147483647, %v2698
      %v2715 = vand.u32 2147483647, %v2699
      %v2716 = vand.u32 2147483647, %v2700
      %v2717 = vand.u32 2147483647, %v2701
      %v2718 = vand.u32 2147483647, %v2702
      %v2719 = vand.u32 2147483647, %v2703
      %v2720 = vand.u32 2147483647, %v2704
      %v2721 = vand.u32 2147483647, %v2705
      %v2722 = vand.u32 2147483647, %v2706
      %v2723 = vand.u32 2147483647, %v2707
      %v2724 = vand.u32 2147483647, %v2708
      %v2725 = vmul.f32 %v2709, 0.3275911
      %v2726 = vmul.f32 %v2710, 0.3275911
      %v2727 = vmul.f32 %v2711, 0.3275911
      %v2728 = vmul.f32 %v2712, 0.3275911
      %v2729 = vmul.f32 %v2713, 0.3275911
      %v2730 = vmul.f32 %v2714, 0.3275911
      %v2731 = vmul.f32 %v2715, 0.3275911
      %v2732 = vmul.f32 %v2716, 0.3275911
      %v2733 = vmul.f32 %v2717, 0.3275911
      %v2734 = vmul.f32 %v2718, 0.3275911
      %v2735 = vmul.f32 %v2719, 0.3275911
      %v2736 = vmul.f32 %v2720, 0.3275911
      %v2737 = vmul.f32 %v2721, 0.3275911
      %v2738 = vmul.f32 %v2722, 0.3275911
      %v2739 = vmul.f32 %v2723, 0.3275911
      %v2740 = vmul.f32 %v2724, 0.3275911
      %v2741 = vadd.f32 %v2725, 1.0
      %v2742 = vadd.f32 %v2726, 1.0
      %v2743 = vadd.f32 %v2727, 1.0
      %v2744 = vadd.f32 %v2728, 1.0
      %v2745 = vadd.f32 %v2729, 1.0
      %v2746 = vadd.f32 %v2730, 1.0
      %v2747 = vadd.f32 %v2731, 1.0
      %v2748 = vadd.f32 %v2732, 1.0
      %v2749 = vadd.f32 %v2733, 1.0
      %v2750 = vadd.f32 %v2734, 1.0
      %v2751 = vadd.f32 %v2735, 1.0
      %v2752 = vadd.f32 %v2736, 1.0
      %v2753 = vadd.f32 %v2737, 1.0
      %v2754 = vadd.f32 %v2738, 1.0
      %v2755 = vadd.f32 %v2739, 1.0
      %v2756 = vadd.f32 %v2740, 1.0
      %v2757 = vrcp.pop %v2741
      %v2758 = vmul.f32 1.0, %v2757
      %v2759 = vrcp.pop %v2742
      %v2760 = vmul.f32 1.0, %v2759
      %v2761 = vrcp.pop %v2743
      %v2762 = vmul.f32 1.0, %v2761
      %v2763 = vrcp.pop %v2744
      %v2764 = vmul.f32 1.0, %v2763
      %v2765 = vrcp.pop %v2745
      %v2766 = vmul.f32 1.0, %v2765
      %v2767 = vrcp.pop %v2746
      %v2768 = vmul.f32 1.0, %v2767
      %v2769 = vrcp.pop %v2747
      %v2770 = vmul.f32 1.0, %v2769
      %v2771 = vrcp.pop %v2748
      %v2772 = vmul.f32 1.0, %v2771
      %v2773 = vrcp.pop %v2749
      %v2774 = vmul.f32 1.0, %v2773
      %v2775 = vrcp.pop %v2750
      %v2776 = vmul.f32 1.0, %v2775
      %v2777 = vrcp.pop %v2751
      %v2778 = vmul.f32 1.0, %v2777
      %v2779 = vrcp.pop %v2752
      %v2780 = vmul.f32 1.0, %v2779
      %v2781 = vrcp.pop %v2753
      %v2782 = vmul.f32 1.0, %v2781
      %v2783 = vrcp.pop %v2754
      %v2784 = vmul.f32 1.0, %v2783
      %v2785 = vrcp.pop %v2755
      %v2786 = vmul.f32 1.0, %v2785
      %v2787 = vrcp.pop %v2756
      %v2788 = vmul.f32 1.0, %v2787
      %v2789 = vmul.f32 %v2758, 1.0614054
      %v2790 = vmul.f32 %v2760, 1.0614054
      %v2791 = vmul.f32 %v2762, 1.0614054
      %v2792 = vmul.f32 %v2764, 1.0614054
      %v2793 = vmul.f32 %v2766, 1.0614054
      %v2794 = vmul.f32 %v2768, 1.0614054
      %v2795 = vmul.f32 %v2770, 1.0614054
      %v2796 = vmul.f32 %v2772, 1.0614054
      %v2797 = vmul.f32 %v2774, 1.0614054
      %v2798 = vmul.f32 %v2776, 1.0614054
      %v2799 = vmul.f32 %v2778, 1.0614054
      %v2800 = vmul.f32 %v2780, 1.0614054
      %v2801 = vmul.f32 %v2782, 1.0614054
      %v2802 = vmul.f32 %v2784, 1.0614054
      %v2803 = vmul.f32 %v2786, 1.0614054
      %v2804 = vmul.f32 %v2788, 1.0614054
      %v2805 = vadd.f32 %v2789, -1.4531521
      %v2806 = vadd.f32 %v2790, -1.4531521
      %v2807 = vadd.f32 %v2791, -1.4531521
      %v2808 = vadd.f32 %v2792, -1.4531521
      %v2809 = vadd.f32 %v2793, -1.4531521
      %v2810 = vadd.f32 %v2794, -1.4531521
      %v2811 = vadd.f32 %v2795, -1.4531521
      %v2812 = vadd.f32 %v2796, -1.4531521
      %v2813 = vadd.f32 %v2797, -1.4531521
      %v2814 = vadd.f32 %v2798, -1.4531521
      %v2815 = vadd.f32 %v2799, -1.4531521
      %v2816 = vadd.f32 %v2800, -1.4531521
      %v2817 = vadd.f32 %v2801, -1.4531521
      %v2818 = vadd.f32 %v2802, -1.4531521
      %v2819 = vadd.f32 %v2803, -1.4531521
      %v2820 = vadd.f32 %v2804, -1.4531521
      %v2821 = vmul.f32 %v2758, %v2805
      %v2822 = vmul.f32 %v2760, %v2806
      %v2823 = vmul.f32 %v2762, %v2807
      %v2824 = vmul.f32 %v2764, %v2808
      %v2825 = vmul.f32 %v2766, %v2809
      %v2826 = vmul.f32 %v2768, %v2810
      %v2827 = vmul.f32 %v2770, %v2811
      %v2828 = vmul.f32 %v2772, %v2812
      %v2829 = vmul.f32 %v2774, %v2813
      %v2830 = vmul.f32 %v2776, %v2814
      %v2831 = vmul.f32 %v2778, %v2815
      %v2832 = vmul.f32 %v2780, %v2816
      %v2833 = vmul.f32 %v2782, %v2817
      %v2834 = vmul.f32 %v2784, %v2818
      %v2835 = vmul.f32 %v2786, %v2819
      %v2836 = vmul.f32 %v2788, %v2820
      %v2837 = vadd.f32 %v2821, 1.4214138
      %v2838 = vadd.f32 %v2822, 1.4214138
      %v2839 = vadd.f32 %v2823, 1.4214138
      %v2840 = vadd.f32 %v2824, 1.4214138
      %v2841 = vadd.f32 %v2825, 1.4214138
      %v2842 = vadd.f32 %v2826, 1.4214138
      %v2843 = vadd.f32 %v2827, 1.4214138
      %v2844 = vadd.f32 %v2828, 1.4214138
      %v2845 = vadd.f32 %v2829, 1.4214138
      %v2846 = vadd.f32 %v2830, 1.4214138
      %v2847 = vadd.f32 %v2831, 1.4214138
      %v2848 = vadd.f32 %v2832, 1.4214138
      %v2849 = vadd.f32 %v2833, 1.4214138
      %v2850 = vadd.f32 %v2834, 1.4214138
      %v2851 = vadd.f32 %v2835, 1.4214138
      %v2852 = vadd.f32 %v2836, 1.4214138
      %v2853 = vmul.f32 %v2758, %v2837
      %v2854 = vmul.f32 %v2760, %v2838
      %v2855 = vmul.f32 %v2762, %v2839
      %v2856 = vmul.f32 %v2764, %v2840
      %v2857 = vmul.f32 %v2766, %v2841
      %v2858 = vmul.f32 %v2768, %v2842
      %v2859 = vmul.f32 %v2770, %v2843
      %v2860 = vmul.f32 %v2772, %v2844
      %v2861 = vmul.f32 %v2774, %v2845
      %v2862 = vmul.f32 %v2776, %v2846
      %v2863 = vmul.f32 %v2778, %v2847
      %v2864 = vmul.f32 %v2780, %v2848
      %v2865 = vmul.f32 %v2782, %v2849
      %v2866 = vmul.f32 %v2784, %v2850
      %v2867 = vmul.f32 %v2786, %v2851
      %v2868 = vmul.f32 %v2788, %v2852
      %v2869 = vadd.f32 %v2853, -0.28449672
      %v2870 = vadd.f32 %v2854, -0.28449672
      %v2871 = vadd.f32 %v2855, -0.28449672
      %v2872 = vadd.f32 %v2856, -0.28449672
      %v2873 = vadd.f32 %v2857, -0.28449672
      %v2874 = vadd.f32 %v2858, -0.28449672
      %v2875 = vadd.f32 %v2859, -0.28449672
      %v2876 = vadd.f32 %v2860, -0.28449672
      %v2877 = vadd.f32 %v2861, -0.28449672
      %v2878 = vadd.f32 %v2862, -0.28449672
      %v2879 = vadd.f32 %v2863, -0.28449672
      %v2880 = vadd.f32 %v2864, -0.28449672
      %v2881 = vadd.f32 %v2865, -0.28449672
      %v2882 = vadd.f32 %v2866, -0.28449672
      %v2883 = vadd.f32 %v2867, -0.28449672
      %v2884 = vadd.f32 %v2868, -0.28449672
      %v2885 = vmul.f32 %v2758, %v2869
      %v2886 = vmul.f32 %v2760, %v2870
      %v2887 = vmul.f32 %v2762, %v2871
      %v2888 = vmul.f32 %v2764, %v2872
      %v2889 = vmul.f32 %v2766, %v2873
      %v2890 = vmul.f32 %v2768, %v2874
      %v2891 = vmul.f32 %v2770, %v2875
      %v2892 = vmul.f32 %v2772, %v2876
      %v2893 = vmul.f32 %v2774, %v2877
      %v2894 = vmul.f32 %v2776, %v2878
      %v2895 = vmul.f32 %v2778, %v2879
      %v2896 = vmul.f32 %v2780, %v2880
      %v2897 = vmul.f32 %v2782, %v2881
      %v2898 = vmul.f32 %v2784, %v2882
      %v2899 = vmul.f32 %v2786, %v2883
      %v2900 = vmul.f32 %v2788, %v2884
      %v2901 = vadd.f32 %v2885, 0.2548296
      %v2902 = vadd.f32 %v2886, 0.2548296
      %v2903 = vadd.f32 %v2887, 0.2548296
      %v2904 = vadd.f32 %v2888, 0.2548296
      %v2905 = vadd.f32 %v2889, 0.2548296
      %v2906 = vadd.f32 %v2890, 0.2548296
      %v2907 = vadd.f32 %v2891, 0.2548296
      %v2908 = vadd.f32 %v2892, 0.2548296
      %v2909 = vadd.f32 %v2893, 0.2548296
      %v2910 = vadd.f32 %v2894, 0.2548296
      %v2911 = vadd.f32 %v2895, 0.2548296
      %v2912 = vadd.f32 %v2896, 0.2548296
      %v2913 = vadd.f32 %v2897, 0.2548296
      %v2914 = vadd.f32 %v2898, 0.2548296
      %v2915 = vadd.f32 %v2899, 0.2548296
      %v2916 = vadd.f32 %v2900, 0.2548296
      %v2917 = vmul.f32 %v2758, %v2901
      %v2918 = vmul.f32 %v2760, %v2902
      %v2919 = vmul.f32 %v2762, %v2903
      %v2920 = vmul.f32 %v2764, %v2904
      %v2921 = vmul.f32 %v2766, %v2905
      %v2922 = vmul.f32 %v2768, %v2906
      %v2923 = vmul.f32 %v2770, %v2907
      %v2924 = vmul.f32 %v2772, %v2908
      %v2925 = vmul.f32 %v2774, %v2909
      %v2926 = vmul.f32 %v2776, %v2910
      %v2927 = vmul.f32 %v2778, %v2911
      %v2928 = vmul.f32 %v2780, %v2912
      %v2929 = vmul.f32 %v2782, %v2913
      %v2930 = vmul.f32 %v2784, %v2914
      %v2931 = vmul.f32 %v2786, %v2915
      %v2932 = vmul.f32 %v2788, %v2916
      %v2933 = vsub.f32 0.0, %v2709
      %v2934 = vsub.f32 0.0, %v2710
      %v2935 = vsub.f32 0.0, %v2711
      %v2936 = vsub.f32 0.0, %v2712
      %v2937 = vsub.f32 0.0, %v2713
      %v2938 = vsub.f32 0.0, %v2714
      %v2939 = vsub.f32 0.0, %v2715
      %v2940 = vsub.f32 0.0, %v2716
      %v2941 = vsub.f32 0.0, %v2717
      %v2942 = vsub.f32 0.0, %v2718
      %v2943 = vsub.f32 0.0, %v2719
      %v2944 = vsub.f32 0.0, %v2720
      %v2945 = vsub.f32 0.0, %v2721
      %v2946 = vsub.f32 0.0, %v2722
      %v2947 = vsub.f32 0.0, %v2723
      %v2948 = vsub.f32 0.0, %v2724
      %v2949 = vmul.f32 %v2933, %v2709
      %v2950 = vmul.f32 %v2934, %v2710
      %v2951 = vmul.f32 %v2935, %v2711
      %v2952 = vmul.f32 %v2936, %v2712
      %v2953 = vmul.f32 %v2937, %v2713
      %v2954 = vmul.f32 %v2938, %v2714
      %v2955 = vmul.f32 %v2939, %v2715
      %v2956 = vmul.f32 %v2940, %v2716
      %v2957 = vmul.f32 %v2941, %v2717
      %v2958 = vmul.f32 %v2942, %v2718
      %v2959 = vmul.f32 %v2943, %v2719
      %v2960 = vmul.f32 %v2944, %v2720
      %v2961 = vmul.f32 %v2945, %v2721
      %v2962 = vmul.f32 %v2946, %v2722
      %v2963 = vmul.f32 %v2947, %v2723
      %v2964 = vmul.f32 %v2948, %v2724
      %v2965 = vmul.f32 %v2949, 1.442695
      %v2966 = vpow.pop %v2965
      %v2967 = vmul.f32 %v2950, 1.442695
      %v2968 = vpow.pop %v2967
      %v2969 = vmul.f32 %v2951, 1.442695
      %v2970 = vpow.pop %v2969
      %v2971 = vmul.f32 %v2952, 1.442695
      %v2972 = vpow.pop %v2971
      %v2973 = vmul.f32 %v2953, 1.442695
      %v2974 = vpow.pop %v2973
      %v2975 = vmul.f32 %v2954, 1.442695
      %v2976 = vpow.pop %v2975
      %v2977 = vmul.f32 %v2955, 1.442695
      %v2978 = vpow.pop %v2977
      %v2979 = vmul.f32 %v2956, 1.442695
      %v2980 = vpow.pop %v2979
      %v2981 = vmul.f32 %v2957, 1.442695
      %v2982 = vpow.pop %v2981
      %v2983 = vmul.f32 %v2958, 1.442695
      %v2984 = vpow.pop %v2983
      %v2985 = vmul.f32 %v2959, 1.442695
      %v2986 = vpow.pop %v2985
      %v2987 = vmul.f32 %v2960, 1.442695
      %v2988 = vpow.pop %v2987
      %v2989 = vmul.f32 %v2961, 1.442695
      %v2990 = vpow.pop %v2989
      %v2991 = vmul.f32 %v2962, 1.442695
      %v2992 = vpow.pop %v2991
      %v2993 = vmul.f32 %v2963, 1.442695
      %v2994 = vpow.pop %v2993
      %v2995 = vmul.f32 %v2964, 1.442695
      %v2996 = vpow.pop %v2995
      %v2997 = vmul.f32 %v2917, %v2966
      %v2998 = vmul.f32 %v2918, %v2968
      %v2999 = vmul.f32 %v2919, %v2970
      %v3000 = vmul.f32 %v2920, %v2972
      %v3001 = vmul.f32 %v2921, %v2974
      %v3002 = vmul.f32 %v2922, %v2976
      %v3003 = vmul.f32 %v2923, %v2978
      %v3004 = vmul.f32 %v2924, %v2980
      %v3005 = vmul.f32 %v2925, %v2982
      %v3006 = vmul.f32 %v2926, %v2984
      %v3007 = vmul.f32 %v2927, %v2986
      %v3008 = vmul.f32 %v2928, %v2988
      %v3009 = vmul.f32 %v2929, %v2990
      %v3010 = vmul.f32 %v2930, %v2992
      %v3011 = vmul.f32 %v2931, %v2994
      %v3012 = vmul.f32 %v2932, %v2996
      %v3013 = vsub.f32 1.0, %v2997
      %v3014 = vsub.f32 1.0, %v2998
      %v3015 = vsub.f32 1.0, %v2999
      %v3016 = vsub.f32 1.0, %v3000
      %v3017 = vsub.f32 1.0, %v3001
      %v3018 = vsub.f32 1.0, %v3002
      %v3019 = vsub.f32 1.0, %v3003
      %v3020 = vsub.f32 1.0, %v3004
      %v3021 = vsub.f32 1.0, %v3005
      %v3022 = vsub.f32 1.0, %v3006
      %v3023 = vsub.f32 1.0, %v3007
      %v3024 = vsub.f32 1.0, %v3008
      %v3025 = vsub.f32 1.0, %v3009
      %v3026 = vsub.f32 1.0, %v3010
      %v3027 = vsub.f32 1.0, %v3011
      %v3028 = vsub.f32 1.0, %v3012
      %vm3029 = vcmp.ge.f32.partialorder %v2693, 0.0
      %vm3030 = vcmp.ge.f32.partialorder %v2694, 0.0
      %vm3031 = vcmp.ge.f32.partialorder %v2695, 0.0
      %vm3032 = vcmp.ge.f32.partialorder %v2696, 0.0
      %vm3033 = vcmp.ge.f32.partialorder %v2697, 0.0
      %vm3034 = vcmp.ge.f32.partialorder %v2698, 0.0
      %vm3035 = vcmp.ge.f32.partialorder %v2699, 0.0
      %vm3036 = vcmp.ge.f32.partialorder %v2700, 0.0
      %vm3037 = vcmp.ge.f32.partialorder %v2701, 0.0
      %vm3038 = vcmp.ge.f32.partialorder %v2702, 0.0
      %vm3039 = vcmp.ge.f32.partialorder %v2703, 0.0
      %vm3040 = vcmp.ge.f32.partialorder %v2704, 0.0
      %vm3041 = vcmp.ge.f32.partialorder %v2705, 0.0
      %vm3042 = vcmp.ge.f32.partialorder %v2706, 0.0
      %vm3043 = vcmp.ge.f32.partialorder %v2707, 0.0
      %vm3044 = vcmp.ge.f32.partialorder %v2708, 0.0
      %v3045 = vsub.f32 0.0, %v3013
      %v3046 = vsub.f32 0.0, %v3014
      %v3047 = vsub.f32 0.0, %v3015
      %v3048 = vsub.f32 0.0, %v3016
      %v3049 = vsub.f32 0.0, %v3017
      %v3050 = vsub.f32 0.0, %v3018
      %v3051 = vsub.f32 0.0, %v3019
      %v3052 = vsub.f32 0.0, %v3020
      %v3053 = vsub.f32 0.0, %v3021
      %v3054 = vsub.f32 0.0, %v3022
      %v3055 = vsub.f32 0.0, %v3023
      %v3056 = vsub.f32 0.0, %v3024
      %v3057 = vsub.f32 0.0, %v3025
      %v3058 = vsub.f32 0.0, %v3026
      %v3059 = vsub.f32 0.0, %v3027
      %v3060 = vsub.f32 0.0, %v3028
      %v3061 = vsel %vm3029, %v3013, %v3045
      %v3062 = vsel %vm3030, %v3014, %v3046
      %v3063 = vsel %vm3031, %v3015, %v3047
      %v3064 = vsel %vm3032, %v3016, %v3048
      %v3065 = vsel %vm3033, %v3017, %v3049
      %v3066 = vsel %vm3034, %v3018, %v3050
      %v3067 = vsel %vm3035, %v3019, %v3051
      %v3068 = vsel %vm3036, %v3020, %v3052
      %v3069 = vsel %vm3037, %v3021, %v3053
      %v3070 = vsel %vm3038, %v3022, %v3054
      %v3071 = vsel %vm3039, %v3023, %v3055
      %v3072 = vsel %vm3040, %v3024, %v3056
      %v3073 = vsel %vm3041, %v3025, %v3057
      %v3074 = vsel %vm3042, %v3026, %v3058
      %v3075 = vsel %vm3043, %v3027, %v3059
      %v3076 = vsel %vm3044, %v3028, %v3060
      %v3077 = vmul.f32 %v2677, 0.5
      %v3078 = vmul.f32 %v2678, 0.5
      %v3079 = vmul.f32 %v2679, 0.5
      %v3080 = vmul.f32 %v2680, 0.5
      %v3081 = vmul.f32 %v2681, 0.5
      %v3082 = vmul.f32 %v2682, 0.5
      %v3083 = vmul.f32 %v2683, 0.5
      %v3084 = vmul.f32 %v2684, 0.5
      %v3085 = vmul.f32 %v2685, 0.5
      %v3086 = vmul.f32 %v2686, 0.5
      %v3087 = vmul.f32 %v2687, 0.5
      %v3088 = vmul.f32 %v2688, 0.5
      %v3089 = vmul.f32 %v2689, 0.5
      %v3090 = vmul.f32 %v2690, 0.5
      %v3091 = vmul.f32 %v2691, 0.5
      %v3092 = vmul.f32 %v2692, 0.5
      %v3093 = vadd.f32 %v3061, 1.0
      %v3094 = vadd.f32 %v3062, 1.0
      %v3095 = vadd.f32 %v3063, 1.0
      %v3096 = vadd.f32 %v3064, 1.0
      %v3097 = vadd.f32 %v3065, 1.0
      %v3098 = vadd.f32 %v3066, 1.0
      %v3099 = vadd.f32 %v3067, 1.0
      %v3100 = vadd.f32 %v3068, 1.0
      %v3101 = vadd.f32 %v3069, 1.0
      %v3102 = vadd.f32 %v3070, 1.0
      %v3103 = vadd.f32 %v3071, 1.0
      %v3104 = vadd.f32 %v3072, 1.0
      %v3105 = vadd.f32 %v3073, 1.0
      %v3106 = vadd.f32 %v3074, 1.0
      %v3107 = vadd.f32 %v3075, 1.0
      %v3108 = vadd.f32 %v3076, 1.0
      %v3109 = vmul.f32 %v3077, %v3093
      %v3110 = vmul.f32 %v3078, %v3094
      %v3111 = vmul.f32 %v3079, %v3095
      %v3112 = vmul.f32 %v3080, %v3096
      %v3113 = vmul.f32 %v3081, %v3097
      %v3114 = vmul.f32 %v3082, %v3098
      %v3115 = vmul.f32 %v3083, %v3099
      %v3116 = vmul.f32 %v3084, %v3100
      %v3117 = vmul.f32 %v3085, %v3101
      %v3118 = vmul.f32 %v3086, %v3102
      %v3119 = vmul.f32 %v3087, %v3103
      %v3120 = vmul.f32 %v3088, %v3104
      %v3121 = vmul.f32 %v3089, %v3105
      %v3122 = vmul.f32 %v3090, %v3106
      %v3123 = vmul.f32 %v3091, %v3107
      %v3124 = vmul.f32 %v3092, %v3108
      %v3125 = vld [vmem:[%s476] sm:$0x1]
      %v3126 = vxor.u32 %v3125, 2147483648
      %v3127 = vmul.f32 %v3126, 1.442695
      %v3128 = vpow.pop %v3127
      %v3129 = vadd.f32 %v3128, 1.0
      %v3130 = vrcp.pop %v3129
      %v3131 = vmul.f32 1.0, %v3130
      %v3132 = vadd.f32 %v3131, 1.0
      %v3134 = vlaneseq
      %v3135 = vshrl.u32 %v3134, 7
      %v3136 = vsub.s32 0, %v3135
      %v3137 = vrot.slane %v3132, %v3136
      %v3139 = vmul.f32 %v3109, %v3137
      %v3140 = vmul.f32 %v3110, %v3137
      %v3141 = vmul.f32 %v3111, %v3137
      %v3142 = vmul.f32 %v3112, %v3137
      %v3143 = vmul.f32 %v3113, %v3137
      %v3144 = vmul.f32 %v3114, %v3137
      %v3145 = vmul.f32 %v3115, %v3137
      %v3146 = vmul.f32 %v3116, %v3137
      %v3147 = vmul.f32 %v3117, %v3137
      %v3148 = vmul.f32 %v3118, %v3137
      %v3149 = vmul.f32 %v3119, %v3137
      %v3150 = vmul.f32 %v3120, %v3137
      %v3151 = vmul.f32 %v3121, %v3137
      %v3152 = vmul.f32 %v3122, %v3137
      %v3153 = vmul.f32 %v3123, %v3137
      %v3154 = vmul.f32 %v3124, %v3137
      %v3155 = vpack.c.bf16 %v3140, %v3139
      %v3156 = vpack.c.bf16 %v3142, %v3141
      %v3157 = vpack.c.bf16 %v3144, %v3143
      %v3158 = vpack.c.bf16 %v3146, %v3145
      %v3159 = vpack.c.bf16 %v3148, %v3147
      %v3160 = vpack.c.bf16 %v3150, %v3149
      %v3161 = vpack.c.bf16 %v3152, %v3151
      %v3162 = vpack.c.bf16 %v3154, %v3153
      %v3163 = vld [vmem:[%s6] sm:$0xf]
      %v3164 = vld [vmem:[%s6 + $0x4] sm:$0xf]
      %v3165 = vld [vmem:[%s6 + $0x8] sm:$0xf]
      %v3166 = vld [vmem:[%s6 + $0xc] sm:$0xf]
      %v3167 = vld [vmem:[%s7] sm:$0x1]
      %v3169 = vlaneseq
      %v3170 = vshrl.u32 %v3169, 7
      %v3171 = vsub.s32 0, %v3170
      %v3172 = vrot.slane %v3167, %v3171
      %v3178 = vunpack.c.l.b16 %v3163
      %v3179 = vunpack.c.l.b16 %v3164
      %v3180 = vunpack.c.l.b16 %v3165
      %v3181 = vunpack.c.l.b16 %v3166
      %v3182 = vpack.c.b16 %v3179, %v3178
      %v3183 = vpack.c.b16 %v3181, %v3180
      %v3187 = vsel %vm1393, %v3155, 0
      %v3190 = vsel %vm1393, %v3156, 0
      %v3193 = vsel %vm1393, %v3157, 0
      %v3196 = vsel %vm1393, %v3158, 0
      %v3199 = vsel %vm1393, %v3159, 0
      %v3202 = vsel %vm1393, %v3160, 0
      %v3205 = vsel %vm1393, %v3161, 0
      %v3208 = vsel %vm1393, %v3162, 0
      %3210 = vmatprep.subr.bf16.mxu0 0
      %3211 = vmatpush1.bf16.msra.mxu0 %v3182
      %3212 = vmatprep.subr.bf16.mxu0 0
      %3213 = vmatpush1.bf16.msra.mxu0 %v3183
      %3214 = vmatprep.subr.bf16.mxu0 0
      %3215 = vmatpush1.bf16.msra.mxu0 0
      %3216 = vmatprep.subr.bf16.mxu0 0
      %3217 = vmatpush1.bf16.msra.mxu0 0
      %3218 = vmatprep.subr.bf16.mxu0 0
      %3219 = vmatpush1.bf16.msra.mxu0 0
      %3220 = vmatprep.subr.bf16.mxu0 0
      %3221 = vmatpush1.bf16.msra.mxu0 0
      %3222 = vmatprep.subr.bf16.mxu0 0
      %3223 = vmatpush1.bf16.msra.mxu0 0
      %3224 = vmatprep.subr.bf16.mxu0 0
      %3225 = vmatpush1.bf16.msra.mxu0 0
      %3226 = vmatprep.subr.bf16.mxu0 0
      %3227 = vmatpush1.bf16.msra.mxu0 0
      %3228 = vmatprep.subr.bf16.mxu0 0
      %3229 = vmatpush1.bf16.msra.mxu0 0
      %3230 = vmatprep.subr.bf16.mxu0 0
      %3231 = vmatpush1.bf16.msra.mxu0 0
      %3232 = vmatprep.subr.bf16.mxu0 0
      %3233 = vmatpush1.bf16.msra.mxu0 0
      %3234 = vmatprep.subr.bf16.mxu0 0
      %3235 = vmatpush1.bf16.msra.mxu0 0
      %3236 = vmatprep.subr.bf16.mxu0 0
      %3237 = vmatpush1.bf16.msra.mxu0 0
      %3238 = vmatprep.subr.bf16.mxu0 0
      %3239 = vmatpush1.bf16.msra.mxu0 0
      %3240 = vmatprep.subr.bf16.mxu0 0
      %3241 = vmatpush1.bf16.msra.mxu0 0
      %3242 = vmatprep.mubr.bf16.mxu0 0
      %3243 = vmatmul.mubr.bf16.gmra.mrb[0].mxu0 %v3187
      %v3244 = vpop.f32.mrb[0].mxu0
      %v3245 = vadd.f32 %v3172, %v3244
      %v3246 = vpop.f32.mrb[0].mxu0
      %v3247 = vpop.f32.mrb[0].mxu0
      %v3248 = vadd.f32 %v3172, %v3247
      %v3249 = vpop.f32.mrb[0].mxu0
      %3250 = vmatprep.mubr.bf16.mxu0 0
      %3251 = vmatmul.mubr.bf16.gmra.mrb[0].mxu0 %v3190
      %v3252 = vpop.f32.mrb[0].mxu0
      %v3253 = vadd.f32 %v3172, %v3252
      %v3254 = vpop.f32.mrb[0].mxu0
      %v3255 = vpop.f32.mrb[0].mxu0
      %v3256 = vadd.f32 %v3172, %v3255
      %v3257 = vpop.f32.mrb[0].mxu0
      %3258 = vmatprep.mubr.bf16.mxu0 0
      %3259 = vmatmul.mubr.bf16.gmra.mrb[0].mxu0 %v3193
      %v3260 = vpop.f32.mrb[0].mxu0
      %v3261 = vadd.f32 %v3172, %v3260
      %v3262 = vpop.f32.mrb[0].mxu0
      %v3263 = vpop.f32.mrb[0].mxu0
      %v3264 = vadd.f32 %v3172, %v3263
      %v3265 = vpop.f32.mrb[0].mxu0
      %3266 = vmatprep.mubr.bf16.mxu0 0
      %3267 = vmatmul.mubr.bf16.gmra.mrb[0].mxu0 %v3196
      %v3268 = vpop.f32.mrb[0].mxu0
      %v3269 = vadd.f32 %v3172, %v3268
      %v3270 = vpop.f32.mrb[0].mxu0
      %v3271 = vpop.f32.mrb[0].mxu0
      %v3272 = vadd.f32 %v3172, %v3271
      %v3273 = vpop.f32.mrb[0].mxu0
      %3274 = vmatprep.mubr.bf16.mxu0 0
      %3275 = vmatmul.mubr.bf16.gmra.mrb[0].mxu0 %v3199
      %v3276 = vpop.f32.mrb[0].mxu0
      %v3277 = vadd.f32 %v3172, %v3276
      %v3278 = vpop.f32.mrb[0].mxu0
      %v3279 = vpop.f32.mrb[0].mxu0
      %v3280 = vadd.f32 %v3172, %v3279
      %v3281 = vpop.f32.mrb[0].mxu0
      %3282 = vmatprep.mubr.bf16.mxu0 0
      %3283 = vmatmul.mubr.bf16.gmra.mrb[0].mxu0 %v3202
      %v3284 = vpop.f32.mrb[0].mxu0
      %v3285 = vadd.f32 %v3172, %v3284
      %v3286 = vpop.f32.mrb[0].mxu0
      %v3287 = vpop.f32.mrb[0].mxu0
      %v3288 = vadd.f32 %v3172, %v3287
      %v3289 = vpop.f32.mrb[0].mxu0
      %3290 = vmatprep.mubr.bf16.mxu0 0
      %3291 = vmatmul.mubr.bf16.gmra.mrb[0].mxu0 %v3205
      %v3292 = vpop.f32.mrb[0].mxu0
      %v3293 = vadd.f32 %v3172, %v3292
      %v3294 = vpop.f32.mrb[0].mxu0
      %v3295 = vpop.f32.mrb[0].mxu0
      %v3296 = vadd.f32 %v3172, %v3295
      %v3297 = vpop.f32.mrb[0].mxu0
      %3298 = vmatprep.mubr.bf16.mxu0 0
      %3299 = vmatmul.mubr.bf16.gmra.mrb[0].mxu0 %v3208
      %v3300 = vpop.f32.mrb[0].mxu0
      %v3301 = vadd.f32 %v3172, %v3300
      %v3302 = vpop.f32.mrb[0].mxu0
      %v3303 = vpop.f32.mrb[0].mxu0
      %v3304 = vadd.f32 %v3172, %v3303
      %v3305 = vpop.f32.mrb[0].mxu0
      %3306 = vdwg.mxu0
      %3307 = vst.msk [vmem:[%s485] sm:$0xff] %vm1393, %v3245
      %3308 = vst.msk [vmem:[%s485 + $0x8] sm:$0xff] %vm1393, %v3248
      %3309 = vst.msk [vmem:[%s485 + $0x10] sm:$0xff] %vm1393, %v3253
      %3310 = vst.msk [vmem:[%s485 + $0x18] sm:$0xff] %vm1393, %v3256
      %3311 = vst.msk [vmem:[%s485 + $0x20] sm:$0xff] %vm1393, %v3261
      %3312 = vst.msk [vmem:[%s485 + $0x28] sm:$0xff] %vm1393, %v3264
      %3313 = vst.msk [vmem:[%s485 + $0x30] sm:$0xff] %vm1393, %v3269
      %3314 = vst.msk [vmem:[%s485 + $0x38] sm:$0xff] %vm1393, %v3272
      %3315 = vst.msk [vmem:[%s485 + $0x40] sm:$0xff] %vm1393, %v3277
      %3316 = vst.msk [vmem:[%s485 + $0x48] sm:$0xff] %vm1393, %v3280
      %3317 = vst.msk [vmem:[%s485 + $0x50] sm:$0xff] %vm1393, %v3285
      %3318 = vst.msk [vmem:[%s485 + $0x58] sm:$0xff] %vm1393, %v3288
      %3319 = vst.msk [vmem:[%s485 + $0x60] sm:$0xff] %vm1393, %v3293
      %3320 = vst.msk [vmem:[%s485 + $0x68] sm:$0xff] %vm1393, %v3296
      %3321 = vst.msk [vmem:[%s485 + $0x70] sm:$0xff] %vm1393, %v3301
      %3322 = vst.msk [vmem:[%s485 + $0x78] sm:$0xff] %vm1393, %v3304
      %s3323 = smul.u32 16, %s24
      %p3324 = scmp.lt.s32.totalorder %s23, 1
      %s3325 = scalar_select %p3324, %s23, 1
      %p3326 = scmp.lt.s32.totalorder %s3323, 31
      %s3327 = scalar_select %p3326, %s3323, 31
      %s3328 = smul.addr %s3325, 32
      %s3329 = sadd.s32 %s3327, %s3328
      %s3330 = smul.addr %s3329, 8
      %s3331 = scalar_lea.vmem %s8, %s3330
      // Predicated region
      $region53: #{asc_forward.3} parent=51 // pred_check
        %p3332 = pneg %p261
      $region54: #{asc_forward.3} parent=51 // pred_check_branch
        %3334 = sbr.rel (%p3332) target = $region56
      $region55: #{asc_forward.3} parent=51 // pred_region
        %s3335 = smul.u32 16, %s24
      $region56: #{asc_forward.3} parent=51 // pred_fallthru
        _
    $region52: #{asc_forward.3} parent=5 // pred_fallthru
      _
    %p3336 = scmp.le.s32.totalorder 2, %s14
    // Predicated region
    $region57: #{asc_forward.3} parent=5 // pred_check
      %p3337 = pneg %p3336
    $region58: #{asc_forward.3} parent=5 // pred_check_branch
      %3339 = sbr.rel (%p3337) target = $region60
    $region59: #{asc_forward.3} parent=5 // pred_region
      %s3340 = ssub.s32 %s14, 2
      // Predicated region
      $region61: #{asc_forward.3} parent=59 // pred_check
        %p3341 = pneg %p267
      $region62: #{asc_forward.3} parent=59 // pred_check_branch
        %3343 = sbr.rel (%p3341) target = $region64
      $region63: #{asc_forward.3} parent=59 // pred_region
        %s3344 = smul.u32 16, %s26
        %p3345 = scmp.lt.s32.totalorder %s25, 1
        %s3346 = scalar_select %p3345, %s25, 1
        %p3347 = scmp.lt.s32.totalorder %s3344, 31
        %s3348 = scalar_select %p3347, %s3344, 31
        %s3349 = smul.addr %s3346, 32
        %s3350 = sadd.s32 %s3348, %s3349
        %s3351 = smul.addr %s3350, 8
        %s3352 = scalar_lea.vmem %s8, %s3351
      $region64: #{asc_forward.3} parent=59 // pred_fallthru
        _
    $region60: #{asc_forward.3} parent=5 // pred_fallthru
      _
  $region6: #{asc_forward.3} parent=0 // loop_footer
    %s18 = sadd.s32 1, %s14
  $region7: #{asc_forward.3} parent=0 // loop_footer_branch
    %13 = sbr.rel target = $region3
  $region8: #{asc_forward.3} parent=0 // loop_exit
    _

// kernel: asc_forward.2
$region0: #{asc_forward.2}
  #allocation0 [shape = 'u32[]', space=smem, size = 0x4, offset = 0x4, fixed_abs, tag = 'smem constant byte address 0x4 - core index']
  #allocation1 [shape = 'u32[144,128]{1,0:T(1,128)}', space=vmem, size = 0x12000, scoped, tag = 'internal scratch']
  #allocation2 [shape = 'f32[1,1]{1,0:T(1,128)S(1)}', space=vmem, size = 0x200, scoped, tag = 'scoped memory for asc_forward.2']
  %s0 = inlined_call_operand.vmem [shape: f32[2,256,32], index: 0, kind: input, shape index: {}, may-alias: {0,1,2}]
  %s1 = inlined_call_operand.vmem [shape: f32[2,256,32], index: 1, kind: input, shape index: {}, may-alias: {0,1,2}]
  %s2 = inlined_call_operand.vmem [shape: f32[2,256,32], index: 2, kind: input, shape index: {}, may-alias: {0,1,2}]
  %s3 = inlined_call_operand.vmem [shape: bf16[9,32,32], index: 3, kind: input, shape index: {}]
  %s4 = inlined_call_operand.vmem [shape: f32[1,32], index: 4, kind: input, shape index: {}]
  %s5 = inlined_call_operand.vmem [shape: bf16[32,16], index: 5, kind: input, shape index: {}]
  %s6 = inlined_call_operand.vmem [shape: f32[1,16], index: 6, kind: input, shape index: {}]
  %s7 = inlined_call_operand.vmem [shape: f32[1,16], index: 7, kind: input, shape index: {}]
  %s8 = inlined_call_operand.<no memory space> [shape: f32[1,1], index: 8, kind: input, shape index: {}]
  %s9 = inlined_call_operand.vmem [shape: f32[2,256,32], index: 9, kind: output, shape index: {0}]
  %s10 = inlined_call_operand.vmem [shape: f32[2,1,32], index: 10, kind: output, shape index: {1}]
  %11 = xla_tuple %s9, %s10
  %s12 = sld [smem:[#allocation0]]
  $region89: #{asc_forward.2} parent=0
    _
  %s14 = ssub.s32 1, %s12
  %s15 = scalar_select 0, %s14, %s12
  %v16 = vstv %s8
  %17 = vst [vmem:[#allocation2] sm:$0x1] %v16
  loop: start=0, step=1, limit=6
  $region2: #{asc_forward.2} parent=0 // loop_pre_header
    _
  $region3: #{asc_forward.2} parent=0 // loop_header
    %s19 = sphi 0, %s23
    %p20 = scmp.ge.s32.totalorder %s19, 6
    %s26 = sphi 0, %s38
    %s27 = sphi 0, %s34
    %s28 = sphi 0, %s26
    %s29 = sphi 0, %s27
    %s30 = sphi 0, %s28
    %s31 = sphi 0, %s29
    %s43 = sphi 0, %s45
    %s46 = sphi 0, %s43
    %s47 = sphi 0, %s46
    %s63 = sphi 0, %s47
    %s79 = sphi 0, %s81
    %s82 = sphi 0, %s79
    %s83 = sphi 0, %s82
    %s99 = sphi 0, %s83
    %s115 = sphi 0, %s117
    %s118 = sphi 0, %s115
    %s119 = sphi 0, %s118
    %s135 = sphi 0, %s119
    %s139 = sphi 0, %s139
    %s141 = sphi 0, %s139
    %s142 = sphi 0, %s141
    %s156 = sphi 0, %s142
    %s160 = sphi 0, %s160
    %s162 = sphi 0, %s160
    %s163 = sphi 0, %s162
    %s177 = sphi 0, %s163
    %s181 = sphi 0, %s181
    %s183 = sphi 0, %s181
    %s184 = sphi 0, %s183
    %s198 = sphi 0, %s184
    %s202 = sphi 0, %s202
    %s204 = sphi 0, %s202
    %s205 = sphi 0, %s204
    %s219 = sphi 0, %s205
    %s223 = sphi 0, %s223
    %s225 = sphi 0, %s223
    %s226 = sphi 0, %s225
    %s240 = sphi 0, %s226
    %s244 = sphi 0, %s244
    %s246 = sphi 0, %s244
    %s247 = sphi 0, %s246
    %s261 = sphi 0, %s247
    %s269 = sphi 0, %s271
    %s272 = sphi 0, %s269
    %s273 = sphi 0, %s272
    %s289 = sphi 0, %s273
    %s295 = sphi 0, %s297
    %s298 = sphi 0, %s295
    %s299 = sphi 0, %s298
    %s315 = sphi 0, %s299
  $region4: #{asc_forward.2} parent=0 // loop_header_branch
    %22 = sbr.rel (%p20) target = $region8
  $region5: #{asc_forward.2} parent=0 // loop_body
    %s24 = ssub.s32 %s19, 1
    %s25 = ssub.s32 %s19, 2
    %s32 = sadd.s32 1, %s27
    %p33 = scmp.ge.s32.totalorder %s32, 2
    %s34 = scalar_select %p33, 0, %s32
    %s35 = sadd.s32 1, %s26
    %s36 = scalar_select %p33, %s35, %s26
    %p37 = scmp.ge.s32.totalorder %s36, 2
    %s38 = scalar_select %p37, 0, %s36
    %s39 = ssub.s32 %s26, %s38
    %s40 = ssub.s32 %s27, %s34
    %s41 = sor.u32 %s39, %s40
    %p42 = scmp.eq.s32.totalorder %s41, 0
    %s44 = sadd.s32 %s43, 1
    %s45 = scalar_select %p42, %s43, %s44
    %p48 = pneg %p42
    %p49 = scmp.eq.s32.totalorder %s19, 3
    %p50 = por %p48, %p49
    %p51 = scmp.ne.s32.totalorder %s43, %s46
    %p52 = scmp.eq.s32.totalorder %s19, 0
    %p53 = por %p51, %p52
    %p54 = scmp.ne.s32.totalorder %s43, %s46
    %p55 = scmp.eq.s32.totalorder %s24, 3
    %p56 = por %p54, %p55
    %p57 = scmp.ne.s32.totalorder %s46, %s47
    %p58 = scmp.eq.s32.totalorder %s24, 0
    %p59 = por %p57, %p58
    %p60 = scmp.ne.s32.totalorder %s46, %s47
    %p61 = scmp.eq.s32.totalorder %s25, 3
    %p62 = por %p60, %p61
    %p64 = scmp.ne.s32.totalorder %s47, %s63
    %p65 = scmp.eq.s32.totalorder %s25, 0
    %p66 = por %p64, %p65
    %s67 = smul.u32 %s27, 8
    %s68 = ssub.s32 %s67, 1
    %p69 = scmp.gt.s32.totalorder %s68, 0
    %s70 = scalar_select %p69, %s68, 0
    %s71 = smul.u32 %s34, 8
    %s72 = ssub.s32 %s71, 1
    %p73 = scmp.gt.s32.totalorder %s72, 0
    %s74 = scalar_select %p73, %s72, 0
    %s75 = ssub.s32 %s26, %s38
    %s76 = ssub.s32 %s70, %s74
    %s77 = sor.u32 %s75, %s76
    %p78 = scmp.eq.s32.totalorder %s77, 0
    %s80 = sadd.s32 %s79, 1
    %s81 = scalar_select %p78, %s79, %s80
    %p84 = pneg %p78
    %p85 = scmp.eq.s32.totalorder %s19, 3
    %p86 = por %p84, %p85
    %p87 = scmp.ne.s32.totalorder %s79, %s82
    %p88 = scmp.eq.s32.totalorder %s19, 0
    %p89 = por %p87, %p88
    %p90 = scmp.ne.s32.totalorder %s79, %s82
    %p91 = scmp.eq.s32.totalorder %s24, 3
    %p92 = por %p90, %p91
    %p93 = scmp.ne.s32.totalorder %s82, %s83
    %p94 = scmp.eq.s32.totalorder %s24, 0
    %p95 = por %p93, %p94
    %p96 = scmp.ne.s32.totalorder %s82, %s83
    %p97 = scmp.eq.s32.totalorder %s25, 3
    %p98 = por %p96, %p97
    %p100 = scmp.ne.s32.totalorder %s83, %s99
    %p101 = scmp.eq.s32.totalorder %s25, 0
    %p102 = por %p100, %p101
    %s103 = smul.u32 %s27, 8
    %s104 = sadd.s32 %s103, 8
    %p105 = scmp.lt.s32.totalorder %s104, 15
    %s106 = scalar_select %p105, %s104, 15
    %s107 = smul.u32 %s34, 8
    %s108 = sadd.s32 %s107, 8
    %p109 = scmp.lt.s32.totalorder %s108, 15
    %s110 = scalar_select %p109, %s108, 15
    %s111 = ssub.s32 %s26, %s38
    %s112 = ssub.s32 %s106, %s110
    %s113 = sor.u32 %s111, %s112
    %p114 = scmp.eq.s32.totalorder %s113, 0
    %s116 = sadd.s32 %s115, 1
    %s117 = scalar_select %p114, %s115, %s116
    %p120 = pneg %p114
    %p121 = scmp.eq.s32.totalorder %s19, 3
    %p122 = por %p120, %p121
    %p123 = scmp.ne.s32.totalorder %s115, %s118
    %p124 = scmp.eq.s32.totalorder %s19, 0
    %p125 = por %p123, %p124
    %p126 = scmp.ne.s32.totalorder %s115, %s118
    %p127 = scmp.eq.s32.totalorder %s24, 3
    %p128 = por %p126, %p127
    %p129 = scmp.ne.s32.totalorder %s118, %s119
    %p130 = scmp.eq.s32.totalorder %s24, 0
    %p131 = por %p129, %p130
    %p132 = scmp.ne.s32.totalorder %s118, %s119
    %p133 = scmp.eq.s32.totalorder %s25, 3
    %p134 = por %p132, %p133
    %p136 = scmp.ne.s32.totalorder %s119, %s135
    %p137 = scmp.eq.s32.totalorder %s25, 0
    %p138 = por %p136, %p137
    %s140 = sadd.s32 %s139, 1
    %p143 = scmp.eq.s32.totalorder %s19, 3
    %p144 = scmp.ne.s32.totalorder %s139, %s141
    %p145 = scmp.eq.s32.totalorder %s19, 0
    %p146 = por %p144, %p145
    %p147 = scmp.ne.s32.totalorder %s139, %s141
    %p148 = scmp.eq.s32.totalorder %s24, 3
    %p149 = por %p147, %p148
    %p150 = scmp.ne.s32.totalorder %s141, %s142
    %p151 = scmp.eq.s32.totalorder %s24, 0
    %p152 = por %p150, %p151
    %p153 = scmp.ne.s32.totalorder %s141, %s142
    %p154 = scmp.eq.s32.totalorder %s25, 3
    %p155 = por %p153, %p154
    %p157 = scmp.ne.s32.totalorder %s142, %s156
    %p158 = scmp.eq.s32.totalorder %s25, 0
    %p159 = por %p157, %p158
    %s161 = sadd.s32 %s160, 1
    %p164 = scmp.eq.s32.totalorder %s19, 3
    %p165 = scmp.ne.s32.totalorder %s160, %s162
    %p166 = scmp.eq.s32.totalorder %s19, 0
    %p167 = por %p165, %p166
    %p168 = scmp.ne.s32.totalorder %s160, %s162
    %p169 = scmp.eq.s32.totalorder %s24, 3
    %p170 = por %p168, %p169
    %p171 = scmp.ne.s32.totalorder %s162, %s163
    %p172 = scmp.eq.s32.totalorder %s24, 0
    %p173 = por %p171, %p172
    %p174 = scmp.ne.s32.totalorder %s162, %s163
    %p175 = scmp.eq.s32.totalorder %s25, 3
    %p176 = por %p174, %p175
    %p178 = scmp.ne.s32.totalorder %s163, %s177
    %p179 = scmp.eq.s32.totalorder %s25, 0
    %p180 = por %p178, %p179
    %s182 = sadd.s32 %s181, 1
    %p185 = scmp.eq.s32.totalorder %s19, 3
    %p186 = scmp.ne.s32.totalorder %s181, %s183
    %p187 = scmp.eq.s32.totalorder %s19, 0
    %p188 = por %p186, %p187
    %p189 = scmp.ne.s32.totalorder %s181, %s183
    %p190 = scmp.eq.s32.totalorder %s24, 3
    %p191 = por %p189, %p190
    %p192 = scmp.ne.s32.totalorder %s183, %s184
    %p193 = scmp.eq.s32.totalorder %s24, 0
    %p194 = por %p192, %p193
    %p195 = scmp.ne.s32.totalorder %s183, %s184
    %p196 = scmp.eq.s32.totalorder %s25, 3
    %p197 = por %p195, %p196
    %p199 = scmp.ne.s32.totalorder %s184, %s198
    %p200 = scmp.eq.s32.totalorder %s25, 0
    %p201 = por %p199, %p200
    %s203 = sadd.s32 %s202, 1
    %p206 = scmp.eq.s32.totalorder %s19, 3
    %p207 = scmp.ne.s32.totalorder %s202, %s204
    %p208 = scmp.eq.s32.totalorder %s19, 0
    %p209 = por %p207, %p208
    %p210 = scmp.ne.s32.totalorder %s202, %s204
    %p211 = scmp.eq.s32.totalorder %s24, 3
    %p212 = por %p210, %p211
    %p213 = scmp.ne.s32.totalorder %s204, %s205
    %p214 = scmp.eq.s32.totalorder %s24, 0
    %p215 = por %p213, %p214
    %p216 = scmp.ne.s32.totalorder %s204, %s205
    %p217 = scmp.eq.s32.totalorder %s25, 3
    %p218 = por %p216, %p217
    %p220 = scmp.ne.s32.totalorder %s205, %s219
    %p221 = scmp.eq.s32.totalorder %s25, 0
    %p222 = por %p220, %p221
    %s224 = sadd.s32 %s223, 1
    %p227 = scmp.eq.s32.totalorder %s19, 3
    %p228 = scmp.ne.s32.totalorder %s223, %s225
    %p229 = scmp.eq.s32.totalorder %s19, 0
    %p230 = por %p228, %p229
    %p231 = scmp.ne.s32.totalorder %s223, %s225
    %p232 = scmp.eq.s32.totalorder %s24, 3
    %p233 = por %p231, %p232
    %p234 = scmp.ne.s32.totalorder %s225, %s226
    %p235 = scmp.eq.s32.totalorder %s24, 0
    %p236 = por %p234, %p235
    %p237 = scmp.ne.s32.totalorder %s225, %s226
    %p238 = scmp.eq.s32.totalorder %s25, 3
    %p239 = por %p237, %p238
    %p241 = scmp.ne.s32.totalorder %s226, %s240
    %p242 = scmp.eq.s32.totalorder %s25, 0
    %p243 = por %p241, %p242
    %s245 = sadd.s32 %s244, 1
    %p248 = scmp.eq.s32.totalorder %s19, 3
    %p249 = scmp.ne.s32.totalorder %s244, %s246
    %p250 = scmp.eq.s32.totalorder %s19, 0
    %p251 = por %p249, %p250
    %p252 = scmp.ne.s32.totalorder %s244, %s246
    %p253 = scmp.eq.s32.totalorder %s24, 3
    %p254 = por %p252, %p253
    %p255 = scmp.ne.s32.totalorder %s246, %s247
    %p256 = scmp.eq.s32.totalorder %s24, 0
    %p257 = por %p255, %p256
    %p258 = scmp.ne.s32.totalorder %s246, %s247
    %p259 = scmp.eq.s32.totalorder %s25, 3
    %p260 = por %p258, %p259
    %p262 = scmp.ne.s32.totalorder %s247, %s261
    %p263 = scmp.eq.s32.totalorder %s25, 0
    %p264 = por %p262, %p263
    %s265 = ssub.s32 %s26, %s38
    %s266 = ssub.s32 %s27, %s34
    %s267 = sor.u32 %s265, %s266
    %p268 = scmp.eq.s32.totalorder %s267, 0
    %s270 = sadd.s32 %s269, 1
    %s271 = scalar_select %p268, %s269, %s270
    %p274 = pneg %p268
    %p275 = scmp.eq.s32.totalorder %s19, 3
    %p276 = por %p274, %p275
    %p277 = scmp.ne.s32.totalorder %s269, %s272
    %p278 = scmp.eq.s32.totalorder %s19, 0
    %p279 = por %p277, %p278
    %p280 = scmp.ne.s32.totalorder %s269, %s272
    %p281 = scmp.eq.s32.totalorder %s24, 3
    %p282 = por %p280, %p281
    %p283 = scmp.ne.s32.totalorder %s272, %s273
    %p284 = scmp.eq.s32.totalorder %s24, 0
    %p285 = por %p283, %p284
    %p286 = scmp.ne.s32.totalorder %s272, %s273
    %p287 = scmp.eq.s32.totalorder %s25, 3
    %p288 = por %p286, %p287
    %p290 = scmp.ne.s32.totalorder %s273, %s289
    %p291 = scmp.eq.s32.totalorder %s25, 0
    %p292 = por %p290, %p291
    %s293 = ssub.s32 %s26, %s38
    %p294 = scmp.eq.s32.totalorder %s293, 0
    %s296 = sadd.s32 %s295, 1
    %s297 = scalar_select %p294, %s295, %s296
    %p300 = pneg %p294
    %p301 = scmp.eq.s32.totalorder %s19, 3
    %p302 = por %p300, %p301
    %p303 = scmp.ne.s32.totalorder %s295, %s298
    %p304 = scmp.eq.s32.totalorder %s19, 0
    %p305 = por %p303, %p304
    %p306 = scmp.ne.s32.totalorder %s295, %s298
    %p307 = scmp.eq.s32.totalorder %s24, 3
    %p308 = por %p306, %p307
    %p309 = scmp.ne.s32.totalorder %s298, %s299
    %p310 = scmp.eq.s32.totalorder %s24, 0
    %p311 = por %p309, %p310
    %p312 = scmp.ne.s32.totalorder %s298, %s299
    %p313 = scmp.eq.s32.totalorder %s25, 3
    %p314 = por %p312, %p313
    %p316 = scmp.ne.s32.totalorder %s299, %s315
    %p317 = scmp.eq.s32.totalorder %s25, 0
    %p318 = por %p316, %p317
    %p319 = scmp.le.s32.totalorder 1, %s19
    %p320 = scmp.lt.s32.totalorder %s19, 5
    %p321 = pnand %p319, %p320
    %p322 = pneg %p321
    // Predicated region
    $region9: #{asc_forward.2} parent=5 // pred_check
      _
    $region10: #{asc_forward.2} parent=5 // pred_check_branch
      %324 = sbr.rel (%p321) target = $region12
    $region11: #{asc_forward.2} parent=5 // pred_region
      %s325 = ssub.s32 %s19, 1
      // Predicated region
      $region13: #{asc_forward.2} parent=11 // pred_check
        %p326 = pneg %p152
      $region14: #{asc_forward.2} parent=11 // pred_check_branch
        %328 = sbr.rel (%p326) target = $region16
      $region15: #{asc_forward.2} parent=11 // pred_region
        _
      $region16: #{asc_forward.2} parent=11 // pred_fallthru
        _
      // Predicated region
      $region17: #{asc_forward.2} parent=11 // pred_check
        %p329 = pneg %p173
      $region18: #{asc_forward.2} parent=11 // pred_check_branch
        %331 = sbr.rel (%p329) target = $region20
      $region19: #{asc_forward.2} parent=11 // pred_region
        _
      $region20: #{asc_forward.2} parent=11 // pred_fallthru
        _
      // Predicated region
      $region21: #{asc_forward.2} parent=11 // pred_check
        %p332 = pneg %p194
      $region22: #{asc_forward.2} parent=11 // pred_check_branch
        %334 = sbr.rel (%p332) target = $region24
      $region23: #{asc_forward.2} parent=11 // pred_region
        _
      $region24: #{asc_forward.2} parent=11 // pred_fallthru
        _
      // Predicated region
      $region25: #{asc_forward.2} parent=11 // pred_check
        %p335 = pneg %p215
      $region26: #{asc_forward.2} parent=11 // pred_check_branch
        %337 = sbr.rel (%p335) target = $region28
      $region27: #{asc_forward.2} parent=11 // pred_region
        _
      $region28: #{asc_forward.2} parent=11 // pred_fallthru
        _
      // Predicated region
      $region29: #{asc_forward.2} parent=11 // pred_check
        %p338 = pneg %p236
      $region30: #{asc_forward.2} parent=11 // pred_check_branch
        %340 = sbr.rel (%p338) target = $region32
      $region31: #{asc_forward.2} parent=11 // pred_region
        _
      $region32: #{asc_forward.2} parent=11 // pred_fallthru
        _
      // Predicated region
      $region33: #{asc_forward.2} parent=11 // pred_check
        %p341 = pneg %p257
      $region34: #{asc_forward.2} parent=11 // pred_check_branch
        %343 = sbr.rel (%p341) target = $region36
      $region35: #{asc_forward.2} parent=11 // pred_region
        _
      $region36: #{asc_forward.2} parent=11 // pred_fallthru
        _
    $region12: #{asc_forward.2} parent=5 // pred_fallthru
      _
    %p344 = scmp.lt.s32.totalorder %s19, 4
    // Predicated region
    $region37: #{asc_forward.2} parent=5 // pred_check
      %p345 = pneg %p344
    $region38: #{asc_forward.2} parent=5 // pred_check_branch
      %347 = sbr.rel (%p345) target = $region40
    $region39: #{asc_forward.2} parent=5 // pred_region
      // Predicated region
      $region41: #{asc_forward.2} parent=39 // pred_check
        %p348 = pneg %p53
      $region42: #{asc_forward.2} parent=39 // pred_check_branch
        %350 = sbr.rel (%p348) target = $region44
      $region43: #{asc_forward.2} parent=39 // pred_region
        %s351 = smul.u32 16, %s27
        %p352 = scmp.lt.s32.totalorder %s26, 1
        %s353 = scalar_select %p352, %s26, 1
        %p354 = scmp.lt.s32.totalorder %s351, 31
        %s355 = scalar_select %p354, %s351, 31
        %s356 = smul.addr %s353, 32
        %s357 = sadd.s32 %s355, %s356
        %s358 = smul.addr %s357, 8
        %s359 = scalar_lea.vmem %s0, %s358
        %s360 = smul.u32 16, %s27
      $region44: #{asc_forward.2} parent=39 // pred_fallthru
        _
      // Predicated region
      $region45: #{asc_forward.2} parent=39 // pred_check
        %p361 = pneg %p89
      $region46: #{asc_forward.2} parent=39 // pred_check_branch
        %363 = sbr.rel (%p361) target = $region48
      $region47: #{asc_forward.2} parent=39 // pred_region
        %s364 = smul.u32 %s27, 8
        %s365 = ssub.s32 %s364, 1
        %p366 = scmp.gt.s32.totalorder %s365, 0
        %s367 = scalar_select %p366, %s365, 0
        %s368 = smul.u32 2, %s367
        %p369 = scmp.lt.s32.totalorder %s26, 1
        %s370 = scalar_select %p369, %s26, 1
        %p371 = scmp.lt.s32.totalorder %s368, 31
        %s372 = scalar_select %p371, %s368, 31
        %s373 = smul.addr %s370, 32
        %s374 = sadd.s32 %s372, %s373
        %s375 = smul.addr %s374, 8
        %s376 = scalar_lea.vmem %s1, %s375
        %s377 = smul.u32 %s27, 8
        %s378 = ssub.s32 %s377, 1
        %p379 = scmp.gt.s32.totalorder %s378, 0
        %s380 = scalar_select %p379, %s378, 0
        %s381 = smul.u32 2, %s380
      $region48: #{asc_forward.2} parent=39 // pred_fallthru
        _
      // Predicated region
      $region49: #{asc_forward.2} parent=39 // pred_check
        %p382 = pneg %p125
      $region50: #{asc_forward.2} parent=39 // pred_check_branch
        %384 = sbr.rel (%p382) target = $region52
      $region51: #{asc_forward.2} parent=39 // pred_region
        %s385 = smul.u32 %s27, 8
        %s386 = sadd.s32 %s385, 8
        %p387 = scmp.lt.s32.totalorder %s386, 15
        %s388 = scalar_select %p387, %s386, 15
        %s389 = smul.u32 2, %s388
        %p390 = scmp.lt.s32.totalorder %s26, 1
        %s391 = scalar_select %p390, %s26, 1
        %p392 = scmp.lt.s32.totalorder %s389, 31
        %s393 = scalar_select %p392, %s389, 31
        %s394 = smul.addr %s391, 32
        %s395 = sadd.s32 %s393, %s394
        %s396 = smul.addr %s395, 8
        %s397 = scalar_lea.vmem %s2, %s396
        %s398 = smul.u32 %s27, 8
        %s399 = sadd.s32 %s398, 8
        %p400 = scmp.lt.s32.totalorder %s399, 15
        %s401 = scalar_select %p400, %s399, 15
        %s402 = smul.u32 2, %s401
      $region52: #{asc_forward.2} parent=39 // pred_fallthru
        _
    $region40: #{asc_forward.2} parent=5 // pred_fallthru
      _
    %p403 = scmp.le.s32.totalorder 1, %s19
    %p404 = scmp.lt.s32.totalorder %s19, 5
    %p405 = pnand %p403, %p404
    %p406 = pneg %p405
    // Predicated region
    $region53: #{asc_forward.2} parent=5 // pred_check
      _
    $region54: #{asc_forward.2} parent=5 // pred_check_branch
      %408 = sbr.rel (%p405) target = $region56
    $region55: #{asc_forward.2} parent=5 // pred_region
      %s409 = ssub.s32 %s19, 1
      %s410 = smul.u32 16, %s29
      %p411 = scmp.lt.s32.totalorder %s28, 1
      %s412 = scalar_select %p411, %s28, 1
      %p413 = scmp.lt.s32.totalorder %s410, 31
      %s414 = scalar_select %p413, %s410, 31
      %s415 = smul.addr %s412, 32
      %s416 = sadd.s32 %s414, %s415
      %s417 = smul.addr %s416, 8
      %s418 = scalar_lea.vmem %s0, %s417
      %p419 = pneg %p59
      %p420 = pneg %p56
      %s421 = smul.u32 %s29, 8
      %s422 = ssub.s32 %s421, 1
      %p423 = scmp.gt.s32.totalorder %s422, 0
      %s424 = scalar_select %p423, %s422, 0
      %s425 = smul.u32 2, %s424
      %p426 = scmp.lt.s32.totalorder %s28, 1
      %s427 = scalar_select %p426, %s28, 1
      %p428 = scmp.lt.s32.totalorder %s425, 31
      %s429 = scalar_select %p428, %s425, 31
      %s430 = smul.addr %s427, 32
      %s431 = sadd.s32 %s429, %s430
      %s432 = smul.addr %s431, 8
      %s433 = scalar_lea.vmem %s1, %s432
      %p434 = pneg %p95
      %p435 = pneg %p92
      %s436 = smul.u32 %s29, 8
      %s437 = sadd.s32 %s436, 8
      %p438 = scmp.lt.s32.totalorder %s437, 15
      %s439 = scalar_select %p438, %s437, 15
      %s440 = smul.u32 2, %s439
      %p441 = scmp.lt.s32.totalorder %s28, 1
      %s442 = scalar_select %p441, %s28, 1
      %p443 = scmp.lt.s32.totalorder %s440, 31
      %s444 = scalar_select %p443, %s440, 31
      %s445 = smul.addr %s442, 32
      %s446 = sadd.s32 %s444, %s445
      %s447 = smul.addr %s446, 8
      %s448 = scalar_lea.vmem %s2, %s447
      %p449 = pneg %p131
      %p450 = pneg %p128
      %p451 = pneg %p152
      %p452 = pneg %p149
      %p453 = pneg %p173
      %p454 = pneg %p170
      %p455 = pneg %p194
      %p456 = pneg %p191
      %p457 = pneg %p215
      %p458 = pneg %p212
      %p459 = pneg %p236
      %p460 = pneg %p233
      %p461 = pneg %p257
      %p462 = pneg %p254
      %p463 = pneg %p285
      %p464 = pneg %p282
      %s465 = smul.u32 16, %s29
      %p466 = scmp.lt.s32.totalorder %s28, 1
      %s467 = scalar_select %p466, %s28, 1
      %p468 = scmp.lt.s32.totalorder %s465, 31
      %s469 = scalar_select %p468, %s465, 31
      %s470 = smul.addr %s467, 32
      %s471 = sadd.s32 %s469, %s470
      %s472 = smul.addr %s471, 8
      %s473 = scalar_lea.vmem %s9, %s472
      %p474 = pneg %p311
      %p475 = pneg %p308
      %p476 = scmp.lt.s32.totalorder %s28, 1
      %s477 = scalar_select %p476, %s28, 1
      %s478 = scalar_lea.vmem %s10, %s477
      %s479 = smul.u32 16, %s29
      %p480 = scmp.lt.s32.totalorder %s28, 1
      %s481 = scalar_select %p480, %s28, 1
      %p482 = scmp.lt.s32.totalorder %s479, 31
      %s483 = scalar_select %p482, %s479, 31
      %s484 = smul.addr %s481, 32
      %s485 = sadd.s32 %s483, %s484
      %s486 = smul.addr %s485, 8
      %s487 = scalar_lea.vmem %s0, %s486
      %s488 = smul.u32 16, %s29
      %s489 = smul.u32 %s29, 8
      %s490 = ssub.s32 %s489, 1
      %p491 = scmp.gt.s32.totalorder %s490, 0
      %s492 = scalar_select %p491, %s490, 0
      %s493 = smul.u32 2, %s492
      %p494 = scmp.lt.s32.totalorder %s28, 1
      %s495 = scalar_select %p494, %s28, 1
      %p496 = scmp.lt.s32.totalorder %s493, 31
      %s497 = scalar_select %p496, %s493, 31
      %s498 = smul.addr %s495, 32
      %s499 = sadd.s32 %s497, %s498
      %s500 = smul.addr %s499, 8
      %s501 = scalar_lea.vmem %s1, %s500
      %s502 = smul.u32 %s29, 8
      %s503 = ssub.s32 %s502, 1
      %p504 = scmp.gt.s32.totalorder %s503, 0
      %s505 = scalar_select %p504, %s503, 0
      %s506 = smul.u32 2, %s505
      %s507 = smul.u32 %s29, 8
      %s508 = sadd.s32 %s507, 8
      %p509 = scmp.lt.s32.totalorder %s508, 15
      %s510 = scalar_select %p509, %s508, 15
      %s511 = smul.u32 2, %s510
      %p512 = scmp.lt.s32.totalorder %s28, 1
      %s513 = scalar_select %p512, %s28, 1
      %p514 = scmp.lt.s32.totalorder %s511, 31
      %s515 = scalar_select %p514, %s511, 31
      %s516 = smul.addr %s513, 32
      %s517 = sadd.s32 %s515, %s516
      %s518 = smul.addr %s517, 8
      %s519 = scalar_lea.vmem %s2, %s518
      %s520 = smul.u32 %s29, 8
      %s521 = sadd.s32 %s520, 8
      %p522 = scmp.lt.s32.totalorder %s521, 15
      %s523 = scalar_select %p522, %s521, 15
      %s524 = smul.u32 2, %s523
      %s525 = smul.u32 16, %s29
      %p526 = scmp.lt.s32.totalorder %s28, 1
      %s527 = scalar_select %p526, %s28, 1
      %p528 = scmp.lt.s32.totalorder %s525, 31
      %s529 = scalar_select %p528, %s525, 31
      %s530 = smul.addr %s527, 32
      %s531 = sadd.s32 %s529, %s530
      %s532 = smul.addr %s531, 8
      %s533 = scalar_lea.vmem %s9, %s532
      %s534 = smul.u32 16, %s29
      %p535 = scmp.lt.s32.totalorder %s28, 1
      %s536 = scalar_select %p535, %s28, 1
      %s537 = scalar_lea.vmem %s10, %s536
      %v541 = vld [vmem:[%s487] sm:$0xff]
      %v542 = vld [vmem:[%s487 + $0x8] sm:$0xff]
      %v543 = vld [vmem:[%s487 + $0x10] sm:$0xff]
      %v544 = vld [vmem:[%s487 + $0x18] sm:$0xff]
      %v545 = vld [vmem:[%s487 + $0x20] sm:$0xff]
      %v546 = vld [vmem:[%s487 + $0x28] sm:$0xff]
      %v547 = vld [vmem:[%s487 + $0x30] sm:$0xff]
      %v548 = vld [vmem:[%s487 + $0x38] sm:$0xff]
      %v549 = vld [vmem:[%s487 + $0x40] sm:$0xff]
      %v550 = vld [vmem:[%s487 + $0x48] sm:$0xff]
      %v551 = vld [vmem:[%s487 + $0x50] sm:$0xff]
      %v552 = vld [vmem:[%s487 + $0x58] sm:$0xff]
      %v553 = vld [vmem:[%s487 + $0x60] sm:$0xff]
      %v554 = vld [vmem:[%s487 + $0x68] sm:$0xff]
      %v555 = vld [vmem:[%s487 + $0x70] sm:$0xff]
      %v556 = vld [vmem:[%s487 + $0x78] sm:$0xff]
      %v557 = vpack.c.bf16 %v542, %v541
      %v558 = vpack.c.bf16 %v544, %v543
      %v559 = vpack.c.bf16 %v546, %v545
      %v560 = vpack.c.bf16 %v548, %v547
      %v561 = vpack.c.bf16 %v550, %v549
      %v562 = vpack.c.bf16 %v552, %v551
      %v563 = vpack.c.bf16 %v554, %v553
      %v564 = vpack.c.bf16 %v556, %v555
      %p565 = scmp.gt.s32.totalorder %s29, 0
      %s566 = scalar_select %p565, 1, 0
      %s567 = scvt.s32.f32 %s566
      %v568 = vld [vmem:[%s501] sm:$0xff]
      %v569 = vld [vmem:[%s501 + $0x8] sm:$0xff]
      %v570 = vstv %s567
      %v571 = vmul.f32 %v568, %v570
      %v572 = vmul.f32 %v569, %v570
      %v573 = vpack.c.bf16 %v572, %v571
      %p574 = scmp.lt.s32.totalorder %s29, 1
      %s575 = scalar_select %p574, 1, 0
      %s576 = scvt.s32.f32 %s575
      %v577 = vld [vmem:[%s519] sm:$0xff]
      %v578 = vld [vmem:[%s519 + $0x8] sm:$0xff]
      %v579 = vstv %s576
      %v580 = vmul.f32 %v577, %v579
      %v581 = vmul.f32 %v578, %v579
      %v582 = vpack.c.bf16 %v581, %v580
      %v584 = vrot.slane %v573, 4
      %vm593 = vcmask 1043456
      %v594 = vrot.slane %v557, 4
      %v595 = vrot.slane %v558, 4
      %v596 = vsel %vm593, %v594, %v595
      %v597 = vrot.slane %v559, 4
      %v598 = vsel %vm593, %v595, %v597
      %v599 = vrot.slane %v560, 4
      %v600 = vsel %vm593, %v597, %v599
      %v601 = vrot.slane %v561, 4
      %v602 = vsel %vm593, %v599, %v601
      %v603 = vrot.slane %v562, 4
      %v604 = vsel %vm593, %v601, %v603
      %v605 = vrot.slane %v563, 4
      %v606 = vsel %vm593, %v603, %v605
      %v607 = vrot.slane %v564, 4
      %v608 = vsel %vm593, %v605, %v607
      %v610 = vrot.slane %v582, 4
      %vm611 = vcmask 1043456
      %v614 = vsel %vm611, 0, %v584
      %v616 = vsel %vm611, %v584, %v594
      %v619 = vsel %vm611, %v607, %v610
      %v620 = vsel %vm611, %v610, 0
      %vm621 = vsmask.f32 256
      %v622 = vshrl.u32 %v614, 16
      %v624 = vrot.slane %v622, 7
      %v625 = vshll.u32 %v614, 16
      %v627 = vor.u32 %v624, %v625
      %v628 = vshrl.u32 %v616, 16
      %v630 = vrot.slane %v628, 7
      %v631 = vshll.u32 %v616, 16
      %v633 = vor.u32 %v630, %v631
      %v634 = vsel %vm621, %v624, %v633
      %v636 = vshrl.u32 %v596, 16
      %v638 = vrot.slane %v636, 7
      %v639 = vshll.u32 %v596, 16
      %v641 = vor.u32 %v638, %v639
      %v642 = vsel %vm621, %v630, %v641
      %v644 = vshrl.u32 %v598, 16
      %v646 = vrot.slane %v644, 7
      %v647 = vshll.u32 %v598, 16
      %v649 = vor.u32 %v646, %v647
      %v650 = vsel %vm621, %v638, %v649
      %v652 = vshrl.u32 %v600, 16
      %v654 = vrot.slane %v652, 7
      %v655 = vshll.u32 %v600, 16
      %v657 = vor.u32 %v654, %v655
      %v658 = vsel %vm621, %v646, %v657
      %v660 = vshrl.u32 %v602, 16
      %v662 = vrot.slane %v660, 7
      %v663 = vshll.u32 %v602, 16
      %v665 = vor.u32 %v662, %v663
      %v666 = vsel %vm621, %v654, %v665
      %v668 = vshrl.u32 %v604, 16
      %v670 = vrot.slane %v668, 7
      %v671 = vshll.u32 %v604, 16
      %v673 = vor.u32 %v670, %v671
      %v674 = vsel %vm621, %v662, %v673
      %v676 = vshrl.u32 %v606, 16
      %v678 = vrot.slane %v676, 7
      %v679 = vshll.u32 %v606, 16
      %v681 = vor.u32 %v678, %v679
      %v682 = vsel %vm621, %v670, %v681
      %v684 = vshrl.u32 %v608, 16
      %v686 = vrot.slane %v684, 7
      %v687 = vshll.u32 %v608, 16
      %v689 = vor.u32 %v686, %v687
      %v690 = vsel %vm621, %v678, %v689
      %v691 = vshrl.u32 %v619, 16
      %v693 = vrot.slane %v691, 7
      %v694 = vshll.u32 %v619, 16
      %v696 = vor.u32 %v693, %v694
      %v697 = vsel %vm621, %v686, %v696
      %v698 = vshrl.u32 %v620, 16
      %v700 = vrot.slane %v698, 7
      %v701 = vshll.u32 %v620, 16
      %v703 = vor.u32 %v700, %v701
      %v704 = vsel %vm621, %v693, %v703
      %vm716 = vcmask 1040384
      %vm717 = vmand %vm716, %vm621
      %v718 = vsel %vm717, 0, %v627
      %vm719 = vsmask.f32 7424
      %v720 = vrot.slane %v625, 1
      %v721 = vor.u32 %v622, %v720
      %v722 = vrot.slane %v631, 1
      %v723 = vsel %vm719, %v721, %v722
      %v724 = vor.u32 %v628, %v722
      %v725 = vrot.slane %v639, 1
      %v726 = vsel %vm719, %v724, %v725
      %v727 = vor.u32 %v636, %v725
      %v728 = vrot.slane %v647, 1
      %v729 = vsel %vm719, %v727, %v728
      %v730 = vor.u32 %v644, %v728
      %v731 = vrot.slane %v655, 1
      %v732 = vsel %vm719, %v730, %v731
      %v733 = vor.u32 %v652, %v731
      %v734 = vrot.slane %v663, 1
      %v735 = vsel %vm719, %v733, %v734
      %v736 = vor.u32 %v660, %v734
      %v737 = vrot.slane %v671, 1
      %v738 = vsel %vm719, %v736, %v737
      %v739 = vor.u32 %v668, %v737
      %v740 = vrot.slane %v679, 1
      %v741 = vsel %vm719, %v739, %v740
      %v742 = vor.u32 %v676, %v740
      %v743 = vrot.slane %v687, 1
      %v744 = vsel %vm719, %v742, %v743
      %v745 = vor.u32 %v684, %v743
      %v746 = vrot.slane %v694, 1
      %v747 = vsel %vm719, %v745, %v746
      %v748 = vor.u32 %v691, %v746
      %v749 = vrot.slane %v701, 1
      %v750 = vsel %vm719, %v748, %v749
      %v751 = vor.u32 %v698, %v749
      %vm763 = vcmask 1047552
      %vm764 = vmand %vm763, %vm719
      %v765 = vsel %vm764, %v751, 0
      %v766 = vlaneseq
      %v767 = vshrl.u32 %v766, 7
      %v768 = vadd.s32 %v767, 8
      %v769 = vadd.s32 %v767, 16
      %v770 = vadd.s32 %v767, 24
      %v771 = vadd.s32 %v767, 32
      %v772 = vadd.s32 %v767, 40
      %v773 = vadd.s32 %v767, 48
      %v774 = vadd.s32 %v767, 56
      %v775 = vadd.s32 %v767, 64
      %v776 = vadd.s32 %v767, 72
      %v777 = vadd.s32 %v767, 80
      %v778 = vadd.s32 %v767, 88
      %v779 = vadd.s32 %v767, 96
      %v780 = vadd.s32 %v767, 104
      %v781 = vadd.s32 %v767, 112
      %v782 = vadd.s32 %v767, 120
      %v783 = vadd.s32 %v767, 128
      %v784 = vadd.s32 %v767, 136
      %v785 = vadd.s32 %v767, 144
      %v786 = vadd.s32 %v767, 152
      %v787 = vadd.s32 %v767, 160
      %v788 = vadd.s32 %v767, 168
      %v789 = vadd.s32 %v768, 8
      %v790 = vadd.s32 %v769, 8
      %v791 = vadd.s32 %v770, 8
      %v792 = vadd.s32 %v771, 8
      %v793 = vadd.s32 %v772, 8
      %v794 = vadd.s32 %v773, 8
      %v795 = vadd.s32 %v774, 8
      %v796 = vadd.s32 %v775, 8
      %v797 = vadd.s32 %v776, 8
      %v798 = vadd.s32 %v777, 8
      %v799 = vadd.s32 %v778, 8
      %v800 = vadd.s32 %v779, 8
      %v801 = vadd.s32 %v780, 8
      %v802 = vadd.s32 %v781, 8
      %v803 = vadd.s32 %v782, 8
      %v804 = vadd.s32 %v783, 8
      %v805 = vadd.s32 %v784, 8
      %v806 = vadd.s32 %v785, 8
      %v807 = vadd.s32 %v786, 8
      %v808 = vadd.s32 %v787, 8
      %v809 = vadd.s32 %v788, 8
      %vm810 = vcmp.lt.s32.totalorder %v768, 0
      %v811 = vsub.s32 0, %v768
      %v812 = vsel %vm810, %v811, %v768
      %v813 = vshrl.u32 %v812, 4
      %v814 = vand.u32 %v812, 15
      %v815 = vsub.s32 0, %v814
      %v816 = vsel %vm810, %v815, %v814
      %vm817 = vcmp.lt.s32.totalorder %v789, 0
      %v818 = vsub.s32 0, %v789
      %v819 = vsel %vm817, %v818, %v789
      %v820 = vshrl.u32 %v819, 4
      %v821 = vand.u32 %v819, 15
      %v822 = vsub.s32 0, %v821
      %v823 = vsel %vm817, %v822, %v821
      %vm824 = vcmp.lt.s32.totalorder %v790, 0
      %v825 = vsub.s32 0, %v790
      %v826 = vsel %vm824, %v825, %v790
      %v827 = vshrl.u32 %v826, 4
      %v828 = vand.u32 %v826, 15
      %v829 = vsub.s32 0, %v828
      %v830 = vsel %vm824, %v829, %v828
      %vm831 = vcmp.lt.s32.totalorder %v791, 0
      %v832 = vsub.s32 0, %v791
      %v833 = vsel %vm831, %v832, %v791
      %v834 = vshrl.u32 %v833, 4
      %v835 = vand.u32 %v833, 15
      %v836 = vsub.s32 0, %v835
      %v837 = vsel %vm831, %v836, %v835
      %vm838 = vcmp.lt.s32.totalorder %v792, 0
      %v839 = vsub.s32 0, %v792
      %v840 = vsel %vm838, %v839, %v792
      %v841 = vshrl.u32 %v840, 4
      %v842 = vand.u32 %v840, 15
      %v843 = vsub.s32 0, %v842
      %v844 = vsel %vm838, %v843, %v842
      %vm845 = vcmp.lt.s32.totalorder %v793, 0
      %v846 = vsub.s32 0, %v793
      %v847 = vsel %vm845, %v846, %v793
      %v848 = vshrl.u32 %v847, 4
      %v849 = vand.u32 %v847, 15
      %v850 = vsub.s32 0, %v849
      %v851 = vsel %vm845, %v850, %v849
      %vm852 = vcmp.lt.s32.totalorder %v794, 0
      %v853 = vsub.s32 0, %v794
      %v854 = vsel %vm852, %v853, %v794
      %v855 = vshrl.u32 %v854, 4
      %v856 = vand.u32 %v854, 15
      %v857 = vsub.s32 0, %v856
      %v858 = vsel %vm852, %v857, %v856
      %vm859 = vcmp.lt.s32.totalorder %v795, 0
      %v860 = vsub.s32 0, %v795
      %v861 = vsel %vm859, %v860, %v795
      %v862 = vshrl.u32 %v861, 4
      %v863 = vand.u32 %v861, 15
      %v864 = vsub.s32 0, %v863
      %v865 = vsel %vm859, %v864, %v863
      %vm866 = vcmp.lt.s32.totalorder %v796, 0
      %v867 = vsub.s32 0, %v796
      %v868 = vsel %vm866, %v867, %v796
      %v869 = vshrl.u32 %v868, 4
      %v870 = vand.u32 %v868, 15
      %v871 = vsub.s32 0, %v870
      %v872 = vsel %vm866, %v871, %v870
      %vm873 = vcmp.lt.s32.totalorder %v797, 0
      %v874 = vsub.s32 0, %v797
      %v875 = vsel %vm873, %v874, %v797
      %v876 = vshrl.u32 %v875, 4
      %v877 = vand.u32 %v875, 15
      %v878 = vsub.s32 0, %v877
      %v879 = vsel %vm873, %v878, %v877
      %vm880 = vcmp.lt.s32.totalorder %v798, 0
      %v881 = vsub.s32 0, %v798
      %v882 = vsel %vm880, %v881, %v798
      %v883 = vshrl.u32 %v882, 4
      %v884 = vand.u32 %v882, 15
      %v885 = vsub.s32 0, %v884
      %v886 = vsel %vm880, %v885, %v884
      %vm887 = vcmp.lt.s32.totalorder %v799, 0
      %v888 = vsub.s32 0, %v799
      %v889 = vsel %vm887, %v888, %v799
      %v890 = vshrl.u32 %v889, 4
      %v891 = vand.u32 %v889, 15
      %v892 = vsub.s32 0, %v891
      %v893 = vsel %vm887, %v892, %v891
      %vm894 = vcmp.lt.s32.totalorder %v800, 0
      %v895 = vsub.s32 0, %v800
      %v896 = vsel %vm894, %v895, %v800
      %v897 = vshrl.u32 %v896, 4
      %v898 = vand.u32 %v896, 15
      %v899 = vsub.s32 0, %v898
      %v900 = vsel %vm894, %v899, %v898
      %vm901 = vcmp.lt.s32.totalorder %v801, 0
      %v902 = vsub.s32 0, %v801
      %v903 = vsel %vm901, %v902, %v801
      %v904 = vshrl.u32 %v903, 4
      %v905 = vand.u32 %v903, 15
      %v906 = vsub.s32 0, %v905
      %v907 = vsel %vm901, %v906, %v905
      %vm908 = vcmp.lt.s32.totalorder %v802, 0
      %v909 = vsub.s32 0, %v802
      %v910 = vsel %vm908, %v909, %v802
      %v911 = vshrl.u32 %v910, 4
      %v912 = vand.u32 %v910, 15
      %v913 = vsub.s32 0, %v912
      %v914 = vsel %vm908, %v913, %v912
      %vm915 = vcmp.lt.s32.totalorder %v803, 0
      %v916 = vsub.s32 0, %v803
      %v917 = vsel %vm915, %v916, %v803
      %v918 = vshrl.u32 %v917, 4
      %v919 = vand.u32 %v917, 15
      %v920 = vsub.s32 0, %v919
      %v921 = vsel %vm915, %v920, %v919
      %vm922 = vcmp.lt.s32.totalorder %v804, 0
      %v923 = vsub.s32 0, %v804
      %v924 = vsel %vm922, %v923, %v804
      %v925 = vshrl.u32 %v924, 4
      %v926 = vand.u32 %v924, 15
      %v927 = vsub.s32 0, %v926
      %v928 = vsel %vm922, %v927, %v926
      %vm929 = vcmp.lt.s32.totalorder %v805, 0
      %v930 = vsub.s32 0, %v805
      %v931 = vsel %vm929, %v930, %v805
      %v932 = vshrl.u32 %v931, 4
      %v933 = vand.u32 %v931, 15
      %v934 = vsub.s32 0, %v933
      %v935 = vsel %vm929, %v934, %v933
      %vm936 = vcmp.lt.s32.totalorder %v806, 0
      %v937 = vsub.s32 0, %v806
      %v938 = vsel %vm936, %v937, %v806
      %v939 = vshrl.u32 %v938, 4
      %v940 = vand.u32 %v938, 15
      %v941 = vsub.s32 0, %v940
      %v942 = vsel %vm936, %v941, %v940
      %vm943 = vcmp.lt.s32.totalorder %v807, 0
      %v944 = vsub.s32 0, %v807
      %v945 = vsel %vm943, %v944, %v807
      %v946 = vshrl.u32 %v945, 4
      %v947 = vand.u32 %v945, 15
      %v948 = vsub.s32 0, %v947
      %v949 = vsel %vm943, %v948, %v947
      %vm950 = vcmp.lt.s32.totalorder %v808, 0
      %v951 = vsub.s32 0, %v808
      %v952 = vsel %vm950, %v951, %v808
      %v953 = vshrl.u32 %v952, 4
      %v954 = vand.u32 %v952, 15
      %v955 = vsub.s32 0, %v954
      %v956 = vsel %vm950, %v955, %v954
      %vm957 = vcmp.lt.s32.totalorder %v809, 0
      %v958 = vsub.s32 0, %v809
      %v959 = vsel %vm957, %v958, %v809
      %v960 = vshrl.u32 %v959, 4
      %v961 = vand.u32 %v959, 15
      %v962 = vsub.s32 0, %v961
      %v963 = vsel %vm957, %v962, %v961
      %vm964 = vcmp.ne.s32.totalorder %v816, 0
      %vm965 = vcmp.ne.s32.totalorder %v823, 0
      %vm966 = vcmp.ne.s32.totalorder %v830, 0
      %vm967 = vcmp.ne.s32.totalorder %v837, 0
      %vm968 = vcmp.ne.s32.totalorder %v844, 0
      %vm969 = vcmp.ne.s32.totalorder %v851, 0
      %vm970 = vcmp.ne.s32.totalorder %v858, 0
      %vm971 = vcmp.ne.s32.totalorder %v865, 0
      %vm972 = vcmp.ne.s32.totalorder %v872, 0
      %vm973 = vcmp.ne.s32.totalorder %v879, 0
      %vm974 = vcmp.ne.s32.totalorder %v886, 0
      %vm975 = vcmp.ne.s32.totalorder %v893, 0
      %vm976 = vcmp.ne.s32.totalorder %v900, 0
      %vm977 = vcmp.ne.s32.totalorder %v907, 0
      %vm978 = vcmp.ne.s32.totalorder %v914, 0
      %vm979 = vcmp.ne.s32.totalorder %v921, 0
      %vm980 = vcmp.ne.s32.totalorder %v928, 0
      %vm981 = vcmp.ne.s32.totalorder %v935, 0
      %vm982 = vcmp.ne.s32.totalorder %v942, 0
      %vm983 = vcmp.ne.s32.totalorder %v949, 0
      %vm984 = vcmp.ne.s32.totalorder %v956, 0
      %vm985 = vcmp.ne.s32.totalorder %v963, 0
      %vm986 = vcmp.lt.s32.totalorder %v816, 0
      %vm987 = vcmp.lt.s32.totalorder %v823, 0
      %vm988 = vcmp.lt.s32.totalorder %v830, 0
      %vm989 = vcmp.lt.s32.totalorder %v837, 0
      %vm990 = vcmp.lt.s32.totalorder %v844, 0
      %vm991 = vcmp.lt.s32.totalorder %v851, 0
      %vm992 = vcmp.lt.s32.totalorder %v858, 0
      %vm993 = vcmp.lt.s32.totalorder %v865, 0
      %vm994 = vcmp.lt.s32.totalorder %v872, 0
      %vm995 = vcmp.lt.s32.totalorder %v879, 0
      %vm996 = vcmp.lt.s32.totalorder %v886, 0
      %vm997 = vcmp.lt.s32.totalorder %v893, 0
      %vm998 = vcmp.lt.s32.totalorder %v900, 0
      %vm999 = vcmp.lt.s32.totalorder %v907, 0
      %vm1000 = vcmp.lt.s32.totalorder %v914, 0
      %vm1001 = vcmp.lt.s32.totalorder %v921, 0
      %vm1002 = vcmp.lt.s32.totalorder %v928, 0
      %vm1003 = vcmp.lt.s32.totalorder %v935, 0
      %vm1004 = vcmp.lt.s32.totalorder %v942, 0
      %vm1005 = vcmp.lt.s32.totalorder %v949, 0
      %vm1006 = vcmp.lt.s32.totalorder %v956, 0
      %vm1007 = vcmp.lt.s32.totalorder %v963, 0
      %vm1008 = vmand %vm986, %vm964
      %vm1009 = vmand %vm987, %vm965
      %vm1010 = vmand %vm988, %vm966
      %vm1011 = vmand %vm989, %vm967
      %vm1012 = vmand %vm990, %vm968
      %vm1013 = vmand %vm991, %vm969
      %vm1014 = vmand %vm992, %vm970
      %vm1015 = vmand %vm993, %vm971
      %vm1016 = vmand %vm994, %vm972
      %vm1017 = vmand %vm995, %vm973
      %vm1018 = vmand %vm996, %vm974
      %vm1019 = vmand %vm997, %vm975
      %vm1020 = vmand %vm998, %vm976
      %vm1021 = vmand %vm999, %vm977
      %vm1022 = vmand %vm1000, %vm978
      %vm1023 = vmand %vm1001, %vm979
      %vm1024 = vmand %vm1002, %vm980
      %vm1025 = vmand %vm1003, %vm981
      %vm1026 = vmand %vm1004, %vm982
      %vm1027 = vmand %vm1005, %vm983
      %vm1028 = vmand %vm1006, %vm984
      %vm1029 = vmand %vm1007, %vm985
      %v1030 = vadd.s32 %v816, 16
      %v1031 = vadd.s32 %v823, 16
      %v1032 = vadd.s32 %v830, 16
      %v1033 = vadd.s32 %v837, 16
      %v1034 = vadd.s32 %v844, 16
      %v1035 = vadd.s32 %v851, 16
      %v1036 = vadd.s32 %v858, 16
      %v1037 = vadd.s32 %v865, 16
      %v1038 = vadd.s32 %v872, 16
      %v1039 = vadd.s32 %v879, 16
      %v1040 = vadd.s32 %v886, 16
      %v1041 = vadd.s32 %v893, 16
      %v1042 = vadd.s32 %v900, 16
      %v1043 = vadd.s32 %v907, 16
      %v1044 = vadd.s32 %v914, 16
      %v1045 = vadd.s32 %v921, 16
      %v1046 = vadd.s32 %v928, 16
      %v1047 = vadd.s32 %v935, 16
      %v1048 = vadd.s32 %v942, 16
      %v1049 = vadd.s32 %v949, 16
      %v1050 = vadd.s32 %v956, 16
      %v1051 = vadd.s32 %v963, 16
      %v1052 = vsel %vm1008, %v1030, %v816
      %v1053 = vsel %vm1009, %v1031, %v823
      %v1054 = vsel %vm1010, %v1032, %v830
      %v1055 = vsel %vm1011, %v1033, %v837
      %v1056 = vsel %vm1012, %v1034, %v844
      %v1057 = vsel %vm1013, %v1035, %v851
      %v1058 = vsel %vm1014, %v1036, %v858
      %v1059 = vsel %vm1015, %v1037, %v865
      %v1060 = vsel %vm1016, %v1038, %v872
      %v1061 = vsel %vm1017, %v1039, %v879
      %v1062 = vsel %vm1018, %v1040, %v886
      %v1063 = vsel %vm1019, %v1041, %v893
      %v1064 = vsel %vm1020, %v1042, %v900
      %v1065 = vsel %vm1021, %v1043, %v907
      %v1066 = vsel %vm1022, %v1044, %v914
      %v1067 = vsel %vm1023, %v1045, %v921
      %v1068 = vsel %vm1024, %v1046, %v928
      %v1069 = vsel %vm1025, %v1047, %v935
      %v1070 = vsel %vm1026, %v1048, %v942
      %v1071 = vsel %vm1027, %v1049, %v949
      %v1072 = vsel %vm1028, %v1050, %v956
      %v1073 = vsel %vm1029, %v1051, %v963
      %vm1074 = vcmp.ge.s32.totalorder %v1052, 1
      %vm1075 = vcmp.ge.s32.totalorder %v1053, 1
      %vm1076 = vcmp.ge.s32.totalorder %v1054, 1
      %vm1077 = vcmp.ge.s32.totalorder %v1055, 1
      %vm1078 = vcmp.ge.s32.totalorder %v1056, 1
      %vm1079 = vcmp.ge.s32.totalorder %v1057, 1
      %vm1080 = vcmp.ge.s32.totalorder %v1058, 1
      %vm1081 = vcmp.ge.s32.totalorder %v1059, 1
      %vm1082 = vcmp.ge.s32.totalorder %v1060, 1
      %vm1083 = vcmp.ge.s32.totalorder %v1061, 1
      %vm1084 = vcmp.ge.s32.totalorder %v1062, 1
      %vm1085 = vcmp.ge.s32.totalorder %v1063, 1
      %vm1086 = vcmp.ge.s32.totalorder %v1064, 1
      %vm1087 = vcmp.ge.s32.totalorder %v1065, 1
      %vm1088 = vcmp.ge.s32.totalorder %v1066, 1
      %vm1089 = vcmp.ge.s32.totalorder %v1067, 1
      %vm1090 = vcmp.ge.s32.totalorder %v1068, 1
      %vm1091 = vcmp.ge.s32.totalorder %v1069, 1
      %vm1092 = vcmp.ge.s32.totalorder %v1070, 1
      %vm1093 = vcmp.ge.s32.totalorder %v1071, 1
      %vm1094 = vcmp.ge.s32.totalorder %v1072, 1
      %vm1095 = vcmp.ge.s32.totalorder %v1073, 1
      %v1096 = vsel %vm1074, 1, 0
      %v1097 = vsel %vm1075, 1, 0
      %v1098 = vsel %vm1076, 1, 0
      %v1099 = vsel %vm1077, 1, 0
      %v1100 = vsel %vm1078, 1, 0
      %v1101 = vsel %vm1079, 1, 0
      %v1102 = vsel %vm1080, 1, 0
      %v1103 = vsel %vm1081, 1, 0
      %v1104 = vsel %vm1082, 1, 0
      %v1105 = vsel %vm1083, 1, 0
      %v1106 = vsel %vm1084, 1, 0
      %v1107 = vsel %vm1085, 1, 0
      %v1108 = vsel %vm1086, 1, 0
      %v1109 = vsel %vm1087, 1, 0
      %v1110 = vsel %vm1088, 1, 0
      %v1111 = vsel %vm1089, 1, 0
      %v1112 = vsel %vm1090, 1, 0
      %v1113 = vsel %vm1091, 1, 0
      %v1114 = vsel %vm1092, 1, 0
      %v1115 = vsel %vm1093, 1, 0
      %v1116 = vsel %vm1094, 1, 0
      %v1117 = vsel %vm1095, 1, 0
      %vm1118 = vcmp.eq.s32.totalorder %v1096, 1
      %vm1119 = vcmp.eq.s32.totalorder %v1097, 1
      %vm1120 = vcmp.eq.s32.totalorder %v1098, 1
      %vm1121 = vcmp.eq.s32.totalorder %v1099, 1
      %vm1122 = vcmp.eq.s32.totalorder %v1100, 1
      %vm1123 = vcmp.eq.s32.totalorder %v1101, 1
      %vm1124 = vcmp.eq.s32.totalorder %v1102, 1
      %vm1125 = vcmp.eq.s32.totalorder %v1103, 1
      %vm1126 = vcmp.eq.s32.totalorder %v1104, 1
      %vm1127 = vcmp.eq.s32.totalorder %v1105, 1
      %vm1128 = vcmp.eq.s32.totalorder %v1106, 1
      %vm1129 = vcmp.eq.s32.totalorder %v1107, 1
      %vm1130 = vcmp.eq.s32.totalorder %v1108, 1
      %vm1131 = vcmp.eq.s32.totalorder %v1109, 1
      %vm1132 = vcmp.eq.s32.totalorder %v1110, 1
      %vm1133 = vcmp.eq.s32.totalorder %v1111, 1
      %vm1134 = vcmp.eq.s32.totalorder %v1112, 1
      %vm1135 = vcmp.eq.s32.totalorder %v1113, 1
      %vm1136 = vcmp.eq.s32.totalorder %v1114, 1
      %vm1137 = vcmp.eq.s32.totalorder %v1115, 1
      %vm1138 = vcmp.eq.s32.totalorder %v1116, 1
      %vm1139 = vcmp.eq.s32.totalorder %v1117, 1
      %vm1140 = vmpackc.low %vm1118, %vm1118
      %vm1141 = vmpackc.low %vm1119, %vm1119
      %vm1142 = vmpackc.low %vm1120, %vm1120
      %vm1143 = vmpackc.low %vm1121, %vm1121
      %vm1144 = vmpackc.low %vm1122, %vm1122
      %vm1145 = vmpackc.low %vm1123, %vm1123
      %vm1146 = vmpackc.low %vm1124, %vm1124
      %vm1147 = vmpackc.low %vm1125, %vm1125
      %vm1148 = vmpackc.low %vm1126, %vm1126
      %vm1149 = vmpackc.low %vm1127, %vm1127
      %vm1150 = vmpackc.low %vm1128, %vm1128
      %vm1151 = vmpackc.low %vm1129, %vm1129
      %vm1152 = vmpackc.low %vm1130, %vm1130
      %vm1153 = vmpackc.low %vm1131, %vm1131
      %vm1154 = vmpackc.low %vm1132, %vm1132
      %vm1155 = vmpackc.low %vm1133, %vm1133
      %vm1156 = vmpackc.low %vm1134, %vm1134
      %vm1157 = vmpackc.low %vm1135, %vm1135
      %vm1158 = vmpackc.low %vm1136, %vm1136
      %vm1159 = vmpackc.low %vm1137, %vm1137
      %vm1160 = vmpackc.low %vm1138, %vm1138
      %vm1161 = vmpackc.low %vm1139, %vm1139
      %v1162 = vsel %vm1140, 65537, 0
      %v1163 = vsel %vm1141, 65537, 0
      %v1164 = vsel %vm1142, 65537, 0
      %v1165 = vsel %vm1143, 65537, 0
      %v1166 = vsel %vm1144, 65537, 0
      %v1167 = vsel %vm1145, 65537, 0
      %v1168 = vsel %vm1146, 65537, 0
      %v1169 = vsel %vm1147, 65537, 0
      %v1170 = vsel %vm1148, 65537, 0
      %v1171 = vsel %vm1149, 65537, 0
      %v1172 = vsel %vm1150, 65537, 0
      %v1173 = vsel %vm1151, 65537, 0
      %v1174 = vsel %vm1152, 65537, 0
      %v1175 = vsel %vm1153, 65537, 0
      %v1176 = vsel %vm1154, 65537, 0
      %v1177 = vsel %vm1155, 65537, 0
      %v1178 = vsel %vm1156, 65537, 0
      %v1179 = vsel %vm1157, 65537, 0
      %v1180 = vsel %vm1158, 65537, 0
      %v1181 = vsel %vm1159, 65537, 0
      %v1182 = vsel %vm1160, 65537, 0
      %v1183 = vsel %vm1161, 65537, 0
      %v1184 = vunpack.c.l.b16 %v1162
      %v1185 = vunpack.c.l.b16 %v1163
      %v1186 = vunpack.c.l.b16 %v1164
      %v1187 = vunpack.c.l.b16 %v1165
      %v1188 = vunpack.c.l.b16 %v1166
      %v1189 = vunpack.c.l.b16 %v1167
      %v1190 = vunpack.c.l.b16 %v1168
      %v1191 = vunpack.c.l.b16 %v1169
      %v1192 = vunpack.c.l.b16 %v1170
      %v1193 = vunpack.c.l.b16 %v1171
      %v1194 = vunpack.c.l.b16 %v1172
      %v1195 = vunpack.c.l.b16 %v1173
      %v1196 = vunpack.c.l.b16 %v1174
      %v1197 = vunpack.c.l.b16 %v1175
      %v1198 = vunpack.c.l.b16 %v1176
      %v1199 = vunpack.c.l.b16 %v1177
      %v1200 = vunpack.c.l.b16 %v1178
      %v1201 = vunpack.c.l.b16 %v1179
      %v1202 = vunpack.c.l.b16 %v1180
      %v1203 = vunpack.c.l.b16 %v1181
      %v1204 = vunpack.c.l.b16 %v1182
      %v1205 = vunpack.c.l.b16 %v1183
      %v1206 = vpack.c.b16 %v1185, %v1184
      %v1207 = vpack.c.b16 %v1187, %v1186
      %v1208 = vpack.c.b16 %v1189, %v1188
      %v1209 = vpack.c.b16 %v1191, %v1190
      %v1210 = vpack.c.b16 %v1193, %v1192
      %v1211 = vpack.c.b16 %v1195, %v1194
      %v1212 = vpack.c.b16 %v1197, %v1196
      %v1213 = vpack.c.b16 %v1199, %v1198
      %v1214 = vpack.c.b16 %v1201, %v1200
      %v1215 = vpack.c.b16 %v1203, %v1202
      %v1216 = vpack.c.b16 %v1205, %v1204
      %vm1217 = vcmp.ne.s16.totalorder %v1206, 0
      %vm1218 = vcmp.ne.s16.totalorder %v1207, 0
      %vm1219 = vcmp.ne.s16.totalorder %v1208, 0
      %vm1220 = vcmp.ne.s16.totalorder %v1209, 0
      %vm1221 = vcmp.ne.s16.totalorder %v1210, 0
      %vm1222 = vcmp.ne.s16.totalorder %v1211, 0
      %vm1223 = vcmp.ne.s16.totalorder %v1212, 0
      %vm1224 = vcmp.ne.s16.totalorder %v1213, 0
      %vm1225 = vcmp.ne.s16.totalorder %v1214, 0
      %vm1226 = vcmp.ne.s16.totalorder %v1215, 0
      %vm1227 = vcmp.ne.s16.totalorder %v1216, 0
      %v1228 = vsel %vm1217, %v718, 0
      %v1229 = vsel %vm1218, %v634, 0
      %v1230 = vsel %vm1219, %v642, 0
      %v1231 = vsel %vm1220, %v650, 0
      %v1232 = vsel %vm1221, %v658, 0
      %v1233 = vsel %vm1222, %v666, 0
      %v1234 = vsel %vm1223, %v674, 0
      %v1235 = vsel %vm1224, %v682, 0
      %v1236 = vsel %vm1225, %v690, 0
      %v1237 = vsel %vm1226, %v697, 0
      %v1238 = vsel %vm1227, %v704, 0
      %vm1239 = vcmp.le.s32.totalorder %v1052, 14
      %vm1240 = vcmp.le.s32.totalorder %v1053, 14
      %vm1241 = vcmp.le.s32.totalorder %v1054, 14
      %vm1242 = vcmp.le.s32.totalorder %v1055, 14
      %vm1243 = vcmp.le.s32.totalorder %v1056, 14
      %vm1244 = vcmp.le.s32.totalorder %v1057, 14
      %vm1245 = vcmp.le.s32.totalorder %v1058, 14
      %vm1246 = vcmp.le.s32.totalorder %v1059, 14
      %vm1247 = vcmp.le.s32.totalorder %v1060, 14
      %vm1248 = vcmp.le.s32.totalorder %v1061, 14
      %vm1249 = vcmp.le.s32.totalorder %v1062, 14
      %vm1250 = vcmp.le.s32.totalorder %v1063, 14
      %vm1251 = vcmp.le.s32.totalorder %v1064, 14
      %vm1252 = vcmp.le.s32.totalorder %v1065, 14
      %vm1253 = vcmp.le.s32.totalorder %v1066, 14
      %vm1254 = vcmp.le.s32.totalorder %v1067, 14
      %vm1255 = vcmp.le.s32.totalorder %v1068, 14
      %vm1256 = vcmp.le.s32.totalorder %v1069, 14
      %vm1257 = vcmp.le.s32.totalorder %v1070, 14
      %vm1258 = vcmp.le.s32.totalorder %v1071, 14
      %vm1259 = vcmp.le.s32.totalorder %v1072, 14
      %vm1260 = vcmp.le.s32.totalorder %v1073, 14
      %v1261 = vsel %vm1239, 1, 0
      %v1262 = vsel %vm1240, 1, 0
      %v1263 = vsel %vm1241, 1, 0
      %v1264 = vsel %vm1242, 1, 0
      %v1265 = vsel %vm1243, 1, 0
      %v1266 = vsel %vm1244, 1, 0
      %v1267 = vsel %vm1245, 1, 0
      %v1268 = vsel %vm1246, 1, 0
      %v1269 = vsel %vm1247, 1, 0
      %v1270 = vsel %vm1248, 1, 0
      %v1271 = vsel %vm1249, 1, 0
      %v1272 = vsel %vm1250, 1, 0
      %v1273 = vsel %vm1251, 1, 0
      %v1274 = vsel %vm1252, 1, 0
      %v1275 = vsel %vm1253, 1, 0
      %v1276 = vsel %vm1254, 1, 0
      %v1277 = vsel %vm1255, 1, 0
      %v1278 = vsel %vm1256, 1, 0
      %v1279 = vsel %vm1257, 1, 0
      %v1280 = vsel %vm1258, 1, 0
      %v1281 = vsel %vm1259, 1, 0
      %v1282 = vsel %vm1260, 1, 0
      %vm1283 = vcmp.eq.s32.totalorder %v1261, 1
      %vm1284 = vcmp.eq.s32.totalorder %v1262, 1
      %vm1285 = vcmp.eq.s32.totalorder %v1263, 1
      %vm1286 = vcmp.eq.s32.totalorder %v1264, 1
      %vm1287 = vcmp.eq.s32.totalorder %v1265, 1
      %vm1288 = vcmp.eq.s32.totalorder %v1266, 1
      %vm1289 = vcmp.eq.s32.totalorder %v1267, 1
      %vm1290 = vcmp.eq.s32.totalorder %v1268, 1
      %vm1291 = vcmp.eq.s32.totalorder %v1269, 1
      %vm1292 = vcmp.eq.s32.totalorder %v1270, 1
      %vm1293 = vcmp.eq.s32.totalorder %v1271, 1
      %vm1294 = vcmp.eq.s32.totalorder %v1272, 1
      %vm1295 = vcmp.eq.s32.totalorder %v1273, 1
      %vm1296 = vcmp.eq.s32.totalorder %v1274, 1
      %vm1297 = vcmp.eq.s32.totalorder %v1275, 1
      %vm1298 = vcmp.eq.s32.totalorder %v1276, 1
      %vm1299 = vcmp.eq.s32.totalorder %v1277, 1
      %vm1300 = vcmp.eq.s32.totalorder %v1278, 1
      %vm1301 = vcmp.eq.s32.totalorder %v1279, 1
      %vm1302 = vcmp.eq.s32.totalorder %v1280, 1
      %vm1303 = vcmp.eq.s32.totalorder %v1281, 1
      %vm1304 = vcmp.eq.s32.totalorder %v1282, 1
      %vm1305 = vmpackc.low %vm1283, %vm1283
      %vm1306 = vmpackc.low %vm1284, %vm1284
      %vm1307 = vmpackc.low %vm1285, %vm1285
      %vm1308 = vmpackc.low %vm1286, %vm1286
      %vm1309 = vmpackc.low %vm1287, %vm1287
      %vm1310 = vmpackc.low %vm1288, %vm1288
      %vm1311 = vmpackc.low %vm1289, %vm1289
      %vm1312 = vmpackc.low %vm1290, %vm1290
      %vm1313 = vmpackc.low %vm1291, %vm1291
      %vm1314 = vmpackc.low %vm1292, %vm1292
      %vm1315 = vmpackc.low %vm1293, %vm1293
      %vm1316 = vmpackc.low %vm1294, %vm1294
      %vm1317 = vmpackc.low %vm1295, %vm1295
      %vm1318 = vmpackc.low %vm1296, %vm1296
      %vm1319 = vmpackc.low %vm1297, %vm1297
      %vm1320 = vmpackc.low %vm1298, %vm1298
      %vm1321 = vmpackc.low %vm1299, %vm1299
      %vm1322 = vmpackc.low %vm1300, %vm1300
      %vm1323 = vmpackc.low %vm1301, %vm1301
      %vm1324 = vmpackc.low %vm1302, %vm1302
      %vm1325 = vmpackc.low %vm1303, %vm1303
      %vm1326 = vmpackc.low %vm1304, %vm1304
      %v1327 = vsel %vm1305, 65537, 0
      %v1328 = vsel %vm1306, 65537, 0
      %v1329 = vsel %vm1307, 65537, 0
      %v1330 = vsel %vm1308, 65537, 0
      %v1331 = vsel %vm1309, 65537, 0
      %v1332 = vsel %vm1310, 65537, 0
      %v1333 = vsel %vm1311, 65537, 0
      %v1334 = vsel %vm1312, 65537, 0
      %v1335 = vsel %vm1313, 65537, 0
      %v1336 = vsel %vm1314, 65537, 0
      %v1337 = vsel %vm1315, 65537, 0
      %v1338 = vsel %vm1316, 65537, 0
      %v1339 = vsel %vm1317, 65537, 0
      %v1340 = vsel %vm1318, 65537, 0
      %v1341 = vsel %vm1319, 65537, 0
      %v1342 = vsel %vm1320, 65537, 0
      %v1343 = vsel %vm1321, 65537, 0
      %v1344 = vsel %vm1322, 65537, 0
      %v1345 = vsel %vm1323, 65537, 0
      %v1346 = vsel %vm1324, 65537, 0
      %v1347 = vsel %vm1325, 65537, 0
      %v1348 = vsel %vm1326, 65537, 0
      %v1349 = vunpack.c.l.b16 %v1327
      %v1350 = vunpack.c.l.b16 %v1328
      %v1351 = vunpack.c.l.b16 %v1329
      %v1352 = vunpack.c.l.b16 %v1330
      %v1353 = vunpack.c.l.b16 %v1331
      %v1354 = vunpack.c.l.b16 %v1332
      %v1355 = vunpack.c.l.b16 %v1333
      %v1356 = vunpack.c.l.b16 %v1334
      %v1357 = vunpack.c.l.b16 %v1335
      %v1358 = vunpack.c.l.b16 %v1336
      %v1359 = vunpack.c.l.b16 %v1337
      %v1360 = vunpack.c.l.b16 %v1338
      %v1361 = vunpack.c.l.b16 %v1339
      %v1362 = vunpack.c.l.b16 %v1340
      %v1363 = vunpack.c.l.b16 %v1341
      %v1364 = vunpack.c.l.b16 %v1342
      %v1365 = vunpack.c.l.b16 %v1343
      %v1366 = vunpack.c.l.b16 %v1344
      %v1367 = vunpack.c.l.b16 %v1345
      %v1368 = vunpack.c.l.b16 %v1346
      %v1369 = vunpack.c.l.b16 %v1347
      %v1370 = vunpack.c.l.b16 %v1348
      %v1371 = vpack.c.b16 %v1350, %v1349
      %v1372 = vpack.c.b16 %v1352, %v1351
      %v1373 = vpack.c.b16 %v1354, %v1353
      %v1374 = vpack.c.b16 %v1356, %v1355
      %v1375 = vpack.c.b16 %v1358, %v1357
      %v1376 = vpack.c.b16 %v1360, %v1359
      %v1377 = vpack.c.b16 %v1362, %v1361
      %v1378 = vpack.c.b16 %v1364, %v1363
      %v1379 = vpack.c.b16 %v1366, %v1365
      %v1380 = vpack.c.b16 %v1368, %v1367
      %v1381 = vpack.c.b16 %v1370, %v1369
      %vm1382 = vcmp.ne.s16.totalorder %v1371, 0
      %vm1383 = vcmp.ne.s16.totalorder %v1372, 0
      %vm1384 = vcmp.ne.s16.totalorder %v1373, 0
      %vm1385 = vcmp.ne.s16.totalorder %v1374, 0
      %vm1386 = vcmp.ne.s16.totalorder %v1375, 0
      %vm1387 = vcmp.ne.s16.totalorder %v1376, 0
      %vm1388 = vcmp.ne.s16.totalorder %v1377, 0
      %vm1389 = vcmp.ne.s16.totalorder %v1378, 0
      %vm1390 = vcmp.ne.s16.totalorder %v1379, 0
      %vm1391 = vcmp.ne.s16.totalorder %v1380, 0
      %vm1392 = vcmp.ne.s16.totalorder %v1381, 0
      %v1393 = vsel %vm1382, %v723, 0
      %v1394 = vsel %vm1383, %v726, 0
      %v1395 = vsel %vm1384, %v729, 0
      %v1396 = vsel %vm1385, %v732, 0
      %v1397 = vsel %vm1386, %v735, 0
      %v1398 = vsel %vm1387, %v738, 0
      %v1399 = vsel %vm1388, %v741, 0
      %v1400 = vsel %vm1389, %v744, 0
      %v1401 = vsel %vm1390, %v747, 0
      %v1402 = vsel %vm1391, %v750, 0
      %v1403 = vsel %vm1392, %v765, 0
      %v1404 = vld [vmem:[%s3] sm:$0xf]
      %v1405 = vld [vmem:[%s3 + $0x4] sm:$0xf]
      %v1406 = vld [vmem:[%s3 + $0x8] sm:$0xf]
      %v1407 = vld [vmem:[%s3 + $0xc] sm:$0xf]
      %s1408 = scalar_lea.vmem %s3, 16
      %v1409 = vld [vmem:[%s1408] sm:$0xf]
      %v1410 = vld [vmem:[%s1408 + $0x4] sm:$0xf]
      %v1411 = vld [vmem:[%s1408 + $0x8] sm:$0xf]
      %v1412 = vld [vmem:[%s1408 + $0xc] sm:$0xf]
      %v1415 = vrot.slane %v614, 4
      %v1416 = vrot.slane %v616, 4
      %v1417 = vsel %vm593, %v1415, %v1416
      %v1418 = vrot.slane %v596, 4
      %v1419 = vsel %vm593, %v1416, %v1418
      %v1420 = vrot.slane %v598, 4
      %v1421 = vsel %vm593, %v1418, %v1420
      %v1422 = vrot.slane %v600, 4
      %v1423 = vsel %vm593, %v1420, %v1422
      %v1424 = vrot.slane %v602, 4
      %v1425 = vsel %vm593, %v1422, %v1424
      %v1426 = vrot.slane %v604, 4
      %v1427 = vsel %vm593, %v1424, %v1426
      %v1428 = vrot.slane %v606, 4
      %v1429 = vsel %vm593, %v1426, %v1428
      %v1430 = vrot.slane %v608, 4
      %v1431 = vsel %vm593, %v1428, %v1430
      %v1436 = vunpack.c.l.b16 %v1409
      %v1437 = vunpack.c.l.b16 %v1410
      %v1438 = vunpack.c.l.b16 %v1411
      %v1439 = vunpack.c.l.b16 %v1412
      %v1440 = vpack.c.b16 %v1437, %v1436
      %v1441 = vpack.c.b16 %v1439, %v1438
      %vm1444 = vcmask 261120
      %v1446 = vsel %vm1444, %v1417, 0
      %v1449 = vsel %vm1444, %v1419, 0
      %v1452 = vsel %vm1444, %v1421, 0
      %v1455 = vsel %vm1444, %v1423, 0
      %v1458 = vsel %vm1444, %v1425, 0
      %v1461 = vsel %vm1444, %v1427, 0
      %v1464 = vsel %vm1444, %v1429, 0
      %v1467 = vsel %vm1444, %v1431, 0
      %1469 = vmatprep.subr.bf16.mxu0 0
      %1470 = vmatpush1.bf16.msra.mxu0 %v1440
      %1471 = vmatprep.subr.bf16.mxu0 0
      %1472 = vmatpush1.bf16.msra.mxu0 %v1441
      %1473 = vmatprep.subr.bf16.mxu0 0
      %1474 = vmatpush1.bf16.msra.mxu0 0
      %1475 = vmatprep.subr.bf16.mxu0 0
      %1476 = vmatpush1.bf16.msra.mxu0 0
      %1477 = vmatprep.subr.bf16.mxu0 0
      %1478 = vmatpush1.bf16.msra.mxu0 0
      %1479 = vmatprep.subr.bf16.mxu0 0
      %1480 = vmatpush1.bf16.msra.mxu0 0
      %1481 = vmatprep.subr.bf16.mxu0 0
      %1482 = vmatpush1.bf16.msra.mxu0 0
      %1483 = vmatprep.subr.bf16.mxu0 0
      %1484 = vmatpush1.bf16.msra.mxu0 0
      %1485 = vmatprep.subr.bf16.mxu0 0
      %1486 = vmatpush1.bf16.msra.mxu0 0
      %1487 = vmatprep.subr.bf16.mxu0 0
      %1488 = vmatpush1.bf16.msra.mxu0 0
      %1489 = vmatprep.subr.bf16.mxu0 0
      %1490 = vmatpush1.bf16.msra.mxu0 0
      %1491 = vmatprep.subr.bf16.mxu0 0
      %1492 = vmatpush1.bf16.msra.mxu0 0
      %1493 = vmatprep.subr.bf16.mxu0 0
      %1494 = vmatpush1.bf16.msra.mxu0 0
      %1495 = vmatprep.subr.bf16.mxu0 0
      %1496 = vmatpush1.bf16.msra.mxu0 0
      %1497 = vmatprep.subr.bf16.mxu0 0
      %1498 = vmatpush1.bf16.msra.mxu0 0
      %1499 = vmatprep.subr.bf16.mxu0 0
      %1500 = vmatpush1.bf16.msra.mxu0 0
      %1501 = vmatprep.mubr.bf16.mxu0 0
      %1502 = vmatmul.mubr.bf16.gmra.mrb[0].mxu0 %v1446
      %v1503 = vpop.f32.mrb[0].mxu0
      %v1504 = vadd.f32 0.0, %v1503
      %v1505 = vpop.f32.mrb[0].mxu0
      %v1506 = vpop.f32.mrb[0].mxu0
      %v1507 = vadd.f32 0.0, %v1506
      %v1508 = vpop.f32.mrb[0].mxu0
      %1509 = vmatprep.mubr.bf16.mxu0 0
      %1510 = vmatmul.mubr.bf16.gmra.mrb[0].mxu0 %v1449
      %v1511 = vpop.f32.mrb[0].mxu0
      %v1512 = vadd.f32 0.0, %v1511
      %v1513 = vpop.f32.mrb[0].mxu0
      %v1514 = vpop.f32.mrb[0].mxu0
      %v1515 = vadd.f32 0.0, %v1514
      %v1516 = vpop.f32.mrb[0].mxu0
      %1517 = vmatprep.mubr.bf16.mxu0 0
      %1518 = vmatmul.mubr.bf16.gmra.mrb[0].mxu0 %v1452
      %v1519 = vpop.f32.mrb[0].mxu0
      %v1520 = vadd.f32 0.0, %v1519
      %v1521 = vpop.f32.mrb[0].mxu0
      %v1522 = vpop.f32.mrb[0].mxu0
      %v1523 = vadd.f32 0.0, %v1522
      %v1524 = vpop.f32.mrb[0].mxu0
      %1525 = vmatprep.mubr.bf16.mxu0 0
      %1526 = vmatmul.mubr.bf16.gmra.mrb[0].mxu0 %v1455
      %v1527 = vpop.f32.mrb[0].mxu0
      %v1528 = vadd.f32 0.0, %v1527
      %v1529 = vpop.f32.mrb[0].mxu0
      %v1530 = vpop.f32.mrb[0].mxu0
      %v1531 = vadd.f32 0.0, %v1530
      %v1532 = vpop.f32.mrb[0].mxu0
      %1533 = vmatprep.mubr.bf16.mxu0 0
      %1534 = vmatmul.mubr.bf16.gmra.mrb[0].mxu0 %v1458
      %v1535 = vpop.f32.mrb[0].mxu0
      %v1536 = vadd.f32 0.0, %v1535
      %v1537 = vpop.f32.mrb[0].mxu0
      %v1538 = vpop.f32.mrb[0].mxu0
      %v1539 = vadd.f32 0.0, %v1538
      %v1540 = vpop.f32.mrb[0].mxu0
      %1541 = vmatprep.mubr.bf16.mxu0 0
      %1542 = vmatmul.mubr.bf16.gmra.mrb[0].mxu0 %v1461
      %v1543 = vpop.f32.mrb[0].mxu0
      %v1544 = vadd.f32 0.0, %v1543
      %v1545 = vpop.f32.mrb[0].mxu0
      %v1546 = vpop.f32.mrb[0].mxu0
      %v1547 = vadd.f32 0.0, %v1546
      %v1548 = vpop.f32.mrb[0].mxu0
      %1549 = vmatprep.mubr.bf16.mxu0 0
      %1550 = vmatmul.mubr.bf16.gmra.mrb[0].mxu0 %v1464
      %v1551 = vpop.f32.mrb[0].mxu0
      %v1552 = vadd.f32 0.0, %v1551
      %v1553 = vpop.f32.mrb[0].mxu0
      %v1554 = vpop.f32.mrb[0].mxu0
      %v1555 = vadd.f32 0.0, %v1554
      %v1556 = vpop.f32.mrb[0].mxu0
      %1557 = vmatprep.mubr.bf16.mxu0 0
      %1558 = vmatmul.mubr.bf16.gmra.mrb[0].mxu0 %v1467
      %v1559 = vpop.f32.mrb[0].mxu0
      %v1560 = vadd.f32 0.0, %v1559
      %v1561 = vpop.f32.mrb[0].mxu0
      %v1562 = vpop.f32.mrb[0].mxu0
      %v1563 = vadd.f32 0.0, %v1562
      %v1564 = vpop.f32.mrb[0].mxu0
      %1565 = vdwg.mxu0
      %v1575 = vrot.slane %v1228, 4
      %v1576 = vrot.slane %v1229, 4
      %v1577 = vsel %vm593, %v1575, %v1576
      %v1578 = vrot.slane %v1230, 4
      %v1579 = vsel %vm593, %v1576, %v1578
      %v1580 = vrot.slane %v1231, 4
      %v1581 = vsel %vm593, %v1578, %v1580
      %v1582 = vrot.slane %v1232, 4
      %v1583 = vsel %vm593, %v1580, %v1582
      %v1584 = vrot.slane %v1233, 4
      %v1585 = vsel %vm593, %v1582, %v1584
      %v1586 = vrot.slane %v1234, 4
      %v1587 = vsel %vm593, %v1584, %v1586
      %v1588 = vrot.slane %v1235, 4
      %v1589 = vsel %vm593, %v1586, %v1588
      %v1590 = vrot.slane %v1236, 4
      %v1591 = vsel %vm593, %v1588, %v1590
      %v1596 = vunpack.c.l.b16 %v1404
      %v1597 = vunpack.c.l.b16 %v1405
      %v1598 = vunpack.c.l.b16 %v1406
      %v1599 = vunpack.c.l.b16 %v1407
      %v1600 = vpack.c.b16 %v1597, %v1596
      %v1601 = vpack.c.b16 %v1599, %v1598
      %v1605 = vsel %vm1444, %v1577, 0
      %v1608 = vsel %vm1444, %v1579, 0
      %v1611 = vsel %vm1444, %v1581, 0
      %v1614 = vsel %vm1444, %v1583, 0
      %v1617 = vsel %vm1444, %v1585, 0
      %v1620 = vsel %vm1444, %v1587, 0
      %v1623 = vsel %vm1444, %v1589, 0
      %v1626 = vsel %vm1444, %v1591, 0
      %1628 = vmatprep.subr.bf16.mxu0 0
      %1629 = vmatpush1.bf16.msra.mxu0 %v1600
      %1630 = vmatprep.subr.bf16.mxu0 0
      %1631 = vmatpush1.bf16.msra.mxu0 %v1601
      %1632 = vmatprep.subr.bf16.mxu0 0
      %1633 = vmatpush1.bf16.msra.mxu0 0
      %1634 = vmatprep.subr.bf16.mxu0 0
      %1635 = vmatpush1.bf16.msra.mxu0 0
      %1636 = vmatprep.subr.bf16.mxu0 0
      %1637 = vmatpush1.bf16.msra.mxu0 0
      %1638 = vmatprep.subr.bf16.mxu0 0
      %1639 = vmatpush1.bf16.msra.mxu0 0
      %1640 = vmatprep.subr.bf16.mxu0 0
      %1641 = vmatpush1.bf16.msra.mxu0 0
      %1642 = vmatprep.subr.bf16.mxu0 0
      %1643 = vmatpush1.bf16.msra.mxu0 0
      %1644 = vmatprep.subr.bf16.mxu0 0
      %1645 = vmatpush1.bf16.msra.mxu0 0
      %1646 = vmatprep.subr.bf16.mxu0 0
      %1647 = vmatpush1.bf16.msra.mxu0 0
      %1648 = vmatprep.subr.bf16.mxu0 0
      %1649 = vmatpush1.bf16.msra.mxu0 0
      %1650 = vmatprep.subr.bf16.mxu0 0
      %1651 = vmatpush1.bf16.msra.mxu0 0
      %1652 = vmatprep.subr.bf16.mxu0 0
      %1653 = vmatpush1.bf16.msra.mxu0 0
      %1654 = vmatprep.subr.bf16.mxu0 0
      %1655 = vmatpush1.bf16.msra.mxu0 0
      %1656 = vmatprep.subr.bf16.mxu0 0
      %1657 = vmatpush1.bf16.msra.mxu0 0
      %1658 = vmatprep.subr.bf16.mxu0 0
      %1659 = vmatpush1.bf16.msra.mxu0 0
      %1660 = vmatprep.mubr.bf16.mxu0 0
      %1661 = vmatmul.mubr.bf16.gmra.mrb[0].mxu0 %v1605
      %v1662 = vpop.f32.mrb[0].mxu0
      %v1663 = vadd.f32 %v1504, %v1662
      %v1664 = vpop.f32.mrb[0].mxu0
      %v1665 = vpop.f32.mrb[0].mxu0
      %v1666 = vadd.f32 %v1507, %v1665
      %v1667 = vpop.f32.mrb[0].mxu0
      %1668 = vmatprep.mubr.bf16.mxu0 0
      %1669 = vmatmul.mubr.bf16.gmra.mrb[0].mxu0 %v1608
      %v1670 = vpop.f32.mrb[0].mxu0
      %v1671 = vadd.f32 %v1512, %v1670
      %v1672 = vpop.f32.mrb[0].mxu0
      %v1673 = vpop.f32.mrb[0].mxu0
      %v1674 = vadd.f32 %v1515, %v1673
      %v1675 = vpop.f32.mrb[0].mxu0
      %1676 = vmatprep.mubr.bf16.mxu0 0
      %1677 = vmatmul.mubr.bf16.gmra.mrb[0].mxu0 %v1611
      %v1678 = vpop.f32.mrb[0].mxu0
      %v1679 = vadd.f32 %v1520, %v1678
      %v1680 = vpop.f32.mrb[0].mxu0
      %v1681 = vpop.f32.mrb[0].mxu0
      %v1682 = vadd.f32 %v1523, %v1681
      %v1683 = vpop.f32.mrb[0].mxu0
      %1684 = vmatprep.mubr.bf16.mxu0 0
      %1685 = vmatmul.mubr.bf16.gmra.mrb[0].mxu0 %v1614
      %v1686 = vpop.f32.mrb[0].mxu0
      %v1687 = vadd.f32 %v1528, %v1686
      %v1688 = vpop.f32.mrb[0].mxu0
      %v1689 = vpop.f32.mrb[0].mxu0
      %v1690 = vadd.f32 %v1531, %v1689
      %v1691 = vpop.f32.mrb[0].mxu0
      %1692 = vmatprep.mubr.bf16.mxu0 0
      %1693 = vmatmul.mubr.bf16.gmra.mrb[0].mxu0 %v1617
      %v1694 = vpop.f32.mrb[0].mxu0
      %v1695 = vadd.f32 %v1536, %v1694
      %v1696 = vpop.f32.mrb[0].mxu0
      %v1697 = vpop.f32.mrb[0].mxu0
      %v1698 = vadd.f32 %v1539, %v1697
      %v1699 = vpop.f32.mrb[0].mxu0
      %1700 = vmatprep.mubr.bf16.mxu0 0
      %1701 = vmatmul.mubr.bf16.gmra.mrb[0].mxu0 %v1620
      %v1702 = vpop.f32.mrb[0].mxu0
      %v1703 = vadd.f32 %v1544, %v1702
      %v1704 = vpop.f32.mrb[0].mxu0
      %v1705 = vpop.f32.mrb[0].mxu0
      %v1706 = vadd.f32 %v1547, %v1705
      %v1707 = vpop.f32.mrb[0].mxu0
      %1708 = vmatprep.mubr.bf16.mxu0 0
      %1709 = vmatmul.mubr.bf16.gmra.mrb[0].mxu0 %v1623
      %v1710 = vpop.f32.mrb[0].mxu0
      %v1711 = vadd.f32 %v1552, %v1710
      %v1712 = vpop.f32.mrb[0].mxu0
      %v1713 = vpop.f32.mrb[0].mxu0
      %v1714 = vadd.f32 %v1555, %v1713
      %v1715 = vpop.f32.mrb[0].mxu0
      %1716 = vmatprep.mubr.bf16.mxu0 0
      %1717 = vmatmul.mubr.bf16.gmra.mrb[0].mxu0 %v1626
      %v1718 = vpop.f32.mrb[0].mxu0
      %v1719 = vadd.f32 %v1560, %v1718
      %v1720 = vpop.f32.mrb[0].mxu0
      %v1721 = vpop.f32.mrb[0].mxu0
      %v1722 = vadd.f32 %v1563, %v1721
      %v1723 = vpop.f32.mrb[0].mxu0
      %1724 = vdwg.mxu0
      %s1725 = scalar_lea.vmem %s3, 32
      %v1726 = vld [vmem:[%s1725] sm:$0xf]
      %v1727 = vld [vmem:[%s1725 + $0x4] sm:$0xf]
      %v1728 = vld [vmem:[%s1725 + $0x8] sm:$0xf]
      %v1729 = vld [vmem:[%s1725 + $0xc] sm:$0xf]
      %v1739 = vrot.slane %v1393, 4
      %v1740 = vrot.slane %v1394, 4
      %v1741 = vsel %vm593, %v1739, %v1740
      %v1742 = vrot.slane %v1395, 4
      %v1743 = vsel %vm593, %v1740, %v1742
      %v1744 = vrot.slane %v1396, 4
      %v1745 = vsel %vm593, %v1742, %v1744
      %v1746 = vrot.slane %v1397, 4
      %v1747 = vsel %vm593, %v1744, %v1746
      %v1748 = vrot.slane %v1398, 4
      %v1749 = vsel %vm593, %v1746, %v1748
      %v1750 = vrot.slane %v1399, 4
      %v1751 = vsel %vm593, %v1748, %v1750
      %v1752 = vrot.slane %v1400, 4
      %v1753 = vsel %vm593, %v1750, %v1752
      %v1754 = vrot.slane %v1401, 4
      %v1755 = vsel %vm593, %v1752, %v1754
      %v1760 = vunpack.c.l.b16 %v1726
      %v1761 = vunpack.c.l.b16 %v1727
      %v1762 = vunpack.c.l.b16 %v1728
      %v1763 = vunpack.c.l.b16 %v1729
      %v1764 = vpack.c.b16 %v1761, %v1760
      %v1765 = vpack.c.b16 %v1763, %v1762
      %v1769 = vsel %vm1444, %v1741, 0
      %v1772 = vsel %vm1444, %v1743, 0
      %v1775 = vsel %vm1444, %v1745, 0
      %v1778 = vsel %vm1444, %v1747, 0
      %v1781 = vsel %vm1444, %v1749, 0
      %v1784 = vsel %vm1444, %v1751, 0
      %v1787 = vsel %vm1444, %v1753, 0
      %v1790 = vsel %vm1444, %v1755, 0
      %1792 = vmatprep.subr.bf16.mxu0 0
      %1793 = vmatpush1.bf16.msra.mxu0 %v1764
      %1794 = vmatprep.subr.bf16.mxu0 0
      %1795 = vmatpush1.bf16.msra.mxu0 %v1765
      %1796 = vmatprep.subr.bf16.mxu0 0
      %1797 = vmatpush1.bf16.msra.mxu0 0
      %1798 = vmatprep.subr.bf16.mxu0 0
      %1799 = vmatpush1.bf16.msra.mxu0 0
      %1800 = vmatprep.subr.bf16.mxu0 0
      %1801 = vmatpush1.bf16.msra.mxu0 0
      %1802 = vmatprep.subr.bf16.mxu0 0
      %1803 = vmatpush1.bf16.msra.mxu0 0
      %1804 = vmatprep.subr.bf16.mxu0 0
      %1805 = vmatpush1.bf16.msra.mxu0 0
      %1806 = vmatprep.subr.bf16.mxu0 0
      %1807 = vmatpush1.bf16.msra.mxu0 0
      %1808 = vmatprep.subr.bf16.mxu0 0
      %1809 = vmatpush1.bf16.msra.mxu0 0
      %1810 = vmatprep.subr.bf16.mxu0 0
      %1811 = vmatpush1.bf16.msra.mxu0 0
      %1812 = vmatprep.subr.bf16.mxu0 0
      %1813 = vmatpush1.bf16.msra.mxu0 0
      %1814 = vmatprep.subr.bf16.mxu0 0
      %1815 = vmatpush1.bf16.msra.mxu0 0
      %1816 = vmatprep.subr.bf16.mxu0 0
      %1817 = vmatpush1.bf16.msra.mxu0 0
      %1818 = vmatprep.subr.bf16.mxu0 0
      %1819 = vmatpush1.bf16.msra.mxu0 0
      %1820 = vmatprep.subr.bf16.mxu0 0
      %1821 = vmatpush1.bf16.msra.mxu0 0
      %1822 = vmatprep.subr.bf16.mxu0 0
      %1823 = vmatpush1.bf16.msra.mxu0 0
      %1824 = vmatprep.mubr.bf16.mxu0 0
      %1825 = vmatmul.mubr.bf16.gmra.mrb[0].mxu0 %v1769
      %v1826 = vpop.f32.mrb[0].mxu0
      %v1827 = vadd.f32 0.0, %v1826
      %v1828 = vpop.f32.mrb[0].mxu0
      %v1829 = vpop.f32.mrb[0].mxu0
      %v1830 = vadd.f32 0.0, %v1829
      %v1831 = vpop.f32.mrb[0].mxu0
      %1832 = vmatprep.mubr.bf16.mxu0 0
      %1833 = vmatmul.mubr.bf16.gmra.mrb[0].mxu0 %v1772
      %v1834 = vpop.f32.mrb[0].mxu0
      %v1835 = vadd.f32 0.0, %v1834
      %v1836 = vpop.f32.mrb[0].mxu0
      %v1837 = vpop.f32.mrb[0].mxu0
      %v1838 = vadd.f32 0.0, %v1837
      %v1839 = vpop.f32.mrb[0].mxu0
      %1840 = vmatprep.mubr.bf16.mxu0 0
      %1841 = vmatmul.mubr.bf16.gmra.mrb[0].mxu0 %v1775
      %v1842 = vpop.f32.mrb[0].mxu0
      %v1843 = vadd.f32 0.0, %v1842
      %v1844 = vpop.f32.mrb[0].mxu0
      %v1845 = vpop.f32.mrb[0].mxu0
      %v1846 = vadd.f32 0.0, %v1845
      %v1847 = vpop.f32.mrb[0].mxu0
      %1848 = vmatprep.mubr.bf16.mxu0 0
      %1849 = vmatmul.mubr.bf16.gmra.mrb[0].mxu0 %v1778
      %v1850 = vpop.f32.mrb[0].mxu0
      %v1851 = vadd.f32 0.0, %v1850
      %v1852 = vpop.f32.mrb[0].mxu0
      %v1853 = vpop.f32.mrb[0].mxu0
      %v1854 = vadd.f32 0.0, %v1853
      %v1855 = vpop.f32.mrb[0].mxu0
      %1856 = vmatprep.mubr.bf16.mxu0 0
      %1857 = vmatmul.mubr.bf16.gmra.mrb[0].mxu0 %v1781
      %v1858 = vpop.f32.mrb[0].mxu0
      %v1859 = vadd.f32 0.0, %v1858
      %v1860 = vpop.f32.mrb[0].mxu0
      %v1861 = vpop.f32.mrb[0].mxu0
      %v1862 = vadd.f32 0.0, %v1861
      %v1863 = vpop.f32.mrb[0].mxu0
      %1864 = vmatprep.mubr.bf16.mxu0 0
      %1865 = vmatmul.mubr.bf16.gmra.mrb[0].mxu0 %v1784
      %v1866 = vpop.f32.mrb[0].mxu0
      %v1867 = vadd.f32 0.0, %v1866
      %v1868 = vpop.f32.mrb[0].mxu0
      %v1869 = vpop.f32.mrb[0].mxu0
      %v1870 = vadd.f32 0.0, %v1869
      %v1871 = vpop.f32.mrb[0].mxu0
      %1872 = vmatprep.mubr.bf16.mxu0 0
      %1873 = vmatmul.mubr.bf16.gmra.mrb[0].mxu0 %v1787
      %v1874 = vpop.f32.mrb[0].mxu0
      %v1875 = vadd.f32 0.0, %v1874
      %v1876 = vpop.f32.mrb[0].mxu0
      %v1877 = vpop.f32.mrb[0].mxu0
      %v1878 = vadd.f32 0.0, %v1877
      %v1879 = vpop.f32.mrb[0].mxu0
      %1880 = vmatprep.mubr.bf16.mxu0 0
      %1881 = vmatmul.mubr.bf16.gmra.mrb[0].mxu0 %v1790
      %v1882 = vpop.f32.mrb[0].mxu0
      %v1883 = vadd.f32 0.0, %v1882
      %v1884 = vpop.f32.mrb[0].mxu0
      %v1885 = vpop.f32.mrb[0].mxu0
      %v1886 = vadd.f32 0.0, %v1885
      %v1887 = vpop.f32.mrb[0].mxu0
      %1888 = vdwg.mxu0
      %v1889 = vadd.f32 %v1663, %v1827
      %v1890 = vadd.f32 %v1666, %v1830
      %v1891 = vadd.f32 %v1671, %v1835
      %v1892 = vadd.f32 %v1674, %v1838
      %v1893 = vadd.f32 %v1679, %v1843
      %v1894 = vadd.f32 %v1682, %v1846
      %v1895 = vadd.f32 %v1687, %v1851
      %v1896 = vadd.f32 %v1690, %v1854
      %v1897 = vadd.f32 %v1695, %v1859
      %v1898 = vadd.f32 %v1698, %v1862
      %v1899 = vadd.f32 %v1703, %v1867
      %v1900 = vadd.f32 %v1706, %v1870
      %v1901 = vadd.f32 %v1711, %v1875
      %v1902 = vadd.f32 %v1714, %v1878
      %v1903 = vadd.f32 %v1719, %v1883
      %v1904 = vadd.f32 %v1722, %v1886
      %s1905 = scalar_lea.vmem %s3, 48
      %v1906 = vld [vmem:[%s1905] sm:$0xf]
      %v1907 = vld [vmem:[%s1905 + $0x4] sm:$0xf]
      %v1908 = vld [vmem:[%s1905 + $0x8] sm:$0xf]
      %v1909 = vld [vmem:[%s1905 + $0xc] sm:$0xf]
      %v1911 = vrot.slane %v1237, 4
      %v1912 = vsel %vm593, %v1590, %v1911
      %v1917 = vunpack.c.l.b16 %v1906
      %v1918 = vunpack.c.l.b16 %v1907
      %v1919 = vunpack.c.l.b16 %v1908
      %v1920 = vunpack.c.l.b16 %v1909
      %v1921 = vpack.c.b16 %v1918, %v1917
      %v1922 = vpack.c.b16 %v1920, %v1919
      %v1926 = vsel %vm1444, %v1912, 0
      %1928 = vmatprep.subr.bf16.mxu0 0
      %1929 = vmatpush1.bf16.msra.mxu0 %v1921
      %1930 = vmatprep.subr.bf16.mxu0 0
      %1931 = vmatpush1.bf16.msra.mxu0 %v1922
      %1932 = vmatprep.subr.bf16.mxu0 0
      %1933 = vmatpush1.bf16.msra.mxu0 0
      %1934 = vmatprep.subr.bf16.mxu0 0
      %1935 = vmatpush1.bf16.msra.mxu0 0
      %1936 = vmatprep.subr.bf16.mxu0 0
      %1937 = vmatpush1.bf16.msra.mxu0 0
      %1938 = vmatprep.subr.bf16.mxu0 0
      %1939 = vmatpush1.bf16.msra.mxu0 0
      %1940 = vmatprep.subr.bf16.mxu0 0
      %1941 = vmatpush1.bf16.msra.mxu0 0
      %1942 = vmatprep.subr.bf16.mxu0 0
      %1943 = vmatpush1.bf16.msra.mxu0 0
      %1944 = vmatprep.subr.bf16.mxu0 0
      %1945 = vmatpush1.bf16.msra.mxu0 0
      %1946 = vmatprep.subr.bf16.mxu0 0
      %1947 = vmatpush1.bf16.msra.mxu0 0
      %1948 = vmatprep.subr.bf16.mxu0 0
      %1949 = vmatpush1.bf16.msra.mxu0 0
      %1950 = vmatprep.subr.bf16.mxu0 0
      %1951 = vmatpush1.bf16.msra.mxu0 0
      %1952 = vmatprep.subr.bf16.mxu0 0
      %1953 = vmatpush1.bf16.msra.mxu0 0
      %1954 = vmatprep.subr.bf16.mxu0 0
      %1955 = vmatpush1.bf16.msra.mxu0 0
      %1956 = vmatprep.subr.bf16.mxu0 0
      %1957 = vmatpush1.bf16.msra.mxu0 0
      %1958 = vmatprep.subr.bf16.mxu0 0
      %1959 = vmatpush1.bf16.msra.mxu0 0
      %1960 = vmatprep.mubr.bf16.mxu0 0
      %1961 = vmatmul.mubr.bf16.gmra.mrb[0].mxu0 %v1608
      %v1962 = vpop.f32.mrb[0].mxu0
      %v1963 = vadd.f32 0.0, %v1962
      %v1964 = vpop.f32.mrb[0].mxu0
      %v1965 = vpop.f32.mrb[0].mxu0
      %v1966 = vadd.f32 0.0, %v1965
      %v1967 = vpop.f32.mrb[0].mxu0
      %1968 = vmatprep.mubr.bf16.mxu0 0
      %1969 = vmatmul.mubr.bf16.gmra.mrb[0].mxu0 %v1611
      %v1970 = vpop.f32.mrb[0].mxu0
      %v1971 = vadd.f32 0.0, %v1970
      %v1972 = vpop.f32.mrb[0].mxu0
      %v1973 = vpop.f32.mrb[0].mxu0
      %v1974 = vadd.f32 0.0, %v1973
      %v1975 = vpop.f32.mrb[0].mxu0
      %1976 = vmatprep.mubr.bf16.mxu0 0
      %1977 = vmatmul.mubr.bf16.gmra.mrb[0].mxu0 %v1614
      %v1978 = vpop.f32.mrb[0].mxu0
      %v1979 = vadd.f32 0.0, %v1978
      %v1980 = vpop.f32.mrb[0].mxu0
      %v1981 = vpop.f32.mrb[0].mxu0
      %v1982 = vadd.f32 0.0, %v1981
      %v1983 = vpop.f32.mrb[0].mxu0
      %1984 = vmatprep.mubr.bf16.mxu0 0
      %1985 = vmatmul.mubr.bf16.gmra.mrb[0].mxu0 %v1617
      %v1986 = vpop.f32.mrb[0].mxu0
      %v1987 = vadd.f32 0.0, %v1986
      %v1988 = vpop.f32.mrb[0].mxu0
      %v1989 = vpop.f32.mrb[0].mxu0
      %v1990 = vadd.f32 0.0, %v1989
      %v1991 = vpop.f32.mrb[0].mxu0
      %1992 = vmatprep.mubr.bf16.mxu0 0
      %1993 = vmatmul.mubr.bf16.gmra.mrb[0].mxu0 %v1620
      %v1994 = vpop.f32.mrb[0].mxu0
      %v1995 = vadd.f32 0.0, %v1994
      %v1996 = vpop.f32.mrb[0].mxu0
      %v1997 = vpop.f32.mrb[0].mxu0
      %v1998 = vadd.f32 0.0, %v1997
      %v1999 = vpop.f32.mrb[0].mxu0
      %2000 = vmatprep.mubr.bf16.mxu0 0
      %2001 = vmatmul.mubr.bf16.gmra.mrb[0].mxu0 %v1623
      %v2002 = vpop.f32.mrb[0].mxu0
      %v2003 = vadd.f32 0.0, %v2002
      %v2004 = vpop.f32.mrb[0].mxu0
      %v2005 = vpop.f32.mrb[0].mxu0
      %v2006 = vadd.f32 0.0, %v2005
      %v2007 = vpop.f32.mrb[0].mxu0
      %2008 = vmatprep.mubr.bf16.mxu0 0
      %2009 = vmatmul.mubr.bf16.gmra.mrb[0].mxu0 %v1626
      %v2010 = vpop.f32.mrb[0].mxu0
      %v2011 = vadd.f32 0.0, %v2010
      %v2012 = vpop.f32.mrb[0].mxu0
      %v2013 = vpop.f32.mrb[0].mxu0
      %v2014 = vadd.f32 0.0, %v2013
      %v2015 = vpop.f32.mrb[0].mxu0
      %2016 = vmatprep.mubr.bf16.mxu0 0
      %2017 = vmatmul.mubr.bf16.gmra.mrb[0].mxu0 %v1926
      %v2018 = vpop.f32.mrb[0].mxu0
      %v2019 = vadd.f32 0.0, %v2018
      %v2020 = vpop.f32.mrb[0].mxu0
      %v2021 = vpop.f32.mrb[0].mxu0
      %v2022 = vadd.f32 0.0, %v2021
      %v2023 = vpop.f32.mrb[0].mxu0
      %2024 = vdwg.mxu0
      %v2025 = vadd.f32 %v1889, %v1963
      %v2026 = vadd.f32 %v1890, %v1966
      %v2027 = vadd.f32 %v1891, %v1971
      %v2028 = vadd.f32 %v1892, %v1974
      %v2029 = vadd.f32 %v1893, %v1979
      %v2030 = vadd.f32 %v1894, %v1982
      %v2031 = vadd.f32 %v1895, %v1987
      %v2032 = vadd.f32 %v1896, %v1990
      %v2033 = vadd.f32 %v1897, %v1995
      %v2034 = vadd.f32 %v1898, %v1998
      %v2035 = vadd.f32 %v1899, %v2003
      %v2036 = vadd.f32 %v1900, %v2006
      %v2037 = vadd.f32 %v1901, %v2011
      %v2038 = vadd.f32 %v1902, %v2014
      %v2039 = vadd.f32 %v1903, %v2019
      %v2040 = vadd.f32 %v1904, %v2022
      %s2041 = scalar_lea.vmem %s3, 64
      %v2042 = vld [vmem:[%s2041] sm:$0xf]
      %v2043 = vld [vmem:[%s2041 + $0x4] sm:$0xf]
      %v2044 = vld [vmem:[%s2041 + $0x8] sm:$0xf]
      %v2045 = vld [vmem:[%s2041 + $0xc] sm:$0xf]
      %v2047 = vrot.slane %v619, 4
      %v2048 = vsel %vm593, %v1430, %v2047
      %v2053 = vunpack.c.l.b16 %v2042
      %v2054 = vunpack.c.l.b16 %v2043
      %v2055 = vunpack.c.l.b16 %v2044
      %v2056 = vunpack.c.l.b16 %v2045
      %v2057 = vpack.c.b16 %v2054, %v2053
      %v2058 = vpack.c.b16 %v2056, %v2055
      %v2062 = vsel %vm1444, %v2048, 0
      %2064 = vmatprep.subr.bf16.mxu0 0
      %2065 = vmatpush1.bf16.msra.mxu0 %v2057
      %2066 = vmatprep.subr.bf16.mxu0 0
      %2067 = vmatpush1.bf16.msra.mxu0 %v2058
      %2068 = vmatprep.subr.bf16.mxu0 0
      %2069 = vmatpush1.bf16.msra.mxu0 0
      %2070 = vmatprep.subr.bf16.mxu0 0
      %2071 = vmatpush1.bf16.msra.mxu0 0
      %2072 = vmatprep.subr.bf16.mxu0 0
      %2073 = vmatpush1.bf16.msra.mxu0 0
      %2074 = vmatprep.subr.bf16.mxu0 0
      %2075 = vmatpush1.bf16.msra.mxu0 0
      %2076 = vmatprep.subr.bf16.mxu0 0
      %2077 = vmatpush1.bf16.msra.mxu0 0
      %2078 = vmatprep.subr.bf16.mxu0 0
      %2079 = vmatpush1.bf16.msra.mxu0 0
      %2080 = vmatprep.subr.bf16.mxu0 0
      %2081 = vmatpush1.bf16.msra.mxu0 0
      %2082 = vmatprep.subr.bf16.mxu0 0
      %2083 = vmatpush1.bf16.msra.mxu0 0
      %2084 = vmatprep.subr.bf16.mxu0 0
      %2085 = vmatpush1.bf16.msra.mxu0 0
      %2086 = vmatprep.subr.bf16.mxu0 0
      %2087 = vmatpush1.bf16.msra.mxu0 0
      %2088 = vmatprep.subr.bf16.mxu0 0
      %2089 = vmatpush1.bf16.msra.mxu0 0
      %2090 = vmatprep.subr.bf16.mxu0 0
      %2091 = vmatpush1.bf16.msra.mxu0 0
      %2092 = vmatprep.subr.bf16.mxu0 0
      %2093 = vmatpush1.bf16.msra.mxu0 0
      %2094 = vmatprep.subr.bf16.mxu0 0
      %2095 = vmatpush1.bf16.msra.mxu0 0
      %2096 = vmatprep.mubr.bf16.mxu0 0
      %2097 = vmatmul.mubr.bf16.gmra.mrb[0].mxu0 %v1449
      %v2098 = vpop.f32.mrb[0].mxu0
      %v2099 = vadd.f32 0.0, %v2098
      %v2100 = vpop.f32.mrb[0].mxu0
      %v2101 = vpop.f32.mrb[0].mxu0
      %v2102 = vadd.f32 0.0, %v2101
      %v2103 = vpop.f32.mrb[0].mxu0
      %2104 = vmatprep.mubr.bf16.mxu0 0
      %2105 = vmatmul.mubr.bf16.gmra.mrb[0].mxu0 %v1452
      %v2106 = vpop.f32.mrb[0].mxu0
      %v2107 = vadd.f32 0.0, %v2106
      %v2108 = vpop.f32.mrb[0].mxu0
      %v2109 = vpop.f32.mrb[0].mxu0
      %v2110 = vadd.f32 0.0, %v2109
      %v2111 = vpop.f32.mrb[0].mxu0
      %2112 = vmatprep.mubr.bf16.mxu0 0
      %2113 = vmatmul.mubr.bf16.gmra.mrb[0].mxu0 %v1455
      %v2114 = vpop.f32.mrb[0].mxu0
      %v2115 = vadd.f32 0.0, %v2114
      %v2116 = vpop.f32.mrb[0].mxu0
      %v2117 = vpop.f32.mrb[0].mxu0
      %v2118 = vadd.f32 0.0, %v2117
      %v2119 = vpop.f32.mrb[0].mxu0
      %2120 = vmatprep.mubr.bf16.mxu0 0
      %2121 = vmatmul.mubr.bf16.gmra.mrb[0].mxu0 %v1458
      %v2122 = vpop.f32.mrb[0].mxu0
      %v2123 = vadd.f32 0.0, %v2122
      %v2124 = vpop.f32.mrb[0].mxu0
      %v2125 = vpop.f32.mrb[0].mxu0
      %v2126 = vadd.f32 0.0, %v2125
      %v2127 = vpop.f32.mrb[0].mxu0
      %2128 = vmatprep.mubr.bf16.mxu0 0
      %2129 = vmatmul.mubr.bf16.gmra.mrb[0].mxu0 %v1461
      %v2130 = vpop.f32.mrb[0].mxu0
      %v2131 = vadd.f32 0.0, %v2130
      %v2132 = vpop.f32.mrb[0].mxu0
      %v2133 = vpop.f32.mrb[0].mxu0
      %v2134 = vadd.f32 0.0, %v2133
      %v2135 = vpop.f32.mrb[0].mxu0
      %2136 = vmatprep.mubr.bf16.mxu0 0
      %2137 = vmatmul.mubr.bf16.gmra.mrb[0].mxu0 %v1464
      %v2138 = vpop.f32.mrb[0].mxu0
      %v2139 = vadd.f32 0.0, %v2138
      %v2140 = vpop.f32.mrb[0].mxu0
      %v2141 = vpop.f32.mrb[0].mxu0
      %v2142 = vadd.f32 0.0, %v2141
      %v2143 = vpop.f32.mrb[0].mxu0
      %2144 = vmatprep.mubr.bf16.mxu0 0
      %2145 = vmatmul.mubr.bf16.gmra.mrb[0].mxu0 %v1467
      %v2146 = vpop.f32.mrb[0].mxu0
      %v2147 = vadd.f32 0.0, %v2146
      %v2148 = vpop.f32.mrb[0].mxu0
      %v2149 = vpop.f32.mrb[0].mxu0
      %v2150 = vadd.f32 0.0, %v2149
      %v2151 = vpop.f32.mrb[0].mxu0
      %2152 = vmatprep.mubr.bf16.mxu0 0
      %2153 = vmatmul.mubr.bf16.gmra.mrb[0].mxu0 %v2062
      %v2154 = vpop.f32.mrb[0].mxu0
      %v2155 = vadd.f32 0.0, %v2154
      %v2156 = vpop.f32.mrb[0].mxu0
      %v2157 = vpop.f32.mrb[0].mxu0
      %v2158 = vadd.f32 0.0, %v2157
      %v2159 = vpop.f32.mrb[0].mxu0
      %2160 = vdwg.mxu0
      %v2161 = vadd.f32 %v2025, %v2099
      %v2162 = vadd.f32 %v2026, %v2102
      %v2163 = vadd.f32 %v2027, %v2107
      %v2164 = vadd.f32 %v2028, %v2110
      %v2165 = vadd.f32 %v2029, %v2115
      %v2166 = vadd.f32 %v2030, %v2118
      %v2167 = vadd.f32 %v2031, %v2123
      %v2168 = vadd.f32 %v2032, %v2126
      %v2169 = vadd.f32 %v2033, %v2131
      %v2170 = vadd.f32 %v2034, %v2134
      %v2171 = vadd.f32 %v2035, %v2139
      %v2172 = vadd.f32 %v2036, %v2142
      %v2173 = vadd.f32 %v2037, %v2147
      %v2174 = vadd.f32 %v2038, %v2150
      %v2175 = vadd.f32 %v2039, %v2155
      %v2176 = vadd.f32 %v2040, %v2158
      %s2177 = scalar_lea.vmem %s3, 80
      %v2178 = vld [vmem:[%s2177] sm:$0xf]
      %v2179 = vld [vmem:[%s2177 + $0x4] sm:$0xf]
      %v2180 = vld [vmem:[%s2177 + $0x8] sm:$0xf]
      %v2181 = vld [vmem:[%s2177 + $0xc] sm:$0xf]
      %v2183 = vrot.slane %v1402, 4
      %v2184 = vsel %vm593, %v1754, %v2183
      %v2189 = vunpack.c.l.b16 %v2178
      %v2190 = vunpack.c.l.b16 %v2179
      %v2191 = vunpack.c.l.b16 %v2180
      %v2192 = vunpack.c.l.b16 %v2181
      %v2193 = vpack.c.b16 %v2190, %v2189
      %v2194 = vpack.c.b16 %v2192, %v2191
      %v2198 = vsel %vm1444, %v2184, 0
      %2200 = vmatprep.subr.bf16.mxu0 0
      %2201 = vmatpush1.bf16.msra.mxu0 %v2193
      %2202 = vmatprep.subr.bf16.mxu0 0
      %2203 = vmatpush1.bf16.msra.mxu0 %v2194
      %2204 = vmatprep.subr.bf16.mxu0 0
      %2205 = vmatpush1.bf16.msra.mxu0 0
      %2206 = vmatprep.subr.bf16.mxu0 0
      %2207 = vmatpush1.bf16.msra.mxu0 0
      %2208 = vmatprep.subr.bf16.mxu0 0
      %2209 = vmatpush1.bf16.msra.mxu0 0
      %2210 = vmatprep.subr.bf16.mxu0 0
      %2211 = vmatpush1.bf16.msra.mxu0 0
      %2212 = vmatprep.subr.bf16.mxu0 0
      %2213 = vmatpush1.bf16.msra.mxu0 0
      %2214 = vmatprep.subr.bf16.mxu0 0
      %2215 = vmatpush1.bf16.msra.mxu0 0
      %2216 = vmatprep.subr.bf16.mxu0 0
      %2217 = vmatpush1.bf16.msra.mxu0 0
      %2218 = vmatprep.subr.bf16.mxu0 0
      %2219 = vmatpush1.bf16.msra.mxu0 0
      %2220 = vmatprep.subr.bf16.mxu0 0
      %2221 = vmatpush1.bf16.msra.mxu0 0
      %2222 = vmatprep.subr.bf16.mxu0 0
      %2223 = vmatpush1.bf16.msra.mxu0 0
      %2224 = vmatprep.subr.bf16.mxu0 0
      %2225 = vmatpush1.bf16.msra.mxu0 0
      %2226 = vmatprep.subr.bf16.mxu0 0
      %2227 = vmatpush1.bf16.msra.mxu0 0
      %2228 = vmatprep.subr.bf16.mxu0 0
      %2229 = vmatpush1.bf16.msra.mxu0 0
      %2230 = vmatprep.subr.bf16.mxu0 0
      %2231 = vmatpush1.bf16.msra.mxu0 0
      %2232 = vmatprep.mubr.bf16.mxu0 0
      %2233 = vmatmul.mubr.bf16.gmra.mrb[0].mxu0 %v1772
      %v2234 = vpop.f32.mrb[0].mxu0
      %v2235 = vadd.f32 0.0, %v2234
      %v2236 = vpop.f32.mrb[0].mxu0
      %v2237 = vpop.f32.mrb[0].mxu0
      %v2238 = vadd.f32 0.0, %v2237
      %v2239 = vpop.f32.mrb[0].mxu0
      %2240 = vmatprep.mubr.bf16.mxu0 0
      %2241 = vmatmul.mubr.bf16.gmra.mrb[0].mxu0 %v1775
      %v2242 = vpop.f32.mrb[0].mxu0
      %v2243 = vadd.f32 0.0, %v2242
      %v2244 = vpop.f32.mrb[0].mxu0
      %v2245 = vpop.f32.mrb[0].mxu0
      %v2246 = vadd.f32 0.0, %v2245
      %v2247 = vpop.f32.mrb[0].mxu0
      %2248 = vmatprep.mubr.bf16.mxu0 0
      %2249 = vmatmul.mubr.bf16.gmra.mrb[0].mxu0 %v1778
      %v2250 = vpop.f32.mrb[0].mxu0
      %v2251 = vadd.f32 0.0, %v2250
      %v2252 = vpop.f32.mrb[0].mxu0
      %v2253 = vpop.f32.mrb[0].mxu0
      %v2254 = vadd.f32 0.0, %v2253
      %v2255 = vpop.f32.mrb[0].mxu0
      %2256 = vmatprep.mubr.bf16.mxu0 0
      %2257 = vmatmul.mubr.bf16.gmra.mrb[0].mxu0 %v1781
      %v2258 = vpop.f32.mrb[0].mxu0
      %v2259 = vadd.f32 0.0, %v2258
      %v2260 = vpop.f32.mrb[0].mxu0
      %v2261 = vpop.f32.mrb[0].mxu0
      %v2262 = vadd.f32 0.0, %v2261
      %v2263 = vpop.f32.mrb[0].mxu0
      %2264 = vmatprep.mubr.bf16.mxu0 0
      %2265 = vmatmul.mubr.bf16.gmra.mrb[0].mxu0 %v1784
      %v2266 = vpop.f32.mrb[0].mxu0
      %v2267 = vadd.f32 0.0, %v2266
      %v2268 = vpop.f32.mrb[0].mxu0
      %v2269 = vpop.f32.mrb[0].mxu0
      %v2270 = vadd.f32 0.0, %v2269
      %v2271 = vpop.f32.mrb[0].mxu0
      %2272 = vmatprep.mubr.bf16.mxu0 0
      %2273 = vmatmul.mubr.bf16.gmra.mrb[0].mxu0 %v1787
      %v2274 = vpop.f32.mrb[0].mxu0
      %v2275 = vadd.f32 0.0, %v2274
      %v2276 = vpop.f32.mrb[0].mxu0
      %v2277 = vpop.f32.mrb[0].mxu0
      %v2278 = vadd.f32 0.0, %v2277
      %v2279 = vpop.f32.mrb[0].mxu0
      %2280 = vmatprep.mubr.bf16.mxu0 0
      %2281 = vmatmul.mubr.bf16.gmra.mrb[0].mxu0 %v1790
      %v2282 = vpop.f32.mrb[0].mxu0
      %v2283 = vadd.f32 0.0, %v2282
      %v2284 = vpop.f32.mrb[0].mxu0
      %v2285 = vpop.f32.mrb[0].mxu0
      %v2286 = vadd.f32 0.0, %v2285
      %v2287 = vpop.f32.mrb[0].mxu0
      %2288 = vmatprep.mubr.bf16.mxu0 0
      %2289 = vmatmul.mubr.bf16.gmra.mrb[0].mxu0 %v2198
      %v2290 = vpop.f32.mrb[0].mxu0
      %v2291 = vadd.f32 0.0, %v2290
      %v2292 = vpop.f32.mrb[0].mxu0
      %v2293 = vpop.f32.mrb[0].mxu0
      %v2294 = vadd.f32 0.0, %v2293
      %v2295 = vpop.f32.mrb[0].mxu0
      %2296 = vdwg.mxu0
      %v2297 = vadd.f32 %v2161, %v2235
      %v2298 = vadd.f32 %v2162, %v2238
      %v2299 = vadd.f32 %v2163, %v2243
      %v2300 = vadd.f32 %v2164, %v2246
      %v2301 = vadd.f32 %v2165, %v2251
      %v2302 = vadd.f32 %v2166, %v2254
      %v2303 = vadd.f32 %v2167, %v2259
      %v2304 = vadd.f32 %v2168, %v2262
      %v2305 = vadd.f32 %v2169, %v2267
      %v2306 = vadd.f32 %v2170, %v2270
      %v2307 = vadd.f32 %v2171, %v2275
      %v2308 = vadd.f32 %v2172, %v2278
      %v2309 = vadd.f32 %v2173, %v2283
      %v2310 = vadd.f32 %v2174, %v2286
      %v2311 = vadd.f32 %v2175, %v2291
      %v2312 = vadd.f32 %v2176, %v2294
      %s2313 = scalar_lea.vmem %s3, 96
      %v2314 = vld [vmem:[%s2313] sm:$0xf]
      %v2315 = vld [vmem:[%s2313 + $0x4] sm:$0xf]
      %v2316 = vld [vmem:[%s2313 + $0x8] sm:$0xf]
      %v2317 = vld [vmem:[%s2313 + $0xc] sm:$0xf]
      %v2319 = vrot.slane %v1238, 4
      %v2320 = vsel %vm593, %v1911, %v2319
      %v2325 = vunpack.c.l.b16 %v2314
      %v2326 = vunpack.c.l.b16 %v2315
      %v2327 = vunpack.c.l.b16 %v2316
      %v2328 = vunpack.c.l.b16 %v2317
      %v2329 = vpack.c.b16 %v2326, %v2325
      %v2330 = vpack.c.b16 %v2328, %v2327
      %v2334 = vsel %vm1444, %v2320, 0
      %2336 = vmatprep.subr.bf16.mxu0 0
      %2337 = vmatpush1.bf16.msra.mxu0 %v2329
      %2338 = vmatprep.subr.bf16.mxu0 0
      %2339 = vmatpush1.bf16.msra.mxu0 %v2330
      %2340 = vmatprep.subr.bf16.mxu0 0
      %2341 = vmatpush1.bf16.msra.mxu0 0
      %2342 = vmatprep.subr.bf16.mxu0 0
      %2343 = vmatpush1.bf16.msra.mxu0 0
      %2344 = vmatprep.subr.bf16.mxu0 0
      %2345 = vmatpush1.bf16.msra.mxu0 0
      %2346 = vmatprep.subr.bf16.mxu0 0
      %2347 = vmatpush1.bf16.msra.mxu0 0
      %2348 = vmatprep.subr.bf16.mxu0 0
      %2349 = vmatpush1.bf16.msra.mxu0 0
      %2350 = vmatprep.subr.bf16.mxu0 0
      %2351 = vmatpush1.bf16.msra.mxu0 0
      %2352 = vmatprep.subr.bf16.mxu0 0
      %2353 = vmatpush1.bf16.msra.mxu0 0
      %2354 = vmatprep.subr.bf16.mxu0 0
      %2355 = vmatpush1.bf16.msra.mxu0 0
      %2356 = vmatprep.subr.bf16.mxu0 0
      %2357 = vmatpush1.bf16.msra.mxu0 0
      %2358 = vmatprep.subr.bf16.mxu0 0
      %2359 = vmatpush1.bf16.msra.mxu0 0
      %2360 = vmatprep.subr.bf16.mxu0 0
      %2361 = vmatpush1.bf16.msra.mxu0 0
      %2362 = vmatprep.subr.bf16.mxu0 0
      %2363 = vmatpush1.bf16.msra.mxu0 0
      %2364 = vmatprep.subr.bf16.mxu0 0
      %2365 = vmatpush1.bf16.msra.mxu0 0
      %2366 = vmatprep.subr.bf16.mxu0 0
      %2367 = vmatpush1.bf16.msra.mxu0 0
      %2368 = vmatprep.mubr.bf16.mxu0 0
      %2369 = vmatmul.mubr.bf16.gmra.mrb[0].mxu0 %v1611
      %v2370 = vpop.f32.mrb[0].mxu0
      %v2371 = vadd.f32 0.0, %v2370
      %v2372 = vpop.f32.mrb[0].mxu0
      %v2373 = vpop.f32.mrb[0].mxu0
      %v2374 = vadd.f32 0.0, %v2373
      %v2375 = vpop.f32.mrb[0].mxu0
      %2376 = vmatprep.mubr.bf16.mxu0 0
      %2377 = vmatmul.mubr.bf16.gmra.mrb[0].mxu0 %v1614
      %v2378 = vpop.f32.mrb[0].mxu0
      %v2379 = vadd.f32 0.0, %v2378
      %v2380 = vpop.f32.mrb[0].mxu0
      %v2381 = vpop.f32.mrb[0].mxu0
      %v2382 = vadd.f32 0.0, %v2381
      %v2383 = vpop.f32.mrb[0].mxu0
      %2384 = vmatprep.mubr.bf16.mxu0 0
      %2385 = vmatmul.mubr.bf16.gmra.mrb[0].mxu0 %v1617
      %v2386 = vpop.f32.mrb[0].mxu0
      %v2387 = vadd.f32 0.0, %v2386
      %v2388 = vpop.f32.mrb[0].mxu0
      %v2389 = vpop.f32.mrb[0].mxu0
      %v2390 = vadd.f32 0.0, %v2389
      %v2391 = vpop.f32.mrb[0].mxu0
      %2392 = vmatprep.mubr.bf16.mxu0 0
      %2393 = vmatmul.mubr.bf16.gmra.mrb[0].mxu0 %v1620
      %v2394 = vpop.f32.mrb[0].mxu0
      %v2395 = vadd.f32 0.0, %v2394
      %v2396 = vpop.f32.mrb[0].mxu0
      %v2397 = vpop.f32.mrb[0].mxu0
      %v2398 = vadd.f32 0.0, %v2397
      %v2399 = vpop.f32.mrb[0].mxu0
      %2400 = vmatprep.mubr.bf16.mxu0 0
      %2401 = vmatmul.mubr.bf16.gmra.mrb[0].mxu0 %v1623
      %v2402 = vpop.f32.mrb[0].mxu0
      %v2403 = vadd.f32 0.0, %v2402
      %v2404 = vpop.f32.mrb[0].mxu0
      %v2405 = vpop.f32.mrb[0].mxu0
      %v2406 = vadd.f32 0.0, %v2405
      %v2407 = vpop.f32.mrb[0].mxu0
      %2408 = vmatprep.mubr.bf16.mxu0 0
      %2409 = vmatmul.mubr.bf16.gmra.mrb[0].mxu0 %v1626
      %v2410 = vpop.f32.mrb[0].mxu0
      %v2411 = vadd.f32 0.0, %v2410
      %v2412 = vpop.f32.mrb[0].mxu0
      %v2413 = vpop.f32.mrb[0].mxu0
      %v2414 = vadd.f32 0.0, %v2413
      %v2415 = vpop.f32.mrb[0].mxu0
      %2416 = vmatprep.mubr.bf16.mxu0 0
      %2417 = vmatmul.mubr.bf16.gmra.mrb[0].mxu0 %v1926
      %v2418 = vpop.f32.mrb[0].mxu0
      %v2419 = vadd.f32 0.0, %v2418
      %v2420 = vpop.f32.mrb[0].mxu0
      %v2421 = vpop.f32.mrb[0].mxu0
      %v2422 = vadd.f32 0.0, %v2421
      %v2423 = vpop.f32.mrb[0].mxu0
      %2424 = vmatprep.mubr.bf16.mxu0 0
      %2425 = vmatmul.mubr.bf16.gmra.mrb[0].mxu0 %v2334
      %v2426 = vpop.f32.mrb[0].mxu0
      %v2427 = vadd.f32 0.0, %v2426
      %v2428 = vpop.f32.mrb[0].mxu0
      %v2429 = vpop.f32.mrb[0].mxu0
      %v2430 = vadd.f32 0.0, %v2429
      %v2431 = vpop.f32.mrb[0].mxu0
      %2432 = vdwg.mxu0
      %v2433 = vadd.f32 %v2297, %v2371
      %v2434 = vadd.f32 %v2298, %v2374
      %v2435 = vadd.f32 %v2299, %v2379
      %v2436 = vadd.f32 %v2300, %v2382
      %v2437 = vadd.f32 %v2301, %v2387
      %v2438 = vadd.f32 %v2302, %v2390
      %v2439 = vadd.f32 %v2303, %v2395
      %v2440 = vadd.f32 %v2304, %v2398
      %v2441 = vadd.f32 %v2305, %v2403
      %v2442 = vadd.f32 %v2306, %v2406
      %v2443 = vadd.f32 %v2307, %v2411
      %v2444 = vadd.f32 %v2308, %v2414
      %v2445 = vadd.f32 %v2309, %v2419
      %v2446 = vadd.f32 %v2310, %v2422
      %v2447 = vadd.f32 %v2311, %v2427
      %v2448 = vadd.f32 %v2312, %v2430
      %s2449 = scalar_lea.vmem %s3, 112
      %v2450 = vld [vmem:[%s2449] sm:$0xf]
      %v2451 = vld [vmem:[%s2449 + $0x4] sm:$0xf]
      %v2452 = vld [vmem:[%s2449 + $0x8] sm:$0xf]
      %v2453 = vld [vmem:[%s2449 + $0xc] sm:$0xf]
      %v2455 = vrot.slane %v620, 4
      %v2456 = vsel %vm593, %v2047, %v2455
      %v2461 = vunpack.c.l.b16 %v2450
      %v2462 = vunpack.c.l.b16 %v2451
      %v2463 = vunpack.c.l.b16 %v2452
      %v2464 = vunpack.c.l.b16 %v2453
      %v2465 = vpack.c.b16 %v2462, %v2461
      %v2466 = vpack.c.b16 %v2464, %v2463
      %v2470 = vsel %vm1444, %v2456, 0
      %2472 = vmatprep.subr.bf16.mxu0 0
      %2473 = vmatpush1.bf16.msra.mxu0 %v2465
      %2474 = vmatprep.subr.bf16.mxu0 0
      %2475 = vmatpush1.bf16.msra.mxu0 %v2466
      %2476 = vmatprep.subr.bf16.mxu0 0
      %2477 = vmatpush1.bf16.msra.mxu0 0
      %2478 = vmatprep.subr.bf16.mxu0 0
      %2479 = vmatpush1.bf16.msra.mxu0 0
      %2480 = vmatprep.subr.bf16.mxu0 0
      %2481 = vmatpush1.bf16.msra.mxu0 0
      %2482 = vmatprep.subr.bf16.mxu0 0
      %2483 = vmatpush1.bf16.msra.mxu0 0
      %2484 = vmatprep.subr.bf16.mxu0 0
      %2485 = vmatpush1.bf16.msra.mxu0 0
      %2486 = vmatprep.subr.bf16.mxu0 0
      %2487 = vmatpush1.bf16.msra.mxu0 0
      %2488 = vmatprep.subr.bf16.mxu0 0
      %2489 = vmatpush1.bf16.msra.mxu0 0
      %2490 = vmatprep.subr.bf16.mxu0 0
      %2491 = vmatpush1.bf16.msra.mxu0 0
      %2492 = vmatprep.subr.bf16.mxu0 0
      %2493 = vmatpush1.bf16.msra.mxu0 0
      %2494 = vmatprep.subr.bf16.mxu0 0
      %2495 = vmatpush1.bf16.msra.mxu0 0
      %2496 = vmatprep.subr.bf16.mxu0 0
      %2497 = vmatpush1.bf16.msra.mxu0 0
      %2498 = vmatprep.subr.bf16.mxu0 0
      %2499 = vmatpush1.bf16.msra.mxu0 0
      %2500 = vmatprep.subr.bf16.mxu0 0
      %2501 = vmatpush1.bf16.msra.mxu0 0
      %2502 = vmatprep.subr.bf16.mxu0 0
      %2503 = vmatpush1.bf16.msra.mxu0 0
      %2504 = vmatprep.mubr.bf16.mxu0 0
      %2505 = vmatmul.mubr.bf16.gmra.mrb[0].mxu0 %v1452
      %v2506 = vpop.f32.mrb[0].mxu0
      %v2507 = vadd.f32 0.0, %v2506
      %v2508 = vpop.f32.mrb[0].mxu0
      %v2509 = vpop.f32.mrb[0].mxu0
      %v2510 = vadd.f32 0.0, %v2509
      %v2511 = vpop.f32.mrb[0].mxu0
      %2512 = vmatprep.mubr.bf16.mxu0 0
      %2513 = vmatmul.mubr.bf16.gmra.mrb[0].mxu0 %v1455
      %v2514 = vpop.f32.mrb[0].mxu0
      %v2515 = vadd.f32 0.0, %v2514
      %v2516 = vpop.f32.mrb[0].mxu0
      %v2517 = vpop.f32.mrb[0].mxu0
      %v2518 = vadd.f32 0.0, %v2517
      %v2519 = vpop.f32.mrb[0].mxu0
      %2520 = vmatprep.mubr.bf16.mxu0 0
      %2521 = vmatmul.mubr.bf16.gmra.mrb[0].mxu0 %v1458
      %v2522 = vpop.f32.mrb[0].mxu0
      %v2523 = vadd.f32 0.0, %v2522
      %v2524 = vpop.f32.mrb[0].mxu0
      %v2525 = vpop.f32.mrb[0].mxu0
      %v2526 = vadd.f32 0.0, %v2525
      %v2527 = vpop.f32.mrb[0].mxu0
      %2528 = vmatprep.mubr.bf16.mxu0 0
      %2529 = vmatmul.mubr.bf16.gmra.mrb[0].mxu0 %v1461
      %v2530 = vpop.f32.mrb[0].mxu0
      %v2531 = vadd.f32 0.0, %v2530
      %v2532 = vpop.f32.mrb[0].mxu0
      %v2533 = vpop.f32.mrb[0].mxu0
      %v2534 = vadd.f32 0.0, %v2533
      %v2535 = vpop.f32.mrb[0].mxu0
      %2536 = vmatprep.mubr.bf16.mxu0 0
      %2537 = vmatmul.mubr.bf16.gmra.mrb[0].mxu0 %v1464
      %v2538 = vpop.f32.mrb[0].mxu0
      %v2539 = vadd.f32 0.0, %v2538
      %v2540 = vpop.f32.mrb[0].mxu0
      %v2541 = vpop.f32.mrb[0].mxu0
      %v2542 = vadd.f32 0.0, %v2541
      %v2543 = vpop.f32.mrb[0].mxu0
      %2544 = vmatprep.mubr.bf16.mxu0 0
      %2545 = vmatmul.mubr.bf16.gmra.mrb[0].mxu0 %v1467
      %v2546 = vpop.f32.mrb[0].mxu0
      %v2547 = vadd.f32 0.0, %v2546
      %v2548 = vpop.f32.mrb[0].mxu0
      %v2549 = vpop.f32.mrb[0].mxu0
      %v2550 = vadd.f32 0.0, %v2549
      %v2551 = vpop.f32.mrb[0].mxu0
      %2552 = vmatprep.mubr.bf16.mxu0 0
      %2553 = vmatmul.mubr.bf16.gmra.mrb[0].mxu0 %v2062
      %v2554 = vpop.f32.mrb[0].mxu0
      %v2555 = vadd.f32 0.0, %v2554
      %v2556 = vpop.f32.mrb[0].mxu0
      %v2557 = vpop.f32.mrb[0].mxu0
      %v2558 = vadd.f32 0.0, %v2557
      %v2559 = vpop.f32.mrb[0].mxu0
      %2560 = vmatprep.mubr.bf16.mxu0 0
      %2561 = vmatmul.mubr.bf16.gmra.mrb[0].mxu0 %v2470
      %v2562 = vpop.f32.mrb[0].mxu0
      %v2563 = vadd.f32 0.0, %v2562
      %v2564 = vpop.f32.mrb[0].mxu0
      %v2565 = vpop.f32.mrb[0].mxu0
      %v2566 = vadd.f32 0.0, %v2565
      %v2567 = vpop.f32.mrb[0].mxu0
      %2568 = vdwg.mxu0
      %v2569 = vadd.f32 %v2433, %v2507
      %v2570 = vadd.f32 %v2434, %v2510
      %v2571 = vadd.f32 %v2435, %v2515
      %v2572 = vadd.f32 %v2436, %v2518
      %v2573 = vadd.f32 %v2437, %v2523
      %v2574 = vadd.f32 %v2438, %v2526
      %v2575 = vadd.f32 %v2439, %v2531
      %v2576 = vadd.f32 %v2440, %v2534
      %v2577 = vadd.f32 %v2441, %v2539
      %v2578 = vadd.f32 %v2442, %v2542
      %v2579 = vadd.f32 %v2443, %v2547
      %v2580 = vadd.f32 %v2444, %v2550
      %v2581 = vadd.f32 %v2445, %v2555
      %v2582 = vadd.f32 %v2446, %v2558
      %v2583 = vadd.f32 %v2447, %v2563
      %v2584 = vadd.f32 %v2448, %v2566
      %s2585 = scalar_lea.vmem %s3, 128
      %v2586 = vld [vmem:[%s2585] sm:$0xf]
      %v2587 = vld [vmem:[%s2585 + $0x4] sm:$0xf]
      %v2588 = vld [vmem:[%s2585 + $0x8] sm:$0xf]
      %v2589 = vld [vmem:[%s2585 + $0xc] sm:$0xf]
      %v2591 = vrot.slane %v1403, 4
      %v2592 = vsel %vm593, %v2183, %v2591
      %v2597 = vunpack.c.l.b16 %v2586
      %v2598 = vunpack.c.l.b16 %v2587
      %v2599 = vunpack.c.l.b16 %v2588
      %v2600 = vunpack.c.l.b16 %v2589
      %v2601 = vpack.c.b16 %v2598, %v2597
      %v2602 = vpack.c.b16 %v2600, %v2599
      %v2606 = vsel %vm1444, %v2592, 0
      %2608 = vmatprep.subr.bf16.mxu0 0
      %2609 = vmatpush1.bf16.msra.mxu0 %v2601
      %2610 = vmatprep.subr.bf16.mxu0 0
      %2611 = vmatpush1.bf16.msra.mxu0 %v2602
      %2612 = vmatprep.subr.bf16.mxu0 0
      %2613 = vmatpush1.bf16.msra.mxu0 0
      %2614 = vmatprep.subr.bf16.mxu0 0
      %2615 = vmatpush1.bf16.msra.mxu0 0
      %2616 = vmatprep.subr.bf16.mxu0 0
      %2617 = vmatpush1.bf16.msra.mxu0 0
      %2618 = vmatprep.subr.bf16.mxu0 0
      %2619 = vmatpush1.bf16.msra.mxu0 0
      %2620 = vmatprep.subr.bf16.mxu0 0
      %2621 = vmatpush1.bf16.msra.mxu0 0
      %2622 = vmatprep.subr.bf16.mxu0 0
      %2623 = vmatpush1.bf16.msra.mxu0 0
      %2624 = vmatprep.subr.bf16.mxu0 0
      %2625 = vmatpush1.bf16.msra.mxu0 0
      %2626 = vmatprep.subr.bf16.mxu0 0
      %2627 = vmatpush1.bf16.msra.mxu0 0
      %2628 = vmatprep.subr.bf16.mxu0 0
      %2629 = vmatpush1.bf16.msra.mxu0 0
      %2630 = vmatprep.subr.bf16.mxu0 0
      %2631 = vmatpush1.bf16.msra.mxu0 0
      %2632 = vmatprep.subr.bf16.mxu0 0
      %2633 = vmatpush1.bf16.msra.mxu0 0
      %2634 = vmatprep.subr.bf16.mxu0 0
      %2635 = vmatpush1.bf16.msra.mxu0 0
      %2636 = vmatprep.subr.bf16.mxu0 0
      %2637 = vmatpush1.bf16.msra.mxu0 0
      %2638 = vmatprep.subr.bf16.mxu0 0
      %2639 = vmatpush1.bf16.msra.mxu0 0
      %2640 = vmatprep.mubr.bf16.mxu0 0
      %2641 = vmatmul.mubr.bf16.gmra.mrb[0].mxu0 %v1775
      %v2642 = vpop.f32.mrb[0].mxu0
      %v2643 = vadd.f32 0.0, %v2642
      %v2644 = vpop.f32.mrb[0].mxu0
      %v2645 = vpop.f32.mrb[0].mxu0
      %v2646 = vadd.f32 0.0, %v2645
      %v2647 = vpop.f32.mrb[0].mxu0
      %2648 = vmatprep.mubr.bf16.mxu0 0
      %2649 = vmatmul.mubr.bf16.gmra.mrb[0].mxu0 %v1778
      %v2650 = vpop.f32.mrb[0].mxu0
      %v2651 = vadd.f32 0.0, %v2650
      %v2652 = vpop.f32.mrb[0].mxu0
      %v2653 = vpop.f32.mrb[0].mxu0
      %v2654 = vadd.f32 0.0, %v2653
      %v2655 = vpop.f32.mrb[0].mxu0
      %2656 = vmatprep.mubr.bf16.mxu0 0
      %2657 = vmatmul.mubr.bf16.gmra.mrb[0].mxu0 %v1781
      %v2658 = vpop.f32.mrb[0].mxu0
      %v2659 = vadd.f32 0.0, %v2658
      %v2660 = vpop.f32.mrb[0].mxu0
      %v2661 = vpop.f32.mrb[0].mxu0
      %v2662 = vadd.f32 0.0, %v2661
      %v2663 = vpop.f32.mrb[0].mxu0
      %2664 = vmatprep.mubr.bf16.mxu0 0
      %2665 = vmatmul.mubr.bf16.gmra.mrb[0].mxu0 %v1784
      %v2666 = vpop.f32.mrb[0].mxu0
      %v2667 = vadd.f32 0.0, %v2666
      %v2668 = vpop.f32.mrb[0].mxu0
      %v2669 = vpop.f32.mrb[0].mxu0
      %v2670 = vadd.f32 0.0, %v2669
      %v2671 = vpop.f32.mrb[0].mxu0
      %2672 = vmatprep.mubr.bf16.mxu0 0
      %2673 = vmatmul.mubr.bf16.gmra.mrb[0].mxu0 %v1787
      %v2674 = vpop.f32.mrb[0].mxu0
      %v2675 = vadd.f32 0.0, %v2674
      %v2676 = vpop.f32.mrb[0].mxu0
      %v2677 = vpop.f32.mrb[0].mxu0
      %v2678 = vadd.f32 0.0, %v2677
      %v2679 = vpop.f32.mrb[0].mxu0
      %2680 = vmatprep.mubr.bf16.mxu0 0
      %2681 = vmatmul.mubr.bf16.gmra.mrb[0].mxu0 %v1790
      %v2682 = vpop.f32.mrb[0].mxu0
      %v2683 = vadd.f32 0.0, %v2682
      %v2684 = vpop.f32.mrb[0].mxu0
      %v2685 = vpop.f32.mrb[0].mxu0
      %v2686 = vadd.f32 0.0, %v2685
      %v2687 = vpop.f32.mrb[0].mxu0
      %2688 = vmatprep.mubr.bf16.mxu0 0
      %2689 = vmatmul.mubr.bf16.gmra.mrb[0].mxu0 %v2198
      %v2690 = vpop.f32.mrb[0].mxu0
      %v2691 = vadd.f32 0.0, %v2690
      %v2692 = vpop.f32.mrb[0].mxu0
      %v2693 = vpop.f32.mrb[0].mxu0
      %v2694 = vadd.f32 0.0, %v2693
      %v2695 = vpop.f32.mrb[0].mxu0
      %2696 = vmatprep.mubr.bf16.mxu0 0
      %2697 = vmatmul.mubr.bf16.gmra.mrb[0].mxu0 %v2606
      %v2698 = vpop.f32.mrb[0].mxu0
      %v2699 = vadd.f32 0.0, %v2698
      %v2700 = vpop.f32.mrb[0].mxu0
      %v2701 = vpop.f32.mrb[0].mxu0
      %v2702 = vadd.f32 0.0, %v2701
      %v2703 = vpop.f32.mrb[0].mxu0
      %2704 = vdwg.mxu0
      %v2705 = vadd.f32 %v2569, %v2643
      %v2706 = vadd.f32 %v2570, %v2646
      %v2707 = vadd.f32 %v2571, %v2651
      %v2708 = vadd.f32 %v2572, %v2654
      %v2709 = vadd.f32 %v2573, %v2659
      %v2710 = vadd.f32 %v2574, %v2662
      %v2711 = vadd.f32 %v2575, %v2667
      %v2712 = vadd.f32 %v2576, %v2670
      %v2713 = vadd.f32 %v2577, %v2675
      %v2714 = vadd.f32 %v2578, %v2678
      %v2715 = vadd.f32 %v2579, %v2683
      %v2716 = vadd.f32 %v2580, %v2686
      %v2717 = vadd.f32 %v2581, %v2691
      %v2718 = vadd.f32 %v2582, %v2694
      %v2719 = vadd.f32 %v2583, %v2699
      %v2720 = vadd.f32 %v2584, %v2702
      %v2721 = vld [vmem:[%s4] sm:$0x1]
      %v2723 = vlaneseq
      %v2724 = vshrl.u32 %v2723, 7
      %v2725 = vsub.s32 0, %v2724
      %v2726 = vrot.slane %v2721, %v2725
      %v2728 = vadd.f32 %v2705, %v2726
      %v2729 = vadd.f32 %v2706, %v2726
      %v2730 = vadd.f32 %v2707, %v2726
      %v2731 = vadd.f32 %v2708, %v2726
      %v2732 = vadd.f32 %v2709, %v2726
      %v2733 = vadd.f32 %v2710, %v2726
      %v2734 = vadd.f32 %v2711, %v2726
      %v2735 = vadd.f32 %v2712, %v2726
      %v2736 = vadd.f32 %v2713, %v2726
      %v2737 = vadd.f32 %v2714, %v2726
      %v2738 = vadd.f32 %v2715, %v2726
      %v2739 = vadd.f32 %v2716, %v2726
      %v2740 = vadd.f32 %v2717, %v2726
      %v2741 = vadd.f32 %v2718, %v2726
      %v2742 = vadd.f32 %v2719, %v2726
      %v2743 = vadd.f32 %v2720, %v2726
      %v2744 = vmul.f32 %v2728, 0.70710677
      %v2745 = vmul.f32 %v2729, 0.70710677
      %v2746 = vmul.f32 %v2730, 0.70710677
      %v2747 = vmul.f32 %v2731, 0.70710677
      %v2748 = vmul.f32 %v2732, 0.70710677
      %v2749 = vmul.f32 %v2733, 0.70710677
      %v2750 = vmul.f32 %v2734, 0.70710677
      %v2751 = vmul.f32 %v2735, 0.70710677
      %v2752 = vmul.f32 %v2736, 0.70710677
      %v2753 = vmul.f32 %v2737, 0.70710677
      %v2754 = vmul.f32 %v2738, 0.70710677
      %v2755 = vmul.f32 %v2739, 0.70710677
      %v2756 = vmul.f32 %v2740, 0.70710677
      %v2757 = vmul.f32 %v2741, 0.70710677
      %v2758 = vmul.f32 %v2742, 0.70710677
      %v2759 = vmul.f32 %v2743, 0.70710677
      %v2760 = vand.u32 2147483647, %v2744
      %v2761 = vand.u32 2147483647, %v2745
      %v2762 = vand.u32 2147483647, %v2746
      %v2763 = vand.u32 2147483647, %v2747
      %v2764 = vand.u32 2147483647, %v2748
      %v2765 = vand.u32 2147483647, %v2749
      %v2766 = vand.u32 2147483647, %v2750
      %v2767 = vand.u32 2147483647, %v2751
      %v2768 = vand.u32 2147483647, %v2752
      %v2769 = vand.u32 2147483647, %v2753
      %v2770 = vand.u32 2147483647, %v2754
      %v2771 = vand.u32 2147483647, %v2755
      %v2772 = vand.u32 2147483647, %v2756
      %v2773 = vand.u32 2147483647, %v2757
      %v2774 = vand.u32 2147483647, %v2758
      %v2775 = vand.u32 2147483647, %v2759
      %v2776 = vmul.f32 %v2760, 0.3275911
      %v2777 = vmul.f32 %v2761, 0.3275911
      %v2778 = vmul.f32 %v2762, 0.3275911
      %v2779 = vmul.f32 %v2763, 0.3275911
      %v2780 = vmul.f32 %v2764, 0.3275911
      %v2781 = vmul.f32 %v2765, 0.3275911
      %v2782 = vmul.f32 %v2766, 0.3275911
      %v2783 = vmul.f32 %v2767, 0.3275911
      %v2784 = vmul.f32 %v2768, 0.3275911
      %v2785 = vmul.f32 %v2769, 0.3275911
      %v2786 = vmul.f32 %v2770, 0.3275911
      %v2787 = vmul.f32 %v2771, 0.3275911
      %v2788 = vmul.f32 %v2772, 0.3275911
      %v2789 = vmul.f32 %v2773, 0.3275911
      %v2790 = vmul.f32 %v2774, 0.3275911
      %v2791 = vmul.f32 %v2775, 0.3275911
      %v2792 = vadd.f32 %v2776, 1.0
      %v2793 = vadd.f32 %v2777, 1.0
      %v2794 = vadd.f32 %v2778, 1.0
      %v2795 = vadd.f32 %v2779, 1.0
      %v2796 = vadd.f32 %v2780, 1.0
      %v2797 = vadd.f32 %v2781, 1.0
      %v2798 = vadd.f32 %v2782, 1.0
      %v2799 = vadd.f32 %v2783, 1.0
      %v2800 = vadd.f32 %v2784, 1.0
      %v2801 = vadd.f32 %v2785, 1.0
      %v2802 = vadd.f32 %v2786, 1.0
      %v2803 = vadd.f32 %v2787, 1.0
      %v2804 = vadd.f32 %v2788, 1.0
      %v2805 = vadd.f32 %v2789, 1.0
      %v2806 = vadd.f32 %v2790, 1.0
      %v2807 = vadd.f32 %v2791, 1.0
      %v2808 = vrcp.pop %v2792
      %v2809 = vmul.f32 1.0, %v2808
      %v2810 = vrcp.pop %v2793
      %v2811 = vmul.f32 1.0, %v2810
      %v2812 = vrcp.pop %v2794
      %v2813 = vmul.f32 1.0, %v2812
      %v2814 = vrcp.pop %v2795
      %v2815 = vmul.f32 1.0, %v2814
      %v2816 = vrcp.pop %v2796
      %v2817 = vmul.f32 1.0, %v2816
      %v2818 = vrcp.pop %v2797
      %v2819 = vmul.f32 1.0, %v2818
      %v2820 = vrcp.pop %v2798
      %v2821 = vmul.f32 1.0, %v2820
      %v2822 = vrcp.pop %v2799
      %v2823 = vmul.f32 1.0, %v2822
      %v2824 = vrcp.pop %v2800
      %v2825 = vmul.f32 1.0, %v2824
      %v2826 = vrcp.pop %v2801
      %v2827 = vmul.f32 1.0, %v2826
      %v2828 = vrcp.pop %v2802
      %v2829 = vmul.f32 1.0, %v2828
      %v2830 = vrcp.pop %v2803
      %v2831 = vmul.f32 1.0, %v2830
      %v2832 = vrcp.pop %v2804
      %v2833 = vmul.f32 1.0, %v2832
      %v2834 = vrcp.pop %v2805
      %v2835 = vmul.f32 1.0, %v2834
      %v2836 = vrcp.pop %v2806
      %v2837 = vmul.f32 1.0, %v2836
      %v2838 = vrcp.pop %v2807
      %v2839 = vmul.f32 1.0, %v2838
      %v2840 = vmul.f32 %v2809, 1.0614054
      %v2841 = vmul.f32 %v2811, 1.0614054
      %v2842 = vmul.f32 %v2813, 1.0614054
      %v2843 = vmul.f32 %v2815, 1.0614054
      %v2844 = vmul.f32 %v2817, 1.0614054
      %v2845 = vmul.f32 %v2819, 1.0614054
      %v2846 = vmul.f32 %v2821, 1.0614054
      %v2847 = vmul.f32 %v2823, 1.0614054
      %v2848 = vmul.f32 %v2825, 1.0614054
      %v2849 = vmul.f32 %v2827, 1.0614054
      %v2850 = vmul.f32 %v2829, 1.0614054
      %v2851 = vmul.f32 %v2831, 1.0614054
      %v2852 = vmul.f32 %v2833, 1.0614054
      %v2853 = vmul.f32 %v2835, 1.0614054
      %v2854 = vmul.f32 %v2837, 1.0614054
      %v2855 = vmul.f32 %v2839, 1.0614054
      %v2856 = vadd.f32 %v2840, -1.4531521
      %v2857 = vadd.f32 %v2841, -1.4531521
      %v2858 = vadd.f32 %v2842, -1.4531521
      %v2859 = vadd.f32 %v2843, -1.4531521
      %v2860 = vadd.f32 %v2844, -1.4531521
      %v2861 = vadd.f32 %v2845, -1.4531521
      %v2862 = vadd.f32 %v2846, -1.4531521
      %v2863 = vadd.f32 %v2847, -1.4531521
      %v2864 = vadd.f32 %v2848, -1.4531521
      %v2865 = vadd.f32 %v2849, -1.4531521
      %v2866 = vadd.f32 %v2850, -1.4531521
      %v2867 = vadd.f32 %v2851, -1.4531521
      %v2868 = vadd.f32 %v2852, -1.4531521
      %v2869 = vadd.f32 %v2853, -1.4531521
      %v2870 = vadd.f32 %v2854, -1.4531521
      %v2871 = vadd.f32 %v2855, -1.4531521
      %v2872 = vmul.f32 %v2809, %v2856
      %v2873 = vmul.f32 %v2811, %v2857
      %v2874 = vmul.f32 %v2813, %v2858
      %v2875 = vmul.f32 %v2815, %v2859
      %v2876 = vmul.f32 %v2817, %v2860
      %v2877 = vmul.f32 %v2819, %v2861
      %v2878 = vmul.f32 %v2821, %v2862
      %v2879 = vmul.f32 %v2823, %v2863
      %v2880 = vmul.f32 %v2825, %v2864
      %v2881 = vmul.f32 %v2827, %v2865
      %v2882 = vmul.f32 %v2829, %v2866
      %v2883 = vmul.f32 %v2831, %v2867
      %v2884 = vmul.f32 %v2833, %v2868
      %v2885 = vmul.f32 %v2835, %v2869
      %v2886 = vmul.f32 %v2837, %v2870
      %v2887 = vmul.f32 %v2839, %v2871
      %v2888 = vadd.f32 %v2872, 1.4214138
      %v2889 = vadd.f32 %v2873, 1.4214138
      %v2890 = vadd.f32 %v2874, 1.4214138
      %v2891 = vadd.f32 %v2875, 1.4214138
      %v2892 = vadd.f32 %v2876, 1.4214138
      %v2893 = vadd.f32 %v2877, 1.4214138
      %v2894 = vadd.f32 %v2878, 1.4214138
      %v2895 = vadd.f32 %v2879, 1.4214138
      %v2896 = vadd.f32 %v2880, 1.4214138
      %v2897 = vadd.f32 %v2881, 1.4214138
      %v2898 = vadd.f32 %v2882, 1.4214138
      %v2899 = vadd.f32 %v2883, 1.4214138
      %v2900 = vadd.f32 %v2884, 1.4214138
      %v2901 = vadd.f32 %v2885, 1.4214138
      %v2902 = vadd.f32 %v2886, 1.4214138
      %v2903 = vadd.f32 %v2887, 1.4214138
      %v2904 = vmul.f32 %v2809, %v2888
      %v2905 = vmul.f32 %v2811, %v2889
      %v2906 = vmul.f32 %v2813, %v2890
      %v2907 = vmul.f32 %v2815, %v2891
      %v2908 = vmul.f32 %v2817, %v2892
      %v2909 = vmul.f32 %v2819, %v2893
      %v2910 = vmul.f32 %v2821, %v2894
      %v2911 = vmul.f32 %v2823, %v2895
      %v2912 = vmul.f32 %v2825, %v2896
      %v2913 = vmul.f32 %v2827, %v2897
      %v2914 = vmul.f32 %v2829, %v2898
      %v2915 = vmul.f32 %v2831, %v2899
      %v2916 = vmul.f32 %v2833, %v2900
      %v2917 = vmul.f32 %v2835, %v2901
      %v2918 = vmul.f32 %v2837, %v2902
      %v2919 = vmul.f32 %v2839, %v2903
      %v2920 = vadd.f32 %v2904, -0.28449672
      %v2921 = vadd.f32 %v2905, -0.28449672
      %v2922 = vadd.f32 %v2906, -0.28449672
      %v2923 = vadd.f32 %v2907, -0.28449672
      %v2924 = vadd.f32 %v2908, -0.28449672
      %v2925 = vadd.f32 %v2909, -0.28449672
      %v2926 = vadd.f32 %v2910, -0.28449672
      %v2927 = vadd.f32 %v2911, -0.28449672
      %v2928 = vadd.f32 %v2912, -0.28449672
      %v2929 = vadd.f32 %v2913, -0.28449672
      %v2930 = vadd.f32 %v2914, -0.28449672
      %v2931 = vadd.f32 %v2915, -0.28449672
      %v2932 = vadd.f32 %v2916, -0.28449672
      %v2933 = vadd.f32 %v2917, -0.28449672
      %v2934 = vadd.f32 %v2918, -0.28449672
      %v2935 = vadd.f32 %v2919, -0.28449672
      %v2936 = vmul.f32 %v2809, %v2920
      %v2937 = vmul.f32 %v2811, %v2921
      %v2938 = vmul.f32 %v2813, %v2922
      %v2939 = vmul.f32 %v2815, %v2923
      %v2940 = vmul.f32 %v2817, %v2924
      %v2941 = vmul.f32 %v2819, %v2925
      %v2942 = vmul.f32 %v2821, %v2926
      %v2943 = vmul.f32 %v2823, %v2927
      %v2944 = vmul.f32 %v2825, %v2928
      %v2945 = vmul.f32 %v2827, %v2929
      %v2946 = vmul.f32 %v2829, %v2930
      %v2947 = vmul.f32 %v2831, %v2931
      %v2948 = vmul.f32 %v2833, %v2932
      %v2949 = vmul.f32 %v2835, %v2933
      %v2950 = vmul.f32 %v2837, %v2934
      %v2951 = vmul.f32 %v2839, %v2935
      %v2952 = vadd.f32 %v2936, 0.2548296
      %v2953 = vadd.f32 %v2937, 0.2548296
      %v2954 = vadd.f32 %v2938, 0.2548296
      %v2955 = vadd.f32 %v2939, 0.2548296
      %v2956 = vadd.f32 %v2940, 0.2548296
      %v2957 = vadd.f32 %v2941, 0.2548296
      %v2958 = vadd.f32 %v2942, 0.2548296
      %v2959 = vadd.f32 %v2943, 0.2548296
      %v2960 = vadd.f32 %v2944, 0.2548296
      %v2961 = vadd.f32 %v2945, 0.2548296
      %v2962 = vadd.f32 %v2946, 0.2548296
      %v2963 = vadd.f32 %v2947, 0.2548296
      %v2964 = vadd.f32 %v2948, 0.2548296
      %v2965 = vadd.f32 %v2949, 0.2548296
      %v2966 = vadd.f32 %v2950, 0.2548296
      %v2967 = vadd.f32 %v2951, 0.2548296
      %v2968 = vmul.f32 %v2809, %v2952
      %v2969 = vmul.f32 %v2811, %v2953
      %v2970 = vmul.f32 %v2813, %v2954
      %v2971 = vmul.f32 %v2815, %v2955
      %v2972 = vmul.f32 %v2817, %v2956
      %v2973 = vmul.f32 %v2819, %v2957
      %v2974 = vmul.f32 %v2821, %v2958
      %v2975 = vmul.f32 %v2823, %v2959
      %v2976 = vmul.f32 %v2825, %v2960
      %v2977 = vmul.f32 %v2827, %v2961
      %v2978 = vmul.f32 %v2829, %v2962
      %v2979 = vmul.f32 %v2831, %v2963
      %v2980 = vmul.f32 %v2833, %v2964
      %v2981 = vmul.f32 %v2835, %v2965
      %v2982 = vmul.f32 %v2837, %v2966
      %v2983 = vmul.f32 %v2839, %v2967
      %v2984 = vsub.f32 0.0, %v2760
      %v2985 = vsub.f32 0.0, %v2761
      %v2986 = vsub.f32 0.0, %v2762
      %v2987 = vsub.f32 0.0, %v2763
      %v2988 = vsub.f32 0.0, %v2764
      %v2989 = vsub.f32 0.0, %v2765
      %v2990 = vsub.f32 0.0, %v2766
      %v2991 = vsub.f32 0.0, %v2767
      %v2992 = vsub.f32 0.0, %v2768
      %v2993 = vsub.f32 0.0, %v2769
      %v2994 = vsub.f32 0.0, %v2770
      %v2995 = vsub.f32 0.0, %v2771
      %v2996 = vsub.f32 0.0, %v2772
      %v2997 = vsub.f32 0.0, %v2773
      %v2998 = vsub.f32 0.0, %v2774
      %v2999 = vsub.f32 0.0, %v2775
      %v3000 = vmul.f32 %v2984, %v2760
      %v3001 = vmul.f32 %v2985, %v2761
      %v3002 = vmul.f32 %v2986, %v2762
      %v3003 = vmul.f32 %v2987, %v2763
      %v3004 = vmul.f32 %v2988, %v2764
      %v3005 = vmul.f32 %v2989, %v2765
      %v3006 = vmul.f32 %v2990, %v2766
      %v3007 = vmul.f32 %v2991, %v2767
      %v3008 = vmul.f32 %v2992, %v2768
      %v3009 = vmul.f32 %v2993, %v2769
      %v3010 = vmul.f32 %v2994, %v2770
      %v3011 = vmul.f32 %v2995, %v2771
      %v3012 = vmul.f32 %v2996, %v2772
      %v3013 = vmul.f32 %v2997, %v2773
      %v3014 = vmul.f32 %v2998, %v2774
      %v3015 = vmul.f32 %v2999, %v2775
      %v3016 = vmul.f32 %v3000, 1.442695
      %v3017 = vpow.pop %v3016
      %v3018 = vmul.f32 %v3001, 1.442695
      %v3019 = vpow.pop %v3018
      %v3020 = vmul.f32 %v3002, 1.442695
      %v3021 = vpow.pop %v3020
      %v3022 = vmul.f32 %v3003, 1.442695
      %v3023 = vpow.pop %v3022
      %v3024 = vmul.f32 %v3004, 1.442695
      %v3025 = vpow.pop %v3024
      %v3026 = vmul.f32 %v3005, 1.442695
      %v3027 = vpow.pop %v3026
      %v3028 = vmul.f32 %v3006, 1.442695
      %v3029 = vpow.pop %v3028
      %v3030 = vmul.f32 %v3007, 1.442695
      %v3031 = vpow.pop %v3030
      %v3032 = vmul.f32 %v3008, 1.442695
      %v3033 = vpow.pop %v3032
      %v3034 = vmul.f32 %v3009, 1.442695
      %v3035 = vpow.pop %v3034
      %v3036 = vmul.f32 %v3010, 1.442695
      %v3037 = vpow.pop %v3036
      %v3038 = vmul.f32 %v3011, 1.442695
      %v3039 = vpow.pop %v3038
      %v3040 = vmul.f32 %v3012, 1.442695
      %v3041 = vpow.pop %v3040
      %v3042 = vmul.f32 %v3013, 1.442695
      %v3043 = vpow.pop %v3042
      %v3044 = vmul.f32 %v3014, 1.442695
      %v3045 = vpow.pop %v3044
      %v3046 = vmul.f32 %v3015, 1.442695
      %v3047 = vpow.pop %v3046
      %v3048 = vmul.f32 %v2968, %v3017
      %v3049 = vmul.f32 %v2969, %v3019
      %v3050 = vmul.f32 %v2970, %v3021
      %v3051 = vmul.f32 %v2971, %v3023
      %v3052 = vmul.f32 %v2972, %v3025
      %v3053 = vmul.f32 %v2973, %v3027
      %v3054 = vmul.f32 %v2974, %v3029
      %v3055 = vmul.f32 %v2975, %v3031
      %v3056 = vmul.f32 %v2976, %v3033
      %v3057 = vmul.f32 %v2977, %v3035
      %v3058 = vmul.f32 %v2978, %v3037
      %v3059 = vmul.f32 %v2979, %v3039
      %v3060 = vmul.f32 %v2980, %v3041
      %v3061 = vmul.f32 %v2981, %v3043
      %v3062 = vmul.f32 %v2982, %v3045
      %v3063 = vmul.f32 %v2983, %v3047
      %v3064 = vsub.f32 1.0, %v3048
      %v3065 = vsub.f32 1.0, %v3049
      %v3066 = vsub.f32 1.0, %v3050
      %v3067 = vsub.f32 1.0, %v3051
      %v3068 = vsub.f32 1.0, %v3052
      %v3069 = vsub.f32 1.0, %v3053
      %v3070 = vsub.f32 1.0, %v3054
      %v3071 = vsub.f32 1.0, %v3055
      %v3072 = vsub.f32 1.0, %v3056
      %v3073 = vsub.f32 1.0, %v3057
      %v3074 = vsub.f32 1.0, %v3058
      %v3075 = vsub.f32 1.0, %v3059
      %v3076 = vsub.f32 1.0, %v3060
      %v3077 = vsub.f32 1.0, %v3061
      %v3078 = vsub.f32 1.0, %v3062
      %v3079 = vsub.f32 1.0, %v3063
      %vm3080 = vcmp.ge.f32.partialorder %v2744, 0.0
      %vm3081 = vcmp.ge.f32.partialorder %v2745, 0.0
      %vm3082 = vcmp.ge.f32.partialorder %v2746, 0.0
      %vm3083 = vcmp.ge.f32.partialorder %v2747, 0.0
      %vm3084 = vcmp.ge.f32.partialorder %v2748, 0.0
      %vm3085 = vcmp.ge.f32.partialorder %v2749, 0.0
      %vm3086 = vcmp.ge.f32.partialorder %v2750, 0.0
      %vm3087 = vcmp.ge.f32.partialorder %v2751, 0.0
      %vm3088 = vcmp.ge.f32.partialorder %v2752, 0.0
      %vm3089 = vcmp.ge.f32.partialorder %v2753, 0.0
      %vm3090 = vcmp.ge.f32.partialorder %v2754, 0.0
      %vm3091 = vcmp.ge.f32.partialorder %v2755, 0.0
      %vm3092 = vcmp.ge.f32.partialorder %v2756, 0.0
      %vm3093 = vcmp.ge.f32.partialorder %v2757, 0.0
      %vm3094 = vcmp.ge.f32.partialorder %v2758, 0.0
      %vm3095 = vcmp.ge.f32.partialorder %v2759, 0.0
      %v3096 = vsub.f32 0.0, %v3064
      %v3097 = vsub.f32 0.0, %v3065
      %v3098 = vsub.f32 0.0, %v3066
      %v3099 = vsub.f32 0.0, %v3067
      %v3100 = vsub.f32 0.0, %v3068
      %v3101 = vsub.f32 0.0, %v3069
      %v3102 = vsub.f32 0.0, %v3070
      %v3103 = vsub.f32 0.0, %v3071
      %v3104 = vsub.f32 0.0, %v3072
      %v3105 = vsub.f32 0.0, %v3073
      %v3106 = vsub.f32 0.0, %v3074
      %v3107 = vsub.f32 0.0, %v3075
      %v3108 = vsub.f32 0.0, %v3076
      %v3109 = vsub.f32 0.0, %v3077
      %v3110 = vsub.f32 0.0, %v3078
      %v3111 = vsub.f32 0.0, %v3079
      %v3112 = vsel %vm3080, %v3064, %v3096
      %v3113 = vsel %vm3081, %v3065, %v3097
      %v3114 = vsel %vm3082, %v3066, %v3098
      %v3115 = vsel %vm3083, %v3067, %v3099
      %v3116 = vsel %vm3084, %v3068, %v3100
      %v3117 = vsel %vm3085, %v3069, %v3101
      %v3118 = vsel %vm3086, %v3070, %v3102
      %v3119 = vsel %vm3087, %v3071, %v3103
      %v3120 = vsel %vm3088, %v3072, %v3104
      %v3121 = vsel %vm3089, %v3073, %v3105
      %v3122 = vsel %vm3090, %v3074, %v3106
      %v3123 = vsel %vm3091, %v3075, %v3107
      %v3124 = vsel %vm3092, %v3076, %v3108
      %v3125 = vsel %vm3093, %v3077, %v3109
      %v3126 = vsel %vm3094, %v3078, %v3110
      %v3127 = vsel %vm3095, %v3079, %v3111
      %v3128 = vmul.f32 %v2728, 0.5
      %v3129 = vmul.f32 %v2729, 0.5
      %v3130 = vmul.f32 %v2730, 0.5
      %v3131 = vmul.f32 %v2731, 0.5
      %v3132 = vmul.f32 %v2732, 0.5
      %v3133 = vmul.f32 %v2733, 0.5
      %v3134 = vmul.f32 %v2734, 0.5
      %v3135 = vmul.f32 %v2735, 0.5
      %v3136 = vmul.f32 %v2736, 0.5
      %v3137 = vmul.f32 %v2737, 0.5
      %v3138 = vmul.f32 %v2738, 0.5
      %v3139 = vmul.f32 %v2739, 0.5
      %v3140 = vmul.f32 %v2740, 0.5
      %v3141 = vmul.f32 %v2741, 0.5
      %v3142 = vmul.f32 %v2742, 0.5
      %v3143 = vmul.f32 %v2743, 0.5
      %v3144 = vadd.f32 %v3112, 1.0
      %v3145 = vadd.f32 %v3113, 1.0
      %v3146 = vadd.f32 %v3114, 1.0
      %v3147 = vadd.f32 %v3115, 1.0
      %v3148 = vadd.f32 %v3116, 1.0
      %v3149 = vadd.f32 %v3117, 1.0
      %v3150 = vadd.f32 %v3118, 1.0
      %v3151 = vadd.f32 %v3119, 1.0
      %v3152 = vadd.f32 %v3120, 1.0
      %v3153 = vadd.f32 %v3121, 1.0
      %v3154 = vadd.f32 %v3122, 1.0
      %v3155 = vadd.f32 %v3123, 1.0
      %v3156 = vadd.f32 %v3124, 1.0
      %v3157 = vadd.f32 %v3125, 1.0
      %v3158 = vadd.f32 %v3126, 1.0
      %v3159 = vadd.f32 %v3127, 1.0
      %v3160 = vmul.f32 %v3128, %v3144
      %v3161 = vmul.f32 %v3129, %v3145
      %v3162 = vmul.f32 %v3130, %v3146
      %v3163 = vmul.f32 %v3131, %v3147
      %v3164 = vmul.f32 %v3132, %v3148
      %v3165 = vmul.f32 %v3133, %v3149
      %v3166 = vmul.f32 %v3134, %v3150
      %v3167 = vmul.f32 %v3135, %v3151
      %v3168 = vmul.f32 %v3136, %v3152
      %v3169 = vmul.f32 %v3137, %v3153
      %v3170 = vmul.f32 %v3138, %v3154
      %v3171 = vmul.f32 %v3139, %v3155
      %v3172 = vmul.f32 %v3140, %v3156
      %v3173 = vmul.f32 %v3141, %v3157
      %v3174 = vmul.f32 %v3142, %v3158
      %v3175 = vmul.f32 %v3143, %v3159
      %v3176 = vld [vmem:[%s5] sm:$0xf]
      %v3177 = vld [vmem:[%s5 + $0x4] sm:$0xf]
      %v3178 = vld [vmem:[%s5 + $0x8] sm:$0xf]
      %v3179 = vld [vmem:[%s5 + $0xc] sm:$0xf]
      %v3180 = vld [vmem:[%s6] sm:$0x1]
      %v3182 = vlaneseq
      %v3183 = vshrl.u32 %v3182, 7
      %v3184 = vsub.s32 0, %v3183
      %v3185 = vrot.slane %v3180, %v3184
      %v3191 = vunpack.c.l.b16 %v3176
      %v3192 = vunpack.c.l.b16 %v3177
      %v3193 = vunpack.c.l.b16 %v3178
      %v3194 = vunpack.c.l.b16 %v3179
      %v3195 = vpack.c.b16 %v3192, %v3191
      %v3196 = vpack.c.b16 %v3194, %v3193
      %v3200 = vsel %vm1444, %v557, 0
      %v3203 = vsel %vm1444, %v558, 0
      %v3206 = vsel %vm1444, %v559, 0
      %v3209 = vsel %vm1444, %v560, 0
      %v3212 = vsel %vm1444, %v561, 0
      %v3215 = vsel %vm1444, %v562, 0
      %v3218 = vsel %vm1444, %v563, 0
      %v3221 = vsel %vm1444, %v564, 0
      %3223 = vmatprep.subr.bf16.mxu0 0
      %3224 = vmatpush1.bf16.msra.mxu0 %v3195
      %3225 = vmatprep.subr.bf16.mxu0 0
      %3226 = vmatpush1.bf16.msra.mxu0 %v3196
      %3227 = vmatprep.subr.bf16.mxu0 0
      %3228 = vmatpush1.bf16.msra.mxu0 0
      %3229 = vmatprep.subr.bf16.mxu0 0
      %3230 = vmatpush1.bf16.msra.mxu0 0
      %3231 = vmatprep.subr.bf16.mxu0 0
      %3232 = vmatpush1.bf16.msra.mxu0 0
      %3233 = vmatprep.subr.bf16.mxu0 0
      %3234 = vmatpush1.bf16.msra.mxu0 0
      %3235 = vmatprep.subr.bf16.mxu0 0
      %3236 = vmatpush1.bf16.msra.mxu0 0
      %3237 = vmatprep.subr.bf16.mxu0 0
      %3238 = vmatpush1.bf16.msra.mxu0 0
      %3239 = vmatprep.subr.bf16.mxu0 0
      %3240 = vmatpush1.bf16.msra.mxu0 0
      %3241 = vmatprep.subr.bf16.mxu0 0
      %3242 = vmatpush1.bf16.msra.mxu0 0
      %3243 = vmatprep.subr.bf16.mxu0 0
      %3244 = vmatpush1.bf16.msra.mxu0 0
      %3245 = vmatprep.subr.bf16.mxu0 0
      %3246 = vmatpush1.bf16.msra.mxu0 0
      %3247 = vmatprep.subr.bf16.mxu0 0
      %3248 = vmatpush1.bf16.msra.mxu0 0
      %3249 = vmatprep.subr.bf16.mxu0 0
      %3250 = vmatpush1.bf16.msra.mxu0 0
      %3251 = vmatprep.subr.bf16.mxu0 0
      %3252 = vmatpush1.bf16.msra.mxu0 0
      %3253 = vmatprep.subr.bf16.mxu0 0
      %3254 = vmatpush1.bf16.msra.mxu0 0
      %3255 = vmatprep.mubr.bf16.mxu0 0
      %3256 = vmatmul.mubr.bf16.gmra.mrb[0].mxu0 %v3200
      %v3257 = vpop.f32.mrb[0].mxu0
      %v3258 = vadd.f32 %v3185, %v3257
      %v3259 = vpop.f32.mrb[0].mxu0
      %v3260 = vpop.f32.mrb[0].mxu0
      %v3261 = vadd.f32 %v3185, %v3260
      %v3262 = vpop.f32.mrb[0].mxu0
      %3263 = vmatprep.mubr.bf16.mxu0 0
      %3264 = vmatmul.mubr.bf16.gmra.mrb[0].mxu0 %v3203
      %v3265 = vpop.f32.mrb[0].mxu0
      %v3266 = vadd.f32 %v3185, %v3265
      %v3267 = vpop.f32.mrb[0].mxu0
      %v3268 = vpop.f32.mrb[0].mxu0
      %v3269 = vadd.f32 %v3185, %v3268
      %v3270 = vpop.f32.mrb[0].mxu0
      %3271 = vmatprep.mubr.bf16.mxu0 0
      %3272 = vmatmul.mubr.bf16.gmra.mrb[0].mxu0 %v3206
      %v3273 = vpop.f32.mrb[0].mxu0
      %v3274 = vadd.f32 %v3185, %v3273
      %v3275 = vpop.f32.mrb[0].mxu0
      %v3276 = vpop.f32.mrb[0].mxu0
      %v3277 = vadd.f32 %v3185, %v3276
      %v3278 = vpop.f32.mrb[0].mxu0
      %3279 = vmatprep.mubr.bf16.mxu0 0
      %3280 = vmatmul.mubr.bf16.gmra.mrb[0].mxu0 %v3209
      %v3281 = vpop.f32.mrb[0].mxu0
      %v3282 = vadd.f32 %v3185, %v3281
      %v3283 = vpop.f32.mrb[0].mxu0
      %v3284 = vpop.f32.mrb[0].mxu0
      %v3285 = vadd.f32 %v3185, %v3284
      %v3286 = vpop.f32.mrb[0].mxu0
      %3287 = vmatprep.mubr.bf16.mxu0 0
      %3288 = vmatmul.mubr.bf16.gmra.mrb[0].mxu0 %v3212
      %v3289 = vpop.f32.mrb[0].mxu0
      %v3290 = vadd.f32 %v3185, %v3289
      %v3291 = vpop.f32.mrb[0].mxu0
      %v3292 = vpop.f32.mrb[0].mxu0
      %v3293 = vadd.f32 %v3185, %v3292
      %v3294 = vpop.f32.mrb[0].mxu0
      %3295 = vmatprep.mubr.bf16.mxu0 0
      %3296 = vmatmul.mubr.bf16.gmra.mrb[0].mxu0 %v3215
      %v3297 = vpop.f32.mrb[0].mxu0
      %v3298 = vadd.f32 %v3185, %v3297
      %v3299 = vpop.f32.mrb[0].mxu0
      %v3300 = vpop.f32.mrb[0].mxu0
      %v3301 = vadd.f32 %v3185, %v3300
      %v3302 = vpop.f32.mrb[0].mxu0
      %3303 = vmatprep.mubr.bf16.mxu0 0
      %3304 = vmatmul.mubr.bf16.gmra.mrb[0].mxu0 %v3218
      %v3305 = vpop.f32.mrb[0].mxu0
      %v3306 = vadd.f32 %v3185, %v3305
      %v3307 = vpop.f32.mrb[0].mxu0
      %v3308 = vpop.f32.mrb[0].mxu0
      %v3309 = vadd.f32 %v3185, %v3308
      %v3310 = vpop.f32.mrb[0].mxu0
      %3311 = vmatprep.mubr.bf16.mxu0 0
      %3312 = vmatmul.mubr.bf16.gmra.mrb[0].mxu0 %v3221
      %v3313 = vpop.f32.mrb[0].mxu0
      %v3314 = vadd.f32 %v3185, %v3313
      %v3315 = vpop.f32.mrb[0].mxu0
      %v3316 = vpop.f32.mrb[0].mxu0
      %v3317 = vadd.f32 %v3185, %v3316
      %v3318 = vpop.f32.mrb[0].mxu0
      %3319 = vdwg.mxu0
      %v3320 = vmul.f32 %v3258, 0.70710677
      %v3321 = vmul.f32 %v3261, 0.70710677
      %v3322 = vmul.f32 %v3266, 0.70710677
      %v3323 = vmul.f32 %v3269, 0.70710677
      %v3324 = vmul.f32 %v3274, 0.70710677
      %v3325 = vmul.f32 %v3277, 0.70710677
      %v3326 = vmul.f32 %v3282, 0.70710677
      %v3327 = vmul.f32 %v3285, 0.70710677
      %v3328 = vmul.f32 %v3290, 0.70710677
      %v3329 = vmul.f32 %v3293, 0.70710677
      %v3330 = vmul.f32 %v3298, 0.70710677
      %v3331 = vmul.f32 %v3301, 0.70710677
      %v3332 = vmul.f32 %v3306, 0.70710677
      %v3333 = vmul.f32 %v3309, 0.70710677
      %v3334 = vmul.f32 %v3314, 0.70710677
      %v3335 = vmul.f32 %v3317, 0.70710677
      %v3336 = vand.u32 2147483647, %v3320
      %v3337 = vand.u32 2147483647, %v3321
      %v3338 = vand.u32 2147483647, %v3322
      %v3339 = vand.u32 2147483647, %v3323
      %v3340 = vand.u32 2147483647, %v3324
      %v3341 = vand.u32 2147483647, %v3325
      %v3342 = vand.u32 2147483647, %v3326
      %v3343 = vand.u32 2147483647, %v3327
      %v3344 = vand.u32 2147483647, %v3328
      %v3345 = vand.u32 2147483647, %v3329
      %v3346 = vand.u32 2147483647, %v3330
      %v3347 = vand.u32 2147483647, %v3331
      %v3348 = vand.u32 2147483647, %v3332
      %v3349 = vand.u32 2147483647, %v3333
      %v3350 = vand.u32 2147483647, %v3334
      %v3351 = vand.u32 2147483647, %v3335
      %v3352 = vmul.f32 %v3336, 0.3275911
      %v3353 = vmul.f32 %v3337, 0.3275911
      %v3354 = vmul.f32 %v3338, 0.3275911
      %v3355 = vmul.f32 %v3339, 0.3275911
      %v3356 = vmul.f32 %v3340, 0.3275911
      %v3357 = vmul.f32 %v3341, 0.3275911
      %v3358 = vmul.f32 %v3342, 0.3275911
      %v3359 = vmul.f32 %v3343, 0.3275911
      %v3360 = vmul.f32 %v3344, 0.3275911
      %v3361 = vmul.f32 %v3345, 0.3275911
      %v3362 = vmul.f32 %v3346, 0.3275911
      %v3363 = vmul.f32 %v3347, 0.3275911
      %v3364 = vmul.f32 %v3348, 0.3275911
      %v3365 = vmul.f32 %v3349, 0.3275911
      %v3366 = vmul.f32 %v3350, 0.3275911
      %v3367 = vmul.f32 %v3351, 0.3275911
      %v3368 = vadd.f32 %v3352, 1.0
      %v3369 = vadd.f32 %v3353, 1.0
      %v3370 = vadd.f32 %v3354, 1.0
      %v3371 = vadd.f32 %v3355, 1.0
      %v3372 = vadd.f32 %v3356, 1.0
      %v3373 = vadd.f32 %v3357, 1.0
      %v3374 = vadd.f32 %v3358, 1.0
      %v3375 = vadd.f32 %v3359, 1.0
      %v3376 = vadd.f32 %v3360, 1.0
      %v3377 = vadd.f32 %v3361, 1.0
      %v3378 = vadd.f32 %v3362, 1.0
      %v3379 = vadd.f32 %v3363, 1.0
      %v3380 = vadd.f32 %v3364, 1.0
      %v3381 = vadd.f32 %v3365, 1.0
      %v3382 = vadd.f32 %v3366, 1.0
      %v3383 = vadd.f32 %v3367, 1.0
      %v3384 = vrcp.pop %v3368
      %v3385 = vmul.f32 1.0, %v3384
      %v3386 = vrcp.pop %v3369
      %v3387 = vmul.f32 1.0, %v3386
      %v3388 = vrcp.pop %v3370
      %v3389 = vmul.f32 1.0, %v3388
      %v3390 = vrcp.pop %v3371
      %v3391 = vmul.f32 1.0, %v3390
      %v3392 = vrcp.pop %v3372
      %v3393 = vmul.f32 1.0, %v3392
      %v3394 = vrcp.pop %v3373
      %v3395 = vmul.f32 1.0, %v3394
      %v3396 = vrcp.pop %v3374
      %v3397 = vmul.f32 1.0, %v3396
      %v3398 = vrcp.pop %v3375
      %v3399 = vmul.f32 1.0, %v3398
      %v3400 = vrcp.pop %v3376
      %v3401 = vmul.f32 1.0, %v3400
      %v3402 = vrcp.pop %v3377
      %v3403 = vmul.f32 1.0, %v3402
      %v3404 = vrcp.pop %v3378
      %v3405 = vmul.f32 1.0, %v3404
      %v3406 = vrcp.pop %v3379
      %v3407 = vmul.f32 1.0, %v3406
      %v3408 = vrcp.pop %v3380
      %v3409 = vmul.f32 1.0, %v3408
      %v3410 = vrcp.pop %v3381
      %v3411 = vmul.f32 1.0, %v3410
      %v3412 = vrcp.pop %v3382
      %v3413 = vmul.f32 1.0, %v3412
      %v3414 = vrcp.pop %v3383
      %v3415 = vmul.f32 1.0, %v3414
      %v3416 = vmul.f32 %v3385, 1.0614054
      %v3417 = vmul.f32 %v3387, 1.0614054
      %v3418 = vmul.f32 %v3389, 1.0614054
      %v3419 = vmul.f32 %v3391, 1.0614054
      %v3420 = vmul.f32 %v3393, 1.0614054
      %v3421 = vmul.f32 %v3395, 1.0614054
      %v3422 = vmul.f32 %v3397, 1.0614054
      %v3423 = vmul.f32 %v3399, 1.0614054
      %v3424 = vmul.f32 %v3401, 1.0614054
      %v3425 = vmul.f32 %v3403, 1.0614054
      %v3426 = vmul.f32 %v3405, 1.0614054
      %v3427 = vmul.f32 %v3407, 1.0614054
      %v3428 = vmul.f32 %v3409, 1.0614054
      %v3429 = vmul.f32 %v3411, 1.0614054
      %v3430 = vmul.f32 %v3413, 1.0614054
      %v3431 = vmul.f32 %v3415, 1.0614054
      %v3432 = vadd.f32 %v3416, -1.4531521
      %v3433 = vadd.f32 %v3417, -1.4531521
      %v3434 = vadd.f32 %v3418, -1.4531521
      %v3435 = vadd.f32 %v3419, -1.4531521
      %v3436 = vadd.f32 %v3420, -1.4531521
      %v3437 = vadd.f32 %v3421, -1.4531521
      %v3438 = vadd.f32 %v3422, -1.4531521
      %v3439 = vadd.f32 %v3423, -1.4531521
      %v3440 = vadd.f32 %v3424, -1.4531521
      %v3441 = vadd.f32 %v3425, -1.4531521
      %v3442 = vadd.f32 %v3426, -1.4531521
      %v3443 = vadd.f32 %v3427, -1.4531521
      %v3444 = vadd.f32 %v3428, -1.4531521
      %v3445 = vadd.f32 %v3429, -1.4531521
      %v3446 = vadd.f32 %v3430, -1.4531521
      %v3447 = vadd.f32 %v3431, -1.4531521
      %v3448 = vmul.f32 %v3385, %v3432
      %v3449 = vmul.f32 %v3387, %v3433
      %v3450 = vmul.f32 %v3389, %v3434
      %v3451 = vmul.f32 %v3391, %v3435
      %v3452 = vmul.f32 %v3393, %v3436
      %v3453 = vmul.f32 %v3395, %v3437
      %v3454 = vmul.f32 %v3397, %v3438
      %v3455 = vmul.f32 %v3399, %v3439
      %v3456 = vmul.f32 %v3401, %v3440
      %v3457 = vmul.f32 %v3403, %v3441
      %v3458 = vmul.f32 %v3405, %v3442
      %v3459 = vmul.f32 %v3407, %v3443
      %v3460 = vmul.f32 %v3409, %v3444
      %v3461 = vmul.f32 %v3411, %v3445
      %v3462 = vmul.f32 %v3413, %v3446
      %v3463 = vmul.f32 %v3415, %v3447
      %v3464 = vadd.f32 %v3448, 1.4214138
      %v3465 = vadd.f32 %v3449, 1.4214138
      %v3466 = vadd.f32 %v3450, 1.4214138
      %v3467 = vadd.f32 %v3451, 1.4214138
      %v3468 = vadd.f32 %v3452, 1.4214138
      %v3469 = vadd.f32 %v3453, 1.4214138
      %v3470 = vadd.f32 %v3454, 1.4214138
      %v3471 = vadd.f32 %v3455, 1.4214138
      %v3472 = vadd.f32 %v3456, 1.4214138
      %v3473 = vadd.f32 %v3457, 1.4214138
      %v3474 = vadd.f32 %v3458, 1.4214138
      %v3475 = vadd.f32 %v3459, 1.4214138
      %v3476 = vadd.f32 %v3460, 1.4214138
      %v3477 = vadd.f32 %v3461, 1.4214138
      %v3478 = vadd.f32 %v3462, 1.4214138
      %v3479 = vadd.f32 %v3463, 1.4214138
      %v3480 = vmul.f32 %v3385, %v3464
      %v3481 = vmul.f32 %v3387, %v3465
      %v3482 = vmul.f32 %v3389, %v3466
      %v3483 = vmul.f32 %v3391, %v3467
      %v3484 = vmul.f32 %v3393, %v3468
      %v3485 = vmul.f32 %v3395, %v3469
      %v3486 = vmul.f32 %v3397, %v3470
      %v3487 = vmul.f32 %v3399, %v3471
      %v3488 = vmul.f32 %v3401, %v3472
      %v3489 = vmul.f32 %v3403, %v3473
      %v3490 = vmul.f32 %v3405, %v3474
      %v3491 = vmul.f32 %v3407, %v3475
      %v3492 = vmul.f32 %v3409, %v3476
      %v3493 = vmul.f32 %v3411, %v3477
      %v3494 = vmul.f32 %v3413, %v3478
      %v3495 = vmul.f32 %v3415, %v3479
      %v3496 = vadd.f32 %v3480, -0.28449672
      %v3497 = vadd.f32 %v3481, -0.28449672
      %v3498 = vadd.f32 %v3482, -0.28449672
      %v3499 = vadd.f32 %v3483, -0.28449672
      %v3500 = vadd.f32 %v3484, -0.28449672
      %v3501 = vadd.f32 %v3485, -0.28449672
      %v3502 = vadd.f32 %v3486, -0.28449672
      %v3503 = vadd.f32 %v3487, -0.28449672
      %v3504 = vadd.f32 %v3488, -0.28449672
      %v3505 = vadd.f32 %v3489, -0.28449672
      %v3506 = vadd.f32 %v3490, -0.28449672
      %v3507 = vadd.f32 %v3491, -0.28449672
      %v3508 = vadd.f32 %v3492, -0.28449672
      %v3509 = vadd.f32 %v3493, -0.28449672
      %v3510 = vadd.f32 %v3494, -0.28449672
      %v3511 = vadd.f32 %v3495, -0.28449672
      %v3512 = vmul.f32 %v3385, %v3496
      %v3513 = vmul.f32 %v3387, %v3497
      %v3514 = vmul.f32 %v3389, %v3498
      %v3515 = vmul.f32 %v3391, %v3499
      %v3516 = vmul.f32 %v3393, %v3500
      %v3517 = vmul.f32 %v3395, %v3501
      %v3518 = vmul.f32 %v3397, %v3502
      %v3519 = vmul.f32 %v3399, %v3503
      %v3520 = vmul.f32 %v3401, %v3504
      %v3521 = vmul.f32 %v3403, %v3505
      %v3522 = vmul.f32 %v3405, %v3506
      %v3523 = vmul.f32 %v3407, %v3507
      %v3524 = vmul.f32 %v3409, %v3508
      %v3525 = vmul.f32 %v3411, %v3509
      %v3526 = vmul.f32 %v3413, %v3510
      %v3527 = vmul.f32 %v3415, %v3511
      %v3528 = vadd.f32 %v3512, 0.2548296
      %v3529 = vadd.f32 %v3513, 0.2548296
      %v3530 = vadd.f32 %v3514, 0.2548296
      %v3531 = vadd.f32 %v3515, 0.2548296
      %v3532 = vadd.f32 %v3516, 0.2548296
      %v3533 = vadd.f32 %v3517, 0.2548296
      %v3534 = vadd.f32 %v3518, 0.2548296
      %v3535 = vadd.f32 %v3519, 0.2548296
      %v3536 = vadd.f32 %v3520, 0.2548296
      %v3537 = vadd.f32 %v3521, 0.2548296
      %v3538 = vadd.f32 %v3522, 0.2548296
      %v3539 = vadd.f32 %v3523, 0.2548296
      %v3540 = vadd.f32 %v3524, 0.2548296
      %v3541 = vadd.f32 %v3525, 0.2548296
      %v3542 = vadd.f32 %v3526, 0.2548296
      %v3543 = vadd.f32 %v3527, 0.2548296
      %v3544 = vmul.f32 %v3385, %v3528
      %v3545 = vmul.f32 %v3387, %v3529
      %v3546 = vmul.f32 %v3389, %v3530
      %v3547 = vmul.f32 %v3391, %v3531
      %v3548 = vmul.f32 %v3393, %v3532
      %v3549 = vmul.f32 %v3395, %v3533
      %v3550 = vmul.f32 %v3397, %v3534
      %v3551 = vmul.f32 %v3399, %v3535
      %v3552 = vmul.f32 %v3401, %v3536
      %v3553 = vmul.f32 %v3403, %v3537
      %v3554 = vmul.f32 %v3405, %v3538
      %v3555 = vmul.f32 %v3407, %v3539
      %v3556 = vmul.f32 %v3409, %v3540
      %v3557 = vmul.f32 %v3411, %v3541
      %v3558 = vmul.f32 %v3413, %v3542
      %v3559 = vmul.f32 %v3415, %v3543
      %v3560 = vsub.f32 0.0, %v3336
      %v3561 = vsub.f32 0.0, %v3337
      %v3562 = vsub.f32 0.0, %v3338
      %v3563 = vsub.f32 0.0, %v3339
      %v3564 = vsub.f32 0.0, %v3340
      %v3565 = vsub.f32 0.0, %v3341
      %v3566 = vsub.f32 0.0, %v3342
      %v3567 = vsub.f32 0.0, %v3343
      %v3568 = vsub.f32 0.0, %v3344
      %v3569 = vsub.f32 0.0, %v3345
      %v3570 = vsub.f32 0.0, %v3346
      %v3571 = vsub.f32 0.0, %v3347
      %v3572 = vsub.f32 0.0, %v3348
      %v3573 = vsub.f32 0.0, %v3349
      %v3574 = vsub.f32 0.0, %v3350
      %v3575 = vsub.f32 0.0, %v3351
      %v3576 = vmul.f32 %v3560, %v3336
      %v3577 = vmul.f32 %v3561, %v3337
      %v3578 = vmul.f32 %v3562, %v3338
      %v3579 = vmul.f32 %v3563, %v3339
      %v3580 = vmul.f32 %v3564, %v3340
      %v3581 = vmul.f32 %v3565, %v3341
      %v3582 = vmul.f32 %v3566, %v3342
      %v3583 = vmul.f32 %v3567, %v3343
      %v3584 = vmul.f32 %v3568, %v3344
      %v3585 = vmul.f32 %v3569, %v3345
      %v3586 = vmul.f32 %v3570, %v3346
      %v3587 = vmul.f32 %v3571, %v3347
      %v3588 = vmul.f32 %v3572, %v3348
      %v3589 = vmul.f32 %v3573, %v3349
      %v3590 = vmul.f32 %v3574, %v3350
      %v3591 = vmul.f32 %v3575, %v3351
      %v3592 = vmul.f32 %v3576, 1.442695
      %v3593 = vpow.pop %v3592
      %v3594 = vmul.f32 %v3577, 1.442695
      %v3595 = vpow.pop %v3594
      %v3596 = vmul.f32 %v3578, 1.442695
      %v3597 = vpow.pop %v3596
      %v3598 = vmul.f32 %v3579, 1.442695
      %v3599 = vpow.pop %v3598
      %v3600 = vmul.f32 %v3580, 1.442695
      %v3601 = vpow.pop %v3600
      %v3602 = vmul.f32 %v3581, 1.442695
      %v3603 = vpow.pop %v3602
      %v3604 = vmul.f32 %v3582, 1.442695
      %v3605 = vpow.pop %v3604
      %v3606 = vmul.f32 %v3583, 1.442695
      %v3607 = vpow.pop %v3606
      %v3608 = vmul.f32 %v3584, 1.442695
      %v3609 = vpow.pop %v3608
      %v3610 = vmul.f32 %v3585, 1.442695
      %v3611 = vpow.pop %v3610
      %v3612 = vmul.f32 %v3586, 1.442695
      %v3613 = vpow.pop %v3612
      %v3614 = vmul.f32 %v3587, 1.442695
      %v3615 = vpow.pop %v3614
      %v3616 = vmul.f32 %v3588, 1.442695
      %v3617 = vpow.pop %v3616
      %v3618 = vmul.f32 %v3589, 1.442695
      %v3619 = vpow.pop %v3618
      %v3620 = vmul.f32 %v3590, 1.442695
      %v3621 = vpow.pop %v3620
      %v3622 = vmul.f32 %v3591, 1.442695
      %v3623 = vpow.pop %v3622
      %v3624 = vmul.f32 %v3544, %v3593
      %v3625 = vmul.f32 %v3545, %v3595
      %v3626 = vmul.f32 %v3546, %v3597
      %v3627 = vmul.f32 %v3547, %v3599
      %v3628 = vmul.f32 %v3548, %v3601
      %v3629 = vmul.f32 %v3549, %v3603
      %v3630 = vmul.f32 %v3550, %v3605
      %v3631 = vmul.f32 %v3551, %v3607
      %v3632 = vmul.f32 %v3552, %v3609
      %v3633 = vmul.f32 %v3553, %v3611
      %v3634 = vmul.f32 %v3554, %v3613
      %v3635 = vmul.f32 %v3555, %v3615
      %v3636 = vmul.f32 %v3556, %v3617
      %v3637 = vmul.f32 %v3557, %v3619
      %v3638 = vmul.f32 %v3558, %v3621
      %v3639 = vmul.f32 %v3559, %v3623
      %v3640 = vsub.f32 1.0, %v3624
      %v3641 = vsub.f32 1.0, %v3625
      %v3642 = vsub.f32 1.0, %v3626
      %v3643 = vsub.f32 1.0, %v3627
      %v3644 = vsub.f32 1.0, %v3628
      %v3645 = vsub.f32 1.0, %v3629
      %v3646 = vsub.f32 1.0, %v3630
      %v3647 = vsub.f32 1.0, %v3631
      %v3648 = vsub.f32 1.0, %v3632
      %v3649 = vsub.f32 1.0, %v3633
      %v3650 = vsub.f32 1.0, %v3634
      %v3651 = vsub.f32 1.0, %v3635
      %v3652 = vsub.f32 1.0, %v3636
      %v3653 = vsub.f32 1.0, %v3637
      %v3654 = vsub.f32 1.0, %v3638
      %v3655 = vsub.f32 1.0, %v3639
      %vm3656 = vcmp.ge.f32.partialorder %v3320, 0.0
      %vm3657 = vcmp.ge.f32.partialorder %v3321, 0.0
      %vm3658 = vcmp.ge.f32.partialorder %v3322, 0.0
      %vm3659 = vcmp.ge.f32.partialorder %v3323, 0.0
      %vm3660 = vcmp.ge.f32.partialorder %v3324, 0.0
      %vm3661 = vcmp.ge.f32.partialorder %v3325, 0.0
      %vm3662 = vcmp.ge.f32.partialorder %v3326, 0.0
      %vm3663 = vcmp.ge.f32.partialorder %v3327, 0.0
      %vm3664 = vcmp.ge.f32.partialorder %v3328, 0.0
      %vm3665 = vcmp.ge.f32.partialorder %v3329, 0.0
      %vm3666 = vcmp.ge.f32.partialorder %v3330, 0.0
      %vm3667 = vcmp.ge.f32.partialorder %v3331, 0.0
      %vm3668 = vcmp.ge.f32.partialorder %v3332, 0.0
      %vm3669 = vcmp.ge.f32.partialorder %v3333, 0.0
      %vm3670 = vcmp.ge.f32.partialorder %v3334, 0.0
      %vm3671 = vcmp.ge.f32.partialorder %v3335, 0.0
      %v3672 = vsub.f32 0.0, %v3640
      %v3673 = vsub.f32 0.0, %v3641
      %v3674 = vsub.f32 0.0, %v3642
      %v3675 = vsub.f32 0.0, %v3643
      %v3676 = vsub.f32 0.0, %v3644
      %v3677 = vsub.f32 0.0, %v3645
      %v3678 = vsub.f32 0.0, %v3646
      %v3679 = vsub.f32 0.0, %v3647
      %v3680 = vsub.f32 0.0, %v3648
      %v3681 = vsub.f32 0.0, %v3649
      %v3682 = vsub.f32 0.0, %v3650
      %v3683 = vsub.f32 0.0, %v3651
      %v3684 = vsub.f32 0.0, %v3652
      %v3685 = vsub.f32 0.0, %v3653
      %v3686 = vsub.f32 0.0, %v3654
      %v3687 = vsub.f32 0.0, %v3655
      %v3688 = vsel %vm3656, %v3640, %v3672
      %v3689 = vsel %vm3657, %v3641, %v3673
      %v3690 = vsel %vm3658, %v3642, %v3674
      %v3691 = vsel %vm3659, %v3643, %v3675
      %v3692 = vsel %vm3660, %v3644, %v3676
      %v3693 = vsel %vm3661, %v3645, %v3677
      %v3694 = vsel %vm3662, %v3646, %v3678
      %v3695 = vsel %vm3663, %v3647, %v3679
      %v3696 = vsel %vm3664, %v3648, %v3680
      %v3697 = vsel %vm3665, %v3649, %v3681
      %v3698 = vsel %vm3666, %v3650, %v3682
      %v3699 = vsel %vm3667, %v3651, %v3683
      %v3700 = vsel %vm3668, %v3652, %v3684
      %v3701 = vsel %vm3669, %v3653, %v3685
      %v3702 = vsel %vm3670, %v3654, %v3686
      %v3703 = vsel %vm3671, %v3655, %v3687
      %v3704 = vmul.f32 %v3258, 0.5
      %v3705 = vmul.f32 %v3261, 0.5
      %v3706 = vmul.f32 %v3266, 0.5
      %v3707 = vmul.f32 %v3269, 0.5
      %v3708 = vmul.f32 %v3274, 0.5
      %v3709 = vmul.f32 %v3277, 0.5
      %v3710 = vmul.f32 %v3282, 0.5
      %v3711 = vmul.f32 %v3285, 0.5
      %v3712 = vmul.f32 %v3290, 0.5
      %v3713 = vmul.f32 %v3293, 0.5
      %v3714 = vmul.f32 %v3298, 0.5
      %v3715 = vmul.f32 %v3301, 0.5
      %v3716 = vmul.f32 %v3306, 0.5
      %v3717 = vmul.f32 %v3309, 0.5
      %v3718 = vmul.f32 %v3314, 0.5
      %v3719 = vmul.f32 %v3317, 0.5
      %v3720 = vadd.f32 %v3688, 1.0
      %v3721 = vadd.f32 %v3689, 1.0
      %v3722 = vadd.f32 %v3690, 1.0
      %v3723 = vadd.f32 %v3691, 1.0
      %v3724 = vadd.f32 %v3692, 1.0
      %v3725 = vadd.f32 %v3693, 1.0
      %v3726 = vadd.f32 %v3694, 1.0
      %v3727 = vadd.f32 %v3695, 1.0
      %v3728 = vadd.f32 %v3696, 1.0
      %v3729 = vadd.f32 %v3697, 1.0
      %v3730 = vadd.f32 %v3698, 1.0
      %v3731 = vadd.f32 %v3699, 1.0
      %v3732 = vadd.f32 %v3700, 1.0
      %v3733 = vadd.f32 %v3701, 1.0
      %v3734 = vadd.f32 %v3702, 1.0
      %v3735 = vadd.f32 %v3703, 1.0
      %v3736 = vmul.f32 %v3704, %v3720
      %v3737 = vmul.f32 %v3705, %v3721
      %v3738 = vmul.f32 %v3706, %v3722
      %v3739 = vmul.f32 %v3707, %v3723
      %v3740 = vmul.f32 %v3708, %v3724
      %v3741 = vmul.f32 %v3709, %v3725
      %v3742 = vmul.f32 %v3710, %v3726
      %v3743 = vmul.f32 %v3711, %v3727
      %v3744 = vmul.f32 %v3712, %v3728
      %v3745 = vmul.f32 %v3713, %v3729
      %v3746 = vmul.f32 %v3714, %v3730
      %v3747 = vmul.f32 %v3715, %v3731
      %v3748 = vmul.f32 %v3716, %v3732
      %v3749 = vmul.f32 %v3717, %v3733
      %v3750 = vmul.f32 %v3718, %v3734
      %v3751 = vmul.f32 %v3719, %v3735
      %v3752 = vld [vmem:[%s7] sm:$0x1]
      %v3754 = vlaneseq
      %v3755 = vshrl.u32 %v3754, 7
      %v3756 = vsub.s32 0, %v3755
      %v3757 = vrot.slane %v3752, %v3756
      %v3759 = vmul.f32 %v3736, %v3757
      %v3760 = vmul.f32 %v3737, %v3757
      %v3761 = vmul.f32 %v3738, %v3757
      %v3762 = vmul.f32 %v3739, %v3757
      %v3763 = vmul.f32 %v3740, %v3757
      %v3764 = vmul.f32 %v3741, %v3757
      %v3765 = vmul.f32 %v3742, %v3757
      %v3766 = vmul.f32 %v3743, %v3757
      %v3767 = vmul.f32 %v3744, %v3757
      %v3768 = vmul.f32 %v3745, %v3757
      %v3769 = vmul.f32 %v3746, %v3757
      %v3770 = vmul.f32 %v3747, %v3757
      %v3771 = vmul.f32 %v3748, %v3757
      %v3772 = vmul.f32 %v3749, %v3757
      %v3773 = vmul.f32 %v3750, %v3757
      %v3774 = vmul.f32 %v3751, %v3757
      %vm3775 = vcmask 130048
      %v3776 = vsel %vm3775, %v3759, 0.0
      %3777 = vadd.xlane.f32.xlu0 %v3776
      %v3778 = vpop.xlane.xlu0 %3777
      %v3779 = vsel %vm3775, %v3760, 0.0
      %3780 = vadd.xlane.f32.xlu0 %v3779
      %v3781 = vpop.xlane.xlu0 %3780
      %v3782 = vsel %vm3775, %v3761, 0.0
      %3783 = vadd.xlane.f32.xlu0 %v3782
      %v3784 = vpop.xlane.xlu0 %3783
      %v3785 = vsel %vm3775, %v3762, 0.0
      %3786 = vadd.xlane.f32.xlu0 %v3785
      %v3787 = vpop.xlane.xlu0 %3786
      %v3788 = vsel %vm3775, %v3763, 0.0
      %3789 = vadd.xlane.f32.xlu0 %v3788
      %v3790 = vpop.xlane.xlu0 %3789
      %v3791 = vsel %vm3775, %v3764, 0.0
      %3792 = vadd.xlane.f32.xlu0 %v3791
      %v3793 = vpop.xlane.xlu0 %3792
      %v3794 = vsel %vm3775, %v3765, 0.0
      %3795 = vadd.xlane.f32.xlu0 %v3794
      %v3796 = vpop.xlane.xlu0 %3795
      %v3797 = vsel %vm3775, %v3766, 0.0
      %3798 = vadd.xlane.f32.xlu0 %v3797
      %v3799 = vpop.xlane.xlu0 %3798
      %v3800 = vsel %vm3775, %v3767, 0.0
      %3801 = vadd.xlane.f32.xlu0 %v3800
      %v3802 = vpop.xlane.xlu0 %3801
      %v3803 = vsel %vm3775, %v3768, 0.0
      %3804 = vadd.xlane.f32.xlu0 %v3803
      %v3805 = vpop.xlane.xlu0 %3804
      %v3806 = vsel %vm3775, %v3769, 0.0
      %3807 = vadd.xlane.f32.xlu0 %v3806
      %v3808 = vpop.xlane.xlu0 %3807
      %v3809 = vsel %vm3775, %v3770, 0.0
      %3810 = vadd.xlane.f32.xlu0 %v3809
      %v3811 = vpop.xlane.xlu0 %3810
      %v3812 = vsel %vm3775, %v3771, 0.0
      %3813 = vadd.xlane.f32.xlu0 %v3812
      %v3814 = vpop.xlane.xlu0 %3813
      %v3815 = vsel %vm3775, %v3772, 0.0
      %3816 = vadd.xlane.f32.xlu0 %v3815
      %v3817 = vpop.xlane.xlu0 %3816
      %v3818 = vsel %vm3775, %v3773, 0.0
      %3819 = vadd.xlane.f32.xlu0 %v3818
      %v3820 = vpop.xlane.xlu0 %3819
      %v3821 = vsel %vm3775, %v3774, 0.0
      %3822 = vadd.xlane.f32.xlu0 %v3821
      %v3823 = vpop.xlane.xlu0 %3822
      %v3824 = vld [vmem:[#allocation2] sm:$0x1]
      %v3826 = vlaneseq
      %v3827 = vshrl.u32 %v3826, 7
      %v3828 = vsub.s32 0, %v3827
      %v3829 = vrot.slane %v3824, %v3828
      %v3831 = vadd.f32 %v3778, %v3829
      %v3832 = vadd.f32 %v3781, %v3829
      %v3833 = vadd.f32 %v3784, %v3829
      %v3834 = vadd.f32 %v3787, %v3829
      %v3835 = vadd.f32 %v3790, %v3829
      %v3836 = vadd.f32 %v3793, %v3829
      %v3837 = vadd.f32 %v3796, %v3829
      %v3838 = vadd.f32 %v3799, %v3829
      %v3839 = vadd.f32 %v3802, %v3829
      %v3840 = vadd.f32 %v3805, %v3829
      %v3841 = vadd.f32 %v3808, %v3829
      %v3842 = vadd.f32 %v3811, %v3829
      %v3843 = vadd.f32 %v3814, %v3829
      %v3844 = vadd.f32 %v3817, %v3829
      %v3845 = vadd.f32 %v3820, %v3829
      %v3846 = vadd.f32 %v3823, %v3829
      %v3847 = vxor.u32 %v3831, 2147483648
      %v3848 = vxor.u32 %v3832, 2147483648
      %v3849 = vxor.u32 %v3833, 2147483648
      %v3850 = vxor.u32 %v3834, 2147483648
      %v3851 = vxor.u32 %v3835, 2147483648
      %v3852 = vxor.u32 %v3836, 2147483648
      %v3853 = vxor.u32 %v3837, 2147483648
      %v3854 = vxor.u32 %v3838, 2147483648
      %v3855 = vxor.u32 %v3839, 2147483648
      %v3856 = vxor.u32 %v3840, 2147483648
      %v3857 = vxor.u32 %v3841, 2147483648
      %v3858 = vxor.u32 %v3842, 2147483648
      %v3859 = vxor.u32 %v3843, 2147483648
      %v3860 = vxor.u32 %v3844, 2147483648
      %v3861 = vxor.u32 %v3845, 2147483648
      %v3862 = vxor.u32 %v3846, 2147483648
      %v3863 = vmul.f32 %v3847, 1.442695
      %v3864 = vpow.pop %v3863
      %v3865 = vmul.f32 %v3848, 1.442695
      %v3866 = vpow.pop %v3865
      %v3867 = vmul.f32 %v3849, 1.442695
      %v3868 = vpow.pop %v3867
      %v3869 = vmul.f32 %v3850, 1.442695
      %v3870 = vpow.pop %v3869
      %v3871 = vmul.f32 %v3851, 1.442695
      %v3872 = vpow.pop %v3871
      %v3873 = vmul.f32 %v3852, 1.442695
      %v3874 = vpow.pop %v3873
      %v3875 = vmul.f32 %v3853, 1.442695
      %v3876 = vpow.pop %v3875
      %v3877 = vmul.f32 %v3854, 1.442695
      %v3878 = vpow.pop %v3877
      %v3879 = vmul.f32 %v3855, 1.442695
      %v3880 = vpow.pop %v3879
      %v3881 = vmul.f32 %v3856, 1.442695
      %v3882 = vpow.pop %v3881
      %v3883 = vmul.f32 %v3857, 1.442695
      %v3884 = vpow.pop %v3883
      %v3885 = vmul.f32 %v3858, 1.442695
      %v3886 = vpow.pop %v3885
      %v3887 = vmul.f32 %v3859, 1.442695
      %v3888 = vpow.pop %v3887
      %v3889 = vmul.f32 %v3860, 1.442695
      %v3890 = vpow.pop %v3889
      %v3891 = vmul.f32 %v3861, 1.442695
      %v3892 = vpow.pop %v3891
      %v3893 = vmul.f32 %v3862, 1.442695
      %v3894 = vpow.pop %v3893
      %v3895 = vadd.f32 %v3864, 1.0
      %v3896 = vadd.f32 %v3866, 1.0
      %v3897 = vadd.f32 %v3868, 1.0
      %v3898 = vadd.f32 %v3870, 1.0
      %v3899 = vadd.f32 %v3872, 1.0
      %v3900 = vadd.f32 %v3874, 1.0
      %v3901 = vadd.f32 %v3876, 1.0
      %v3902 = vadd.f32 %v3878, 1.0
      %v3903 = vadd.f32 %v3880, 1.0
      %v3904 = vadd.f32 %v3882, 1.0
      %v3905 = vadd.f32 %v3884, 1.0
      %v3906 = vadd.f32 %v3886, 1.0
      %v3907 = vadd.f32 %v3888, 1.0
      %v3908 = vadd.f32 %v3890, 1.0
      %v3909 = vadd.f32 %v3892, 1.0
      %v3910 = vadd.f32 %v3894, 1.0
      %v3911 = vrcp.pop %v3895
      %v3912 = vmul.f32 1.0, %v3911
      %v3913 = vrcp.pop %v3896
      %v3914 = vmul.f32 1.0, %v3913
      %v3915 = vrcp.pop %v3897
      %v3916 = vmul.f32 1.0, %v3915
      %v3917 = vrcp.pop %v3898
      %v3918 = vmul.f32 1.0, %v3917
      %v3919 = vrcp.pop %v3899
      %v3920 = vmul.f32 1.0, %v3919
      %v3921 = vrcp.pop %v3900
      %v3922 = vmul.f32 1.0, %v3921
      %v3923 = vrcp.pop %v3901
      %v3924 = vmul.f32 1.0, %v3923
      %v3925 = vrcp.pop %v3902
      %v3926 = vmul.f32 1.0, %v3925
      %v3927 = vrcp.pop %v3903
      %v3928 = vmul.f32 1.0, %v3927
      %v3929 = vrcp.pop %v3904
      %v3930 = vmul.f32 1.0, %v3929
      %v3931 = vrcp.pop %v3905
      %v3932 = vmul.f32 1.0, %v3931
      %v3933 = vrcp.pop %v3906
      %v3934 = vmul.f32 1.0, %v3933
      %v3935 = vrcp.pop %v3907
      %v3936 = vmul.f32 1.0, %v3935
      %v3937 = vrcp.pop %v3908
      %v3938 = vmul.f32 1.0, %v3937
      %v3939 = vrcp.pop %v3909
      %v3940 = vmul.f32 1.0, %v3939
      %v3941 = vrcp.pop %v3910
      %v3942 = vmul.f32 1.0, %v3941
      %v3943 = vadd.f32 %v3912, 1.0
      %v3944 = vadd.f32 %v3914, 1.0
      %v3945 = vadd.f32 %v3916, 1.0
      %v3946 = vadd.f32 %v3918, 1.0
      %v3947 = vadd.f32 %v3920, 1.0
      %v3948 = vadd.f32 %v3922, 1.0
      %v3949 = vadd.f32 %v3924, 1.0
      %v3950 = vadd.f32 %v3926, 1.0
      %v3951 = vadd.f32 %v3928, 1.0
      %v3952 = vadd.f32 %v3930, 1.0
      %v3953 = vadd.f32 %v3932, 1.0
      %v3954 = vadd.f32 %v3934, 1.0
      %v3955 = vadd.f32 %v3936, 1.0
      %v3956 = vadd.f32 %v3938, 1.0
      %v3957 = vadd.f32 %v3940, 1.0
      %v3958 = vadd.f32 %v3942, 1.0
      %3960 = vset.pattern.permute.xlu0 0
      %3961 = vperm.xlu0 %3960, %v3943
      %v3962 = vpop.permute.xlu0 %3961
      %3965 = vset.pattern.permute.xlu0 0
      %3966 = vperm.xlu0 %3965, %v3944
      %v3967 = vpop.permute.xlu0 %3966
      %3970 = vset.pattern.permute.xlu0 0
      %3971 = vperm.xlu0 %3970, %v3945
      %v3972 = vpop.permute.xlu0 %3971
      %3975 = vset.pattern.permute.xlu0 0
      %3976 = vperm.xlu0 %3975, %v3946
      %v3977 = vpop.permute.xlu0 %3976
      %3980 = vset.pattern.permute.xlu0 0
      %3981 = vperm.xlu0 %3980, %v3947
      %v3982 = vpop.permute.xlu0 %3981
      %3985 = vset.pattern.permute.xlu0 0
      %3986 = vperm.xlu0 %3985, %v3948
      %v3987 = vpop.permute.xlu0 %3986
      %3990 = vset.pattern.permute.xlu0 0
      %3991 = vperm.xlu0 %3990, %v3949
      %v3992 = vpop.permute.xlu0 %3991
      %3995 = vset.pattern.permute.xlu0 0
      %3996 = vperm.xlu0 %3995, %v3950
      %v3997 = vpop.permute.xlu0 %3996
      %4000 = vset.pattern.permute.xlu0 0
      %4001 = vperm.xlu0 %4000, %v3951
      %v4002 = vpop.permute.xlu0 %4001
      %4005 = vset.pattern.permute.xlu0 0
      %4006 = vperm.xlu0 %4005, %v3952
      %v4007 = vpop.permute.xlu0 %4006
      %4010 = vset.pattern.permute.xlu0 0
      %4011 = vperm.xlu0 %4010, %v3953
      %v4012 = vpop.permute.xlu0 %4011
      %4015 = vset.pattern.permute.xlu0 0
      %4016 = vperm.xlu0 %4015, %v3954
      %v4017 = vpop.permute.xlu0 %4016
      %4020 = vset.pattern.permute.xlu0 0
      %4021 = vperm.xlu0 %4020, %v3955
      %v4022 = vpop.permute.xlu0 %4021
      %4025 = vset.pattern.permute.xlu0 0
      %4026 = vperm.xlu0 %4025, %v3956
      %v4027 = vpop.permute.xlu0 %4026
      %4030 = vset.pattern.permute.xlu0 0
      %4031 = vperm.xlu0 %4030, %v3957
      %v4032 = vpop.permute.xlu0 %4031
      %4035 = vset.pattern.permute.xlu0 0
      %4036 = vperm.xlu0 %4035, %v3958
      %v4037 = vpop.permute.xlu0 %4036
      %v4039 = vmul.f32 %v3160, %v3962
      %v4040 = vmul.f32 %v3161, %v3967
      %v4041 = vmul.f32 %v3162, %v3972
      %v4042 = vmul.f32 %v3163, %v3977
      %v4043 = vmul.f32 %v3164, %v3982
      %v4044 = vmul.f32 %v3165, %v3987
      %v4045 = vmul.f32 %v3166, %v3992
      %v4046 = vmul.f32 %v3167, %v3997
      %v4047 = vmul.f32 %v3168, %v4002
      %v4048 = vmul.f32 %v3169, %v4007
      %v4049 = vmul.f32 %v3170, %v4012
      %v4050 = vmul.f32 %v3171, %v4017
      %v4051 = vmul.f32 %v3172, %v4022
      %v4052 = vmul.f32 %v3173, %v4027
      %v4053 = vmul.f32 %v3174, %v4032
      %v4054 = vmul.f32 %v3175, %v4037
      %4055 = vst.msk [vmem:[%s533] sm:$0xff] %vm1444, %v4039
      %4056 = vst.msk [vmem:[%s533 + $0x8] sm:$0xff] %vm1444, %v4040
      %4057 = vst.msk [vmem:[%s533 + $0x10] sm:$0xff] %vm1444, %v4041
      %4058 = vst.msk [vmem:[%s533 + $0x18] sm:$0xff] %vm1444, %v4042
      %4059 = vst.msk [vmem:[%s533 + $0x20] sm:$0xff] %vm1444, %v4043
      %4060 = vst.msk [vmem:[%s533 + $0x28] sm:$0xff] %vm1444, %v4044
      %4061 = vst.msk [vmem:[%s533 + $0x30] sm:$0xff] %vm1444, %v4045
      %4062 = vst.msk [vmem:[%s533 + $0x38] sm:$0xff] %vm1444, %v4046
      %4063 = vst.msk [vmem:[%s533 + $0x40] sm:$0xff] %vm1444, %v4047
      %4064 = vst.msk [vmem:[%s533 + $0x48] sm:$0xff] %vm1444, %v4048
      %4065 = vst.msk [vmem:[%s533 + $0x50] sm:$0xff] %vm1444, %v4049
      %4066 = vst.msk [vmem:[%s533 + $0x58] sm:$0xff] %vm1444, %v4050
      %4067 = vst.msk [vmem:[%s533 + $0x60] sm:$0xff] %vm1444, %v4051
      %4068 = vst.msk [vmem:[%s533 + $0x68] sm:$0xff] %vm1444, %v4052
      %4069 = vst.msk [vmem:[%s533 + $0x70] sm:$0xff] %vm1444, %v4053
      %4070 = vst.msk [vmem:[%s533 + $0x78] sm:$0xff] %vm1444, %v4054
      %v4071 = vsel %vm1444, %v541, 0.0
      %v4072 = vsel %vm1444, %v542, 0.0
      %v4073 = vadd.f32 %v4071, %v4072
      %v4074 = vsel %vm1444, %v543, 0.0
      %v4075 = vadd.f32 %v4073, %v4074
      %v4076 = vsel %vm1444, %v544, 0.0
      %v4077 = vadd.f32 %v4075, %v4076
      %v4078 = vsel %vm1444, %v545, 0.0
      %v4079 = vadd.f32 %v4077, %v4078
      %v4080 = vsel %vm1444, %v546, 0.0
      %v4081 = vadd.f32 %v4079, %v4080
      %v4082 = vsel %vm1444, %v547, 0.0
      %v4083 = vadd.f32 %v4081, %v4082
      %v4084 = vsel %vm1444, %v548, 0.0
      %v4085 = vadd.f32 %v4083, %v4084
      %v4086 = vsel %vm1444, %v549, 0.0
      %v4087 = vadd.f32 %v4085, %v4086
      %v4088 = vsel %vm1444, %v550, 0.0
      %v4089 = vadd.f32 %v4087, %v4088
      %v4090 = vsel %vm1444, %v551, 0.0
      %v4091 = vadd.f32 %v4089, %v4090
      %v4092 = vsel %vm1444, %v552, 0.0
      %v4093 = vadd.f32 %v4091, %v4092
      %v4094 = vsel %vm1444, %v553, 0.0
      %v4095 = vadd.f32 %v4093, %v4094
      %v4096 = vsel %vm1444, %v554, 0.0
      %v4097 = vadd.f32 %v4095, %v4096
      %v4098 = vsel %vm1444, %v555, 0.0
      %v4099 = vadd.f32 %v4097, %v4098
      %v4100 = vsel %vm1444, %v556, 0.0
      %v4101 = vadd.f32 %v4099, %v4100
      %v4102 = vrot.slane %v4101, 4
      %v4103 = vadd.f32 %v4101, %v4102
      %v4104 = vrot.slane %v4103, 2
      %v4105 = vadd.f32 %v4103, %v4104
      %v4106 = vrot.slane %v4105, 1
      %v4107 = vadd.f32 %v4105, %v4106
      %p4108 = scmp.eq.s32.totalorder %s29, 0
      // Predicated region
      $region57: #{asc_forward.2} parent=55 // pred_check
        %p4109 = pneg %p4108
      $region58: #{asc_forward.2} parent=55 // pred_check_branch
        %4111 = sbr.rel (%p4109) target = $region60
      $region59: #{asc_forward.2} parent=55 // pred_region
        %vm4112 = vcmask 253952
        %4113 = vst.msk [vmem:[%s537] sm:$0x1] %vm4112, %v4107
      $region60: #{asc_forward.2} parent=55 // pred_fallthru
        _
      // Predicated region
      $region61: #{asc_forward.2} parent=55 // pred_check
        %p4114 = pneg %p565
      $region62: #{asc_forward.2} parent=55 // pred_check_branch
        %4116 = sbr.rel (%p4114) target = $region64
      $region63: #{asc_forward.2} parent=55 // pred_region
        %v4117 = vld [vmem:[%s537] sm:$0x1]
        %v4118 = vadd.f32 %v4117, %v4107
        %vm4119 = vcmask 253952
        %4120 = vst.msk [vmem:[%s537] sm:$0x1] %vm4119, %v4118
      $region64: #{asc_forward.2} parent=55 // pred_fallthru
        _
      %p4121 = scmp.eq.s32.totalorder %s29, 1
      // Predicated region
      $region65: #{asc_forward.2} parent=55 // pred_check
        %p4122 = pneg %p4121
      $region66: #{asc_forward.2} parent=55 // pred_check_branch
        %4124 = sbr.rel (%p4122) target = $region68
      $region67: #{asc_forward.2} parent=55 // pred_region
        %v4125 = vld [vmem:[%s537] sm:$0x1]
        %v4126 = vmul.f32 %v4125, 0.00390625
        %vm4127 = vcmask 253952
        %4128 = vst.msk [vmem:[%s537] sm:$0x1] %vm4127, %v4126
      $region68: #{asc_forward.2} parent=55 // pred_fallthru
        _
      %s4129 = smul.u32 16, %s29
      %p4130 = scmp.lt.s32.totalorder %s28, 1
      %s4131 = scalar_select %p4130, %s28, 1
      %p4132 = scmp.lt.s32.totalorder %s4129, 31
      %s4133 = scalar_select %p4132, %s4129, 31
      %s4134 = smul.addr %s4131, 32
      %s4135 = sadd.s32 %s4133, %s4134
      %s4136 = smul.addr %s4135, 8
      %s4137 = scalar_lea.vmem %s9, %s4136
      %p4138 = scmp.lt.s32.totalorder %s28, 1
      %s4139 = scalar_select %p4138, %s28, 1
      %s4140 = scalar_lea.vmem %s10, %s4139
      // Predicated region
      $region69: #{asc_forward.2} parent=55 // pred_check
        %p4141 = pneg %p282
      $region70: #{asc_forward.2} parent=55 // pred_check_branch
        %4143 = sbr.rel (%p4141) target = $region72
      $region71: #{asc_forward.2} parent=55 // pred_region
        %s4144 = smul.u32 16, %s29
      $region72: #{asc_forward.2} parent=55 // pred_fallthru
        _
      // Predicated region
      $region73: #{asc_forward.2} parent=55 // pred_check
        %p4145 = pneg %p308
      $region74: #{asc_forward.2} parent=55 // pred_check_branch
        %4147 = sbr.rel (%p4145) target = $region76
      $region75: #{asc_forward.2} parent=55 // pred_region
        _
      $region76: #{asc_forward.2} parent=55 // pred_fallthru
        _
    $region56: #{asc_forward.2} parent=5 // pred_fallthru
      _
    %p4148 = scmp.le.s32.totalorder 2, %s19
    // Predicated region
    $region77: #{asc_forward.2} parent=5 // pred_check
      %p4149 = pneg %p4148
    $region78: #{asc_forward.2} parent=5 // pred_check_branch
      %4151 = sbr.rel (%p4149) target = $region80
    $region79: #{asc_forward.2} parent=5 // pred_region
      %s4152 = ssub.s32 %s19, 2
      // Predicated region
      $region81: #{asc_forward.2} parent=79 // pred_check
        %p4153 = pneg %p288
      $region82: #{asc_forward.2} parent=79 // pred_check_branch
        %4155 = sbr.rel (%p4153) target = $region84
      $region83: #{asc_forward.2} parent=79 // pred_region
        %s4156 = smul.u32 16, %s31
        %p4157 = scmp.lt.s32.totalorder %s30, 1
        %s4158 = scalar_select %p4157, %s30, 1
        %p4159 = scmp.lt.s32.totalorder %s4156, 31
        %s4160 = scalar_select %p4159, %s4156, 31
        %s4161 = smul.addr %s4158, 32
        %s4162 = sadd.s32 %s4160, %s4161
        %s4163 = smul.addr %s4162, 8
        %s4164 = scalar_lea.vmem %s9, %s4163
      $region84: #{asc_forward.2} parent=79 // pred_fallthru
        _
      // Predicated region
      $region85: #{asc_forward.2} parent=79 // pred_check
        %p4165 = pneg %p314
      $region86: #{asc_forward.2} parent=79 // pred_check_branch
        %4167 = sbr.rel (%p4165) target = $region88
      $region87: #{asc_forward.2} parent=79 // pred_region
        %p4168 = scmp.lt.s32.totalorder %s30, 1
        %s4169 = scalar_select %p4168, %s30, 1
        %s4170 = scalar_lea.vmem %s10, %s4169
      $region88: #{asc_forward.2} parent=79 // pred_fallthru
        _
    $region80: #{asc_forward.2} parent=5 // pred_fallthru
      _
  $region6: #{asc_forward.2} parent=0 // loop_footer
    %s23 = sadd.s32 1, %s19
  $region7: #{asc_forward.2} parent=0 // loop_footer_branch
    %18 = sbr.rel target = $region3
  $region8: #{asc_forward.2} parent=0 // loop_exit
    _

</llo_original>
